<compile_context>
chip_gen: v6e
topology: v6e:2x2x1
jax: 0.10.0
libtpu: 0.0.40
codegen_flags: <defaults>
</compile_context>

<pallas_src>
import functools
import math

import jax
import jax.numpy as jnp
from jax.experimental import pallas as pl
from jax.experimental.pallas import tpu as pltpu

_LN_EPS = 1e-5                      # PyTorch LayerNorm default
_GELU_C = 0.7978845608028654        # sqrt(2/pi)

# Row indices of the packed per-block vector-parameter array (attention kernel).
_V_BP, _V_LN2G, _V_LN2B, _V_B1, _V_B2 = 0, 1, 2, 3, 4


def _round_up(n, m):
    return -(-n // m) * m


_VMEM_LIMIT_CACHE = None


def _vmem_limit():
    """Generation-aware scoped-VMEM limit (~80% of physical VMEM)."""
    global _VMEM_LIMIT_CACHE
    if _VMEM_LIMIT_CACHE is None:
        try:
            cap = int(pltpu.get_tpu_info().vmem_capacity_bytes)
        except Exception:                       # CPU/interpret or API drift
            cap = 64 * 1024 * 1024
        _VMEM_LIMIT_CACHE = max(32 * 1024 * 1024, int(cap * 0.8))
    return _VMEM_LIMIT_CACHE


def _pick_tile(n, cap):
    """Largest divisor of n that is <= cap and sublane-aligned (or n itself)."""
    for t in range(min(cap, n), 0, -1):
        if n % t == 0 and (t % 8 == 0 or t == n):
            return t
    return n


def _mosaic_params(dimension_semantics):
    return pltpu.CompilerParams(dimension_semantics=dimension_semantics,
                                vmem_limit_bytes=_vmem_limit())


# ----------------------------------------------------------------------------
# Pallas kernels
# ----------------------------------------------------------------------------

def _ln_qkv_kernel(x_ref, w_ref, g_ref, o_ref, *, d_true):
    """LayerNorm(dim) + fused QKV projection for one tile of rows.

    x_ref: (tr, dp)      bf16 tokens (zero-padded beyond d_true)
    w_ref: (dp, 3*ip)    bf16 fused [wq*scale | wk | wv] (sections column-padded)
    g_ref: (2, dp)       f32  rows = [gamma, beta] of LayerNorm(dim)
    o_ref: (tr, 3*ip)    bf16 fused [q_scaled | k | v]
    """
    x = x_ref[...].astype(jnp.float32)
    dp = x.shape[-1]
    inv_d = 1.0 / float(d_true)
    mask = (jax.lax.broadcasted_iota(jnp.int32, (1, dp), 1) < d_true
            ).astype(jnp.float32)
    mu = jnp.sum(x, axis=-1, keepdims=True) * inv_d
    diff = (x - mu) * mask
    var = jnp.sum(diff * diff, axis=-1, keepdims=True) * inv_d
    xn = diff * jax.lax.rsqrt(var + _LN_EPS) * g_ref[0:1, :] + g_ref[1:2, :]
    o_ref[...] = jnp.dot(xn.astype(jnp.bfloat16), w_ref[...],
                         preferred_element_type=jnp.float32).astype(jnp.bfloat16)


def _flash_block_kernel(q_ref, k_ref, v_ref, vq_ref, wp_ref, w1_ref, w2_ref,
                        vec_ref, o_ref, m_sc, l_sc, acc_sc, *, in_true):
    """Flash attention (online softmax) + proj + v-residual + LN2 + MLP.

    Grid = (B, num_q_tiles, num_kv_tiles); kv axis is the trailing 'arbitrary'
    axis.  q/k/v/vq are bf16 tiles of the fused qkv tensor (scale folded in q).
    Running softmax state lives in f32 VMEM scratch (m_sc, l_sc, acc_sc).
    """
    ki = pl.program_id(2)

    @pl.when(ki == 0)
    def _init():
        m_sc[...] = jnp.full(m_sc.shape, -jnp.inf, jnp.float32)
        l_sc[...] = jnp.zeros(l_sc.shape, jnp.float32)
        acc_sc[...] = jnp.zeros(acc_sc.shape, jnp.float32)

    q = q_ref[0]                                           # (tq, ip) bf16
    k = k_ref[0]                                           # (tkv, ip) bf16
    v = v_ref[0]                                           # (tkv, ip) bf16

    s = jax.lax.dot_general(q, k, (((1,), (1,)), ((), ())),
                            preferred_element_type=jnp.float32)     # (tq, tkv)
    m_prev = m_sc[...]
    m_new = jnp.maximum(m_prev, jnp.max(s, axis=-1, keepdims=True))
    alpha = jnp.exp(m_prev - m_new)
    p = jnp.exp(s - m_new)                                           # f32 tile
    l_sc[...] = alpha * l_sc[...] + jnp.sum(p, axis=-1, keepdims=True)
    acc_sc[...] = alpha * acc_sc[...] + jnp.dot(
        p.astype(jnp.bfloat16), v, preferred_element_type=jnp.float32)
    m_sc[...] = m_new

    @pl.when(ki == pl.num_programs(2) - 1)
    def _finalize():
        ip = acc_sc.shape[-1]
        hp = w1_ref.shape[1]
        o = acc_sc[...] * pl.reciprocal(l_sc[...], approx=True)      # (tq, ip)
        proj = (jnp.dot(o.astype(jnp.bfloat16), wp_ref[...],
                        preferred_element_type=jnp.float32)
                + vec_ref[_V_BP:_V_BP + 1, :ip])
        # residual_before=True: skip connection uses v (dim mismatch with input)
        y = vq_ref[0].astype(jnp.float32) + proj

        inv_i = 1.0 / float(in_true)
        mask = (jax.lax.broadcasted_iota(jnp.int32, (1, ip), 1) < in_true
                ).astype(jnp.float32)
        mu = jnp.sum(y, axis=-1, keepdims=True) * inv_i
        d = (y - mu) * mask
        var = jnp.sum(d * d, axis=-1, keepdims=True) * inv_i
        yn = (d * jax.lax.rsqrt(var + _LN_EPS) * vec_ref[_V_LN2G:_V_LN2G + 1, :ip]
              + vec_ref[_V_LN2B:_V_LN2B + 1, :ip])

        h = (jnp.dot(yn.astype(jnp.bfloat16), w1_ref[...],
                     preferred_element_type=jnp.float32)
             + vec_ref[_V_B1:_V_B1 + 1, :hp])
        # tanh-approx GELU (EUP tanh) -- small deviation from exact-erf GELU.
        h = 0.5 * h * (1.0 + jnp.tanh(_GELU_C * (h + 0.044715 * h * h * h)))
        mlp = (jnp.dot(h.astype(jnp.bfloat16), w2_ref[...],
                       preferred_element_type=jnp.float32)
               + vec_ref[_V_B2:_V_B2 + 1, :ip])
        o_ref[0] = (y + mlp).astype(o_ref.dtype)


def _project_kernel(x_ref, w_ref, b_ref, o_ref):
    o_ref[...] = (jnp.dot(x_ref[...], w_ref[...],
                          preferred_element_type=jnp.float32) + b_ref[...])


# ----------------------------------------------------------------------------
# Kernel wrappers
# ----------------------------------------------------------------------------

def ln_qkv(tokens, blk):
    """tokens: (B, N, dp) bf16 -> fused (B, N, 3*ip) bf16 = [q*scale | k | v]."""
    B, N, dp = tokens.shape
    total = B * N                      # flatten batch into rows (row-wise op)
    tr = _pick_tile(total, 512)
    c3 = blk["wqkv"].shape[1]
    out = pl.pallas_call(
        functools.partial(_ln_qkv_kernel, d_true=blk["meta"]["d_true"]),
        out_shape=jax.ShapeDtypeStruct((total, c3), jnp.bfloat16),
        grid=(total // tr,),
        in_specs=[pl.BlockSpec((tr, dp), lambda r: (r, 0)),
                  pl.BlockSpec(blk["wqkv"].shape, lambda r: (0, 0)),
                  pl.BlockSpec(blk["g1"].shape, lambda r: (0, 0))],
        out_specs=pl.BlockSpec((tr, c3), lambda r: (r, 0)),
        compiler_params=_mosaic_params(("parallel",)),
    )(tokens.reshape(total, dp), blk["wqkv"], blk["g1"])
    return out.reshape(B, N, c3)


def flash_block(qkv, blk):
    """Fused-qkv (B, N, 3*ip) bf16 -> residual-stream output (B, N, ip) bf16."""
    B, N, _ = qkv.shape
    meta = blk["meta"]
    ip = meta["ip"]
    tq = _pick_tile(N, 256)
    kv_cap = 512 if _vmem_limit() >= 80 * 1024 * 1024 else 256
    tkv = _pick_tile(N, kv_cap)
    grid = (B, N // tq, N // tkv)

    out = pl.pallas_call(
        functools.partial(_flash_block_kernel, in_true=meta["in_true"]),
        out_shape=jax.ShapeDtypeStruct((B, N, ip), jnp.bfloat16),
        grid=grid,
        in_specs=[
            pl.BlockSpec((1, tq, ip), lambda b, qi, ki: (b, qi, 0)),   # q tile
            pl.BlockSpec((1, tkv, ip), lambda b, qi, ki: (b, ki, 1)),  # k tile
            pl.BlockSpec((1, tkv, ip), lambda b, qi, ki: (b, ki, 2)),  # v tile
            pl.BlockSpec((1, tq, ip), lambda b, qi, ki: (b, qi, 2)),   # v @ q rows
            pl.BlockSpec(blk["wp"].shape, lambda b, qi, ki: (0, 0)),
            pl.BlockSpec(blk["w1"].shape, lambda b, qi, ki: (0, 0)),
            pl.BlockSpec(blk["w2"].shape, lambda b, qi, ki: (0, 0)),
            pl.BlockSpec(blk["vec"].shape, lambda b, qi, ki: (0, 0)),
        ],
        out_specs=pl.BlockSpec((1, tq, ip), lambda b, qi, ki: (b, qi, 0)),
        scratch_shapes=[pltpu.VMEM((tq, 1), jnp.float32),    # running max
                        pltpu.VMEM((tq, 1), jnp.float32),    # running sum
                        pltpu.VMEM((tq, ip), jnp.float32)],  # running acc
        compiler_params=_mosaic_params(("parallel", "parallel", "arbitrary")),
    )(qkv, qkv, qkv, qkv, blk["wp"], blk["w1"], blk["w2"], blk["vec"])
    return out


def project_linear(tokens, w, b, e_true):
    """tokens: (B, N, dp) bf16, w: (dp, ep) bf16 -> (B, N, e_true) f32."""
    B, N, dp = tokens.shape
    total = B * N
    tr = _pick_tile(total, 512)
    ep = w.shape[1]
    out = pl.pallas_call(
        _project_kernel,
        out_shape=jax.ShapeDtypeStruct((total, ep), jnp.float32),
        grid=(total // tr,),
        in_specs=[pl.BlockSpec((tr, dp), lambda r: (r, 0)),
                  pl.BlockSpec(w.shape, lambda r: (0, 0)),
                  pl.BlockSpec(b.shape, lambda r: (0, 0))],
        out_specs=pl.BlockSpec((tr, ep), lambda r: (r, 0)),
        compiler_params=_mosaic_params(("parallel",)),
    )(tokens.reshape(total, dp), w, b)
    return out.reshape(B, N, ep)[:, :, :e_true]


# ----------------------------------------------------------------------------
# nn.Unfold equivalent (pure data movement, plain JAX, NHWC, bf16 stream)
# ----------------------------------------------------------------------------

def unfold_nhwc(x, k, stride, pad, pad_features_to=None):
    """PyTorch nn.Unfold(k, stride, pad) + transpose(1,2) on an NHWC image.

    x: (B, H, W, C) -> (B, Ho*Wo, C*k*k) with torch feature ordering
    f = c*(k*k) + i*k + j and L = oh*Wo + ow.  Optionally emits the
    zero-padded feature layout directly (fused by XLA under jit) so the
    downstream kernel sees a lane-dense, 128-multiple feature dim with no
    separate pad pass.
    """
    B, H, W, C = x.shape
    xp = jnp.pad(x, ((0, 0), (pad, pad), (pad, pad), (0, 0)))
    Ho = (H + 2 * pad - k) // stride + 1
    Wo = (W + 2 * pad - k) // stride + 1
    cols = []
    for i in range(k):
        for j in range(k):
            cols.append(xp[:, i:i + stride * Ho:stride, j:j + stride * Wo:stride, :])
    col = jnp.stack(cols, axis=-1)                    # (B, Ho, Wo, C, k*k)
    t = col.reshape(B, Ho * Wo, C * k * k)
    if pad_features_to is not None and pad_features_to > C * k * k:
        # TODO(synk): stream true-width features and rely on Mosaic's
        # unaligned-K matmul once validated on all target generations.
        t = jnp.pad(t, ((0, 0), (0, 0), (0, pad_features_to - C * k * k)))
    return t


# ----------------------------------------------------------------------------
# Parameter init (deterministic, synthetic) + padding / packing / bf16 prep
# ----------------------------------------------------------------------------

def init_block_params(key, dim, in_dim, factor=1):
    hidden = in_dim * factor
    ks = jax.random.split(key, 6)
    std = 0.02
    f32 = jnp.float32
    return {
        "ln1_g": jnp.ones((dim,), f32),
        "ln1_b": jnp.zeros((dim,), f32),
        "wq": (jax.random.normal(ks[0], (dim, in_dim)) * std).astype(f32),
        "wk": (jax.random.normal(ks[1], (dim, in_dim)) * std).astype(f32),
        "wv": (jax.random.normal(ks[2], (dim, in_dim)) * std).astype(f32),
        "wp": (jax.random.normal(ks[3], (in_dim, in_dim)) * std).astype(f32),
        "bp": jnp.zeros((in_dim,), f32),
        "ln2_g": jnp.ones((in_dim,), f32),
        "ln2_b": jnp.zeros((in_dim,), f32),
        "w1": (jax.random.normal(ks[4], (in_dim, hidden)) * std).astype(f32),
        "b1": jnp.zeros((hidden,), f32),
        "w2": (jax.random.normal(ks[5], (hidden, in_dim)) * std).astype(f32),
        "b2": jnp.zeros((in_dim,), f32),
    }


def prep_block_params(raw, scale):
    """Fuse wq/wk/wv into one 384-wide bf16 weight (scale folded into q columns),
    pad feature dims to 128 multiples, pack small vector params."""
    dim, in_dim = raw["wq"].shape
    hidden = raw["w1"].shape[1]
    dp, ip, hp = _round_up(dim, 128), _round_up(in_dim, 128), _round_up(hidden, 128)

    def pad2(a, r, c):
        return jnp.pad(a, ((0, r - a.shape[0]), (0, c - a.shape[1])))

    def row(v, width):
        return jnp.pad(v.reshape(1, -1), ((0, 0), (0, width - v.shape[-1])))

    wqkv = jnp.concatenate([pad2(raw["wq"] * scale, dp, ip),
                            pad2(raw["wk"], dp, ip),
                            pad2(raw["wv"], dp, ip)], axis=1).astype(jnp.bfloat16)
    g1 = jnp.concatenate([row(raw["ln1_g"], dp), row(raw["ln1_b"], dp)], axis=0)
    p2 = max(ip, hp)
    vec = jnp.concatenate([row(raw["bp"], p2), row(raw["ln2_g"], p2),
                           row(raw["ln2_b"], p2), row(raw["b1"], p2),
                           row(raw["b2"], p2), jnp.zeros((3, p2), jnp.float32)],
                          axis=0)                                   # (8, p2)
    return {
        "wqkv": wqkv,
        "g1": g1,
        "wp": pad2(raw["wp"], ip, ip).astype(jnp.bfloat16),
        "w1": pad2(raw["w1"], ip, hp).astype(jnp.bfloat16),
        "w2": pad2(raw["w2"], hp, ip).astype(jnp.bfloat16),
        "vec": vec,
        "meta": {"d_true": dim, "in_true": in_dim, "dp": dp, "ip": ip, "hp": hp},
    }


def init_t2t_params(key, in_channels, token_dim, embed_dim):
    k1, k2, k3 = jax.random.split(key, 3)
    dim1 = in_channels * 7 * 7
    dim2 = token_dim * 3 * 3
    # T2T Token_transformer: scale = head_dim ** -0.5, head_dim = in_dim (1 head)
    scale = float(token_dim) ** -0.5
    blk1 = prep_block_params(init_block_params(k1, dim1, token_dim, 1), scale)
    blk2 = prep_block_params(init_block_params(k2, dim2, token_dim, 1), scale)
    dp2 = blk2["meta"]["dp"]
    ep = _round_up(embed_dim, 128)
    w = jax.random.normal(k3, (dim2, embed_dim)) * 0.02
    return {
        "attn1": blk1,
        "attn2": blk2,
        "proj_w": jnp.pad(w, ((0, dp2 - dim2), (0, ep - embed_dim))).astype(jnp.bfloat16),
        "proj_b": jnp.zeros((1, ep), jnp.float32),
        "embed_dim": embed_dim,
    }


# ----------------------------------------------------------------------------
# Full T2TModule forward
# ----------------------------------------------------------------------------

def t2t_forward(x, params):
    blk1, blk2 = params["attn1"], params["attn2"]

    # x: NCHW f32 -> transpose ONCE to NHWC; everything downstream stays NHWC
    # and streams as bf16.
    img = jnp.transpose(x, (0, 2, 3, 1)).astype(jnp.bfloat16)

    # stage 0: soft_split_zero (7x7 / s4 / p2) + attention_one
    t = unfold_nhwc(img, 7, 4, 2, pad_features_to=blk1["meta"]["dp"])
    y = flash_block(ln_qkv(t, blk1), blk1)                   # (B, L0, ip) bf16
    c = blk1["meta"]["in_true"]
    B, N, _ = y.shape
    nh = int(math.isqrt(N))
    img = y[:, :, :c].reshape(B, nh, nh, c)                  # NHWC, no transpose

    # stage 1: soft_split_one (3x3 / s2 / p1) + attention_two
    t = unfold_nhwc(img, 3, 2, 1, pad_features_to=blk2["meta"]["dp"])
    y = flash_block(ln_qkv(t, blk2), blk2)
    c = blk2["meta"]["in_true"]
    B, N, _ = y.shape
    nh = int(math.isqrt(N))
    img = y[:, :, :c].reshape(B, nh, nh, c)

    # stage 2: soft_split_two (3x3 / s2 / p1) + Linear projection
    t = unfold_nhwc(img, 3, 2, 1, pad_features_to=blk2["meta"]["dp"])
    return project_linear(t, params["proj_w"], params["proj_b"], params["embed_dim"])


# ----------------------------------------------------------------------------
# Main
# ----------------------------------------------------------------------------

if __name__ == "__main__":
    # Small but structurally faithful shapes:
    #   img_size=32 -> 8x8 tokens -> 4x4 -> 2x2 (num_patches = (32//16)^2 = 4)
    B, C, IMG = 2, 3, 32
    TOKEN_DIM, EMBED_DIM = 64, 128

    key = jax.random.PRNGKey(0)
    kx, kp = jax.random.split(key)
    x = jax.random.normal(kx, (B, C, IMG, IMG), dtype=jnp.float32)
    params = init_t2t_params(kp, C, TOKEN_DIM, EMBED_DIM)

    fwd = jax.jit(lambda inp: t2t_forward(inp, params))
    out = jax.block_until_ready(fwd(x))

    expected_patches = (IMG // 16) * (IMG // 16)
    assert out.shape == (B, expected_patches, EMBED_DIM), out.shape
    assert bool(jnp.all(jnp.isfinite(out)))
    print("KERNEL_OK")
</pallas_src>

<mosaic_0001>
module attributes {stable_mosaic.version = 11 : i64} {
  func.func @_ln_qkv_kernel(%arg0: i32, %arg1: memref<128x256xbf16, #tpu.memory_space<vmem>>, %arg2: memref<256x384xbf16, #tpu.memory_space<vmem>>, %arg3: memref<2x256xf32, #tpu.memory_space<vmem>>, %arg4: memref<128x384xbf16, #tpu.memory_space<vmem>>) attributes {dimension_semantics = [#tpu.dimension_semantics<parallel>], iteration_bounds = array<i64: 1>, scalar_prefetch = 0 : i64, scratch_operands = 0 : i64, tpu.core_type = #tpu.core_type<tc>, window_params = [{transform_indices = @transform_0, window_bounds = array<i64: 128, 256>}, {pipeline_mode = #tpu.pipeline_mode<synchronous>, transform_indices = @transform_1, window_bounds = array<i64: 256, 384>}, {pipeline_mode = #tpu.pipeline_mode<synchronous>, transform_indices = @transform_2, window_bounds = array<i64: 2, 256>}, {transform_indices = @transform_3, window_bounds = array<i64: 128, 384>}]} {
    %c0 = arith.constant 0 : index
    %c0_0 = arith.constant 0 : index
    %0 = vector.load %arg1[%c0, %c0_0] : memref<128x256xbf16, #tpu.memory_space<vmem>>, vector<128x256xbf16>
    %1 = arith.extf %0 : vector<128x256xbf16> to vector<128x256xf32>
    %2 = tpu.iota {dimensions = array<i32: 1>} : vector<1x256xi32>
    %c147_i32 = arith.constant 147 : i32
    %3 = vector.broadcast %c147_i32 : i32 to vector<1x256xi32>
    %4 = arith.cmpi slt, %2, %3 : vector<1x256xi32>
    %5 = arith.extui %4 : vector<1x256xi1> to vector<1x256xi32>
    %6 = arith.sitofp %5 : vector<1x256xi32> to vector<1x256xf32>
    %cst = arith.constant dense<0.000000e+00> : vector<128xf32>
    %7 = vector.multi_reduction <add>, %1, %cst [1] : vector<128x256xf32> to vector<128xf32>
    %8 = vector.shape_cast %7 : vector<128xf32> to vector<128x1xf32>
    %cst_1 = arith.constant 0.00680272094 : f32
    %9 = vector.broadcast %cst_1 : f32 to vector<128x1xf32>
    %10 = arith.mulf %8, %9 : vector<128x1xf32>
    %11 = vector.broadcast %10 : vector<128x1xf32> to vector<128x256xf32>
    %12 = arith.subf %1, %11 : vector<128x256xf32>
    %13 = vector.broadcast %6 : vector<1x256xf32> to vector<128x256xf32>
    %14 = arith.mulf %12, %13 : vector<128x256xf32>
    %15 = arith.mulf %14, %14 : vector<128x256xf32>
    %cst_2 = arith.constant dense<0.000000e+00> : vector<128xf32>
    %16 = vector.multi_reduction <add>, %15, %cst_2 [1] : vector<128x256xf32> to vector<128xf32>
    %17 = vector.shape_cast %16 : vector<128xf32> to vector<128x1xf32>
    %cst_3 = arith.constant 0.00680272094 : f32
    %18 = vector.broadcast %cst_3 : f32 to vector<128x1xf32>
    %19 = arith.mulf %17, %18 : vector<128x1xf32>
    %cst_4 = arith.constant 9.99999974E-6 : f32
    %20 = vector.broadcast %cst_4 : f32 to vector<128x1xf32>
    %21 = arith.addf %19, %20 : vector<128x1xf32>
    %22 = math.rsqrt %21 : vector<128x1xf32>
    %23 = vector.broadcast %22 : vector<128x1xf32> to vector<128x256xf32>
    %24 = arith.mulf %14, %23 : vector<128x256xf32>
    %c0_5 = arith.constant 0 : index
    %c0_6 = arith.constant 0 : index
    %25 = vector.load %arg3[%c0_5, %c0_6] : memref<2x256xf32, #tpu.memory_space<vmem>>, vector<1x256xf32>
    %26 = vector.broadcast %25 : vector<1x256xf32> to vector<128x256xf32>
    %27 = arith.mulf %24, %26 : vector<128x256xf32>
    %c1 = arith.constant 1 : index
    %c0_7 = arith.constant 0 : index
    %28 = vector.load %arg3[%c1, %c0_7] : memref<2x256xf32, #tpu.memory_space<vmem>>, vector<1x256xf32>
    %29 = vector.broadcast %28 : vector<1x256xf32> to vector<128x256xf32>
    %30 = arith.addf %27, %29 : vector<128x256xf32>
    %31 = arith.truncf %30 : vector<128x256xf32> to vector<128x256xbf16>
    %c0_8 = arith.constant 0 : index
    %c0_9 = arith.constant 0 : index
    %32 = vector.load %arg2[%c0_8, %c0_9] : memref<256x384xbf16, #tpu.memory_space<vmem>>, vector<256x384xbf16>
    %cst_10 = arith.constant dense<0.000000e+00> : vector<128x384xf32>
    %33 = tpu.matmul %31, %32, %cst_10 {dimension_numbers = #tpu.dot_dimension_numbers<[1], [0], [0], [1], [0, 0, 1, 1], [], []>} : vector<128x256xbf16>, vector<256x384xbf16>, vector<128x384xf32> -> vector<128x384xf32>
    %34 = arith.truncf %33 : vector<128x384xf32> to vector<128x384xbf16>
    %c0_11 = arith.constant 0 : index
    %c0_12 = arith.constant 0 : index
    %35 = vector.load %arg4[%c0_11, %c0_12] : memref<128x384xbf16, #tpu.memory_space<vmem>>, vector<128x384xbf16>
    tpu.vector_store %arg4[%c0_11, %c0_12], %34 {strides = array<i32>} : memref<128x384xbf16, #tpu.memory_space<vmem>>, vector<128x384xbf16>,
    return
  }
  func.func @transform_0(%arg0: i32) -> (i32, i32) {
    %c0_i32 = arith.constant 0 : i32
    %c0_i32_0 = arith.constant 0 : i32
    return %arg0, %c0_i32 : i32, i32
  }
  func.func @transform_1(%arg0: i32) -> (i32, i32) {
    %c0_i32 = arith.constant 0 : i32
    %c0_i32_0 = arith.constant 0 : i32
    %c0_i32_1 = arith.constant 0 : i32
    return %c0_i32, %c0_i32_0 : i32, i32
  }
  func.func @transform_2(%arg0: i32) -> (i32, i32) {
    %c0_i32 = arith.constant 0 : i32
    %c0_i32_0 = arith.constant 0 : i32
    %c0_i32_1 = arith.constant 0 : i32
    return %c0_i32, %c0_i32_0 : i32, i32
  }
  func.func @transform_3(%arg0: i32) -> (i32, i32) {
    %c0_i32 = arith.constant 0 : i32
    %c0_i32_0 = arith.constant 0 : i32
    return %arg0, %c0_i32 : i32, i32
  }
}

module attributes {stable_mosaic.version = 11 : i64} {
  func.func @_flash_block_kernel(%arg0: i32, %arg1: i32, %arg2: i32, %arg3: memref<1x64x128xbf16, #tpu.memory_space<vmem>>, %arg4: memref<1x64x128xbf16, #tpu.memory_space<vmem>>, %arg5: memref<1x64x128xbf16, #tpu.memory_space<vmem>>, %arg6: memref<1x64x128xbf16, #tpu.memory_space<vmem>>, %arg7: memref<128x128xbf16, #tpu.memory_space<vmem>>, %arg8: memref<128x128xbf16, #tpu.memory_space<vmem>>, %arg9: memref<128x128xbf16, #tpu.memory_space<vmem>>, %arg10: memref<8x128xf32, #tpu.memory_space<vmem>>, %arg11: memref<1x64x128xbf16, #tpu.memory_space<vmem>>, %arg12: memref<64x1xf32, #tpu.memory_space<vmem>>, %arg13: memref<64x1xf32, #tpu.memory_space<vmem>>, %arg14: memref<64x128xf32, #tpu.memory_space<vmem>>) attributes {dimension_semantics = [#tpu.dimension_semantics<parallel>, #tpu.dimension_semantics<parallel>, #tpu.dimension_semantics<arbitrary>], iteration_bounds = array<i64: 2, 1, 1>, scalar_prefetch = 0 : i64, scratch_operands = 3 : i64, tpu.core_type = #tpu.core_type<tc>, window_params = [{transform_indices = @transform_0, window_bounds = array<i64: 1, 64, 128>}, {transform_indices = @transform_1, window_bounds = array<i64: 1, 64, 128>}, {transform_indices = @transform_2, window_bounds = array<i64: 1, 64, 128>}, {transform_indices = @transform_3, window_bounds = array<i64: 1, 64, 128>}, {pipeline_mode = #tpu.pipeline_mode<synchronous>, transform_indices = @transform_4, window_bounds = array<i64: 128, 128>}, {pipeline_mode = #tpu.pipeline_mode<synchronous>, transform_indices = @transform_5, window_bounds = array<i64: 128, 128>}, {pipeline_mode = #tpu.pipeline_mode<synchronous>, transform_indices = @transform_6, window_bounds = array<i64: 128, 128>}, {pipeline_mode = #tpu.pipeline_mode<synchronous>, transform_indices = @transform_7, window_bounds = array<i64: 8, 128>}, {transform_indices = @transform_8, window_bounds = array<i64: 1, 64, 128>}]} {
    %c0_i32 = arith.constant 0 : i32
    %0 = arith.cmpi eq, %arg2, %c0_i32 : i32
    %1 = arith.extui %0 : i1 to i32
    %c0_i32_0 = arith.constant 0 : i32
    %2 = arith.cmpi ne, %1, %c0_i32_0 : i32
    scf.if %2 {
      %cst_26 = arith.constant 0xFF800000 : f32
      %36 = vector.broadcast %cst_26 : f32 to vector<64x1xf32>
      %c0_27 = arith.constant 0 : index
      %c0_28 = arith.constant 0 : index
      %37 = vector.load %arg12[%c0_27, %c0_28] : memref<64x1xf32, #tpu.memory_space<vmem>>, vector<64x1xf32>
      tpu.vector_store %arg12[%c0_27, %c0_28], %36 {strides = array<i32>} : memref<64x1xf32, #tpu.memory_space<vmem>>, vector<64x1xf32>,
      %cst_29 = arith.constant 0.000000e+00 : f32
      %38 = vector.broadcast %cst_29 : f32 to vector<64x1xf32>
      %c0_30 = arith.constant 0 : index
      %c0_31 = arith.constant 0 : index
      %39 = vector.load %arg13[%c0_30, %c0_31] : memref<64x1xf32, #tpu.memory_space<vmem>>, vector<64x1xf32>
      tpu.vector_store %arg13[%c0_30, %c0_31], %38 {strides = array<i32>} : memref<64x1xf32, #tpu.memory_space<vmem>>, vector<64x1xf32>,
      %cst_32 = arith.constant 0.000000e+00 : f32
      %40 = vector.broadcast %cst_32 : f32 to vector<64x128xf32>
      %c0_33 = arith.constant 0 : index
      %c0_34 = arith.constant 0 : index
      %41 = vector.load %arg14[%c0_33, %c0_34] : memref<64x128xf32, #tpu.memory_space<vmem>>, vector<64x128xf32>
      tpu.vector_store %arg14[%c0_33, %c0_34], %40 {strides = array<i32>} : memref<64x128xf32, #tpu.memory_space<vmem>>, vector<64x128xf32>,
    } else {
    }
    %c0 = arith.constant 0 : index
    %c0_1 = arith.constant 0 : index
    %c0_2 = arith.constant 0 : index
    %3 = vector.load %arg3[%c0, %c0_1, %c0_2] : memref<1x64x128xbf16, #tpu.memory_space<vmem>>, vector<1x64x128xbf16>
    %4 = vector.shape_cast %3 : vector<1x64x128xbf16> to vector<64x128xbf16>
    %c0_3 = arith.constant 0 : index
    %c0_4 = arith.constant 0 : index
    %c0_5 = arith.constant 0 : index
    %5 = vector.load %arg4[%c0_3, %c0_4, %c0_5] : memref<1x64x128xbf16, #tpu.memory_space<vmem>>, vector<1x64x128xbf16>
    %6 = vector.shape_cast %5 : vector<1x64x128xbf16> to vector<64x128xbf16>
    %c0_6 = arith.constant 0 : index
    %c0_7 = arith.constant 0 : index
    %c0_8 = arith.constant 0 : index
    %7 = vector.load %arg5[%c0_6, %c0_7, %c0_8] : memref<1x64x128xbf16, #tpu.memory_space<vmem>>, vector<1x64x128xbf16>
    %8 = vector.shape_cast %7 : vector<1x64x128xbf16> to vector<64x128xbf16>
    %cst = arith.constant dense<0.000000e+00> : vector<64x64xf32>
    %9 = tpu.matmul %4, %6, %cst {dimension_numbers = #tpu.dot_dimension_numbers<[1], [1], [0], [0], [0, 0, 1, 0], [], []>} : vector<64x128xbf16>, vector<64x128xbf16>, vector<64x64xf32> -> vector<64x64xf32>
    %c0_9 = arith.constant 0 : index
    %c0_10 = arith.constant 0 : index
    %10 = vector.load %arg12[%c0_9, %c0_10] : memref<64x1xf32, #tpu.memory_space<vmem>>, vector<64x1xf32>
    %cst_11 = arith.constant dense<0xFF800000> : vector<64xf32>
    %11 = vector.multi_reduction <maximumf>, %9, %cst_11 [1] : vector<64x64xf32> to vector<64xf32>
    %12 = vector.shape_cast %11 : vector<64xf32> to vector<64x1xf32>
    %13 = arith.maximumf %10, %12 : vector<64x1xf32>
    %14 = arith.subf %10, %13 : vector<64x1xf32>
    %15 = math.exp %14 : vector<64x1xf32>
    %16 = vector.broadcast %13 : vector<64x1xf32> to vector<64x64xf32>
    %17 = arith.subf %9, %16 : vector<64x64xf32>
    %18 = math.exp %17 : vector<64x64xf32>
    %c0_12 = arith.constant 0 : index
    %c0_13 = arith.constant 0 : index
    %19 = vector.load %arg13[%c0_12, %c0_13] : memref<64x1xf32, #tpu.memory_space<vmem>>, vector<64x1xf32>
    %20 = arith.mulf %15, %19 : vector<64x1xf32>
    %cst_14 = arith.constant dense<0.000000e+00> : vector<64xf32>
    %21 = vector.multi_reduction <add>, %18, %cst_14 [1] : vector<64x64xf32> to vector<64xf32>
    %22 = vector.shape_cast %21 : vector<64xf32> to vector<64x1xf32>
    %23 = arith.addf %20, %22 : vector<64x1xf32>
    %c0_15 = arith.constant 0 : index
    %c0_16 = arith.constant 0 : index
    %24 = vector.load %arg13[%c0_15, %c0_16] : memref<64x1xf32, #tpu.memory_space<vmem>>, vector<64x1xf32>
    tpu.vector_store %arg13[%c0_15, %c0_16], %23 {strides = array<i32>} : memref<64x1xf32, #tpu.memory_space<vmem>>, vector<64x1xf32>,
    %c0_17 = arith.constant 0 : index
    %c0_18 = arith.constant 0 : index
    %25 = vector.load %arg14[%c0_17, %c0_18] : memref<64x128xf32, #tpu.memory_space<vmem>>, vector<64x128xf32>
    %26 = vector.broadcast %15 : vector<64x1xf32> to vector<64x128xf32>
    %27 = arith.mulf %26, %25 : vector<64x128xf32>
    %28 = arith.truncf %18 : vector<64x64xf32> to vector<64x64xbf16>
    %cst_19 = arith.constant dense<0.000000e+00> : vector<64x128xf32>
    %29 = tpu.matmul %28, %8, %cst_19 {dimension_numbers = #tpu.dot_dimension_numbers<[1], [0], [0], [1], [0, 0, 1, 1], [], []>} : vector<64x64xbf16>, vector<64x128xbf16>, vector<64x128xf32> -> vector<64x128xf32>
    %30 = arith.addf %27, %29 : vector<64x128xf32>
    %c0_20 = arith.constant 0 : index
    %c0_21 = arith.constant 0 : index
    %31 = vector.load %arg14[%c0_20, %c0_21] : memref<64x128xf32, #tpu.memory_space<vmem>>, vector<64x128xf32>
    tpu.vector_store %arg14[%c0_20, %c0_21], %30 {strides = array<i32>} : memref<64x128xf32, #tpu.memory_space<vmem>>, vector<64x128xf32>,
    %c0_22 = arith.constant 0 : index
    %c0_23 = arith.constant 0 : index
    %32 = vector.load %arg12[%c0_22, %c0_23] : memref<64x1xf32, #tpu.memory_space<vmem>>, vector<64x1xf32>
    tpu.vector_store %arg12[%c0_22, %c0_23], %13 {strides = array<i32>} : memref<64x1xf32, #tpu.memory_space<vmem>>, vector<64x1xf32>,
    %c0_i32_24 = arith.constant 0 : i32
    %33 = arith.cmpi eq, %arg2, %c0_i32_24 : i32
    %34 = arith.extui %33 : i1 to i32
    %c0_i32_25 = arith.constant 0 : i32
    %35 = arith.cmpi ne, %34, %c0_i32_25 : i32
    scf.if %35 {
      %c0_26 = arith.constant 0 : index
      %c0_27 = arith.constant 0 : index
      %36 = vector.load %arg14[%c0_26, %c0_27] : memref<64x128xf32, #tpu.memory_space<vmem>>, vector<64x128xf32>
      %c0_28 = arith.constant 0 : index
      %c0_29 = arith.constant 0 : index
      %37 = vector.load %arg13[%c0_28, %c0_29] : memref<64x1xf32, #tpu.memory_space<vmem>>, vector<64x1xf32>
      %38 = tpu.reciprocal %37 {approx = true} : vector<64x1xf32> -> vector<64x1xf32>
      %39 = vector.broadcast %38 : vector<64x1xf32> to vector<64x128xf32>
      %40 = arith.mulf %36, %39 : vector<64x128xf32>
      %41 = arith.truncf %40 : vector<64x128xf32> to vector<64x128xbf16>
      %c0_30 = arith.constant 0 : index
      %c0_31 = arith.constant 0 : index
      %42 = vector.load %arg7[%c0_30, %c0_31] : memref<128x128xbf16, #tpu.memory_space<vmem>>, vector<128x128xbf16>
      %cst_32 = arith.constant dense<0.000000e+00> : vector<64x128xf32>
      %43 = tpu.matmul %41, %42, %cst_32 {dimension_numbers = #tpu.dot_dimension_numbers<[1], [0], [0], [1], [0, 0, 1, 1], [], []>} : vector<64x128xbf16>, vector<128x128xbf16>, vector<64x128xf32> -> vector<64x128xf32>
      %c0_33 = arith.constant 0 : index
      %c0_34 = arith.constant 0 : index
      %44 = vector.load %arg10[%c0_33, %c0_34] : memref<8x128xf32, #tpu.memory_space<vmem>>, vector<1x128xf32>
      %45 = vector.broadcast %44 : vector<1x128xf32> to vector<64x128xf32>
      %46 = arith.addf %43, %45 : vector<64x128xf32>
      %c0_35 = arith.constant 0 : index
      %c0_36 = arith.constant 0 : index
      %c0_37 = arith.constant 0 : index
      %47 = vector.load %arg6[%c0_35, %c0_36, %c0_37] : memref<1x64x128xbf16, #tpu.memory_space<vmem>>, vector<1x64x128xbf16>
      %48 = vector.shape_cast %47 : vector<1x64x128xbf16> to vector<64x128xbf16>
      %49 = arith.extf %48 : vector<64x128xbf16> to vector<64x128xf32>
      %50 = arith.addf %49, %46 : vector<64x128xf32>
      %51 = tpu.iota {dimensions = array<i32: 1>} : vector<1x128xi32>
      %c64_i32 = arith.constant 64 : i32
      %52 = vector.broadcast %c64_i32 : i32 to vector<1x128xi32>
      %53 = arith.cmpi slt, %51, %52 : vector<1x128xi32>
      %54 = arith.extui %53 : vector<1x128xi1> to vector<1x128xi32>
      %55 = arith.sitofp %54 : vector<1x128xi32> to vector<1x128xf32>
      %cst_38 = arith.constant dense<0.000000e+00> : vector<64xf32>
      %56 = vector.multi_reduction <add>, %50, %cst_38 [1] : vector<64x128xf32> to vector<64xf32>
      %57 = vector.shape_cast %56 : vector<64xf32> to vector<64x1xf32>
      %cst_39 = arith.constant 1.562500e-02 : f32
      %58 = vector.broadcast %cst_39 : f32 to vector<64x1xf32>
      %59 = arith.mulf %57, %58 : vector<64x1xf32>
      %60 = vector.broadcast %59 : vector<64x1xf32> to vector<64x128xf32>
      %61 = arith.subf %50, %60 : vector<64x128xf32>
      %62 = vector.broadcast %55 : vector<1x128xf32> to vector<64x128xf32>
      %63 = arith.mulf %61, %62 : vector<64x128xf32>
      %64 = arith.mulf %63, %63 : vector<64x128xf32>
      %cst_40 = arith.constant dense<0.000000e+00> : vector<64xf32>
      %65 = vector.multi_reduction <add>, %64, %cst_40 [1] : vector<64x128xf32> to vector<64xf32>
      %66 = vector.shape_cast %65 : vector<64xf32> to vector<64x1xf32>
      %cst_41 = arith.constant 1.562500e-02 : f32
      %67 = vector.broadcast %cst_41 : f32 to vector<64x1xf32>
      %68 = arith.mulf %66, %67 : vector<64x1xf32>
      %cst_42 = arith.constant 9.99999974E-6 : f32
      %69 = vector.broadcast %cst_42 : f32 to vector<64x1xf32>
      %70 = arith.addf %68, %69 : vector<64x1xf32>
      %71 = math.rsqrt %70 : vector<64x1xf32>
      %72 = vector.broadcast %71 : vector<64x1xf32> to vector<64x128xf32>
      %73 = arith.mulf %63, %72 : vector<64x128xf32>
      %c1 = arith.constant 1 : index
      %c0_43 = arith.constant 0 : index
      %74 = vector.load %arg10[%c1, %c0_43] : memref<8x128xf32, #tpu.memory_space<vmem>>, vector<1x128xf32>
      %75 = vector.broadcast %74 : vector<1x128xf32> to vector<64x128xf32>
      %76 = arith.mulf %73, %75 : vector<64x128xf32>
      %c2 = arith.constant 2 : index
      %c0_44 = arith.constant 0 : index
      %77 = vector.load %arg10[%c2, %c0_44] : memref<8x128xf32, #tpu.memory_space<vmem>>, vector<1x128xf32>
      %78 = vector.broadcast %77 : vector<1x128xf32> to vector<64x128xf32>
      %79 = arith.addf %76, %78 : vector<64x128xf32>
      %80 = arith.truncf %79 : vector<64x128xf32> to vector<64x128xbf16>
      %c0_45 = arith.constant 0 : index
      %c0_46 = arith.constant 0 : index
      %81 = vector.load %arg8[%c0_45, %c0_46] : memref<128x128xbf16, #tpu.memory_space<vmem>>, vector<128x128xbf16>
      %cst_47 = arith.constant dense<0.000000e+00> : vector<64x128xf32>
      %82 = tpu.matmul %80, %81, %cst_47 {dimension_numbers = #tpu.dot_dimension_numbers<[1], [0], [0], [1], [0, 0, 1, 1], [], []>} : vector<64x128xbf16>, vector<128x128xbf16>, vector<64x128xf32> -> vector<64x128xf32>
      %c3 = arith.constant 3 : index
      %c0_48 = arith.constant 0 : index
      %83 = vector.load %arg10[%c3, %c0_48] : memref<8x128xf32, #tpu.memory_space<vmem>>, vector<1x128xf32>
      %84 = vector.broadcast %83 : vector<1x128xf32> to vector<64x128xf32>
      %85 = arith.addf %82, %84 : vector<64x128xf32>
      %cst_49 = arith.constant 5.000000e-01 : f32
      %86 = vector.broadcast %cst_49 : f32 to vector<64x128xf32>
      %87 = arith.mulf %86, %85 : vector<64x128xf32>
      %cst_50 = arith.constant 4.471500e-02 : f32
      %88 = vector.broadcast %cst_50 : f32 to vector<64x128xf32>
      %89 = arith.mulf %88, %85 : vector<64x128xf32>
      %90 = arith.mulf %89, %85 : vector<64x128xf32>
      %91 = arith.mulf %90, %85 : vector<64x128xf32>
      %92 = arith.addf %85, %91 : vector<64x128xf32>
      %cst_51 = arith.constant 0.797884583 : f32
      %93 = vector.broadcast %cst_51 : f32 to vector<64x128xf32>
      %94 = arith.mulf %93, %92 : vector<64x128xf32>
      %95 = math.tanh %94 : vector<64x128xf32>
      %cst_52 = arith.constant 1.000000e+00 : f32
      %96 = vector.broadcast %cst_52 : f32 to vector<64x128xf32>
      %97 = arith.addf %96, %95 : vector<64x128xf32>
      %98 = arith.mulf %87, %97 : vector<64x128xf32>
      %99 = arith.truncf %98 : vector<64x128xf32> to vector<64x128xbf16>
      %c0_53 = arith.constant 0 : index
      %c0_54 = arith.constant 0 : index
      %100 = vector.load %arg9[%c0_53, %c0_54] : memref<128x128xbf16, #tpu.memory_space<vmem>>, vector<128x128xbf16>
      %cst_55 = arith.constant dense<0.000000e+00> : vector<64x128xf32>
      %101 = tpu.matmul %99, %100, %cst_55 {dimension_numbers = #tpu.dot_dimension_numbers<[1], [0], [0], [1], [0, 0, 1, 1], [], []>} : vector<64x128xbf16>, vector<128x128xbf16>, vector<64x128xf32> -> vector<64x128xf32>
      %c4 = arith.constant 4 : index
      %c0_56 = arith.constant 0 : index
      %102 = vector.load %arg10[%c4, %c0_56] : memref<8x128xf32, #tpu.memory_space<vmem>>, vector<1x128xf32>
      %103 = vector.broadcast %102 : vector<1x128xf32> to vector<64x128xf32>
      %104 = arith.addf %101, %103 : vector<64x128xf32>
      %105 = arith.addf %50, %104 : vector<64x128xf32>
      %106 = arith.truncf %105 : vector<64x128xf32> to vector<64x128xbf16>
      %c0_57 = arith.constant 0 : index
      %c0_58 = arith.constant 0 : index
      %c0_59 = arith.constant 0 : index
      %107 = vector.load %arg11[%c0_57, %c0_58, %c0_59] : memref<1x64x128xbf16, #tpu.memory_space<vmem>>, vector<1x64x128xbf16>
      %108 = vector.shape_cast %107 : vector<1x64x128xbf16> to vector<64x128xbf16>
      %109 = vector.shape_cast %106 : vector<64x128xbf16> to vector<1x64x128xbf16>
      tpu.vector_store %arg11[%c0_57, %c0_58, %c0_59], %109 {strides = array<i32>} : memref<1x64x128xbf16, #tpu.memory_space<vmem>>, vector<1x64x128xbf16>,
    } else {
    }
    return
  }
  func.func @transform_0(%arg0: i32, %arg1: i32, %arg2: i32) -> (i32, i32, i32) {
    %c0_i32 = arith.constant 0 : i32
    %c0_i32_0 = arith.constant 0 : i32
    return %arg0, %arg1, %c0_i32 : i32, i32, i32
  }
  func.func @transform_1(%arg0: i32, %arg1: i32, %arg2: i32) -> (i32, i32, i32) {
    %c1_i32 = arith.constant 1 : i32
    %c0_i32 = arith.constant 0 : i32
    return %arg0, %arg2, %c1_i32 : i32, i32, i32
  }
  func.func @transform_2(%arg0: i32, %arg1: i32, %arg2: i32) -> (i32, i32, i32) {
    %c2_i32 = arith.constant 2 : i32
    %c0_i32 = arith.constant 0 : i32
    return %arg0, %arg2, %c2_i32 : i32, i32, i32
  }
  func.func @transform_3(%arg0: i32, %arg1: i32, %arg2: i32) -> (i32, i32, i32) {
    %c2_i32 = arith.constant 2 : i32
    %c0_i32 = arith.constant 0 : i32
    return %arg0, %arg1, %c2_i32 : i32, i32, i32
  }
  func.func @transform_4(%arg0: i32, %arg1: i32, %arg2: i32) -> (i32, i32) {
    %c0_i32 = arith.constant 0 : i32
    %c0_i32_0 = arith.constant 0 : i32
    %c0_i32_1 = arith.constant 0 : i32
    return %c0_i32, %c0_i32_0 : i32, i32
  }
  func.func @transform_5(%arg0: i32, %arg1: i32, %arg2: i32) -> (i32, i32) {
    %c0_i32 = arith.constant 0 : i32
    %c0_i32_0 = arith.constant 0 : i32
    %c0_i32_1 = arith.constant 0 : i32
    return %c0_i32, %c0_i32_0 : i32, i32
  }
  func.func @transform_6(%arg0: i32, %arg1: i32, %arg2: i32) -> (i32, i32) {
    %c0_i32 = arith.constant 0 : i32
    %c0_i32_0 = arith.constant 0 : i32
    %c0_i32_1 = arith.constant 0 : i32
    return %c0_i32, %c0_i32_0 : i32, i32
  }
  func.func @transform_7(%arg0: i32, %arg1: i32, %arg2: i32) -> (i32, i32) {
    %c0_i32 = arith.constant 0 : i32
    %c0_i32_0 = arith.constant 0 : i32
    %c0_i32_1 = arith.constant 0 : i32
    return %c0_i32, %c0_i32_0 : i32, i32
  }
  func.func @transform_8(%arg0: i32, %arg1: i32, %arg2: i32) -> (i32, i32, i32) {
    %c0_i32 = arith.constant 0 : i32
    %c0_i32_0 = arith.constant 0 : i32
    return %arg0, %arg1, %c0_i32 : i32, i32, i32
  }
}

module attributes {stable_mosaic.version = 11 : i64} {
  func.func @_ln_qkv_kernel(%arg0: i32, %arg1: memref<32x640xbf16, #tpu.memory_space<vmem>>, %arg2: memref<640x384xbf16, #tpu.memory_space<vmem>>, %arg3: memref<2x640xf32, #tpu.memory_space<vmem>>, %arg4: memref<32x384xbf16, #tpu.memory_space<vmem>>) attributes {dimension_semantics = [#tpu.dimension_semantics<parallel>], iteration_bounds = array<i64: 1>, scalar_prefetch = 0 : i64, scratch_operands = 0 : i64, tpu.core_type = #tpu.core_type<tc>, window_params = [{transform_indices = @transform_0, window_bounds = array<i64: 32, 640>}, {pipeline_mode = #tpu.pipeline_mode<synchronous>, transform_indices = @transform_1, window_bounds = array<i64: 640, 384>}, {pipeline_mode = #tpu.pipeline_mode<synchronous>, transform_indices = @transform_2, window_bounds = array<i64: 2, 640>}, {transform_indices = @transform_3, window_bounds = array<i64: 32, 384>}]} {
    %c0 = arith.constant 0 : index
    %c0_0 = arith.constant 0 : index
    %0 = vector.load %arg1[%c0, %c0_0] : memref<32x640xbf16, #tpu.memory_space<vmem>>, vector<32x640xbf16>
    %1 = arith.extf %0 : vector<32x640xbf16> to vector<32x640xf32>
    %2 = tpu.iota {dimensions = array<i32: 1>} : vector<1x640xi32>
    %c576_i32 = arith.constant 576 : i32
    %3 = vector.broadcast %c576_i32 : i32 to vector<1x640xi32>
    %4 = arith.cmpi slt, %2, %3 : vector<1x640xi32>
    %5 = arith.extui %4 : vector<1x640xi1> to vector<1x640xi32>
    %6 = arith.sitofp %5 : vector<1x640xi32> to vector<1x640xf32>
    %cst = arith.constant dense<0.000000e+00> : vector<32xf32>
    %7 = vector.multi_reduction <add>, %1, %cst [1] : vector<32x640xf32> to vector<32xf32>
    %8 = vector.shape_cast %7 : vector<32xf32> to vector<32x1xf32>
    %cst_1 = arith.constant 0.00173611112 : f32
    %9 = vector.broadcast %cst_1 : f32 to vector<32x1xf32>
    %10 = arith.mulf %8, %9 : vector<32x1xf32>
    %11 = vector.broadcast %10 : vector<32x1xf32> to vector<32x640xf32>
    %12 = arith.subf %1, %11 : vector<32x640xf32>
    %13 = vector.broadcast %6 : vector<1x640xf32> to vector<32x640xf32>
    %14 = arith.mulf %12, %13 : vector<32x640xf32>
    %15 = arith.mulf %14, %14 : vector<32x640xf32>
    %cst_2 = arith.constant dense<0.000000e+00> : vector<32xf32>
    %16 = vector.multi_reduction <add>, %15, %cst_2 [1] : vector<32x640xf32> to vector<32xf32>
    %17 = vector.shape_cast %16 : vector<32xf32> to vector<32x1xf32>
    %cst_3 = arith.constant 0.00173611112 : f32
    %18 = vector.broadcast %cst_3 : f32 to vector<32x1xf32>
    %19 = arith.mulf %17, %18 : vector<32x1xf32>
    %cst_4 = arith.constant 9.99999974E-6 : f32
    %20 = vector.broadcast %cst_4 : f32 to vector<32x1xf32>
    %21 = arith.addf %19, %20 : vector<32x1xf32>
    %22 = math.rsqrt %21 : vector<32x1xf32>
    %23 = vector.broadcast %22 : vector<32x1xf32> to vector<32x640xf32>
    %24 = arith.mulf %14, %23 : vector<32x640xf32>
    %c0_5 = arith.constant 0 : index
    %c0_6 = arith.constant 0 : index
    %25 = vector.load %arg3[%c0_5, %c0_6] : memref<2x640xf32, #tpu.memory_space<vmem>>, vector<1x640xf32>
    %26 = vector.broadcast %25 : vector<1x640xf32> to vector<32x640xf32>
    %27 = arith.mulf %24, %26 : vector<32x640xf32>
    %c1 = arith.constant 1 : index
    %c0_7 = arith.constant 0 : index
    %28 = vector.load %arg3[%c1, %c0_7] : memref<2x640xf32, #tpu.memory_space<vmem>>, vector<1x640xf32>
    %29 = vector.broadcast %28 : vector<1x640xf32> to vector<32x640xf32>
    %30 = arith.addf %27, %29 : vector<32x640xf32>
    %31 = arith.truncf %30 : vector<32x640xf32> to vector<32x640xbf16>
    %c0_8 = arith.constant 0 : index
    %c0_9 = arith.constant 0 : index
    %32 = vector.load %arg2[%c0_8, %c0_9] : memref<640x384xbf16, #tpu.memory_space<vmem>>, vector<640x384xbf16>
    %cst_10 = arith.constant dense<0.000000e+00> : vector<32x384xf32>
    %33 = tpu.matmul %31, %32, %cst_10 {dimension_numbers = #tpu.dot_dimension_numbers<[1], [0], [0], [1], [0, 0, 1, 1], [], []>} : vector<32x640xbf16>, vector<640x384xbf16>, vector<32x384xf32> -> vector<32x384xf32>
    %34 = arith.truncf %33 : vector<32x384xf32> to vector<32x384xbf16>
    %c0_11 = arith.constant 0 : index
    %c0_12 = arith.constant 0 : index
    %35 = vector.load %arg4[%c0_11, %c0_12] : memref<32x384xbf16, #tpu.memory_space<vmem>>, vector<32x384xbf16>
    tpu.vector_store %arg4[%c0_11, %c0_12], %34 {strides = array<i32>} : memref<32x384xbf16, #tpu.memory_space<vmem>>, vector<32x384xbf16>,
    return
  }
  func.func @transform_0(%arg0: i32) -> (i32, i32) {
    %c0_i32 = arith.constant 0 : i32
    %c0_i32_0 = arith.constant 0 : i32
    return %arg0, %c0_i32 : i32, i32
  }
  func.func @transform_1(%arg0: i32) -> (i32, i32) {
    %c0_i32 = arith.constant 0 : i32
    %c0_i32_0 = arith.constant 0 : i32
    %c0_i32_1 = arith.constant 0 : i32
    return %c0_i32, %c0_i32_0 : i32, i32
  }
  func.func @transform_2(%arg0: i32) -> (i32, i32) {
    %c0_i32 = arith.constant 0 : i32
    %c0_i32_0 = arith.constant 0 : i32
    %c0_i32_1 = arith.constant 0 : i32
    return %c0_i32, %c0_i32_0 : i32, i32
  }
  func.func @transform_3(%arg0: i32) -> (i32, i32) {
    %c0_i32 = arith.constant 0 : i32
    %c0_i32_0 = arith.constant 0 : i32
    return %arg0, %c0_i32 : i32, i32
  }
}

module attributes {stable_mosaic.version = 11 : i64} {
  func.func @_flash_block_kernel(%arg0: i32, %arg1: i32, %arg2: i32, %arg3: memref<1x16x128xbf16, #tpu.memory_space<vmem>>, %arg4: memref<1x16x128xbf16, #tpu.memory_space<vmem>>, %arg5: memref<1x16x128xbf16, #tpu.memory_space<vmem>>, %arg6: memref<1x16x128xbf16, #tpu.memory_space<vmem>>, %arg7: memref<128x128xbf16, #tpu.memory_space<vmem>>, %arg8: memref<128x128xbf16, #tpu.memory_space<vmem>>, %arg9: memref<128x128xbf16, #tpu.memory_space<vmem>>, %arg10: memref<8x128xf32, #tpu.memory_space<vmem>>, %arg11: memref<1x16x128xbf16, #tpu.memory_space<vmem>>, %arg12: memref<16x1xf32, #tpu.memory_space<vmem>>, %arg13: memref<16x1xf32, #tpu.memory_space<vmem>>, %arg14: memref<16x128xf32, #tpu.memory_space<vmem>>) attributes {dimension_semantics = [#tpu.dimension_semantics<parallel>, #tpu.dimension_semantics<parallel>, #tpu.dimension_semantics<arbitrary>], iteration_bounds = array<i64: 2, 1, 1>, scalar_prefetch = 0 : i64, scratch_operands = 3 : i64, tpu.core_type = #tpu.core_type<tc>, window_params = [{transform_indices = @transform_0, window_bounds = array<i64: 1, 16, 128>}, {transform_indices = @transform_1, window_bounds = array<i64: 1, 16, 128>}, {transform_indices = @transform_2, window_bounds = array<i64: 1, 16, 128>}, {transform_indices = @transform_3, window_bounds = array<i64: 1, 16, 128>}, {pipeline_mode = #tpu.pipeline_mode<synchronous>, transform_indices = @transform_4, window_bounds = array<i64: 128, 128>}, {pipeline_mode = #tpu.pipeline_mode<synchronous>, transform_indices = @transform_5, window_bounds = array<i64: 128, 128>}, {pipeline_mode = #tpu.pipeline_mode<synchronous>, transform_indices = @transform_6, window_bounds = array<i64: 128, 128>}, {pipeline_mode = #tpu.pipeline_mode<synchronous>, transform_indices = @transform_7, window_bounds = array<i64: 8, 128>}, {transform_indices = @transform_8, window_bounds = array<i64: 1, 16, 128>}]} {
    %c0_i32 = arith.constant 0 : i32
    %0 = arith.cmpi eq, %arg2, %c0_i32 : i32
    %1 = arith.extui %0 : i1 to i32
    %c0_i32_0 = arith.constant 0 : i32
    %2 = arith.cmpi ne, %1, %c0_i32_0 : i32
    scf.if %2 {
      %cst_26 = arith.constant 0xFF800000 : f32
      %36 = vector.broadcast %cst_26 : f32 to vector<16x1xf32>
      %c0_27 = arith.constant 0 : index
      %c0_28 = arith.constant 0 : index
      %37 = vector.load %arg12[%c0_27, %c0_28] : memref<16x1xf32, #tpu.memory_space<vmem>>, vector<16x1xf32>
      tpu.vector_store %arg12[%c0_27, %c0_28], %36 {strides = array<i32>} : memref<16x1xf32, #tpu.memory_space<vmem>>, vector<16x1xf32>,
      %cst_29 = arith.constant 0.000000e+00 : f32
      %38 = vector.broadcast %cst_29 : f32 to vector<16x1xf32>
      %c0_30 = arith.constant 0 : index
      %c0_31 = arith.constant 0 : index
      %39 = vector.load %arg13[%c0_30, %c0_31] : memref<16x1xf32, #tpu.memory_space<vmem>>, vector<16x1xf32>
      tpu.vector_store %arg13[%c0_30, %c0_31], %38 {strides = array<i32>} : memref<16x1xf32, #tpu.memory_space<vmem>>, vector<16x1xf32>,
      %cst_32 = arith.constant 0.000000e+00 : f32
      %40 = vector.broadcast %cst_32 : f32 to vector<16x128xf32>
      %c0_33 = arith.constant 0 : index
      %c0_34 = arith.constant 0 : index
      %41 = vector.load %arg14[%c0_33, %c0_34] : memref<16x128xf32, #tpu.memory_space<vmem>>, vector<16x128xf32>
      tpu.vector_store %arg14[%c0_33, %c0_34], %40 {strides = array<i32>} : memref<16x128xf32, #tpu.memory_space<vmem>>, vector<16x128xf32>,
    } else {
    }
    %c0 = arith.constant 0 : index
    %c0_1 = arith.constant 0 : index
    %c0_2 = arith.constant 0 : index
    %3 = vector.load %arg3[%c0, %c0_1, %c0_2] : memref<1x16x128xbf16, #tpu.memory_space<vmem>>, vector<1x16x128xbf16>
    %4 = vector.shape_cast %3 : vector<1x16x128xbf16> to vector<16x128xbf16>
    %c0_3 = arith.constant 0 : index
    %c0_4 = arith.constant 0 : index
    %c0_5 = arith.constant 0 : index
    %5 = vector.load %arg4[%c0_3, %c0_4, %c0_5] : memref<1x16x128xbf16, #tpu.memory_space<vmem>>, vector<1x16x128xbf16>
    %6 = vector.shape_cast %5 : vector<1x16x128xbf16> to vector<16x128xbf16>
    %c0_6 = arith.constant 0 : index
    %c0_7 = arith.constant 0 : index
    %c0_8 = arith.constant 0 : index
    %7 = vector.load %arg5[%c0_6, %c0_7, %c0_8] : memref<1x16x128xbf16, #tpu.memory_space<vmem>>, vector<1x16x128xbf16>
    %8 = vector.shape_cast %7 : vector<1x16x128xbf16> to vector<16x128xbf16>
    %cst = arith.constant dense<0.000000e+00> : vector<16x16xf32>
    %9 = tpu.matmul %4, %6, %cst {dimension_numbers = #tpu.dot_dimension_numbers<[1], [1], [0], [0], [0, 0, 1, 0], [], []>} : vector<16x128xbf16>, vector<16x128xbf16>, vector<16x16xf32> -> vector<16x16xf32>
    %c0_9 = arith.constant 0 : index
    %c0_10 = arith.constant 0 : index
    %10 = vector.load %arg12[%c0_9, %c0_10] : memref<16x1xf32, #tpu.memory_space<vmem>>, vector<16x1xf32>
    %cst_11 = arith.constant dense<0xFF800000> : vector<16xf32>
    %11 = vector.multi_reduction <maximumf>, %9, %cst_11 [1] : vector<16x16xf32> to vector<16xf32>
    %12 = vector.shape_cast %11 : vector<16xf32> to vector<16x1xf32>
    %13 = arith.maximumf %10, %12 : vector<16x1xf32>
    %14 = arith.subf %10, %13 : vector<16x1xf32>
    %15 = math.exp %14 : vector<16x1xf32>
    %16 = vector.broadcast %13 : vector<16x1xf32> to vector<16x16xf32>
    %17 = arith.subf %9, %16 : vector<16x16xf32>
    %18 = math.exp %17 : vector<16x16xf32>
    %c0_12 = arith.constant 0 : index
    %c0_13 = arith.constant 0 : index
    %19 = vector.load %arg13[%c0_12, %c0_13] : memref<16x1xf32, #tpu.memory_space<vmem>>, vector<16x1xf32>
    %20 = arith.mulf %15, %19 : vector<16x1xf32>
    %cst_14 = arith.constant dense<0.000000e+00> : vector<16xf32>
    %21 = vector.multi_reduction <add>, %18, %cst_14 [1] : vector<16x16xf32> to vector<16xf32>
    %22 = vector.shape_cast %21 : vector<16xf32> to vector<16x1xf32>
    %23 = arith.addf %20, %22 : vector<16x1xf32>
    %c0_15 = arith.constant 0 : index
    %c0_16 = arith.constant 0 : index
    %24 = vector.load %arg13[%c0_15, %c0_16] : memref<16x1xf32, #tpu.memory_space<vmem>>, vector<16x1xf32>
    tpu.vector_store %arg13[%c0_15, %c0_16], %23 {strides = array<i32>} : memref<16x1xf32, #tpu.memory_space<vmem>>, vector<16x1xf32>,
    %c0_17 = arith.constant 0 : index
    %c0_18 = arith.constant 0 : index
    %25 = vector.load %arg14[%c0_17, %c0_18] : memref<16x128xf32, #tpu.memory_space<vmem>>, vector<16x128xf32>
    %26 = vector.broadcast %15 : vector<16x1xf32> to vector<16x128xf32>
    %27 = arith.mulf %26, %25 : vector<16x128xf32>
    %28 = arith.truncf %18 : vector<16x16xf32> to vector<16x16xbf16>
    %cst_19 = arith.constant dense<0.000000e+00> : vector<16x128xf32>
    %29 = tpu.matmul %28, %8, %cst_19 {dimension_numbers = #tpu.dot_dimension_numbers<[1], [0], [0], [1], [0, 0, 1, 1], [], []>} : vector<16x16xbf16>, vector<16x128xbf16>, vector<16x128xf32> -> vector<16x128xf32>
    %30 = arith.addf %27, %29 : vector<16x128xf32>
    %c0_20 = arith.constant 0 : index
    %c0_21 = arith.constant 0 : index
    %31 = vector.load %arg14[%c0_20, %c0_21] : memref<16x128xf32, #tpu.memory_space<vmem>>, vector<16x128xf32>
    tpu.vector_store %arg14[%c0_20, %c0_21], %30 {strides = array<i32>} : memref<16x128xf32, #tpu.memory_space<vmem>>, vector<16x128xf32>,
    %c0_22 = arith.constant 0 : index
    %c0_23 = arith.constant 0 : index
    %32 = vector.load %arg12[%c0_22, %c0_23] : memref<16x1xf32, #tpu.memory_space<vmem>>, vector<16x1xf32>
    tpu.vector_store %arg12[%c0_22, %c0_23], %13 {strides = array<i32>} : memref<16x1xf32, #tpu.memory_space<vmem>>, vector<16x1xf32>,
    %c0_i32_24 = arith.constant 0 : i32
    %33 = arith.cmpi eq, %arg2, %c0_i32_24 : i32
    %34 = arith.extui %33 : i1 to i32
    %c0_i32_25 = arith.constant 0 : i32
    %35 = arith.cmpi ne, %34, %c0_i32_25 : i32
    scf.if %35 {
      %c0_26 = arith.constant 0 : index
      %c0_27 = arith.constant 0 : index
      %36 = vector.load %arg14[%c0_26, %c0_27] : memref<16x128xf32, #tpu.memory_space<vmem>>, vector<16x128xf32>
      %c0_28 = arith.constant 0 : index
      %c0_29 = arith.constant 0 : index
      %37 = vector.load %arg13[%c0_28, %c0_29] : memref<16x1xf32, #tpu.memory_space<vmem>>, vector<16x1xf32>
      %38 = tpu.reciprocal %37 {approx = true} : vector<16x1xf32> -> vector<16x1xf32>
      %39 = vector.broadcast %38 : vector<16x1xf32> to vector<16x128xf32>
      %40 = arith.mulf %36, %39 : vector<16x128xf32>
      %41 = arith.truncf %40 : vector<16x128xf32> to vector<16x128xbf16>
      %c0_30 = arith.constant 0 : index
      %c0_31 = arith.constant 0 : index
      %42 = vector.load %arg7[%c0_30, %c0_31] : memref<128x128xbf16, #tpu.memory_space<vmem>>, vector<128x128xbf16>
      %cst_32 = arith.constant dense<0.000000e+00> : vector<16x128xf32>
      %43 = tpu.matmul %41, %42, %cst_32 {dimension_numbers = #tpu.dot_dimension_numbers<[1], [0], [0], [1], [0, 0, 1, 1], [], []>} : vector<16x128xbf16>, vector<128x128xbf16>, vector<16x128xf32> -> vector<16x128xf32>
      %c0_33 = arith.constant 0 : index
      %c0_34 = arith.constant 0 : index
      %44 = vector.load %arg10[%c0_33, %c0_34] : memref<8x128xf32, #tpu.memory_space<vmem>>, vector<1x128xf32>
      %45 = vector.broadcast %44 : vector<1x128xf32> to vector<16x128xf32>
      %46 = arith.addf %43, %45 : vector<16x128xf32>
      %c0_35 = arith.constant 0 : index
      %c0_36 = arith.constant 0 : index
      %c0_37 = arith.constant 0 : index
      %47 = vector.load %arg6[%c0_35, %c0_36, %c0_37] : memref<1x16x128xbf16, #tpu.memory_space<vmem>>, vector<1x16x128xbf16>
      %48 = vector.shape_cast %47 : vector<1x16x128xbf16> to vector<16x128xbf16>
      %49 = arith.extf %48 : vector<16x128xbf16> to vector<16x128xf32>
      %50 = arith.addf %49, %46 : vector<16x128xf32>
      %51 = tpu.iota {dimensions = array<i32: 1>} : vector<1x128xi32>
      %c64_i32 = arith.constant 64 : i32
      %52 = vector.broadcast %c64_i32 : i32 to vector<1x128xi32>
      %53 = arith.cmpi slt, %51, %52 : vector<1x128xi32>
      %54 = arith.extui %53 : vector<1x128xi1> to vector<1x128xi32>
      %55 = arith.sitofp %54 : vector<1x128xi32> to vector<1x128xf32>
      %cst_38 = arith.constant dense<0.000000e+00> : vector<16xf32>
      %56 = vector.multi_reduction <add>, %50, %cst_38 [1] : vector<16x128xf32> to vector<16xf32>
      %57 = vector.shape_cast %56 : vector<16xf32> to vector<16x1xf32>
      %cst_39 = arith.constant 1.562500e-02 : f32
      %58 = vector.broadcast %cst_39 : f32 to vector<16x1xf32>
      %59 = arith.mulf %57, %58 : vector<16x1xf32>
      %60 = vector.broadcast %59 : vector<16x1xf32> to vector<16x128xf32>
      %61 = arith.subf %50, %60 : vector<16x128xf32>
      %62 = vector.broadcast %55 : vector<1x128xf32> to vector<16x128xf32>
      %63 = arith.mulf %61, %62 : vector<16x128xf32>
      %64 = arith.mulf %63, %63 : vector<16x128xf32>
      %cst_40 = arith.constant dense<0.000000e+00> : vector<16xf32>
      %65 = vector.multi_reduction <add>, %64, %cst_40 [1] : vector<16x128xf32> to vector<16xf32>
      %66 = vector.shape_cast %65 : vector<16xf32> to vector<16x1xf32>
      %cst_41 = arith.constant 1.562500e-02 : f32
      %67 = vector.broadcast %cst_41 : f32 to vector<16x1xf32>
      %68 = arith.mulf %66, %67 : vector<16x1xf32>
      %cst_42 = arith.constant 9.99999974E-6 : f32
      %69 = vector.broadcast %cst_42 : f32 to vector<16x1xf32>
      %70 = arith.addf %68, %69 : vector<16x1xf32>
      %71 = math.rsqrt %70 : vector<16x1xf32>
      %72 = vector.broadcast %71 : vector<16x1xf32> to vector<16x128xf32>
      %73 = arith.mulf %63, %72 : vector<16x128xf32>
      %c1 = arith.constant 1 : index
      %c0_43 = arith.constant 0 : index
      %74 = vector.load %arg10[%c1, %c0_43] : memref<8x128xf32, #tpu.memory_space<vmem>>, vector<1x128xf32>
      %75 = vector.broadcast %74 : vector<1x128xf32> to vector<16x128xf32>
      %76 = arith.mulf %73, %75 : vector<16x128xf32>
      %c2 = arith.constant 2 : index
      %c0_44 = arith.constant 0 : index
      %77 = vector.load %arg10[%c2, %c0_44] : memref<8x128xf32, #tpu.memory_space<vmem>>, vector<1x128xf32>
      %78 = vector.broadcast %77 : vector<1x128xf32> to vector<16x128xf32>
      %79 = arith.addf %76, %78 : vector<16x128xf32>
      %80 = arith.truncf %79 : vector<16x128xf32> to vector<16x128xbf16>
      %c0_45 = arith.constant 0 : index
      %c0_46 = arith.constant 0 : index
      %81 = vector.load %arg8[%c0_45, %c0_46] : memref<128x128xbf16, #tpu.memory_space<vmem>>, vector<128x128xbf16>
      %cst_47 = arith.constant dense<0.000000e+00> : vector<16x128xf32>
      %82 = tpu.matmul %80, %81, %cst_47 {dimension_numbers = #tpu.dot_dimension_numbers<[1], [0], [0], [1], [0, 0, 1, 1], [], []>} : vector<16x128xbf16>, vector<128x128xbf16>, vector<16x128xf32> -> vector<16x128xf32>
      %c3 = arith.constant 3 : index
      %c0_48 = arith.constant 0 : index
      %83 = vector.load %arg10[%c3, %c0_48] : memref<8x128xf32, #tpu.memory_space<vmem>>, vector<1x128xf32>
      %84 = vector.broadcast %83 : vector<1x128xf32> to vector<16x128xf32>
      %85 = arith.addf %82, %84 : vector<16x128xf32>
      %cst_49 = arith.constant 5.000000e-01 : f32
      %86 = vector.broadcast %cst_49 : f32 to vector<16x128xf32>
      %87 = arith.mulf %86, %85 : vector<16x128xf32>
      %cst_50 = arith.constant 4.471500e-02 : f32
      %88 = vector.broadcast %cst_50 : f32 to vector<16x128xf32>
      %89 = arith.mulf %88, %85 : vector<16x128xf32>
      %90 = arith.mulf %89, %85 : vector<16x128xf32>
      %91 = arith.mulf %90, %85 : vector<16x128xf32>
      %92 = arith.addf %85, %91 : vector<16x128xf32>
      %cst_51 = arith.constant 0.797884583 : f32
      %93 = vector.broadcast %cst_51 : f32 to vector<16x128xf32>
      %94 = arith.mulf %93, %92 : vector<16x128xf32>
      %95 = math.tanh %94 : vector<16x128xf32>
      %cst_52 = arith.constant 1.000000e+00 : f32
      %96 = vector.broadcast %cst_52 : f32 to vector<16x128xf32>
      %97 = arith.addf %96, %95 : vector<16x128xf32>
      %98 = arith.mulf %87, %97 : vector<16x128xf32>
      %99 = arith.truncf %98 : vector<16x128xf32> to vector<16x128xbf16>
      %c0_53 = arith.constant 0 : index
      %c0_54 = arith.constant 0 : index
      %100 = vector.load %arg9[%c0_53, %c0_54] : memref<128x128xbf16, #tpu.memory_space<vmem>>, vector<128x128xbf16>
      %cst_55 = arith.constant dense<0.000000e+00> : vector<16x128xf32>
      %101 = tpu.matmul %99, %100, %cst_55 {dimension_numbers = #tpu.dot_dimension_numbers<[1], [0], [0], [1], [0, 0, 1, 1], [], []>} : vector<16x128xbf16>, vector<128x128xbf16>, vector<16x128xf32> -> vector<16x128xf32>
      %c4 = arith.constant 4 : index
      %c0_56 = arith.constant 0 : index
      %102 = vector.load %arg10[%c4, %c0_56] : memref<8x128xf32, #tpu.memory_space<vmem>>, vector<1x128xf32>
      %103 = vector.broadcast %102 : vector<1x128xf32> to vector<16x128xf32>
      %104 = arith.addf %101, %103 : vector<16x128xf32>
      %105 = arith.addf %50, %104 : vector<16x128xf32>
      %106 = arith.truncf %105 : vector<16x128xf32> to vector<16x128xbf16>
      %c0_57 = arith.constant 0 : index
      %c0_58 = arith.constant 0 : index
      %c0_59 = arith.constant 0 : index
      %107 = vector.load %arg11[%c0_57, %c0_58, %c0_59] : memref<1x16x128xbf16, #tpu.memory_space<vmem>>, vector<1x16x128xbf16>
      %108 = vector.shape_cast %107 : vector<1x16x128xbf16> to vector<16x128xbf16>
      %109 = vector.shape_cast %106 : vector<16x128xbf16> to vector<1x16x128xbf16>
      tpu.vector_store %arg11[%c0_57, %c0_58, %c0_59], %109 {strides = array<i32>} : memref<1x16x128xbf16, #tpu.memory_space<vmem>>, vector<1x16x128xbf16>,
    } else {
    }
    return
  }
  func.func @transform_0(%arg0: i32, %arg1: i32, %arg2: i32) -> (i32, i32, i32) {
    %c0_i32 = arith.constant 0 : i32
    %c0_i32_0 = arith.constant 0 : i32
    return %arg0, %arg1, %c0_i32 : i32, i32, i32
  }
  func.func @transform_1(%arg0: i32, %arg1: i32, %arg2: i32) -> (i32, i32, i32) {
    %c1_i32 = arith.constant 1 : i32
    %c0_i32 = arith.constant 0 : i32
    return %arg0, %arg2, %c1_i32 : i32, i32, i32
  }
  func.func @transform_2(%arg0: i32, %arg1: i32, %arg2: i32) -> (i32, i32, i32) {
    %c2_i32 = arith.constant 2 : i32
    %c0_i32 = arith.constant 0 : i32
    return %arg0, %arg2, %c2_i32 : i32, i32, i32
  }
  func.func @transform_3(%arg0: i32, %arg1: i32, %arg2: i32) -> (i32, i32, i32) {
    %c2_i32 = arith.constant 2 : i32
    %c0_i32 = arith.constant 0 : i32
    return %arg0, %arg1, %c2_i32 : i32, i32, i32
  }
  func.func @transform_4(%arg0: i32, %arg1: i32, %arg2: i32) -> (i32, i32) {
    %c0_i32 = arith.constant 0 : i32
    %c0_i32_0 = arith.constant 0 : i32
    %c0_i32_1 = arith.constant 0 : i32
    return %c0_i32, %c0_i32_0 : i32, i32
  }
  func.func @transform_5(%arg0: i32, %arg1: i32, %arg2: i32) -> (i32, i32) {
    %c0_i32 = arith.constant 0 : i32
    %c0_i32_0 = arith.constant 0 : i32
    %c0_i32_1 = arith.constant 0 : i32
    return %c0_i32, %c0_i32_0 : i32, i32
  }
  func.func @transform_6(%arg0: i32, %arg1: i32, %arg2: i32) -> (i32, i32) {
    %c0_i32 = arith.constant 0 : i32
    %c0_i32_0 = arith.constant 0 : i32
    %c0_i32_1 = arith.constant 0 : i32
    return %c0_i32, %c0_i32_0 : i32, i32
  }
  func.func @transform_7(%arg0: i32, %arg1: i32, %arg2: i32) -> (i32, i32) {
    %c0_i32 = arith.constant 0 : i32
    %c0_i32_0 = arith.constant 0 : i32
    %c0_i32_1 = arith.constant 0 : i32
    return %c0_i32, %c0_i32_0 : i32, i32
  }
  func.func @transform_8(%arg0: i32, %arg1: i32, %arg2: i32) -> (i32, i32, i32) {
    %c0_i32 = arith.constant 0 : i32
    %c0_i32_0 = arith.constant 0 : i32
    return %arg0, %arg1, %c0_i32 : i32, i32, i32
  }
}

module attributes {stable_mosaic.version = 11 : i64} {
  func.func @_project_kernel(%arg0: i32, %arg1: memref<8x640xbf16, #tpu.memory_space<vmem>>, %arg2: memref<640x128xbf16, #tpu.memory_space<vmem>>, %arg3: memref<1x128xf32, #tpu.memory_space<vmem>>, %arg4: memref<8x128xf32, #tpu.memory_space<vmem>>) attributes {dimension_semantics = [#tpu.dimension_semantics<parallel>], iteration_bounds = array<i64: 1>, scalar_prefetch = 0 : i64, scratch_operands = 0 : i64, tpu.core_type = #tpu.core_type<tc>, window_params = [{transform_indices = @transform_0, window_bounds = array<i64: 8, 640>}, {pipeline_mode = #tpu.pipeline_mode<synchronous>, transform_indices = @transform_1, window_bounds = array<i64: 640, 128>}, {pipeline_mode = #tpu.pipeline_mode<synchronous>, transform_indices = @transform_2, window_bounds = array<i64: 1, 128>}, {transform_indices = @transform_3, window_bounds = array<i64: 8, 128>}]} {
    %c0 = arith.constant 0 : index
    %c0_0 = arith.constant 0 : index
    %0 = vector.load %arg1[%c0, %c0_0] : memref<8x640xbf16, #tpu.memory_space<vmem>>, vector<8x640xbf16>
    %c0_1 = arith.constant 0 : index
    %c0_2 = arith.constant 0 : index
    %1 = vector.load %arg2[%c0_1, %c0_2] : memref<640x128xbf16, #tpu.memory_space<vmem>>, vector<640x128xbf16>
    %cst = arith.constant dense<0.000000e+00> : vector<8x128xf32>
    %2 = tpu.matmul %0, %1, %cst {dimension_numbers = #tpu.dot_dimension_numbers<[1], [0], [0], [1], [0, 0, 1, 1], [], []>} : vector<8x640xbf16>, vector<640x128xbf16>, vector<8x128xf32> -> vector<8x128xf32>
    %c0_3 = arith.constant 0 : index
    %c0_4 = arith.constant 0 : index
    %3 = vector.load %arg3[%c0_3, %c0_4] : memref<1x128xf32, #tpu.memory_space<vmem>>, vector<1x128xf32>
    %4 = vector.broadcast %3 : vector<1x128xf32> to vector<8x128xf32>
    %5 = arith.addf %2, %4 : vector<8x128xf32>
    %c0_5 = arith.constant 0 : index
    %c0_6 = arith.constant 0 : index
    %6 = vector.load %arg4[%c0_5, %c0_6] : memref<8x128xf32, #tpu.memory_space<vmem>>, vector<8x128xf32>
    tpu.vector_store %arg4[%c0_5, %c0_6], %5 {strides = array<i32>} : memref<8x128xf32, #tpu.memory_space<vmem>>, vector<8x128xf32>,
    return
  }
  func.func @transform_0(%arg0: i32) -> (i32, i32) {
    %c0_i32 = arith.constant 0 : i32
    %c0_i32_0 = arith.constant 0 : i32
    return %arg0, %c0_i32 : i32, i32
  }
  func.func @transform_1(%arg0: i32) -> (i32, i32) {
    %c0_i32 = arith.constant 0 : i32
    %c0_i32_0 = arith.constant 0 : i32
    %c0_i32_1 = arith.constant 0 : i32
    return %c0_i32, %c0_i32_0 : i32, i32
  }
  func.func @transform_2(%arg0: i32) -> (i32, i32) {
    %c0_i32 = arith.constant 0 : i32
    %c0_i32_0 = arith.constant 0 : i32
    %c0_i32_1 = arith.constant 0 : i32
    return %c0_i32, %c0_i32_0 : i32, i32
  }
  func.func @transform_3(%arg0: i32) -> (i32, i32) {
    %c0_i32 = arith.constant 0 : i32
    %c0_i32_0 = arith.constant 0 : i32
    return %arg0, %c0_i32 : i32, i32
  }
}

</mosaic_0001>

<llo_original>
// kernel: _lambda_.6
$region0: #{_lambda_.6}
  #allocation0 [shape = 'u32[]', space=smem, size = 0x4, offset = 0x4, fixed_abs, tag = 'smem constant byte address 0x4 - core index']
  #allocation1 [shape = 'u32[144,128]{1,0:T(1,128)}', space=vmem, size = 0x12000, scoped, tag = 'internal scratch']
  #allocation2 [shape = 'f32[64,1]{1,0:T(8,128)}', space=vmem, size = 0x8000, scoped, tag = 'scratch operand']
  #allocation3 [shape = 'f32[64,1]{1,0:T(8,128)}', space=vmem, size = 0x8000, scoped, tag = 'scratch operand']
  #allocation4 [shape = 'f32[64,128]{1,0:T(8,128)}', space=vmem, size = 0x8000, scoped, tag = 'scratch operand']
  %s0 = inlined_call_operand.vmem [shape: bf16[2,64,384], index: 0, kind: input, shape index: {}, may-alias: {0,1,2,3}]
  %s1 = inlined_call_operand.vmem [shape: bf16[2,64,384], index: 1, kind: input, shape index: {}, may-alias: {0,1,2,3}]
  %s2 = inlined_call_operand.vmem [shape: bf16[2,64,384], index: 2, kind: input, shape index: {}, may-alias: {0,1,2,3}]
  %s3 = inlined_call_operand.vmem [shape: bf16[2,64,384], index: 3, kind: input, shape index: {}, may-alias: {0,1,2,3}]
  %s4 = inlined_call_operand.vmem [shape: bf16[128,128], index: 4, kind: input, shape index: {}]
  %s5 = inlined_call_operand.vmem [shape: bf16[128,128], index: 5, kind: input, shape index: {}]
  %s6 = inlined_call_operand.vmem [shape: bf16[128,128], index: 6, kind: input, shape index: {}]
  %s7 = inlined_call_operand.vmem [shape: f32[8,128], index: 7, kind: input, shape index: {}]
  %s8 = inlined_call_operand.vmem [shape: bf16[2,64,128], index: 8, kind: output, shape index: {}]
  %s9 = sld [smem:[#allocation0]]
  $region237: #{_lambda_.6} parent=0
    _
  %s11 = ssub.s32 1, %s9
  %s12 = scalar_select 0, %s11, %s9
  $region1: #{_lambda_.6} parent=0
    #allocation5 [shape = 'u8[32768]{0}', space=vmem, size = 0x8000, scoped, tag = 'input window, operand 0']
    #allocation6 [shape = 'u8[32768]{0}', space=vmem, size = 0x8000, scoped, tag = 'input window, operand 1']
    #allocation7 [shape = 'u8[32768]{0}', space=vmem, size = 0x8000, scoped, tag = 'input window, operand 2']
    #allocation8 [shape = 'u8[32768]{0}', space=vmem, size = 0x8000, scoped, tag = 'input window, operand 3']
    loop: start=0, step=1, limit=4
    $region2: #{_lambda_.6} parent=1 // loop_pre_header
      _
    $region3: #{_lambda_.6} parent=1 // loop_header
      %s14 = sphi 0, %s18
      %p15 = scmp.ge.s32.totalorder %s14, 4
      %s21 = sphi 0, %s40
      %s22 = sphi 0, %s36
      %s23 = sphi 0, %s32
      %s24 = sphi 0, %s21
      %s25 = sphi 0, %s22
      %s26 = sphi 0, %s23
      %s27 = sphi 0, %s24
      %s28 = sphi 0, %s25
      %s29 = sphi 0, %s26
      %s45 = sphi 0, %s47
      %s48 = sphi 0, %s45
      %s49 = sphi 0, %s48
      %s65 = sphi 0, %s49
      %s73 = sphi 0, %s75
      %s76 = sphi 0, %s73
      %s77 = sphi 0, %s76
      %s93 = sphi 0, %s77
      %s101 = sphi 0, %s103
      %s104 = sphi 0, %s101
      %s105 = sphi 0, %s104
      %s121 = sphi 0, %s105
      %s129 = sphi 0, %s131
      %s132 = sphi 0, %s129
      %s133 = sphi 0, %s132
      %s149 = sphi 0, %s133
      %s153 = sphi 0, %s153
      %s155 = sphi 0, %s153
      %s156 = sphi 0, %s155
      %s170 = sphi 0, %s156
      %s174 = sphi 0, %s174
      %s176 = sphi 0, %s174
      %s177 = sphi 0, %s176
      %s191 = sphi 0, %s177
      %s195 = sphi 0, %s195
      %s197 = sphi 0, %s195
      %s198 = sphi 0, %s197
      %s212 = sphi 0, %s198
      %s216 = sphi 0, %s216
      %s218 = sphi 0, %s216
      %s219 = sphi 0, %s218
      %s233 = sphi 0, %s219
      %s241 = sphi 0, %s243
      %s244 = sphi 0, %s241
      %s245 = sphi 0, %s244
      %s261 = sphi 0, %s245
    $region4: #{_lambda_.6} parent=1 // loop_header_branch
      %17 = sbr.rel (%p15) target = $region8
    $region5: #{_lambda_.6} parent=1 // loop_body
      %s19 = ssub.s32 %s14, 1
      %s20 = ssub.s32 %s14, 2
      %s30 = sadd.s32 1, %s23
      %p31 = scmp.ge.s32.totalorder %s30, 1
      %s32 = scalar_select %p31, 0, %s30
      %s33 = sadd.s32 1, %s22
      %s34 = scalar_select %p31, %s33, %s22
      %p35 = scmp.ge.s32.totalorder %s34, 1
      %s36 = scalar_select %p35, 0, %s34
      %s37 = sadd.s32 1, %s21
      %s38 = scalar_select %p35, %s37, %s21
      %p39 = scmp.ge.s32.totalorder %s38, 2
      %s40 = scalar_select %p39, 0, %s38
      %s41 = ssub.s32 %s21, %s40
      %s42 = ssub.s32 %s22, %s36
      %s43 = sor.u32 %s41, %s42
      %p44 = scmp.eq.s32.totalorder %s43, 0
      %s46 = sadd.s32 %s45, 1
      %s47 = scalar_select %p44, %s45, %s46
      %p50 = pneg %p44
      %p51 = scmp.eq.s32.totalorder %s14, 1
      %p52 = por %p50, %p51
      %p53 = scmp.ne.s32.totalorder %s45, %s48
      %p54 = scmp.eq.s32.totalorder %s14, 0
      %p55 = por %p53, %p54
      %p56 = scmp.ne.s32.totalorder %s45, %s48
      %p57 = scmp.eq.s32.totalorder %s19, 1
      %p58 = por %p56, %p57
      %p59 = scmp.ne.s32.totalorder %s48, %s49
      %p60 = scmp.eq.s32.totalorder %s19, 0
      %p61 = por %p59, %p60
      %p62 = scmp.ne.s32.totalorder %s48, %s49
      %p63 = scmp.eq.s32.totalorder %s20, 1
      %p64 = por %p62, %p63
      %p66 = scmp.ne.s32.totalorder %s49, %s65
      %p67 = scmp.eq.s32.totalorder %s20, 0
      %p68 = por %p66, %p67
      %s69 = ssub.s32 %s21, %s40
      %s70 = ssub.s32 %s23, %s32
      %s71 = sor.u32 %s69, %s70
      %p72 = scmp.eq.s32.totalorder %s71, 0
      %s74 = sadd.s32 %s73, 1
      %s75 = scalar_select %p72, %s73, %s74
      %p78 = pneg %p72
      %p79 = scmp.eq.s32.totalorder %s14, 1
      %p80 = por %p78, %p79
      %p81 = scmp.ne.s32.totalorder %s73, %s76
      %p82 = scmp.eq.s32.totalorder %s14, 0
      %p83 = por %p81, %p82
      %p84 = scmp.ne.s32.totalorder %s73, %s76
      %p85 = scmp.eq.s32.totalorder %s19, 1
      %p86 = por %p84, %p85
      %p87 = scmp.ne.s32.totalorder %s76, %s77
      %p88 = scmp.eq.s32.totalorder %s19, 0
      %p89 = por %p87, %p88
      %p90 = scmp.ne.s32.totalorder %s76, %s77
      %p91 = scmp.eq.s32.totalorder %s20, 1
      %p92 = por %p90, %p91
      %p94 = scmp.ne.s32.totalorder %s77, %s93
      %p95 = scmp.eq.s32.totalorder %s20, 0
      %p96 = por %p94, %p95
      %s97 = ssub.s32 %s21, %s40
      %s98 = ssub.s32 %s23, %s32
      %s99 = sor.u32 %s97, %s98
      %p100 = scmp.eq.s32.totalorder %s99, 0
      %s102 = sadd.s32 %s101, 1
      %s103 = scalar_select %p100, %s101, %s102
      %p106 = pneg %p100
      %p107 = scmp.eq.s32.totalorder %s14, 1
      %p108 = por %p106, %p107
      %p109 = scmp.ne.s32.totalorder %s101, %s104
      %p110 = scmp.eq.s32.totalorder %s14, 0
      %p111 = por %p109, %p110
      %p112 = scmp.ne.s32.totalorder %s101, %s104
      %p113 = scmp.eq.s32.totalorder %s19, 1
      %p114 = por %p112, %p113
      %p115 = scmp.ne.s32.totalorder %s104, %s105
      %p116 = scmp.eq.s32.totalorder %s19, 0
      %p117 = por %p115, %p116
      %p118 = scmp.ne.s32.totalorder %s104, %s105
      %p119 = scmp.eq.s32.totalorder %s20, 1
      %p120 = por %p118, %p119
      %p122 = scmp.ne.s32.totalorder %s105, %s121
      %p123 = scmp.eq.s32.totalorder %s20, 0
      %p124 = por %p122, %p123
      %s125 = ssub.s32 %s21, %s40
      %s126 = ssub.s32 %s22, %s36
      %s127 = sor.u32 %s125, %s126
      %p128 = scmp.eq.s32.totalorder %s127, 0
      %s130 = sadd.s32 %s129, 1
      %s131 = scalar_select %p128, %s129, %s130
      %p134 = pneg %p128
      %p135 = scmp.eq.s32.totalorder %s14, 1
      %p136 = por %p134, %p135
      %p137 = scmp.ne.s32.totalorder %s129, %s132
      %p138 = scmp.eq.s32.totalorder %s14, 0
      %p139 = por %p137, %p138
      %p140 = scmp.ne.s32.totalorder %s129, %s132
      %p141 = scmp.eq.s32.totalorder %s19, 1
      %p142 = por %p140, %p141
      %p143 = scmp.ne.s32.totalorder %s132, %s133
      %p144 = scmp.eq.s32.totalorder %s19, 0
      %p145 = por %p143, %p144
      %p146 = scmp.ne.s32.totalorder %s132, %s133
      %p147 = scmp.eq.s32.totalorder %s20, 1
      %p148 = por %p146, %p147
      %p150 = scmp.ne.s32.totalorder %s133, %s149
      %p151 = scmp.eq.s32.totalorder %s20, 0
      %p152 = por %p150, %p151
      %s154 = sadd.s32 %s153, 1
      %p157 = scmp.eq.s32.totalorder %s14, 1
      %p158 = scmp.ne.s32.totalorder %s153, %s155
      %p159 = scmp.eq.s32.totalorder %s14, 0
      %p160 = por %p158, %p159
      %p161 = scmp.ne.s32.totalorder %s153, %s155
      %p162 = scmp.eq.s32.totalorder %s19, 1
      %p163 = por %p161, %p162
      %p164 = scmp.ne.s32.totalorder %s155, %s156
      %p165 = scmp.eq.s32.totalorder %s19, 0
      %p166 = por %p164, %p165
      %p167 = scmp.ne.s32.totalorder %s155, %s156
      %p168 = scmp.eq.s32.totalorder %s20, 1
      %p169 = por %p167, %p168
      %p171 = scmp.ne.s32.totalorder %s156, %s170
      %p172 = scmp.eq.s32.totalorder %s20, 0
      %p173 = por %p171, %p172
      %s175 = sadd.s32 %s174, 1
      %p178 = scmp.eq.s32.totalorder %s14, 1
      %p179 = scmp.ne.s32.totalorder %s174, %s176
      %p180 = scmp.eq.s32.totalorder %s14, 0
      %p181 = por %p179, %p180
      %p182 = scmp.ne.s32.totalorder %s174, %s176
      %p183 = scmp.eq.s32.totalorder %s19, 1
      %p184 = por %p182, %p183
      %p185 = scmp.ne.s32.totalorder %s176, %s177
      %p186 = scmp.eq.s32.totalorder %s19, 0
      %p187 = por %p185, %p186
      %p188 = scmp.ne.s32.totalorder %s176, %s177
      %p189 = scmp.eq.s32.totalorder %s20, 1
      %p190 = por %p188, %p189
      %p192 = scmp.ne.s32.totalorder %s177, %s191
      %p193 = scmp.eq.s32.totalorder %s20, 0
      %p194 = por %p192, %p193
      %s196 = sadd.s32 %s195, 1
      %p199 = scmp.eq.s32.totalorder %s14, 1
      %p200 = scmp.ne.s32.totalorder %s195, %s197
      %p201 = scmp.eq.s32.totalorder %s14, 0
      %p202 = por %p200, %p201
      %p203 = scmp.ne.s32.totalorder %s195, %s197
      %p204 = scmp.eq.s32.totalorder %s19, 1
      %p205 = por %p203, %p204
      %p206 = scmp.ne.s32.totalorder %s197, %s198
      %p207 = scmp.eq.s32.totalorder %s19, 0
      %p208 = por %p206, %p207
      %p209 = scmp.ne.s32.totalorder %s197, %s198
      %p210 = scmp.eq.s32.totalorder %s20, 1
      %p211 = por %p209, %p210
      %p213 = scmp.ne.s32.totalorder %s198, %s212
      %p214 = scmp.eq.s32.totalorder %s20, 0
      %p215 = por %p213, %p214
      %s217 = sadd.s32 %s216, 1
      %p220 = scmp.eq.s32.totalorder %s14, 1
      %p221 = scmp.ne.s32.totalorder %s216, %s218
      %p222 = scmp.eq.s32.totalorder %s14, 0
      %p223 = por %p221, %p222
      %p224 = scmp.ne.s32.totalorder %s216, %s218
      %p225 = scmp.eq.s32.totalorder %s19, 1
      %p226 = por %p224, %p225
      %p227 = scmp.ne.s32.totalorder %s218, %s219
      %p228 = scmp.eq.s32.totalorder %s19, 0
      %p229 = por %p227, %p228
      %p230 = scmp.ne.s32.totalorder %s218, %s219
      %p231 = scmp.eq.s32.totalorder %s20, 1
      %p232 = por %p230, %p231
      %p234 = scmp.ne.s32.totalorder %s219, %s233
      %p235 = scmp.eq.s32.totalorder %s20, 0
      %p236 = por %p234, %p235
      %s237 = ssub.s32 %s21, %s40
      %s238 = ssub.s32 %s22, %s36
      %s239 = sor.u32 %s237, %s238
      %p240 = scmp.eq.s32.totalorder %s239, 0
      %s242 = sadd.s32 %s241, 1
      %s243 = scalar_select %p240, %s241, %s242
      %p246 = pneg %p240
      %p247 = scmp.eq.s32.totalorder %s14, 1
      %p248 = por %p246, %p247
      %p249 = scmp.ne.s32.totalorder %s241, %s244
      %p250 = scmp.eq.s32.totalorder %s14, 0
      %p251 = por %p249, %p250
      %p252 = scmp.ne.s32.totalorder %s241, %s244
      %p253 = scmp.eq.s32.totalorder %s19, 1
      %p254 = por %p252, %p253
      %p255 = scmp.ne.s32.totalorder %s244, %s245
      %p256 = scmp.eq.s32.totalorder %s19, 0
      %p257 = por %p255, %p256
      %p258 = scmp.ne.s32.totalorder %s244, %s245
      %p259 = scmp.eq.s32.totalorder %s20, 1
      %p260 = por %p258, %p259
      %p262 = scmp.ne.s32.totalorder %s245, %s261
      %p263 = scmp.eq.s32.totalorder %s20, 0
      %p264 = por %p262, %p263
      %p265 = scmp.le.s32.totalorder 1, %s14
      %p266 = scmp.lt.s32.totalorder %s14, 3
      %p267 = pnand %p265, %p266
      %p268 = pneg %p267
      // Predicated region
      $region9: #{_lambda_.6} parent=5 // pred_check
        _
      $region10: #{_lambda_.6} parent=5 // pred_check_branch
        %270 = sbr.rel (%p267) target = $region12
      $region11: #{_lambda_.6} parent=5 // pred_region
        %s271 = ssub.s32 %s14, 1
        // Predicated region
        $region13: #{_lambda_.6} parent=11 // pred_check
          %p272 = pneg %p166
        $region14: #{_lambda_.6} parent=11 // pred_check_branch
          %274 = sbr.rel (%p272) target = $region16
        $region15: #{_lambda_.6} parent=11 // pred_region
          _
        $region16: #{_lambda_.6} parent=11 // pred_fallthru
          _
        // Predicated region
        $region17: #{_lambda_.6} parent=11 // pred_check
          %p275 = pneg %p187
        $region18: #{_lambda_.6} parent=11 // pred_check_branch
          %277 = sbr.rel (%p275) target = $region20
        $region19: #{_lambda_.6} parent=11 // pred_region
          _
        $region20: #{_lambda_.6} parent=11 // pred_fallthru
          _
        // Predicated region
        $region21: #{_lambda_.6} parent=11 // pred_check
          %p278 = pneg %p208
        $region22: #{_lambda_.6} parent=11 // pred_check_branch
          %280 = sbr.rel (%p278) target = $region24
        $region23: #{_lambda_.6} parent=11 // pred_region
          _
        $region24: #{_lambda_.6} parent=11 // pred_fallthru
          _
        // Predicated region
        $region25: #{_lambda_.6} parent=11 // pred_check
          %p281 = pneg %p229
        $region26: #{_lambda_.6} parent=11 // pred_check_branch
          %283 = sbr.rel (%p281) target = $region28
        $region27: #{_lambda_.6} parent=11 // pred_region
          _
        $region28: #{_lambda_.6} parent=11 // pred_fallthru
          _
      $region12: #{_lambda_.6} parent=5 // pred_fallthru
        _
      %p284 = scmp.lt.s32.totalorder %s14, 2
      // Predicated region
      $region29: #{_lambda_.6} parent=5 // pred_check
        %p285 = pneg %p284
      $region30: #{_lambda_.6} parent=5 // pred_check_branch
        %287 = sbr.rel (%p285) target = $region32
      $region31: #{_lambda_.6} parent=5 // pred_region
        // Predicated region
        $region33: #{_lambda_.6} parent=31 // pred_check
          %p288 = pneg %p55
        $region34: #{_lambda_.6} parent=31 // pred_check_branch
          %290 = sbr.rel (%p288) target = $region36
        $region35: #{_lambda_.6} parent=31 // pred_region
          %s291 = sand.u32 %s45, 1
          %s292 = sand.u32 %s45, 1
          %s293 = smul.addr %s292, 32
          %s294 = scalar_lea.vmem [#allocation5], %s293
          %s295 = smul.u32 8, %s22
          %s296 = smul.addr %s295, 3
          %s297 = smul.addr %s21, 24
          %s298 = sadd.s32 %s296, %s297
          %s299 = smul.addr %s298, 4
          %s300 = scalar_lea.vmem %s0, %s299
          // Predicated region
          $region37: #{_lambda_.6} parent=35 // pred_check
            _
          $region38: #{_lambda_.6} parent=35 // pred_check_branch
            %302 = sbr.rel (0) target = $region40
          $region39: #{_lambda_.6} parent=35 // pred_region
            // Predicated region
            $region41: #{_lambda_.6} parent=39 // pred_check
              _
            $region42: #{_lambda_.6} parent=39 // pred_check_branch
              %304 = sbr.rel target = $region44
            $region43: #{_lambda_.6} parent=39 // pred_region
              // Predicated region
              $region56: #{_lambda_.6} parent=43 // pred_check
                _
              $region57: #{_lambda_.6} parent=43 // pred_check_branch
                %334 = sbr.rel (0) target = $region59
              $region58: #{_lambda_.6} parent=43 // pred_region
                loop: start=0, step=1, limit=1
                $region60: #{_lambda_.6} parent=58 // loop_pre_header
                  _
                $region61: #{_lambda_.6} parent=58 // loop_header
                  %s336 = sphi 0, %s340
                  %p337 = scmp.ge.s32.totalorder %s336, 1
                  %s341 = sphi %s300, %s300
                  %s342 = sphi %s294, %s294
                $region62: #{_lambda_.6} parent=58 // loop_header_branch
                  %339 = sbr.rel (%p337) target = $region66
                $region63: #{_lambda_.6} parent=58 // loop_body
                  _
                $region64: #{_lambda_.6} parent=58 // loop_footer
                  %s340 = sadd.s32 1, %s336
                $region65: #{_lambda_.6} parent=58 // loop_footer_branch
                  %335 = sbr.rel target = $region61
                $region66: #{_lambda_.6} parent=58 // loop_exit
                  _
                %s344 = ssub.s32 16, 1
                loop: start=0, step=1, limit=1
                $region67: #{_lambda_.6} parent=58 // loop_pre_header
                  _
                $region68: #{_lambda_.6} parent=58 // loop_header
                  %s346 = sphi 0, %s350
                  %p347 = scmp.ge.s32.totalorder %s346, 1
                  %s351 = sphi %s300, %s300
                  %s352 = sphi %s294, %s294
                $region69: #{_lambda_.6} parent=58 // loop_header_branch
                  %349 = sbr.rel (%p347) target = $region73
                $region70: #{_lambda_.6} parent=58 // loop_body
                  %v353 = vld [vmem:[%s351] sm:%s344]
                  %354 = vst [vmem:[%s352] sm:%s344] %v353
                  %v355 = vld [vmem:[%s351 + $0xc] sm:%s344]
                  %356 = vst [vmem:[%s352 + $0x4] sm:%s344] %v355
                  %v357 = vld [vmem:[%s351 + $0x18] sm:%s344]
                  %358 = vst [vmem:[%s352 + $0x8] sm:%s344] %v357
                  %v359 = vld [vmem:[%s351 + $0x24] sm:%s344]
                  %360 = vst [vmem:[%s352 + $0xc] sm:%s344] %v359
                  %v361 = vld [vmem:[%s351 + $0x30] sm:%s344]
                  %362 = vst [vmem:[%s352 + $0x10] sm:%s344] %v361
                  %v363 = vld [vmem:[%s351 + $0x3c] sm:%s344]
                  %364 = vst [vmem:[%s352 + $0x14] sm:%s344] %v363
                  %v365 = vld [vmem:[%s351 + $0x48] sm:%s344]
                  %366 = vst [vmem:[%s352 + $0x18] sm:%s344] %v365
                  %v367 = vld [vmem:[%s351 + $0x54] sm:%s344]
                  %368 = vst [vmem:[%s352 + $0x1c] sm:%s344] %v367
                $region71: #{_lambda_.6} parent=58 // loop_footer
                  %s350 = sadd.s32 1, %s346
                $region72: #{_lambda_.6} parent=58 // loop_footer_branch
                  %345 = sbr.rel target = $region68
                $region73: #{_lambda_.6} parent=58 // loop_exit
                  _
              $region59: #{_lambda_.6} parent=43 // pred_fallthru
                _
            $region44: #{_lambda_.6} parent=39 // pred_fallthru
              _
            // Predicated region
            $region45: #{_lambda_.6} parent=39 // pred_check
              _
            $region46: #{_lambda_.6} parent=39 // pred_check_branch
              %306 = sbr.rel (0) target = $region48
            $region47: #{_lambda_.6} parent=39 // pred_region
              %s308 = ssub.s32 16, 1
              loop: start=0, step=1, limit=1
              $region49: #{_lambda_.6} parent=47 // loop_pre_header
                _
              $region50: #{_lambda_.6} parent=47 // loop_header
                %s310 = sphi 0, %s314
                %p311 = scmp.ge.s32.totalorder %s310, 1
                %s315 = sphi %s300, %s300
                %s316 = sphi %s294, %s294
              $region51: #{_lambda_.6} parent=47 // loop_header_branch
                %313 = sbr.rel (%p311) target = $region55
              $region52: #{_lambda_.6} parent=47 // loop_body
                %v317 = vld [vmem:[%s315] sm:%s308]
                %318 = vst [vmem:[%s316] sm:%s308] %v317
                %v319 = vld [vmem:[%s315 + $0xc] sm:%s308]
                %320 = vst [vmem:[%s316 + $0x4] sm:%s308] %v319
                %v321 = vld [vmem:[%s315 + $0x18] sm:%s308]
                %322 = vst [vmem:[%s316 + $0x8] sm:%s308] %v321
                %v323 = vld [vmem:[%s315 + $0x24] sm:%s308]
                %324 = vst [vmem:[%s316 + $0xc] sm:%s308] %v323
                %v325 = vld [vmem:[%s315 + $0x30] sm:%s308]
                %326 = vst [vmem:[%s316 + $0x10] sm:%s308] %v325
                %v327 = vld [vmem:[%s315 + $0x3c] sm:%s308]
                %328 = vst [vmem:[%s316 + $0x14] sm:%s308] %v327
                %v329 = vld [vmem:[%s315 + $0x48] sm:%s308]
                %330 = vst [vmem:[%s316 + $0x18] sm:%s308] %v329
                %v331 = vld [vmem:[%s315 + $0x54] sm:%s308]
                %332 = vst [vmem:[%s316 + $0x1c] sm:%s308] %v331
              $region53: #{_lambda_.6} parent=47 // loop_footer
                %s314 = sadd.s32 1, %s310
              $region54: #{_lambda_.6} parent=47 // loop_footer_branch
                %309 = sbr.rel target = $region50
              $region55: #{_lambda_.6} parent=47 // loop_exit
                _
            $region48: #{_lambda_.6} parent=39 // pred_fallthru
              _
          $region40: #{_lambda_.6} parent=35 // pred_fallthru
            _
          %369 = vnop
        $region36: #{_lambda_.6} parent=31 // pred_fallthru
          _
        // Predicated region
        $region74: #{_lambda_.6} parent=31 // pred_check
          %p370 = pneg %p83
        $region75: #{_lambda_.6} parent=31 // pred_check_branch
          %372 = sbr.rel (%p370) target = $region77
        $region76: #{_lambda_.6} parent=31 // pred_region
          %s373 = sand.u32 %s73, 1
          %s374 = sand.u32 %s73, 1
          %s375 = smul.addr %s374, 32
          %s376 = scalar_lea.vmem [#allocation6], %s375
          %s377 = smul.u32 8, %s23
          %s378 = smul.addr %s377, 3
          %s379 = sadd.s32 1, %s378
          %s380 = smul.addr %s21, 24
          %s381 = sadd.s32 %s379, %s380
          %s382 = smul.addr %s381, 4
          %s383 = scalar_lea.vmem %s1, %s382
          // Predicated region
          $region78: #{_lambda_.6} parent=76 // pred_check
            _
          $region79: #{_lambda_.6} parent=76 // pred_check_branch
            %385 = sbr.rel (0) target = $region81
          $region80: #{_lambda_.6} parent=76 // pred_region
            // Predicated region
            $region82: #{_lambda_.6} parent=80 // pred_check
              _
            $region83: #{_lambda_.6} parent=80 // pred_check_branch
              %387 = sbr.rel target = $region85
            $region84: #{_lambda_.6} parent=80 // pred_region
              // Predicated region
              $region97: #{_lambda_.6} parent=84 // pred_check
                _
              $region98: #{_lambda_.6} parent=84 // pred_check_branch
                %417 = sbr.rel (0) target = $region100
              $region99: #{_lambda_.6} parent=84 // pred_region
                loop: start=0, step=1, limit=1
                $region101: #{_lambda_.6} parent=99 // loop_pre_header
                  _
                $region102: #{_lambda_.6} parent=99 // loop_header
                  %s419 = sphi 0, %s423
                  %p420 = scmp.ge.s32.totalorder %s419, 1
                  %s424 = sphi %s383, %s383
                  %s425 = sphi %s376, %s376
                $region103: #{_lambda_.6} parent=99 // loop_header_branch
                  %422 = sbr.rel (%p420) target = $region107
                $region104: #{_lambda_.6} parent=99 // loop_body
                  _
                $region105: #{_lambda_.6} parent=99 // loop_footer
                  %s423 = sadd.s32 1, %s419
                $region106: #{_lambda_.6} parent=99 // loop_footer_branch
                  %418 = sbr.rel target = $region102
                $region107: #{_lambda_.6} parent=99 // loop_exit
                  _
                %s427 = ssub.s32 16, 1
                loop: start=0, step=1, limit=1
                $region108: #{_lambda_.6} parent=99 // loop_pre_header
                  _
                $region109: #{_lambda_.6} parent=99 // loop_header
                  %s429 = sphi 0, %s433
                  %p430 = scmp.ge.s32.totalorder %s429, 1
                  %s434 = sphi %s383, %s383
                  %s435 = sphi %s376, %s376
                $region110: #{_lambda_.6} parent=99 // loop_header_branch
                  %432 = sbr.rel (%p430) target = $region114
                $region111: #{_lambda_.6} parent=99 // loop_body
                  %v436 = vld [vmem:[%s434] sm:%s427]
                  %437 = vst [vmem:[%s435] sm:%s427] %v436
                  %v438 = vld [vmem:[%s434 + $0xc] sm:%s427]
                  %439 = vst [vmem:[%s435 + $0x4] sm:%s427] %v438
                  %v440 = vld [vmem:[%s434 + $0x18] sm:%s427]
                  %441 = vst [vmem:[%s435 + $0x8] sm:%s427] %v440
                  %v442 = vld [vmem:[%s434 + $0x24] sm:%s427]
                  %443 = vst [vmem:[%s435 + $0xc] sm:%s427] %v442
                  %v444 = vld [vmem:[%s434 + $0x30] sm:%s427]
                  %445 = vst [vmem:[%s435 + $0x10] sm:%s427] %v444
                  %v446 = vld [vmem:[%s434 + $0x3c] sm:%s427]
                  %447 = vst [vmem:[%s435 + $0x14] sm:%s427] %v446
                  %v448 = vld [vmem:[%s434 + $0x48] sm:%s427]
                  %449 = vst [vmem:[%s435 + $0x18] sm:%s427] %v448
                  %v450 = vld [vmem:[%s434 + $0x54] sm:%s427]
                  %451 = vst [vmem:[%s435 + $0x1c] sm:%s427] %v450
                $region112: #{_lambda_.6} parent=99 // loop_footer
                  %s433 = sadd.s32 1, %s429
                $region113: #{_lambda_.6} parent=99 // loop_footer_branch
                  %428 = sbr.rel target = $region109
                $region114: #{_lambda_.6} parent=99 // loop_exit
                  _
              $region100: #{_lambda_.6} parent=84 // pred_fallthru
                _
            $region85: #{_lambda_.6} parent=80 // pred_fallthru
              _
            // Predicated region
            $region86: #{_lambda_.6} parent=80 // pred_check
              _
            $region87: #{_lambda_.6} parent=80 // pred_check_branch
              %389 = sbr.rel (0) target = $region89
            $region88: #{_lambda_.6} parent=80 // pred_region
              %s391 = ssub.s32 16, 1
              loop: start=0, step=1, limit=1
              $region90: #{_lambda_.6} parent=88 // loop_pre_header
                _
              $region91: #{_lambda_.6} parent=88 // loop_header
                %s393 = sphi 0, %s397
                %p394 = scmp.ge.s32.totalorder %s393, 1
                %s398 = sphi %s383, %s383
                %s399 = sphi %s376, %s376
              $region92: #{_lambda_.6} parent=88 // loop_header_branch
                %396 = sbr.rel (%p394) target = $region96
              $region93: #{_lambda_.6} parent=88 // loop_body
                %v400 = vld [vmem:[%s398] sm:%s391]
                %401 = vst [vmem:[%s399] sm:%s391] %v400
                %v402 = vld [vmem:[%s398 + $0xc] sm:%s391]
                %403 = vst [vmem:[%s399 + $0x4] sm:%s391] %v402
                %v404 = vld [vmem:[%s398 + $0x18] sm:%s391]
                %405 = vst [vmem:[%s399 + $0x8] sm:%s391] %v404
                %v406 = vld [vmem:[%s398 + $0x24] sm:%s391]
                %407 = vst [vmem:[%s399 + $0xc] sm:%s391] %v406
                %v408 = vld [vmem:[%s398 + $0x30] sm:%s391]
                %409 = vst [vmem:[%s399 + $0x10] sm:%s391] %v408
                %v410 = vld [vmem:[%s398 + $0x3c] sm:%s391]
                %411 = vst [vmem:[%s399 + $0x14] sm:%s391] %v410
                %v412 = vld [vmem:[%s398 + $0x48] sm:%s391]
                %413 = vst [vmem:[%s399 + $0x18] sm:%s391] %v412
                %v414 = vld [vmem:[%s398 + $0x54] sm:%s391]
                %415 = vst [vmem:[%s399 + $0x1c] sm:%s391] %v414
              $region94: #{_lambda_.6} parent=88 // loop_footer
                %s397 = sadd.s32 1, %s393
              $region95: #{_lambda_.6} parent=88 // loop_footer_branch
                %392 = sbr.rel target = $region91
              $region96: #{_lambda_.6} parent=88 // loop_exit
                _
            $region89: #{_lambda_.6} parent=80 // pred_fallthru
              _
          $region81: #{_lambda_.6} parent=76 // pred_fallthru
            _
          %452 = vnop
        $region77: #{_lambda_.6} parent=31 // pred_fallthru
          _
        // Predicated region
        $region115: #{_lambda_.6} parent=31 // pred_check
          %p453 = pneg %p111
        $region116: #{_lambda_.6} parent=31 // pred_check_branch
          %455 = sbr.rel (%p453) target = $region118
        $region117: #{_lambda_.6} parent=31 // pred_region
          %s456 = sand.u32 %s101, 1
          %s457 = sand.u32 %s101, 1
          %s458 = smul.addr %s457, 32
          %s459 = scalar_lea.vmem [#allocation7], %s458
          %s460 = smul.u32 8, %s23
          %s461 = smul.addr %s460, 3
          %s462 = sadd.s32 2, %s461
          %s463 = smul.addr %s21, 24
          %s464 = sadd.s32 %s462, %s463
          %s465 = smul.addr %s464, 4
          %s466 = scalar_lea.vmem %s2, %s465
          // Predicated region
          $region119: #{_lambda_.6} parent=117 // pred_check
            _
          $region120: #{_lambda_.6} parent=117 // pred_check_branch
            %468 = sbr.rel (0) target = $region122
          $region121: #{_lambda_.6} parent=117 // pred_region
            // Predicated region
            $region123: #{_lambda_.6} parent=121 // pred_check
              _
            $region124: #{_lambda_.6} parent=121 // pred_check_branch
              %470 = sbr.rel target = $region126
            $region125: #{_lambda_.6} parent=121 // pred_region
              // Predicated region
              $region138: #{_lambda_.6} parent=125 // pred_check
                _
              $region139: #{_lambda_.6} parent=125 // pred_check_branch
                %500 = sbr.rel (0) target = $region141
              $region140: #{_lambda_.6} parent=125 // pred_region
                loop: start=0, step=1, limit=1
                $region142: #{_lambda_.6} parent=140 // loop_pre_header
                  _
                $region143: #{_lambda_.6} parent=140 // loop_header
                  %s502 = sphi 0, %s506
                  %p503 = scmp.ge.s32.totalorder %s502, 1
                  %s507 = sphi %s466, %s466
                  %s508 = sphi %s459, %s459
                $region144: #{_lambda_.6} parent=140 // loop_header_branch
                  %505 = sbr.rel (%p503) target = $region148
                $region145: #{_lambda_.6} parent=140 // loop_body
                  _
                $region146: #{_lambda_.6} parent=140 // loop_footer
                  %s506 = sadd.s32 1, %s502
                $region147: #{_lambda_.6} parent=140 // loop_footer_branch
                  %501 = sbr.rel target = $region143
                $region148: #{_lambda_.6} parent=140 // loop_exit
                  _
                %s510 = ssub.s32 16, 1
                loop: start=0, step=1, limit=1
                $region149: #{_lambda_.6} parent=140 // loop_pre_header
                  _
                $region150: #{_lambda_.6} parent=140 // loop_header
                  %s512 = sphi 0, %s516
                  %p513 = scmp.ge.s32.totalorder %s512, 1
                  %s517 = sphi %s466, %s466
                  %s518 = sphi %s459, %s459
                $region151: #{_lambda_.6} parent=140 // loop_header_branch
                  %515 = sbr.rel (%p513) target = $region155
                $region152: #{_lambda_.6} parent=140 // loop_body
                  %v519 = vld [vmem:[%s517] sm:%s510]
                  %520 = vst [vmem:[%s518] sm:%s510] %v519
                  %v521 = vld [vmem:[%s517 + $0xc] sm:%s510]
                  %522 = vst [vmem:[%s518 + $0x4] sm:%s510] %v521
                  %v523 = vld [vmem:[%s517 + $0x18] sm:%s510]
                  %524 = vst [vmem:[%s518 + $0x8] sm:%s510] %v523
                  %v525 = vld [vmem:[%s517 + $0x24] sm:%s510]
                  %526 = vst [vmem:[%s518 + $0xc] sm:%s510] %v525
                  %v527 = vld [vmem:[%s517 + $0x30] sm:%s510]
                  %528 = vst [vmem:[%s518 + $0x10] sm:%s510] %v527
                  %v529 = vld [vmem:[%s517 + $0x3c] sm:%s510]
                  %530 = vst [vmem:[%s518 + $0x14] sm:%s510] %v529
                  %v531 = vld [vmem:[%s517 + $0x48] sm:%s510]
                  %532 = vst [vmem:[%s518 + $0x18] sm:%s510] %v531
                  %v533 = vld [vmem:[%s517 + $0x54] sm:%s510]
                  %534 = vst [vmem:[%s518 + $0x1c] sm:%s510] %v533
                $region153: #{_lambda_.6} parent=140 // loop_footer
                  %s516 = sadd.s32 1, %s512
                $region154: #{_lambda_.6} parent=140 // loop_footer_branch
                  %511 = sbr.rel target = $region150
                $region155: #{_lambda_.6} parent=140 // loop_exit
                  _
              $region141: #{_lambda_.6} parent=125 // pred_fallthru
                _
            $region126: #{_lambda_.6} parent=121 // pred_fallthru
              _
            // Predicated region
            $region127: #{_lambda_.6} parent=121 // pred_check
              _
            $region128: #{_lambda_.6} parent=121 // pred_check_branch
              %472 = sbr.rel (0) target = $region130
            $region129: #{_lambda_.6} parent=121 // pred_region
              %s474 = ssub.s32 16, 1
              loop: start=0, step=1, limit=1
              $region131: #{_lambda_.6} parent=129 // loop_pre_header
                _
              $region132: #{_lambda_.6} parent=129 // loop_header
                %s476 = sphi 0, %s480
                %p477 = scmp.ge.s32.totalorder %s476, 1
                %s481 = sphi %s466, %s466
                %s482 = sphi %s459, %s459
              $region133: #{_lambda_.6} parent=129 // loop_header_branch
                %479 = sbr.rel (%p477) target = $region137
              $region134: #{_lambda_.6} parent=129 // loop_body
                %v483 = vld [vmem:[%s481] sm:%s474]
                %484 = vst [vmem:[%s482] sm:%s474] %v483
                %v485 = vld [vmem:[%s481 + $0xc] sm:%s474]
                %486 = vst [vmem:[%s482 + $0x4] sm:%s474] %v485
                %v487 = vld [vmem:[%s481 + $0x18] sm:%s474]
                %488 = vst [vmem:[%s482 + $0x8] sm:%s474] %v487
                %v489 = vld [vmem:[%s481 + $0x24] sm:%s474]
                %490 = vst [vmem:[%s482 + $0xc] sm:%s474] %v489
                %v491 = vld [vmem:[%s481 + $0x30] sm:%s474]
                %492 = vst [vmem:[%s482 + $0x10] sm:%s474] %v491
                %v493 = vld [vmem:[%s481 + $0x3c] sm:%s474]
                %494 = vst [vmem:[%s482 + $0x14] sm:%s474] %v493
                %v495 = vld [vmem:[%s481 + $0x48] sm:%s474]
                %496 = vst [vmem:[%s482 + $0x18] sm:%s474] %v495
                %v497 = vld [vmem:[%s481 + $0x54] sm:%s474]
                %498 = vst [vmem:[%s482 + $0x1c] sm:%s474] %v497
              $region135: #{_lambda_.6} parent=129 // loop_footer
                %s480 = sadd.s32 1, %s476
              $region136: #{_lambda_.6} parent=129 // loop_footer_branch
                %475 = sbr.rel target = $region132
              $region137: #{_lambda_.6} parent=129 // loop_exit
                _
            $region130: #{_lambda_.6} parent=121 // pred_fallthru
              _
          $region122: #{_lambda_.6} parent=117 // pred_fallthru
            _
          %535 = vnop
        $region118: #{_lambda_.6} parent=31 // pred_fallthru
          _
        // Predicated region
        $region156: #{_lambda_.6} parent=31 // pred_check
          %p536 = pneg %p139
        $region157: #{_lambda_.6} parent=31 // pred_check_branch
          %538 = sbr.rel (%p536) target = $region159
        $region158: #{_lambda_.6} parent=31 // pred_region
          %s539 = sand.u32 %s129, 1
          %s540 = sand.u32 %s129, 1
          %s541 = smul.addr %s540, 32
          %s542 = scalar_lea.vmem [#allocation8], %s541
          %s543 = smul.u32 8, %s22
          %s544 = smul.addr %s543, 3
          %s545 = sadd.s32 2, %s544
          %s546 = smul.addr %s21, 24
          %s547 = sadd.s32 %s545, %s546
          %s548 = smul.addr %s547, 4
          %s549 = scalar_lea.vmem %s3, %s548
          // Predicated region
          $region160: #{_lambda_.6} parent=158 // pred_check
            _
          $region161: #{_lambda_.6} parent=158 // pred_check_branch
            %551 = sbr.rel (0) target = $region163
          $region162: #{_lambda_.6} parent=158 // pred_region
            // Predicated region
            $region164: #{_lambda_.6} parent=162 // pred_check
              _
            $region165: #{_lambda_.6} parent=162 // pred_check_branch
              %553 = sbr.rel target = $region167
            $region166: #{_lambda_.6} parent=162 // pred_region
              // Predicated region
              $region179: #{_lambda_.6} parent=166 // pred_check
                _
              $region180: #{_lambda_.6} parent=166 // pred_check_branch
                %583 = sbr.rel (0) target = $region182
              $region181: #{_lambda_.6} parent=166 // pred_region
                loop: start=0, step=1, limit=1
                $region183: #{_lambda_.6} parent=181 // loop_pre_header
                  _
                $region184: #{_lambda_.6} parent=181 // loop_header
                  %s585 = sphi 0, %s589
                  %p586 = scmp.ge.s32.totalorder %s585, 1
                  %s590 = sphi %s549, %s549
                  %s591 = sphi %s542, %s542
                $region185: #{_lambda_.6} parent=181 // loop_header_branch
                  %588 = sbr.rel (%p586) target = $region189
                $region186: #{_lambda_.6} parent=181 // loop_body
                  _
                $region187: #{_lambda_.6} parent=181 // loop_footer
                  %s589 = sadd.s32 1, %s585
                $region188: #{_lambda_.6} parent=181 // loop_footer_branch
                  %584 = sbr.rel target = $region184
                $region189: #{_lambda_.6} parent=181 // loop_exit
                  _
                %s593 = ssub.s32 16, 1
                loop: start=0, step=1, limit=1
                $region190: #{_lambda_.6} parent=181 // loop_pre_header
                  _
                $region191: #{_lambda_.6} parent=181 // loop_header
                  %s595 = sphi 0, %s599
                  %p596 = scmp.ge.s32.totalorder %s595, 1
                  %s600 = sphi %s549, %s549
                  %s601 = sphi %s542, %s542
                $region192: #{_lambda_.6} parent=181 // loop_header_branch
                  %598 = sbr.rel (%p596) target = $region196
                $region193: #{_lambda_.6} parent=181 // loop_body
                  %v602 = vld [vmem:[%s600] sm:%s593]
                  %603 = vst [vmem:[%s601] sm:%s593] %v602
                  %v604 = vld [vmem:[%s600 + $0xc] sm:%s593]
                  %605 = vst [vmem:[%s601 + $0x4] sm:%s593] %v604
                  %v606 = vld [vmem:[%s600 + $0x18] sm:%s593]
                  %607 = vst [vmem:[%s601 + $0x8] sm:%s593] %v606
                  %v608 = vld [vmem:[%s600 + $0x24] sm:%s593]
                  %609 = vst [vmem:[%s601 + $0xc] sm:%s593] %v608
                  %v610 = vld [vmem:[%s600 + $0x30] sm:%s593]
                  %611 = vst [vmem:[%s601 + $0x10] sm:%s593] %v610
                  %v612 = vld [vmem:[%s600 + $0x3c] sm:%s593]
                  %613 = vst [vmem:[%s601 + $0x14] sm:%s593] %v612
                  %v614 = vld [vmem:[%s600 + $0x48] sm:%s593]
                  %615 = vst [vmem:[%s601 + $0x18] sm:%s593] %v614
                  %v616 = vld [vmem:[%s600 + $0x54] sm:%s593]
                  %617 = vst [vmem:[%s601 + $0x1c] sm:%s593] %v616
                $region194: #{_lambda_.6} parent=181 // loop_footer
                  %s599 = sadd.s32 1, %s595
                $region195: #{_lambda_.6} parent=181 // loop_footer_branch
                  %594 = sbr.rel target = $region191
                $region196: #{_lambda_.6} parent=181 // loop_exit
                  _
              $region182: #{_lambda_.6} parent=166 // pred_fallthru
                _
            $region167: #{_lambda_.6} parent=162 // pred_fallthru
              _
            // Predicated region
            $region168: #{_lambda_.6} parent=162 // pred_check
              _
            $region169: #{_lambda_.6} parent=162 // pred_check_branch
              %555 = sbr.rel (0) target = $region171
            $region170: #{_lambda_.6} parent=162 // pred_region
              %s557 = ssub.s32 16, 1
              loop: start=0, step=1, limit=1
              $region172: #{_lambda_.6} parent=170 // loop_pre_header
                _
              $region173: #{_lambda_.6} parent=170 // loop_header
                %s559 = sphi 0, %s563
                %p560 = scmp.ge.s32.totalorder %s559, 1
                %s564 = sphi %s549, %s549
                %s565 = sphi %s542, %s542
              $region174: #{_lambda_.6} parent=170 // loop_header_branch
                %562 = sbr.rel (%p560) target = $region178
              $region175: #{_lambda_.6} parent=170 // loop_body
                %v566 = vld [vmem:[%s564] sm:%s557]
                %567 = vst [vmem:[%s565] sm:%s557] %v566
                %v568 = vld [vmem:[%s564 + $0xc] sm:%s557]
                %569 = vst [vmem:[%s565 + $0x4] sm:%s557] %v568
                %v570 = vld [vmem:[%s564 + $0x18] sm:%s557]
                %571 = vst [vmem:[%s565 + $0x8] sm:%s557] %v570
                %v572 = vld [vmem:[%s564 + $0x24] sm:%s557]
                %573 = vst [vmem:[%s565 + $0xc] sm:%s557] %v572
                %v574 = vld [vmem:[%s564 + $0x30] sm:%s557]
                %575 = vst [vmem:[%s565 + $0x10] sm:%s557] %v574
                %v576 = vld [vmem:[%s564 + $0x3c] sm:%s557]
                %577 = vst [vmem:[%s565 + $0x14] sm:%s557] %v576
                %v578 = vld [vmem:[%s564 + $0x48] sm:%s557]
                %579 = vst [vmem:[%s565 + $0x18] sm:%s557] %v578
                %v580 = vld [vmem:[%s564 + $0x54] sm:%s557]
                %581 = vst [vmem:[%s565 + $0x1c] sm:%s557] %v580
              $region176: #{_lambda_.6} parent=170 // loop_footer
                %s563 = sadd.s32 1, %s559
              $region177: #{_lambda_.6} parent=170 // loop_footer_branch
                %558 = sbr.rel target = $region173
              $region178: #{_lambda_.6} parent=170 // loop_exit
                _
            $region171: #{_lambda_.6} parent=162 // pred_fallthru
              _
          $region163: #{_lambda_.6} parent=158 // pred_fallthru
            _
          %618 = vnop
        $region159: #{_lambda_.6} parent=31 // pred_fallthru
          _
      $region32: #{_lambda_.6} parent=5 // pred_fallthru
        _
      %p619 = scmp.le.s32.totalorder 1, %s14
      %p620 = scmp.lt.s32.totalorder %s14, 3
      %p621 = pnand %p619, %p620
      %p622 = pneg %p621
      // Predicated region
      $region197: #{_lambda_.6} parent=5 // pred_check
        _
      $region198: #{_lambda_.6} parent=5 // pred_check_branch
        %624 = sbr.rel (%p621) target = $region200
      $region199: #{_lambda_.6} parent=5 // pred_region
        %s625 = ssub.s32 %s14, 1
        %s626 = sand.u32 %s48, 1
        %s627 = sand.u32 %s48, 1
        %s628 = smul.addr %s627, 32
        %s629 = scalar_lea.vmem [#allocation5], %s628
        // Predicated region
        $region201: #{_lambda_.6} parent=199 // pred_check
          %p630 = pneg %p61
        $region202: #{_lambda_.6} parent=199 // pred_check_branch
          %632 = sbr.rel (%p630) target = $region204
        $region203: #{_lambda_.6} parent=199 // pred_region
          _
        $region204: #{_lambda_.6} parent=199 // pred_fallthru
          _
        %s633 = sand.u32 %s76, 1
        %s634 = sand.u32 %s76, 1
        %s635 = smul.addr %s634, 32
        %s636 = scalar_lea.vmem [#allocation6], %s635
        // Predicated region
        $region205: #{_lambda_.6} parent=199 // pred_check
          %p637 = pneg %p89
        $region206: #{_lambda_.6} parent=199 // pred_check_branch
          %639 = sbr.rel (%p637) target = $region208
        $region207: #{_lambda_.6} parent=199 // pred_region
          _
        $region208: #{_lambda_.6} parent=199 // pred_fallthru
          _
        %s640 = sand.u32 %s104, 1
        %s641 = sand.u32 %s104, 1
        %s642 = smul.addr %s641, 32
        %s643 = scalar_lea.vmem [#allocation7], %s642
        // Predicated region
        $region209: #{_lambda_.6} parent=199 // pred_check
          %p644 = pneg %p117
        $region210: #{_lambda_.6} parent=199 // pred_check_branch
          %646 = sbr.rel (%p644) target = $region212
        $region211: #{_lambda_.6} parent=199 // pred_region
          _
        $region212: #{_lambda_.6} parent=199 // pred_fallthru
          _
        %s647 = sand.u32 %s132, 1
        %s648 = sand.u32 %s132, 1
        %s649 = smul.addr %s648, 32
        %s650 = scalar_lea.vmem [#allocation8], %s649
        // Predicated region
        $region213: #{_lambda_.6} parent=199 // pred_check
          %p651 = pneg %p145
        $region214: #{_lambda_.6} parent=199 // pred_check_branch
          %653 = sbr.rel (%p651) target = $region216
        $region215: #{_lambda_.6} parent=199 // pred_region
          _
        $region216: #{_lambda_.6} parent=199 // pred_fallthru
          _
        %s654 = sand.u32 %s48, 1
        %s655 = sand.u32 %s48, 1
        %s656 = smul.addr %s655, 32
        %s657 = scalar_lea.vmem [#allocation5], %s656
        %p658 = pneg %p61
        %p659 = pneg %p58
        %s660 = sand.u32 %s76, 1
        %s661 = sand.u32 %s76, 1
        %s662 = smul.addr %s661, 32
        %s663 = scalar_lea.vmem [#allocation6], %s662
        %p664 = pneg %p89
        %p665 = pneg %p86
        %s666 = sand.u32 %s104, 1
        %s667 = sand.u32 %s104, 1
        %s668 = smul.addr %s667, 32
        %s669 = scalar_lea.vmem [#allocation7], %s668
        %p670 = pneg %p117
        %p671 = pneg %p114
        %s672 = sand.u32 %s132, 1
        %s673 = sand.u32 %s132, 1
        %s674 = smul.addr %s673, 32
        %s675 = scalar_lea.vmem [#allocation8], %s674
        %p676 = pneg %p145
        %p677 = pneg %p142
        %p678 = pneg %p166
        %p679 = pneg %p163
        %p680 = pneg %p187
        %p681 = pneg %p184
        %p682 = pneg %p208
        %p683 = pneg %p205
        %p684 = pneg %p229
        %p685 = pneg %p226
        %p686 = pneg %p257
        %p687 = pneg %p254
        %s688 = smul.u32 8, %s25
        %p689 = scmp.lt.s32.totalorder %s24, 1
        %s690 = scalar_select %p689, %s24, 1
        %p691 = scmp.lt.s32.totalorder %s688, 7
        %s692 = scalar_select %p691, %s688, 7
        %s693 = smul.addr %s690, 8
        %s694 = sadd.s32 %s692, %s693
        %s695 = smul.addr %s694, 4
        %s696 = scalar_lea.vmem %s8, %s695
        %s697 = smul.u32 8, %s25
        %s698 = smul.u32 8, %s26
        %s699 = smul.u32 8, %s26
        %s700 = smul.u32 8, %s25
        %s701 = smul.u32 8, %s25
        %p702 = scmp.lt.s32.totalorder %s24, 1
        %s703 = scalar_select %p702, %s24, 1
        %p704 = scmp.lt.s32.totalorder %s701, 7
        %s705 = scalar_select %p704, %s701, 7
        %s706 = smul.addr %s703, 8
        %s707 = sadd.s32 %s705, %s706
        %s708 = smul.addr %s707, 4
        %s709 = scalar_lea.vmem %s8, %s708
        %s710 = smul.u32 8, %s25
        %p712 = scmp.eq.s32.totalorder %s26, 0
        // Predicated region
        $region217: #{_lambda_.6} parent=199 // pred_check
          %p713 = pneg %p712
        $region218: #{_lambda_.6} parent=199 // pred_check_branch
          %715 = sbr.rel (%p713) target = $region220
        $region219: #{_lambda_.6} parent=199 // pred_region
          %vm716 = vcmask 7168
          %717 = vst.msk [vmem:[#allocation2] sm:$0xff] %vm716, -inf
          %718 = vst.msk [vmem:[#allocation2 + $0x8] sm:$0xff] %vm716, -inf
          %719 = vst.msk [vmem:[#allocation2 + $0x10] sm:$0xff] %vm716, -inf
          %720 = vst.msk [vmem:[#allocation2 + $0x18] sm:$0xff] %vm716, -inf
          %721 = vst.msk [vmem:[#allocation2 + $0x20] sm:$0xff] %vm716, -inf
          %722 = vst.msk [vmem:[#allocation2 + $0x28] sm:$0xff] %vm716, -inf
          %723 = vst.msk [vmem:[#allocation2 + $0x30] sm:$0xff] %vm716, -inf
          %724 = vst.msk [vmem:[#allocation2 + $0x38] sm:$0xff] %vm716, -inf
          %725 = vst.msk [vmem:[#allocation3] sm:$0xff] %vm716, 0.0
          %726 = vst.msk [vmem:[#allocation3 + $0x8] sm:$0xff] %vm716, 0.0
          %727 = vst.msk [vmem:[#allocation3 + $0x10] sm:$0xff] %vm716, 0.0
          %728 = vst.msk [vmem:[#allocation3 + $0x18] sm:$0xff] %vm716, 0.0
          %729 = vst.msk [vmem:[#allocation3 + $0x20] sm:$0xff] %vm716, 0.0
          %730 = vst.msk [vmem:[#allocation3 + $0x28] sm:$0xff] %vm716, 0.0
          %731 = vst.msk [vmem:[#allocation3 + $0x30] sm:$0xff] %vm716, 0.0
          %732 = vst.msk [vmem:[#allocation3 + $0x38] sm:$0xff] %vm716, 0.0
          %733 = vst [vmem:[#allocation4] sm:$0xff] 0.0
          %734 = vst [vmem:[#allocation4 + $0x8] sm:$0xff] 0.0
          %735 = vst [vmem:[#allocation4 + $0x10] sm:$0xff] 0.0
          %736 = vst [vmem:[#allocation4 + $0x18] sm:$0xff] 0.0
          %737 = vst [vmem:[#allocation4 + $0x20] sm:$0xff] 0.0
          %738 = vst [vmem:[#allocation4 + $0x28] sm:$0xff] 0.0
          %739 = vst [vmem:[#allocation4 + $0x30] sm:$0xff] 0.0
          %740 = vst [vmem:[#allocation4 + $0x38] sm:$0xff] 0.0
        $region220: #{_lambda_.6} parent=199 // pred_fallthru
          _
        %v741 = vld [vmem:[%s629] sm:$0xf]
        %v742 = vld [vmem:[%s629 + $0x4] sm:$0xf]
        %v743 = vld [vmem:[%s629 + $0x8] sm:$0xf]
        %v744 = vld [vmem:[%s629 + $0xc] sm:$0xf]
        %v745 = vld [vmem:[%s629 + $0x10] sm:$0xf]
        %v746 = vld [vmem:[%s629 + $0x14] sm:$0xf]
        %v747 = vld [vmem:[%s629 + $0x18] sm:$0xf]
        %v748 = vld [vmem:[%s629 + $0x1c] sm:$0xf]
        %v749 = vld [vmem:[%s636] sm:$0xf]
        %v750 = vld [vmem:[%s636 + $0x4] sm:$0xf]
        %v751 = vld [vmem:[%s636 + $0x8] sm:$0xf]
        %v752 = vld [vmem:[%s636 + $0xc] sm:$0xf]
        %v753 = vld [vmem:[%s636 + $0x10] sm:$0xf]
        %v754 = vld [vmem:[%s636 + $0x14] sm:$0xf]
        %v755 = vld [vmem:[%s636 + $0x18] sm:$0xf]
        %v756 = vld [vmem:[%s636 + $0x1c] sm:$0xf]
        %v757 = vld [vmem:[%s643] sm:$0xf]
        %v758 = vld [vmem:[%s643 + $0x4] sm:$0xf]
        %v759 = vld [vmem:[%s643 + $0x8] sm:$0xf]
        %v760 = vld [vmem:[%s643 + $0xc] sm:$0xf]
        %v761 = vld [vmem:[%s643 + $0x10] sm:$0xf]
        %v762 = vld [vmem:[%s643 + $0x14] sm:$0xf]
        %v763 = vld [vmem:[%s643 + $0x18] sm:$0xf]
        %v764 = vld [vmem:[%s643 + $0x1c] sm:$0xf]
        %v773 = vunpack.c.l.b16 %v741
        %v774 = vunpack.c.l.b16 %v742
        %v775 = vunpack.c.l.b16 %v743
        %v776 = vunpack.c.l.b16 %v744
        %v777 = vunpack.c.l.b16 %v745
        %v778 = vunpack.c.l.b16 %v746
        %v779 = vunpack.c.l.b16 %v747
        %v780 = vunpack.c.l.b16 %v748
        %v781 = vpack.c.b16 %v774, %v773
        %v782 = vpack.c.b16 %v776, %v775
        %v783 = vpack.c.b16 %v778, %v777
        %v784 = vpack.c.b16 %v780, %v779
        %v797 = vunpack.c.l.b16 %v749
        %v798 = vunpack.c.l.b16 %v750
        %v799 = vunpack.c.l.b16 %v751
        %v800 = vunpack.c.l.b16 %v752
        %v801 = vunpack.c.l.b16 %v753
        %v802 = vunpack.c.l.b16 %v754
        %v803 = vunpack.c.l.b16 %v755
        %v804 = vunpack.c.l.b16 %v756
        %v805 = vpack.c.b16 %v798, %v797
        %v806 = vpack.c.b16 %v800, %v799
        %v807 = vpack.c.b16 %v802, %v801
        %v808 = vpack.c.b16 %v804, %v803
        %813 = vmatprep.subr.bf16.mxu0 0
        %814 = vmatpush1.bf16.xpose.msra.mxu0 0
        %815 = vmatprep.subr.bf16.mxu0 0
        %816 = vmatpush1.bf16.xpose.msra.mxu0 0
        %817 = vmatprep.subr.bf16.mxu0 0
        %818 = vmatpush1.bf16.xpose.msra.mxu0 0
        %819 = vmatprep.subr.bf16.mxu0 0
        %820 = vmatpush1.bf16.xpose.msra.mxu0 0
        %821 = vmatprep.subr.bf16.mxu0 0
        %822 = vmatpush1.bf16.xpose.msra.mxu0 %v808
        %823 = vmatprep.subr.bf16.mxu0 0
        %824 = vmatpush1.bf16.xpose.msra.mxu0 %v807
        %825 = vmatprep.subr.bf16.mxu0 0
        %826 = vmatpush1.bf16.xpose.msra.mxu0 %v806
        %827 = vmatprep.subr.bf16.mxu0 0
        %828 = vmatpush1.bf16.xpose.msra.mxu0 %v805
        %829 = vmatprep.subr.bf16.mxu0 0
        %830 = vmatpush2.bf16.xpose.msra.mxu0 0
        %831 = vmatprep.subr.bf16.mxu0 0
        %832 = vmatpush2.bf16.xpose.msra.mxu0 0
        %833 = vmatprep.subr.bf16.mxu0 0
        %834 = vmatpush2.bf16.xpose.msra.mxu0 0
        %835 = vmatprep.subr.bf16.mxu0 0
        %836 = vmatpush2.bf16.xpose.msra.mxu0 0
        %837 = vmatprep.subr.bf16.mxu0 0
        %838 = vmatpush2.bf16.xpose.msra.mxu0 0
        %839 = vmatprep.subr.bf16.mxu0 0
        %840 = vmatpush2.bf16.xpose.msra.mxu0 0
        %841 = vmatprep.subr.bf16.mxu0 0
        %842 = vmatpush2.bf16.xpose.msra.mxu0 0
        %843 = vmatprep.subr.bf16.mxu0 0
        %844 = vmatpush2.bf16.xpose.msra.mxu0 0
        %845 = vmatprep.mubr.bf16.mxu0 0
        %846 = vmatmul.mubr.bf16.gmra.mxu0 %v781
        %v847 = vpop.f32.mrf.mxu0
        %v848 = vadd.f32 0.0, %v847
        %v849 = vpop.f32.mrf.mxu0
        %v850 = vpop.f32.mrf.mxu0
        %v851 = vadd.f32 0.0, %v850
        %v852 = vpop.f32.mrf.mxu0
        %853 = vmatprep.mubr.bf16.mxu0 0
        %854 = vmatmul.mubr.bf16.gmra.mxu0 %v782
        %v855 = vpop.f32.mrf.mxu0
        %v856 = vadd.f32 0.0, %v855
        %v857 = vpop.f32.mrf.mxu0
        %v858 = vpop.f32.mrf.mxu0
        %v859 = vadd.f32 0.0, %v858
        %v860 = vpop.f32.mrf.mxu0
        %861 = vmatprep.mubr.bf16.mxu0 0
        %862 = vmatmul.mubr.bf16.gmra.mxu0 %v783
        %v863 = vpop.f32.mrf.mxu0
        %v864 = vadd.f32 0.0, %v863
        %v865 = vpop.f32.mrf.mxu0
        %v866 = vpop.f32.mrf.mxu0
        %v867 = vadd.f32 0.0, %v866
        %v868 = vpop.f32.mrf.mxu0
        %869 = vmatprep.mubr.bf16.mxu0 0
        %870 = vmatmul.mubr.bf16.gmra.mxu0 %v784
        %v871 = vpop.f32.mrf.mxu0
        %v872 = vadd.f32 0.0, %v871
        %v873 = vpop.f32.mrf.mxu0
        %v874 = vpop.f32.mrf.mxu0
        %v875 = vadd.f32 0.0, %v874
        %v876 = vpop.f32.mrf.mxu0
        %877 = vdwg.mxu0
        %v878 = vld [vmem:[#allocation2] sm:$0xff]
        %v879 = vld [vmem:[#allocation2 + $0x8] sm:$0xff]
        %v880 = vld [vmem:[#allocation2 + $0x10] sm:$0xff]
        %v881 = vld [vmem:[#allocation2 + $0x18] sm:$0xff]
        %v882 = vld [vmem:[#allocation2 + $0x20] sm:$0xff]
        %v883 = vld [vmem:[#allocation2 + $0x28] sm:$0xff]
        %v884 = vld [vmem:[#allocation2 + $0x30] sm:$0xff]
        %v885 = vld [vmem:[#allocation2 + $0x38] sm:$0xff]
        %vm886 = vcmask 523264
        %v887 = vsel %vm886, %v848, -inf
        %888 = vmax.xlane.f32.xlu0 %v887
        %v889 = vpop.xlane.xlu0 %888
        %v890 = vsel %vm886, %v851, -inf
        %891 = vmax.xlane.f32.xlu0 %v890
        %v892 = vpop.xlane.xlu0 %891
        %v893 = vsel %vm886, %v856, -inf
        %894 = vmax.xlane.f32.xlu0 %v893
        %v895 = vpop.xlane.xlu0 %894
        %v896 = vsel %vm886, %v859, -inf
        %897 = vmax.xlane.f32.xlu0 %v896
        %v898 = vpop.xlane.xlu0 %897
        %v899 = vsel %vm886, %v864, -inf
        %900 = vmax.xlane.f32.xlu0 %v899
        %v901 = vpop.xlane.xlu0 %900
        %v902 = vsel %vm886, %v867, -inf
        %903 = vmax.xlane.f32.xlu0 %v902
        %v904 = vpop.xlane.xlu0 %903
        %v905 = vsel %vm886, %v872, -inf
        %906 = vmax.xlane.f32.xlu0 %v905
        %v907 = vpop.xlane.xlu0 %906
        %v908 = vsel %vm886, %v875, -inf
        %909 = vmax.xlane.f32.xlu0 %v908
        %v910 = vpop.xlane.xlu0 %909
        %v911 = vmax.f32 %v878, %v889
        %v912 = vmax.f32 %v879, %v892
        %v913 = vmax.f32 %v880, %v895
        %v914 = vmax.f32 %v881, %v898
        %v915 = vmax.f32 %v882, %v901
        %v916 = vmax.f32 %v883, %v904
        %v917 = vmax.f32 %v884, %v907
        %v918 = vmax.f32 %v885, %v910
        %v919 = vsub.f32 %v878, %v911
        %v920 = vsub.f32 %v879, %v912
        %v921 = vsub.f32 %v880, %v913
        %v922 = vsub.f32 %v881, %v914
        %v923 = vsub.f32 %v882, %v915
        %v924 = vsub.f32 %v883, %v916
        %v925 = vsub.f32 %v884, %v917
        %v926 = vsub.f32 %v885, %v918
        %v927 = vmul.f32 %v919, 1.442695
        %v928 = vpow.pop %v927
        %v929 = vmul.f32 %v920, 1.442695
        %v930 = vpow.pop %v929
        %v931 = vmul.f32 %v921, 1.442695
        %v932 = vpow.pop %v931
        %v933 = vmul.f32 %v922, 1.442695
        %v934 = vpow.pop %v933
        %v935 = vmul.f32 %v923, 1.442695
        %v936 = vpow.pop %v935
        %v937 = vmul.f32 %v924, 1.442695
        %v938 = vpow.pop %v937
        %v939 = vmul.f32 %v925, 1.442695
        %v940 = vpow.pop %v939
        %v941 = vmul.f32 %v926, 1.442695
        %v942 = vpow.pop %v941
        %944 = vset.pattern.permute.xlu0 0
        %945 = vperm.xlu0 %944, %v911
        %v946 = vpop.permute.xlu0 %945
        %949 = vset.pattern.permute.xlu0 0
        %950 = vperm.xlu0 %949, %v912
        %v951 = vpop.permute.xlu0 %950
        %954 = vset.pattern.permute.xlu0 0
        %955 = vperm.xlu0 %954, %v913
        %v956 = vpop.permute.xlu0 %955
        %959 = vset.pattern.permute.xlu0 0
        %960 = vperm.xlu0 %959, %v914
        %v961 = vpop.permute.xlu0 %960
        %964 = vset.pattern.permute.xlu0 0
        %965 = vperm.xlu0 %964, %v915
        %v966 = vpop.permute.xlu0 %965
        %969 = vset.pattern.permute.xlu0 0
        %970 = vperm.xlu0 %969, %v916
        %v971 = vpop.permute.xlu0 %970
        %974 = vset.pattern.permute.xlu0 0
        %975 = vperm.xlu0 %974, %v917
        %v976 = vpop.permute.xlu0 %975
        %979 = vset.pattern.permute.xlu0 0
        %980 = vperm.xlu0 %979, %v918
        %v981 = vpop.permute.xlu0 %980
        %v983 = vsub.f32 %v848, %v946
        %v984 = vsub.f32 %v851, %v951
        %v985 = vsub.f32 %v856, %v956
        %v986 = vsub.f32 %v859, %v961
        %v987 = vsub.f32 %v864, %v966
        %v988 = vsub.f32 %v867, %v971
        %v989 = vsub.f32 %v872, %v976
        %v990 = vsub.f32 %v875, %v981
        %v991 = vmul.f32 %v983, 1.442695
        %v992 = vpow.pop %v991
        %v993 = vmul.f32 %v984, 1.442695
        %v994 = vpow.pop %v993
        %v995 = vmul.f32 %v985, 1.442695
        %v996 = vpow.pop %v995
        %v997 = vmul.f32 %v986, 1.442695
        %v998 = vpow.pop %v997
        %v999 = vmul.f32 %v987, 1.442695
        %v1000 = vpow.pop %v999
        %v1001 = vmul.f32 %v988, 1.442695
        %v1002 = vpow.pop %v1001
        %v1003 = vmul.f32 %v989, 1.442695
        %v1004 = vpow.pop %v1003
        %v1005 = vmul.f32 %v990, 1.442695
        %v1006 = vpow.pop %v1005
        %v1007 = vld [vmem:[#allocation3] sm:$0xff]
        %v1008 = vld [vmem:[#allocation3 + $0x8] sm:$0xff]
        %v1009 = vld [vmem:[#allocation3 + $0x10] sm:$0xff]
        %v1010 = vld [vmem:[#allocation3 + $0x18] sm:$0xff]
        %v1011 = vld [vmem:[#allocation3 + $0x20] sm:$0xff]
        %v1012 = vld [vmem:[#allocation3 + $0x28] sm:$0xff]
        %v1013 = vld [vmem:[#allocation3 + $0x30] sm:$0xff]
        %v1014 = vld [vmem:[#allocation3 + $0x38] sm:$0xff]
        %v1015 = vmul.f32 %v928, %v1007
        %v1016 = vmul.f32 %v930, %v1008
        %v1017 = vmul.f32 %v932, %v1009
        %v1018 = vmul.f32 %v934, %v1010
        %v1019 = vmul.f32 %v936, %v1011
        %v1020 = vmul.f32 %v938, %v1012
        %v1021 = vmul.f32 %v940, %v1013
        %v1022 = vmul.f32 %v942, %v1014
        %v1023 = vsel %vm886, %v992, 0.0
        %1024 = vadd.xlane.f32.xlu0 %v1023
        %v1025 = vpop.xlane.xlu0 %1024
        %v1026 = vsel %vm886, %v994, 0.0
        %1027 = vadd.xlane.f32.xlu0 %v1026
        %v1028 = vpop.xlane.xlu0 %1027
        %v1029 = vsel %vm886, %v996, 0.0
        %1030 = vadd.xlane.f32.xlu0 %v1029
        %v1031 = vpop.xlane.xlu0 %1030
        %v1032 = vsel %vm886, %v998, 0.0
        %1033 = vadd.xlane.f32.xlu0 %v1032
        %v1034 = vpop.xlane.xlu0 %1033
        %v1035 = vsel %vm886, %v1000, 0.0
        %1036 = vadd.xlane.f32.xlu0 %v1035
        %v1037 = vpop.xlane.xlu0 %1036
        %v1038 = vsel %vm886, %v1002, 0.0
        %1039 = vadd.xlane.f32.xlu0 %v1038
        %v1040 = vpop.xlane.xlu0 %1039
        %v1041 = vsel %vm886, %v1004, 0.0
        %1042 = vadd.xlane.f32.xlu0 %v1041
        %v1043 = vpop.xlane.xlu0 %1042
        %v1044 = vsel %vm886, %v1006, 0.0
        %1045 = vadd.xlane.f32.xlu0 %v1044
        %v1046 = vpop.xlane.xlu0 %1045
        %v1047 = vadd.f32 %v1015, %v1025
        %v1048 = vadd.f32 %v1016, %v1028
        %v1049 = vadd.f32 %v1017, %v1031
        %v1050 = vadd.f32 %v1018, %v1034
        %v1051 = vadd.f32 %v1019, %v1037
        %v1052 = vadd.f32 %v1020, %v1040
        %v1053 = vadd.f32 %v1021, %v1043
        %v1054 = vadd.f32 %v1022, %v1046
        %vm1055 = vcmask 7168
        %1056 = vst.msk [vmem:[#allocation3] sm:$0xff] %vm1055, %v1047
        %1057 = vst.msk [vmem:[#allocation3 + $0x8] sm:$0xff] %vm1055, %v1048
        %1058 = vst.msk [vmem:[#allocation3 + $0x10] sm:$0xff] %vm1055, %v1049
        %1059 = vst.msk [vmem:[#allocation3 + $0x18] sm:$0xff] %vm1055, %v1050
        %1060 = vst.msk [vmem:[#allocation3 + $0x20] sm:$0xff] %vm1055, %v1051
        %1061 = vst.msk [vmem:[#allocation3 + $0x28] sm:$0xff] %vm1055, %v1052
        %1062 = vst.msk [vmem:[#allocation3 + $0x30] sm:$0xff] %vm1055, %v1053
        %1063 = vst.msk [vmem:[#allocation3 + $0x38] sm:$0xff] %vm1055, %v1054
        %v1064 = vld [vmem:[#allocation4] sm:$0xff]
        %v1065 = vld [vmem:[#allocation4 + $0x8] sm:$0xff]
        %v1066 = vld [vmem:[#allocation4 + $0x10] sm:$0xff]
        %v1067 = vld [vmem:[#allocation4 + $0x18] sm:$0xff]
        %v1068 = vld [vmem:[#allocation4 + $0x20] sm:$0xff]
        %v1069 = vld [vmem:[#allocation4 + $0x28] sm:$0xff]
        %v1070 = vld [vmem:[#allocation4 + $0x30] sm:$0xff]
        %v1071 = vld [vmem:[#allocation4 + $0x38] sm:$0xff]
        %1073 = vset.pattern.permute.xlu0 0
        %1074 = vperm.xlu0 %1073, %v928
        %v1075 = vpop.permute.xlu0 %1074
        %1078 = vset.pattern.permute.xlu0 0
        %1079 = vperm.xlu0 %1078, %v930
        %v1080 = vpop.permute.xlu0 %1079
        %1083 = vset.pattern.permute.xlu0 0
        %1084 = vperm.xlu0 %1083, %v932
        %v1085 = vpop.permute.xlu0 %1084
        %1088 = vset.pattern.permute.xlu0 0
        %1089 = vperm.xlu0 %1088, %v934
        %v1090 = vpop.permute.xlu0 %1089
        %1093 = vset.pattern.permute.xlu0 0
        %1094 = vperm.xlu0 %1093, %v936
        %v1095 = vpop.permute.xlu0 %1094
        %1098 = vset.pattern.permute.xlu0 0
        %1099 = vperm.xlu0 %1098, %v938
        %v1100 = vpop.permute.xlu0 %1099
        %1103 = vset.pattern.permute.xlu0 0
        %1104 = vperm.xlu0 %1103, %v940
        %v1105 = vpop.permute.xlu0 %1104
        %1108 = vset.pattern.permute.xlu0 0
        %1109 = vperm.xlu0 %1108, %v942
        %v1110 = vpop.permute.xlu0 %1109
        %v1112 = vmul.f32 %v1075, %v1064
        %v1113 = vmul.f32 %v1080, %v1065
        %v1114 = vmul.f32 %v1085, %v1066
        %v1115 = vmul.f32 %v1090, %v1067
        %v1116 = vmul.f32 %v1095, %v1068
        %v1117 = vmul.f32 %v1100, %v1069
        %v1118 = vmul.f32 %v1105, %v1070
        %v1119 = vmul.f32 %v1110, %v1071
        %v1120 = vpack.c.bf16 %v994, %v992
        %v1121 = vpack.c.bf16 %v998, %v996
        %v1122 = vpack.c.bf16 %v1002, %v1000
        %v1123 = vpack.c.bf16 %v1006, %v1004
        %v1132 = vunpack.c.l.b16 %v757
        %v1133 = vunpack.c.l.b16 %v758
        %v1134 = vunpack.c.l.b16 %v759
        %v1135 = vunpack.c.l.b16 %v760
        %v1136 = vunpack.c.l.b16 %v761
        %v1137 = vunpack.c.l.b16 %v762
        %v1138 = vunpack.c.l.b16 %v763
        %v1139 = vunpack.c.l.b16 %v764
        %v1140 = vpack.c.b16 %v1133, %v1132
        %v1141 = vpack.c.b16 %v1135, %v1134
        %v1142 = vpack.c.b16 %v1137, %v1136
        %v1143 = vpack.c.b16 %v1139, %v1138
        %v1149 = vsel %vm886, %v1120, 0
        %v1152 = vsel %vm886, %v1121, 0
        %v1155 = vsel %vm886, %v1122, 0
        %v1158 = vsel %vm886, %v1123, 0
        %1160 = vmatprep.subr.bf16.mxu0 0
        %1161 = vmatpush1.bf16.msra.mxu0 0
        %1162 = vmatprep.subr.bf16.mxu0 0
        %1163 = vmatpush1.bf16.msra.mxu0 0
        %1164 = vmatprep.subr.bf16.mxu0 0
        %1165 = vmatpush1.bf16.msra.mxu0 0
        %1166 = vmatprep.subr.bf16.mxu0 0
        %1167 = vmatpush1.bf16.msra.mxu0 0
        %1168 = vmatprep.subr.bf16.mxu0 0
        %1169 = vmatpush1.bf16.msra.mxu0 %v1143
        %1170 = vmatprep.subr.bf16.mxu0 0
        %1171 = vmatpush1.bf16.msra.mxu0 %v1142
        %1172 = vmatprep.subr.bf16.mxu0 0
        %1173 = vmatpush1.bf16.msra.mxu0 %v1141
        %1174 = vmatprep.subr.bf16.mxu0 0
        %1175 = vmatpush1.bf16.msra.mxu0 %v1140
        %1176 = vmatprep.subr.bf16.mxu0 0
        %1177 = vmatpush2.bf16.msra.mxu0 0
        %1178 = vmatprep.subr.bf16.mxu0 0
        %1179 = vmatpush2.bf16.msra.mxu0 0
        %1180 = vmatprep.subr.bf16.mxu0 0
        %1181 = vmatpush2.bf16.msra.mxu0 0
        %1182 = vmatprep.subr.bf16.mxu0 0
        %1183 = vmatpush2.bf16.msra.mxu0 0
        %1184 = vmatprep.subr.bf16.mxu0 0
        %1185 = vmatpush2.bf16.msra.mxu0 0
        %1186 = vmatprep.subr.bf16.mxu0 0
        %1187 = vmatpush2.bf16.msra.mxu0 0
        %1188 = vmatprep.subr.bf16.mxu0 0
        %1189 = vmatpush2.bf16.msra.mxu0 0
        %1190 = vmatprep.subr.bf16.mxu0 0
        %1191 = vmatpush2.bf16.msra.mxu0 0
        %1192 = vmatprep.mubr.bf16.mxu0 0
        %1193 = vmatmul.mubr.bf16.gmra.mxu0 %v1149
        %v1194 = vpop.f32.mrf.mxu0
        %v1195 = vadd.f32 0.0, %v1194
        %v1196 = vpop.f32.mrf.mxu0
        %v1197 = vpop.f32.mrf.mxu0
        %v1198 = vadd.f32 0.0, %v1197
        %v1199 = vpop.f32.mrf.mxu0
        %1200 = vmatprep.mubr.bf16.mxu0 0
        %1201 = vmatmul.mubr.bf16.gmra.mxu0 %v1152
        %v1202 = vpop.f32.mrf.mxu0
        %v1203 = vadd.f32 0.0, %v1202
        %v1204 = vpop.f32.mrf.mxu0
        %v1205 = vpop.f32.mrf.mxu0
        %v1206 = vadd.f32 0.0, %v1205
        %v1207 = vpop.f32.mrf.mxu0
        %1208 = vmatprep.mubr.bf16.mxu0 0
        %1209 = vmatmul.mubr.bf16.gmra.mxu0 %v1155
        %v1210 = vpop.f32.mrf.mxu0
        %v1211 = vadd.f32 0.0, %v1210
        %v1212 = vpop.f32.mrf.mxu0
        %v1213 = vpop.f32.mrf.mxu0
        %v1214 = vadd.f32 0.0, %v1213
        %v1215 = vpop.f32.mrf.mxu0
        %1216 = vmatprep.mubr.bf16.mxu0 0
        %1217 = vmatmul.mubr.bf16.gmra.mxu0 %v1158
        %v1218 = vpop.f32.mrf.mxu0
        %v1219 = vadd.f32 0.0, %v1218
        %v1220 = vpop.f32.mrf.mxu0
        %v1221 = vpop.f32.mrf.mxu0
        %v1222 = vadd.f32 0.0, %v1221
        %v1223 = vpop.f32.mrf.mxu0
        %1224 = vdwg.mxu0
        %v1225 = vadd.f32 %v1112, %v1195
        %v1226 = vadd.f32 %v1113, %v1198
        %v1227 = vadd.f32 %v1114, %v1203
        %v1228 = vadd.f32 %v1115, %v1206
        %v1229 = vadd.f32 %v1116, %v1211
        %v1230 = vadd.f32 %v1117, %v1214
        %v1231 = vadd.f32 %v1118, %v1219
        %v1232 = vadd.f32 %v1119, %v1222
        %1233 = vst [vmem:[#allocation4] sm:$0xff] %v1225
        %1234 = vst [vmem:[#allocation4 + $0x8] sm:$0xff] %v1226
        %1235 = vst [vmem:[#allocation4 + $0x10] sm:$0xff] %v1227
        %1236 = vst [vmem:[#allocation4 + $0x18] sm:$0xff] %v1228
        %1237 = vst [vmem:[#allocation4 + $0x20] sm:$0xff] %v1229
        %1238 = vst [vmem:[#allocation4 + $0x28] sm:$0xff] %v1230
        %1239 = vst [vmem:[#allocation4 + $0x30] sm:$0xff] %v1231
        %1240 = vst [vmem:[#allocation4 + $0x38] sm:$0xff] %v1232
        %1241 = vst.msk [vmem:[#allocation2] sm:$0xff] %vm1055, %v911
        %1242 = vst.msk [vmem:[#allocation2 + $0x8] sm:$0xff] %vm1055, %v912
        %1243 = vst.msk [vmem:[#allocation2 + $0x10] sm:$0xff] %vm1055, %v913
        %1244 = vst.msk [vmem:[#allocation2 + $0x18] sm:$0xff] %vm1055, %v914
        %1245 = vst.msk [vmem:[#allocation2 + $0x20] sm:$0xff] %vm1055, %v915
        %1246 = vst.msk [vmem:[#allocation2 + $0x28] sm:$0xff] %vm1055, %v916
        %1247 = vst.msk [vmem:[#allocation2 + $0x30] sm:$0xff] %vm1055, %v917
        %1248 = vst.msk [vmem:[#allocation2 + $0x38] sm:$0xff] %vm1055, %v918
        // Predicated region
        $region221: #{_lambda_.6} parent=199 // pred_check
          %p1249 = pneg %p712
        $region222: #{_lambda_.6} parent=199 // pred_check_branch
          %1251 = sbr.rel (%p1249) target = $region224
        $region223: #{_lambda_.6} parent=199 // pred_region
          %v1252 = vld [vmem:[#allocation4] sm:$0xff]
          %v1253 = vld [vmem:[#allocation4 + $0x8] sm:$0xff]
          %v1254 = vld [vmem:[#allocation4 + $0x10] sm:$0xff]
          %v1255 = vld [vmem:[#allocation4 + $0x18] sm:$0xff]
          %v1256 = vld [vmem:[#allocation4 + $0x20] sm:$0xff]
          %v1257 = vld [vmem:[#allocation4 + $0x28] sm:$0xff]
          %v1258 = vld [vmem:[#allocation4 + $0x30] sm:$0xff]
          %v1259 = vld [vmem:[#allocation4 + $0x38] sm:$0xff]
          %v1260 = vld [vmem:[#allocation3] sm:$0xff]
          %v1261 = vld [vmem:[#allocation3 + $0x8] sm:$0xff]
          %v1262 = vld [vmem:[#allocation3 + $0x10] sm:$0xff]
          %v1263 = vld [vmem:[#allocation3 + $0x18] sm:$0xff]
          %v1264 = vld [vmem:[#allocation3 + $0x20] sm:$0xff]
          %v1265 = vld [vmem:[#allocation3 + $0x28] sm:$0xff]
          %v1266 = vld [vmem:[#allocation3 + $0x30] sm:$0xff]
          %v1267 = vld [vmem:[#allocation3 + $0x38] sm:$0xff]
          %v1268 = vrcp.pop %v1260
          %v1269 = vrcp.pop %v1261
          %v1270 = vrcp.pop %v1262
          %v1271 = vrcp.pop %v1263
          %v1272 = vrcp.pop %v1264
          %v1273 = vrcp.pop %v1265
          %v1274 = vrcp.pop %v1266
          %v1275 = vrcp.pop %v1267
          %1277 = vset.pattern.permute.xlu0 0
          %1278 = vperm.xlu0 %1277, %v1268
          %v1279 = vpop.permute.xlu0 %1278
          %1282 = vset.pattern.permute.xlu0 0
          %1283 = vperm.xlu0 %1282, %v1269
          %v1284 = vpop.permute.xlu0 %1283
          %1287 = vset.pattern.permute.xlu0 0
          %1288 = vperm.xlu0 %1287, %v1270
          %v1289 = vpop.permute.xlu0 %1288
          %1292 = vset.pattern.permute.xlu0 0
          %1293 = vperm.xlu0 %1292, %v1271
          %v1294 = vpop.permute.xlu0 %1293
          %1297 = vset.pattern.permute.xlu0 0
          %1298 = vperm.xlu0 %1297, %v1272
          %v1299 = vpop.permute.xlu0 %1298
          %1302 = vset.pattern.permute.xlu0 0
          %1303 = vperm.xlu0 %1302, %v1273
          %v1304 = vpop.permute.xlu0 %1303
          %1307 = vset.pattern.permute.xlu0 0
          %1308 = vperm.xlu0 %1307, %v1274
          %v1309 = vpop.permute.xlu0 %1308
          %1312 = vset.pattern.permute.xlu0 0
          %1313 = vperm.xlu0 %1312, %v1275
          %v1314 = vpop.permute.xlu0 %1313
          %v1316 = vmul.f32 %v1252, %v1279
          %v1317 = vmul.f32 %v1253, %v1284
          %v1318 = vmul.f32 %v1254, %v1289
          %v1319 = vmul.f32 %v1255, %v1294
          %v1320 = vmul.f32 %v1256, %v1299
          %v1321 = vmul.f32 %v1257, %v1304
          %v1322 = vmul.f32 %v1258, %v1309
          %v1323 = vmul.f32 %v1259, %v1314
          %v1324 = vpack.c.bf16 %v1317, %v1316
          %v1325 = vpack.c.bf16 %v1319, %v1318
          %v1326 = vpack.c.bf16 %v1321, %v1320
          %v1327 = vpack.c.bf16 %v1323, %v1322
          %v1328 = vld [vmem:[%s4] sm:$0xf]
          %v1329 = vld [vmem:[%s4 + $0x4] sm:$0xf]
          %v1330 = vld [vmem:[%s4 + $0x8] sm:$0xf]
          %v1331 = vld [vmem:[%s4 + $0xc] sm:$0xf]
          %v1332 = vld [vmem:[%s4 + $0x10] sm:$0xf]
          %v1333 = vld [vmem:[%s4 + $0x14] sm:$0xf]
          %v1334 = vld [vmem:[%s4 + $0x18] sm:$0xf]
          %v1335 = vld [vmem:[%s4 + $0x1c] sm:$0xf]
          %v1336 = vld [vmem:[%s4 + $0x20] sm:$0xf]
          %v1337 = vld [vmem:[%s4 + $0x24] sm:$0xf]
          %v1338 = vld [vmem:[%s4 + $0x28] sm:$0xf]
          %v1339 = vld [vmem:[%s4 + $0x2c] sm:$0xf]
          %v1340 = vld [vmem:[%s4 + $0x30] sm:$0xf]
          %v1341 = vld [vmem:[%s4 + $0x34] sm:$0xf]
          %v1342 = vld [vmem:[%s4 + $0x38] sm:$0xf]
          %v1343 = vld [vmem:[%s4 + $0x3c] sm:$0xf]
          %v1344 = vld [vmem:[%s7] sm:$0x1]
          %v1345 = vlaneseq
          %v1346 = vshrl.u32 %v1345, 7
          %v1347 = vsub.s32 0, %v1346
          %v1348 = vrot.slane %v1344, %v1347
          %v1365 = vunpack.c.l.b16 %v1328
          %v1366 = vunpack.c.l.b16 %v1329
          %v1367 = vunpack.c.l.b16 %v1330
          %v1368 = vunpack.c.l.b16 %v1331
          %v1369 = vunpack.c.l.b16 %v1332
          %v1370 = vunpack.c.l.b16 %v1333
          %v1371 = vunpack.c.l.b16 %v1334
          %v1372 = vunpack.c.l.b16 %v1335
          %v1373 = vunpack.c.l.b16 %v1336
          %v1374 = vunpack.c.l.b16 %v1337
          %v1375 = vunpack.c.l.b16 %v1338
          %v1376 = vunpack.c.l.b16 %v1339
          %v1377 = vunpack.c.l.b16 %v1340
          %v1378 = vunpack.c.l.b16 %v1341
          %v1379 = vunpack.c.l.b16 %v1342
          %v1380 = vunpack.c.l.b16 %v1343
          %v1381 = vpack.c.b16 %v1366, %v1365
          %v1382 = vpack.c.b16 %v1368, %v1367
          %v1383 = vpack.c.b16 %v1370, %v1369
          %v1384 = vpack.c.b16 %v1372, %v1371
          %v1385 = vpack.c.b16 %v1374, %v1373
          %v1386 = vpack.c.b16 %v1376, %v1375
          %v1387 = vpack.c.b16 %v1378, %v1377
          %v1388 = vpack.c.b16 %v1380, %v1379
          %1397 = vmatprep.subr.bf16.mxu0 0
          %1398 = vmatpush1.bf16.msra.mxu0 %v1388
          %1399 = vmatprep.subr.bf16.mxu0 0
          %1400 = vmatpush1.bf16.msra.mxu0 %v1387
          %1401 = vmatprep.subr.bf16.mxu0 0
          %1402 = vmatpush1.bf16.msra.mxu0 %v1386
          %1403 = vmatprep.subr.bf16.mxu0 0
          %1404 = vmatpush1.bf16.msra.mxu0 %v1385
          %1405 = vmatprep.subr.bf16.mxu0 0
          %1406 = vmatpush1.bf16.msra.mxu0 %v1384
          %1407 = vmatprep.subr.bf16.mxu0 0
          %1408 = vmatpush1.bf16.msra.mxu0 %v1383
          %1409 = vmatprep.subr.bf16.mxu0 0
          %1410 = vmatpush1.bf16.msra.mxu0 %v1382
          %1411 = vmatprep.subr.bf16.mxu0 0
          %1412 = vmatpush1.bf16.msra.mxu0 %v1381
          %1413 = vmatprep.subr.bf16.mxu0 0
          %1414 = vmatpush2.bf16.msra.mxu0 0
          %1415 = vmatprep.subr.bf16.mxu0 0
          %1416 = vmatpush2.bf16.msra.mxu0 0
          %1417 = vmatprep.subr.bf16.mxu0 0
          %1418 = vmatpush2.bf16.msra.mxu0 0
          %1419 = vmatprep.subr.bf16.mxu0 0
          %1420 = vmatpush2.bf16.msra.mxu0 0
          %1421 = vmatprep.subr.bf16.mxu0 0
          %1422 = vmatpush2.bf16.msra.mxu0 0
          %1423 = vmatprep.subr.bf16.mxu0 0
          %1424 = vmatpush2.bf16.msra.mxu0 0
          %1425 = vmatprep.subr.bf16.mxu0 0
          %1426 = vmatpush2.bf16.msra.mxu0 0
          %1427 = vmatprep.subr.bf16.mxu0 0
          %1428 = vmatpush2.bf16.msra.mxu0 0
          %1429 = vmatprep.mubr.bf16.mxu0 0
          %1430 = vmatmul.mubr.bf16.gmra.mxu0 %v1324
          %v1431 = vpop.f32.mrf.mxu0
          %v1432 = vadd.f32 %v1348, %v1431
          %v1433 = vpop.f32.mrf.mxu0
          %v1434 = vpop.f32.mrf.mxu0
          %v1435 = vadd.f32 %v1348, %v1434
          %v1436 = vpop.f32.mrf.mxu0
          %1437 = vmatprep.mubr.bf16.mxu0 0
          %1438 = vmatmul.mubr.bf16.gmra.mxu0 %v1325
          %v1439 = vpop.f32.mrf.mxu0
          %v1440 = vadd.f32 %v1348, %v1439
          %v1441 = vpop.f32.mrf.mxu0
          %v1442 = vpop.f32.mrf.mxu0
          %v1443 = vadd.f32 %v1348, %v1442
          %v1444 = vpop.f32.mrf.mxu0
          %1445 = vmatprep.mubr.bf16.mxu0 0
          %1446 = vmatmul.mubr.bf16.gmra.mxu0 %v1326
          %v1447 = vpop.f32.mrf.mxu0
          %v1448 = vadd.f32 %v1348, %v1447
          %v1449 = vpop.f32.mrf.mxu0
          %v1450 = vpop.f32.mrf.mxu0
          %v1451 = vadd.f32 %v1348, %v1450
          %v1452 = vpop.f32.mrf.mxu0
          %1453 = vmatprep.mubr.bf16.mxu0 0
          %1454 = vmatmul.mubr.bf16.gmra.mxu0 %v1327
          %v1455 = vpop.f32.mrf.mxu0
          %v1456 = vadd.f32 %v1348, %v1455
          %v1457 = vpop.f32.mrf.mxu0
          %v1458 = vpop.f32.mrf.mxu0
          %v1459 = vadd.f32 %v1348, %v1458
          %v1460 = vpop.f32.mrf.mxu0
          %1461 = vdwg.mxu0
          %v1462 = vld [vmem:[%s650] sm:$0xf]
          %v1463 = vld [vmem:[%s650 + $0x4] sm:$0xf]
          %v1464 = vld [vmem:[%s650 + $0x8] sm:$0xf]
          %v1465 = vld [vmem:[%s650 + $0xc] sm:$0xf]
          %v1466 = vld [vmem:[%s650 + $0x10] sm:$0xf]
          %v1467 = vld [vmem:[%s650 + $0x14] sm:$0xf]
          %v1468 = vld [vmem:[%s650 + $0x18] sm:$0xf]
          %v1469 = vld [vmem:[%s650 + $0x1c] sm:$0xf]
          %v1470 = vunpack.c.l.bf16 %v1462
          %v1471 = vunpack.c.l.bf16 %v1463
          %v1472 = vunpack.c.l.bf16 %v1464
          %v1473 = vunpack.c.l.bf16 %v1465
          %v1474 = vunpack.c.l.bf16 %v1466
          %v1475 = vunpack.c.l.bf16 %v1467
          %v1476 = vunpack.c.l.bf16 %v1468
          %v1477 = vunpack.c.l.bf16 %v1469
          %v1478 = vadd.f32 %v1470, %v1432
          %v1479 = vadd.f32 %v1471, %v1435
          %v1480 = vadd.f32 %v1472, %v1440
          %v1481 = vadd.f32 %v1473, %v1443
          %v1482 = vadd.f32 %v1474, %v1448
          %v1483 = vadd.f32 %v1475, %v1451
          %v1484 = vadd.f32 %v1476, %v1456
          %v1485 = vadd.f32 %v1477, %v1459
          %v1486 = vlaneseq
          %v1487 = vand.u32 %v1486, 127
          %vm1488 = vcmp.lt.s32.totalorder %v1487, 64
          %v1489 = vsel %vm1488, 1, 0
          %v1490 = vcvt.s32.f32 %v1489
          %1491 = vadd.xlane.f32.xlu0 %v1478
          %v1492 = vpop.xlane.xlu0 %1491
          %1493 = vadd.xlane.f32.xlu0 %v1479
          %v1494 = vpop.xlane.xlu0 %1493
          %1495 = vadd.xlane.f32.xlu0 %v1480
          %v1496 = vpop.xlane.xlu0 %1495
          %1497 = vadd.xlane.f32.xlu0 %v1481
          %v1498 = vpop.xlane.xlu0 %1497
          %1499 = vadd.xlane.f32.xlu0 %v1482
          %v1500 = vpop.xlane.xlu0 %1499
          %1501 = vadd.xlane.f32.xlu0 %v1483
          %v1502 = vpop.xlane.xlu0 %1501
          %1503 = vadd.xlane.f32.xlu0 %v1484
          %v1504 = vpop.xlane.xlu0 %1503
          %1505 = vadd.xlane.f32.xlu0 %v1485
          %v1506 = vpop.xlane.xlu0 %1505
          %v1507 = vmul.f32 %v1492, 0.015625
          %v1508 = vmul.f32 %v1494, 0.015625
          %v1509 = vmul.f32 %v1496, 0.015625
          %v1510 = vmul.f32 %v1498, 0.015625
          %v1511 = vmul.f32 %v1500, 0.015625
          %v1512 = vmul.f32 %v1502, 0.015625
          %v1513 = vmul.f32 %v1504, 0.015625
          %v1514 = vmul.f32 %v1506, 0.015625
          %v1515 = vsub.f32 %v1478, %v1507
          %v1516 = vsub.f32 %v1479, %v1508
          %v1517 = vsub.f32 %v1480, %v1509
          %v1518 = vsub.f32 %v1481, %v1510
          %v1519 = vsub.f32 %v1482, %v1511
          %v1520 = vsub.f32 %v1483, %v1512
          %v1521 = vsub.f32 %v1484, %v1513
          %v1522 = vsub.f32 %v1485, %v1514
          %v1523 = vmul.f32 %v1515, %v1490
          %v1524 = vmul.f32 %v1516, %v1490
          %v1525 = vmul.f32 %v1517, %v1490
          %v1526 = vmul.f32 %v1518, %v1490
          %v1527 = vmul.f32 %v1519, %v1490
          %v1528 = vmul.f32 %v1520, %v1490
          %v1529 = vmul.f32 %v1521, %v1490
          %v1530 = vmul.f32 %v1522, %v1490
          %v1531 = vmul.f32 %v1523, %v1523
          %v1532 = vmul.f32 %v1524, %v1524
          %v1533 = vmul.f32 %v1525, %v1525
          %v1534 = vmul.f32 %v1526, %v1526
          %v1535 = vmul.f32 %v1527, %v1527
          %v1536 = vmul.f32 %v1528, %v1528
          %v1537 = vmul.f32 %v1529, %v1529
          %v1538 = vmul.f32 %v1530, %v1530
          %1539 = vadd.xlane.f32.xlu0 %v1531
          %v1540 = vpop.xlane.xlu0 %1539
          %1541 = vadd.xlane.f32.xlu0 %v1532
          %v1542 = vpop.xlane.xlu0 %1541
          %1543 = vadd.xlane.f32.xlu0 %v1533
          %v1544 = vpop.xlane.xlu0 %1543
          %1545 = vadd.xlane.f32.xlu0 %v1534
          %v1546 = vpop.xlane.xlu0 %1545
          %1547 = vadd.xlane.f32.xlu0 %v1535
          %v1548 = vpop.xlane.xlu0 %1547
          %1549 = vadd.xlane.f32.xlu0 %v1536
          %v1550 = vpop.xlane.xlu0 %1549
          %1551 = vadd.xlane.f32.xlu0 %v1537
          %v1552 = vpop.xlane.xlu0 %1551
          %1553 = vadd.xlane.f32.xlu0 %v1538
          %v1554 = vpop.xlane.xlu0 %1553
          %v1555 = vmul.f32 %v1540, 0.015625
          %v1556 = vmul.f32 %v1542, 0.015625
          %v1557 = vmul.f32 %v1544, 0.015625
          %v1558 = vmul.f32 %v1546, 0.015625
          %v1559 = vmul.f32 %v1548, 0.015625
          %v1560 = vmul.f32 %v1550, 0.015625
          %v1561 = vmul.f32 %v1552, 0.015625
          %v1562 = vmul.f32 %v1554, 0.015625
          %v1563 = vadd.f32 %v1555, 1e-05
          %v1564 = vadd.f32 %v1556, 1e-05
          %v1565 = vadd.f32 %v1557, 1e-05
          %v1566 = vadd.f32 %v1558, 1e-05
          %v1567 = vadd.f32 %v1559, 1e-05
          %v1568 = vadd.f32 %v1560, 1e-05
          %v1569 = vadd.f32 %v1561, 1e-05
          %v1570 = vadd.f32 %v1562, 1e-05
          %v1571 = vrsqrt.pop %v1563
          %v1572 = vrsqrt.pop %v1564
          %v1573 = vrsqrt.pop %v1565
          %v1574 = vrsqrt.pop %v1566
          %v1575 = vrsqrt.pop %v1567
          %v1576 = vrsqrt.pop %v1568
          %v1577 = vrsqrt.pop %v1569
          %v1578 = vrsqrt.pop %v1570
          %v1579 = vmul.f32 %v1523, %v1571
          %v1580 = vmul.f32 %v1524, %v1572
          %v1581 = vmul.f32 %v1525, %v1573
          %v1582 = vmul.f32 %v1526, %v1574
          %v1583 = vmul.f32 %v1527, %v1575
          %v1584 = vmul.f32 %v1528, %v1576
          %v1585 = vmul.f32 %v1529, %v1577
          %v1586 = vmul.f32 %v1530, %v1578
          %v1587 = vld [vmem:[%s7 + $0x1] sm:$0x1]
          %v1588 = vlaneseq
          %v1589 = vshrl.u32 %v1588, 7
          %v1590 = vsub.s32 0, %v1589
          %v1591 = vrot.slane %v1587, %v1590
          %v1592 = vmul.f32 %v1579, %v1591
          %v1593 = vmul.f32 %v1580, %v1591
          %v1594 = vmul.f32 %v1581, %v1591
          %v1595 = vmul.f32 %v1582, %v1591
          %v1596 = vmul.f32 %v1583, %v1591
          %v1597 = vmul.f32 %v1584, %v1591
          %v1598 = vmul.f32 %v1585, %v1591
          %v1599 = vmul.f32 %v1586, %v1591
          %v1600 = vld [vmem:[%s7 + $0x2] sm:$0x1]
          %v1601 = vlaneseq
          %v1602 = vshrl.u32 %v1601, 7
          %v1603 = vsub.s32 0, %v1602
          %v1604 = vrot.slane %v1600, %v1603
          %v1605 = vadd.f32 %v1592, %v1604
          %v1606 = vadd.f32 %v1593, %v1604
          %v1607 = vadd.f32 %v1594, %v1604
          %v1608 = vadd.f32 %v1595, %v1604
          %v1609 = vadd.f32 %v1596, %v1604
          %v1610 = vadd.f32 %v1597, %v1604
          %v1611 = vadd.f32 %v1598, %v1604
          %v1612 = vadd.f32 %v1599, %v1604
          %v1613 = vpack.c.bf16 %v1606, %v1605
          %v1614 = vpack.c.bf16 %v1608, %v1607
          %v1615 = vpack.c.bf16 %v1610, %v1609
          %v1616 = vpack.c.bf16 %v1612, %v1611
          %v1617 = vld [vmem:[%s5] sm:$0xf]
          %v1618 = vld [vmem:[%s5 + $0x4] sm:$0xf]
          %v1619 = vld [vmem:[%s5 + $0x8] sm:$0xf]
          %v1620 = vld [vmem:[%s5 + $0xc] sm:$0xf]
          %v1621 = vld [vmem:[%s5 + $0x10] sm:$0xf]
          %v1622 = vld [vmem:[%s5 + $0x14] sm:$0xf]
          %v1623 = vld [vmem:[%s5 + $0x18] sm:$0xf]
          %v1624 = vld [vmem:[%s5 + $0x1c] sm:$0xf]
          %v1625 = vld [vmem:[%s5 + $0x20] sm:$0xf]
          %v1626 = vld [vmem:[%s5 + $0x24] sm:$0xf]
          %v1627 = vld [vmem:[%s5 + $0x28] sm:$0xf]
          %v1628 = vld [vmem:[%s5 + $0x2c] sm:$0xf]
          %v1629 = vld [vmem:[%s5 + $0x30] sm:$0xf]
          %v1630 = vld [vmem:[%s5 + $0x34] sm:$0xf]
          %v1631 = vld [vmem:[%s5 + $0x38] sm:$0xf]
          %v1632 = vld [vmem:[%s5 + $0x3c] sm:$0xf]
          %v1633 = vld [vmem:[%s7 + $0x3] sm:$0x1]
          %v1634 = vlaneseq
          %v1635 = vshrl.u32 %v1634, 7
          %v1636 = vsub.s32 0, %v1635
          %v1637 = vrot.slane %v1633, %v1636
          %v1654 = vunpack.c.l.b16 %v1617
          %v1655 = vunpack.c.l.b16 %v1618
          %v1656 = vunpack.c.l.b16 %v1619
          %v1657 = vunpack.c.l.b16 %v1620
          %v1658 = vunpack.c.l.b16 %v1621
          %v1659 = vunpack.c.l.b16 %v1622
          %v1660 = vunpack.c.l.b16 %v1623
          %v1661 = vunpack.c.l.b16 %v1624
          %v1662 = vunpack.c.l.b16 %v1625
          %v1663 = vunpack.c.l.b16 %v1626
          %v1664 = vunpack.c.l.b16 %v1627
          %v1665 = vunpack.c.l.b16 %v1628
          %v1666 = vunpack.c.l.b16 %v1629
          %v1667 = vunpack.c.l.b16 %v1630
          %v1668 = vunpack.c.l.b16 %v1631
          %v1669 = vunpack.c.l.b16 %v1632
          %v1670 = vpack.c.b16 %v1655, %v1654
          %v1671 = vpack.c.b16 %v1657, %v1656
          %v1672 = vpack.c.b16 %v1659, %v1658
          %v1673 = vpack.c.b16 %v1661, %v1660
          %v1674 = vpack.c.b16 %v1663, %v1662
          %v1675 = vpack.c.b16 %v1665, %v1664
          %v1676 = vpack.c.b16 %v1667, %v1666
          %v1677 = vpack.c.b16 %v1669, %v1668
          %1686 = vmatprep.subr.bf16.mxu0 0
          %1687 = vmatpush1.bf16.msra.mxu0 %v1677
          %1688 = vmatprep.subr.bf16.mxu0 0
          %1689 = vmatpush1.bf16.msra.mxu0 %v1676
          %1690 = vmatprep.subr.bf16.mxu0 0
          %1691 = vmatpush1.bf16.msra.mxu0 %v1675
          %1692 = vmatprep.subr.bf16.mxu0 0
          %1693 = vmatpush1.bf16.msra.mxu0 %v1674
          %1694 = vmatprep.subr.bf16.mxu0 0
          %1695 = vmatpush1.bf16.msra.mxu0 %v1673
          %1696 = vmatprep.subr.bf16.mxu0 0
          %1697 = vmatpush1.bf16.msra.mxu0 %v1672
          %1698 = vmatprep.subr.bf16.mxu0 0
          %1699 = vmatpush1.bf16.msra.mxu0 %v1671
          %1700 = vmatprep.subr.bf16.mxu0 0
          %1701 = vmatpush1.bf16.msra.mxu0 %v1670
          %1702 = vmatprep.subr.bf16.mxu0 0
          %1703 = vmatpush2.bf16.msra.mxu0 0
          %1704 = vmatprep.subr.bf16.mxu0 0
          %1705 = vmatpush2.bf16.msra.mxu0 0
          %1706 = vmatprep.subr.bf16.mxu0 0
          %1707 = vmatpush2.bf16.msra.mxu0 0
          %1708 = vmatprep.subr.bf16.mxu0 0
          %1709 = vmatpush2.bf16.msra.mxu0 0
          %1710 = vmatprep.subr.bf16.mxu0 0
          %1711 = vmatpush2.bf16.msra.mxu0 0
          %1712 = vmatprep.subr.bf16.mxu0 0
          %1713 = vmatpush2.bf16.msra.mxu0 0
          %1714 = vmatprep.subr.bf16.mxu0 0
          %1715 = vmatpush2.bf16.msra.mxu0 0
          %1716 = vmatprep.subr.bf16.mxu0 0
          %1717 = vmatpush2.bf16.msra.mxu0 0
          %1718 = vmatprep.mubr.bf16.mxu0 0
          %1719 = vmatmul.mubr.bf16.gmra.mxu0 %v1613
          %v1720 = vpop.f32.mrf.mxu0
          %v1721 = vadd.f32 %v1637, %v1720
          %v1722 = vpop.f32.mrf.mxu0
          %v1723 = vpop.f32.mrf.mxu0
          %v1724 = vadd.f32 %v1637, %v1723
          %v1725 = vpop.f32.mrf.mxu0
          %1726 = vmatprep.mubr.bf16.mxu0 0
          %1727 = vmatmul.mubr.bf16.gmra.mxu0 %v1614
          %v1728 = vpop.f32.mrf.mxu0
          %v1729 = vadd.f32 %v1637, %v1728
          %v1730 = vpop.f32.mrf.mxu0
          %v1731 = vpop.f32.mrf.mxu0
          %v1732 = vadd.f32 %v1637, %v1731
          %v1733 = vpop.f32.mrf.mxu0
          %1734 = vmatprep.mubr.bf16.mxu0 0
          %1735 = vmatmul.mubr.bf16.gmra.mxu0 %v1615
          %v1736 = vpop.f32.mrf.mxu0
          %v1737 = vadd.f32 %v1637, %v1736
          %v1738 = vpop.f32.mrf.mxu0
          %v1739 = vpop.f32.mrf.mxu0
          %v1740 = vadd.f32 %v1637, %v1739
          %v1741 = vpop.f32.mrf.mxu0
          %1742 = vmatprep.mubr.bf16.mxu0 0
          %1743 = vmatmul.mubr.bf16.gmra.mxu0 %v1616
          %v1744 = vpop.f32.mrf.mxu0
          %v1745 = vadd.f32 %v1637, %v1744
          %v1746 = vpop.f32.mrf.mxu0
          %v1747 = vpop.f32.mrf.mxu0
          %v1748 = vadd.f32 %v1637, %v1747
          %v1749 = vpop.f32.mrf.mxu0
          %1750 = vdwg.mxu0
          %v1751 = vmul.f32 %v1721, 0.5
          %v1752 = vmul.f32 %v1724, 0.5
          %v1753 = vmul.f32 %v1729, 0.5
          %v1754 = vmul.f32 %v1732, 0.5
          %v1755 = vmul.f32 %v1737, 0.5
          %v1756 = vmul.f32 %v1740, 0.5
          %v1757 = vmul.f32 %v1745, 0.5
          %v1758 = vmul.f32 %v1748, 0.5
          %v1759 = vmul.f32 %v1721, 0.044715
          %v1760 = vmul.f32 %v1724, 0.044715
          %v1761 = vmul.f32 %v1729, 0.044715
          %v1762 = vmul.f32 %v1732, 0.044715
          %v1763 = vmul.f32 %v1737, 0.044715
          %v1764 = vmul.f32 %v1740, 0.044715
          %v1765 = vmul.f32 %v1745, 0.044715
          %v1766 = vmul.f32 %v1748, 0.044715
          %v1767 = vmul.f32 %v1759, %v1721
          %v1768 = vmul.f32 %v1760, %v1724
          %v1769 = vmul.f32 %v1761, %v1729
          %v1770 = vmul.f32 %v1762, %v1732
          %v1771 = vmul.f32 %v1763, %v1737
          %v1772 = vmul.f32 %v1764, %v1740
          %v1773 = vmul.f32 %v1765, %v1745
          %v1774 = vmul.f32 %v1766, %v1748
          %v1775 = vmul.f32 %v1767, %v1721
          %v1776 = vmul.f32 %v1768, %v1724
          %v1777 = vmul.f32 %v1769, %v1729
          %v1778 = vmul.f32 %v1770, %v1732
          %v1779 = vmul.f32 %v1771, %v1737
          %v1780 = vmul.f32 %v1772, %v1740
          %v1781 = vmul.f32 %v1773, %v1745
          %v1782 = vmul.f32 %v1774, %v1748
          %v1783 = vadd.f32 %v1721, %v1775
          %v1784 = vadd.f32 %v1724, %v1776
          %v1785 = vadd.f32 %v1729, %v1777
          %v1786 = vadd.f32 %v1732, %v1778
          %v1787 = vadd.f32 %v1737, %v1779
          %v1788 = vadd.f32 %v1740, %v1780
          %v1789 = vadd.f32 %v1745, %v1781
          %v1790 = vadd.f32 %v1748, %v1782
          %v1791 = vmul.f32 %v1783, 0.7978846
          %v1792 = vmul.f32 %v1784, 0.7978846
          %v1793 = vmul.f32 %v1785, 0.7978846
          %v1794 = vmul.f32 %v1786, 0.7978846
          %v1795 = vmul.f32 %v1787, 0.7978846
          %v1796 = vmul.f32 %v1788, 0.7978846
          %v1797 = vmul.f32 %v1789, 0.7978846
          %v1798 = vmul.f32 %v1790, 0.7978846
          %v1799 = vtanh.pop %v1791
          %v1800 = vtanh.pop %v1792
          %v1801 = vtanh.pop %v1793
          %v1802 = vtanh.pop %v1794
          %v1803 = vtanh.pop %v1795
          %v1804 = vtanh.pop %v1796
          %v1805 = vtanh.pop %v1797
          %v1806 = vtanh.pop %v1798
          %v1807 = vadd.f32 %v1799, 1.0
          %v1808 = vadd.f32 %v1800, 1.0
          %v1809 = vadd.f32 %v1801, 1.0
          %v1810 = vadd.f32 %v1802, 1.0
          %v1811 = vadd.f32 %v1803, 1.0
          %v1812 = vadd.f32 %v1804, 1.0
          %v1813 = vadd.f32 %v1805, 1.0
          %v1814 = vadd.f32 %v1806, 1.0
          %v1815 = vmul.f32 %v1751, %v1807
          %v1816 = vmul.f32 %v1752, %v1808
          %v1817 = vmul.f32 %v1753, %v1809
          %v1818 = vmul.f32 %v1754, %v1810
          %v1819 = vmul.f32 %v1755, %v1811
          %v1820 = vmul.f32 %v1756, %v1812
          %v1821 = vmul.f32 %v1757, %v1813
          %v1822 = vmul.f32 %v1758, %v1814
          %v1823 = vpack.c.bf16 %v1816, %v1815
          %v1824 = vpack.c.bf16 %v1818, %v1817
          %v1825 = vpack.c.bf16 %v1820, %v1819
          %v1826 = vpack.c.bf16 %v1822, %v1821
          %v1827 = vld [vmem:[%s6] sm:$0xf]
          %v1828 = vld [vmem:[%s6 + $0x4] sm:$0xf]
          %v1829 = vld [vmem:[%s6 + $0x8] sm:$0xf]
          %v1830 = vld [vmem:[%s6 + $0xc] sm:$0xf]
          %v1831 = vld [vmem:[%s6 + $0x10] sm:$0xf]
          %v1832 = vld [vmem:[%s6 + $0x14] sm:$0xf]
          %v1833 = vld [vmem:[%s6 + $0x18] sm:$0xf]
          %v1834 = vld [vmem:[%s6 + $0x1c] sm:$0xf]
          %v1835 = vld [vmem:[%s6 + $0x20] sm:$0xf]
          %v1836 = vld [vmem:[%s6 + $0x24] sm:$0xf]
          %v1837 = vld [vmem:[%s6 + $0x28] sm:$0xf]
          %v1838 = vld [vmem:[%s6 + $0x2c] sm:$0xf]
          %v1839 = vld [vmem:[%s6 + $0x30] sm:$0xf]
          %v1840 = vld [vmem:[%s6 + $0x34] sm:$0xf]
          %v1841 = vld [vmem:[%s6 + $0x38] sm:$0xf]
          %v1842 = vld [vmem:[%s6 + $0x3c] sm:$0xf]
          %v1843 = vld [vmem:[%s7 + $0x4] sm:$0x1]
          %v1844 = vlaneseq
          %v1845 = vshrl.u32 %v1844, 7
          %v1846 = vsub.s32 0, %v1845
          %v1847 = vrot.slane %v1843, %v1846
          %v1864 = vunpack.c.l.b16 %v1827
          %v1865 = vunpack.c.l.b16 %v1828
          %v1866 = vunpack.c.l.b16 %v1829
          %v1867 = vunpack.c.l.b16 %v1830
          %v1868 = vunpack.c.l.b16 %v1831
          %v1869 = vunpack.c.l.b16 %v1832
          %v1870 = vunpack.c.l.b16 %v1833
          %v1871 = vunpack.c.l.b16 %v1834
          %v1872 = vunpack.c.l.b16 %v1835
          %v1873 = vunpack.c.l.b16 %v1836
          %v1874 = vunpack.c.l.b16 %v1837
          %v1875 = vunpack.c.l.b16 %v1838
          %v1876 = vunpack.c.l.b16 %v1839
          %v1877 = vunpack.c.l.b16 %v1840
          %v1878 = vunpack.c.l.b16 %v1841
          %v1879 = vunpack.c.l.b16 %v1842
          %v1880 = vpack.c.b16 %v1865, %v1864
          %v1881 = vpack.c.b16 %v1867, %v1866
          %v1882 = vpack.c.b16 %v1869, %v1868
          %v1883 = vpack.c.b16 %v1871, %v1870
          %v1884 = vpack.c.b16 %v1873, %v1872
          %v1885 = vpack.c.b16 %v1875, %v1874
          %v1886 = vpack.c.b16 %v1877, %v1876
          %v1887 = vpack.c.b16 %v1879, %v1878
          %1896 = vmatprep.subr.bf16.mxu0 0
          %1897 = vmatpush1.bf16.msra.mxu0 %v1887
          %1898 = vmatprep.subr.bf16.mxu0 0
          %1899 = vmatpush1.bf16.msra.mxu0 %v1886
          %1900 = vmatprep.subr.bf16.mxu0 0
          %1901 = vmatpush1.bf16.msra.mxu0 %v1885
          %1902 = vmatprep.subr.bf16.mxu0 0
          %1903 = vmatpush1.bf16.msra.mxu0 %v1884
          %1904 = vmatprep.subr.bf16.mxu0 0
          %1905 = vmatpush1.bf16.msra.mxu0 %v1883
          %1906 = vmatprep.subr.bf16.mxu0 0
          %1907 = vmatpush1.bf16.msra.mxu0 %v1882
          %1908 = vmatprep.subr.bf16.mxu0 0
          %1909 = vmatpush1.bf16.msra.mxu0 %v1881
          %1910 = vmatprep.subr.bf16.mxu0 0
          %1911 = vmatpush1.bf16.msra.mxu0 %v1880
          %1912 = vmatprep.subr.bf16.mxu0 0
          %1913 = vmatpush2.bf16.msra.mxu0 0
          %1914 = vmatprep.subr.bf16.mxu0 0
          %1915 = vmatpush2.bf16.msra.mxu0 0
          %1916 = vmatprep.subr.bf16.mxu0 0
          %1917 = vmatpush2.bf16.msra.mxu0 0
          %1918 = vmatprep.subr.bf16.mxu0 0
          %1919 = vmatpush2.bf16.msra.mxu0 0
          %1920 = vmatprep.subr.bf16.mxu0 0
          %1921 = vmatpush2.bf16.msra.mxu0 0
          %1922 = vmatprep.subr.bf16.mxu0 0
          %1923 = vmatpush2.bf16.msra.mxu0 0
          %1924 = vmatprep.subr.bf16.mxu0 0
          %1925 = vmatpush2.bf16.msra.mxu0 0
          %1926 = vmatprep.subr.bf16.mxu0 0
          %1927 = vmatpush2.bf16.msra.mxu0 0
          %1928 = vmatprep.mubr.bf16.mxu0 0
          %1929 = vmatmul.mubr.bf16.gmra.mxu0 %v1823
          %v1930 = vpop.f32.mrf.mxu0
          %v1931 = vadd.f32 %v1847, %v1930
          %v1932 = vpop.f32.mrf.mxu0
          %v1933 = vpop.f32.mrf.mxu0
          %v1934 = vadd.f32 %v1847, %v1933
          %v1935 = vpop.f32.mrf.mxu0
          %1936 = vmatprep.mubr.bf16.mxu0 0
          %1937 = vmatmul.mubr.bf16.gmra.mxu0 %v1824
          %v1938 = vpop.f32.mrf.mxu0
          %v1939 = vadd.f32 %v1847, %v1938
          %v1940 = vpop.f32.mrf.mxu0
          %v1941 = vpop.f32.mrf.mxu0
          %v1942 = vadd.f32 %v1847, %v1941
          %v1943 = vpop.f32.mrf.mxu0
          %1944 = vmatprep.mubr.bf16.mxu0 0
          %1945 = vmatmul.mubr.bf16.gmra.mxu0 %v1825
          %v1946 = vpop.f32.mrf.mxu0
          %v1947 = vadd.f32 %v1847, %v1946
          %v1948 = vpop.f32.mrf.mxu0
          %v1949 = vpop.f32.mrf.mxu0
          %v1950 = vadd.f32 %v1847, %v1949
          %v1951 = vpop.f32.mrf.mxu0
          %1952 = vmatprep.mubr.bf16.mxu0 0
          %1953 = vmatmul.mubr.bf16.gmra.mxu0 %v1826
          %v1954 = vpop.f32.mrf.mxu0
          %v1955 = vadd.f32 %v1847, %v1954
          %v1956 = vpop.f32.mrf.mxu0
          %v1957 = vpop.f32.mrf.mxu0
          %v1958 = vadd.f32 %v1847, %v1957
          %v1959 = vpop.f32.mrf.mxu0
          %1960 = vdwg.mxu0
          %v1961 = vadd.f32 %v1478, %v1931
          %v1962 = vadd.f32 %v1479, %v1934
          %v1963 = vadd.f32 %v1480, %v1939
          %v1964 = vadd.f32 %v1481, %v1942
          %v1965 = vadd.f32 %v1482, %v1947
          %v1966 = vadd.f32 %v1483, %v1950
          %v1967 = vadd.f32 %v1484, %v1955
          %v1968 = vadd.f32 %v1485, %v1958
          %v1969 = vpack.c.bf16 %v1962, %v1961
          %v1970 = vpack.c.bf16 %v1964, %v1963
          %v1971 = vpack.c.bf16 %v1966, %v1965
          %v1972 = vpack.c.bf16 %v1968, %v1967
          %v1977 = vunpack.c.l.b16 %v1969
          %v1978 = vunpack.c.h.b16 %v1969
          %v1979 = vunpack.c.l.b16 %v1970
          %v1980 = vunpack.c.h.b16 %v1970
          %v1981 = vunpack.c.l.b16 %v1971
          %v1982 = vunpack.c.h.b16 %v1971
          %v1983 = vunpack.c.l.b16 %v1972
          %v1984 = vunpack.c.h.b16 %v1972
          %v1985 = vpack.c.b16 %v1977, %v1977
          %v1986 = vpack.c.b16 %v1978, %v1978
          %v1987 = vpack.c.b16 %v1979, %v1979
          %v1988 = vpack.c.b16 %v1980, %v1980
          %v1989 = vpack.c.b16 %v1981, %v1981
          %v1990 = vpack.c.b16 %v1982, %v1982
          %v1991 = vpack.c.b16 %v1983, %v1983
          %v1992 = vpack.c.b16 %v1984, %v1984
          %2001 = vst [vmem:[%s709] sm:$0xf] %v1985
          %2002 = vst [vmem:[%s709 + $0x4] sm:$0xf] %v1986
          %2003 = vst [vmem:[%s709 + $0x8] sm:$0xf] %v1987
          %2004 = vst [vmem:[%s709 + $0xc] sm:$0xf] %v1988
          %2005 = vst [vmem:[%s709 + $0x10] sm:$0xf] %v1989
          %2006 = vst [vmem:[%s709 + $0x14] sm:$0xf] %v1990
          %2007 = vst [vmem:[%s709 + $0x18] sm:$0xf] %v1991
          %2008 = vst [vmem:[%s709 + $0x1c] sm:$0xf] %v1992
        $region224: #{_lambda_.6} parent=199 // pred_fallthru
          _
        %s2009 = smul.u32 8, %s25
        %p2010 = scmp.lt.s32.totalorder %s24, 1
        %s2011 = scalar_select %p2010, %s24, 1
        %p2012 = scmp.lt.s32.totalorder %s2009, 7
        %s2013 = scalar_select %p2012, %s2009, 7
        %s2014 = smul.addr %s2011, 8
        %s2015 = sadd.s32 %s2013, %s2014
        %s2016 = smul.addr %s2015, 4
        %s2017 = scalar_lea.vmem %s8, %s2016
        // Predicated region
        $region225: #{_lambda_.6} parent=199 // pred_check
          %p2018 = pneg %p254
        $region226: #{_lambda_.6} parent=199 // pred_check_branch
          %2020 = sbr.rel (%p2018) target = $region228
        $region227: #{_lambda_.6} parent=199 // pred_region
          %s2021 = smul.u32 8, %s25
        $region228: #{_lambda_.6} parent=199 // pred_fallthru
          _
      $region200: #{_lambda_.6} parent=5 // pred_fallthru
        _
      %p2022 = scmp.le.s32.totalorder 2, %s14
      // Predicated region
      $region229: #{_lambda_.6} parent=5 // pred_check
        %p2023 = pneg %p2022
      $region230: #{_lambda_.6} parent=5 // pred_check_branch
        %2025 = sbr.rel (%p2023) target = $region232
      $region231: #{_lambda_.6} parent=5 // pred_region
        %s2026 = ssub.s32 %s14, 2
        // Predicated region
        $region233: #{_lambda_.6} parent=231 // pred_check
          %p2027 = pneg %p260
        $region234: #{_lambda_.6} parent=231 // pred_check_branch
          %2029 = sbr.rel (%p2027) target = $region236
        $region235: #{_lambda_.6} parent=231 // pred_region
          %s2030 = smul.u32 8, %s28
          %p2031 = scmp.lt.s32.totalorder %s27, 1
          %s2032 = scalar_select %p2031, %s27, 1
          %p2033 = scmp.lt.s32.totalorder %s2030, 7
          %s2034 = scalar_select %p2033, %s2030, 7
          %s2035 = smul.addr %s2032, 8
          %s2036 = sadd.s32 %s2034, %s2035
          %s2037 = smul.addr %s2036, 4
          %s2038 = scalar_lea.vmem %s8, %s2037
        $region236: #{_lambda_.6} parent=231 // pred_fallthru
          _
      $region232: #{_lambda_.6} parent=5 // pred_fallthru
        _
    $region6: #{_lambda_.6} parent=1 // loop_footer
      %s18 = sadd.s32 1, %s14
    $region7: #{_lambda_.6} parent=1 // loop_footer_branch
      %13 = sbr.rel target = $region3
    $region8: #{_lambda_.6} parent=1 // loop_exit
      _

// kernel: _lambda_.5
$region0: #{_lambda_.5}
  #allocation0 [shape = 'u32[]', space=smem, size = 0x4, offset = 0x4, fixed_abs, tag = 'smem constant byte address 0x4 - core index']
  #allocation1 [shape = 'u32[144,128]{1,0:T(1,128)}', space=vmem, size = 0x12000, scoped, tag = 'internal scratch']
  %s0 = inlined_call_operand.vmem [shape: bf16[128,256], index: 0, kind: input, shape index: {}]
  %s1 = inlined_call_operand.vmem [shape: bf16[256,384], index: 1, kind: input, shape index: {}]
  %s2 = inlined_call_operand.vmem [shape: f32[2,256], index: 2, kind: input, shape index: {}]
  %s3 = inlined_call_operand.vmem [shape: bf16[128,384], index: 3, kind: output, shape index: {}]
  %s4 = sld [smem:[#allocation0]]
  $region22: #{_lambda_.5} parent=0
    _
  %s6 = ssub.s32 1, %s4
  %s7 = scalar_select 0, %s6, %s4
  // Predicated region
  $region2: #{_lambda_.5} parent=0 // pred_check
    _
  $region3: #{_lambda_.5} parent=0 // pred_check_branch
    %9 = sbr.rel (0) target = $region5
  $region4: #{_lambda_.5} parent=0 // pred_region
    _
  $region5: #{_lambda_.5} parent=0 // pred_fallthru
    _
  // Predicated region
  $region6: #{_lambda_.5} parent=0 // pred_check
    _
  $region7: #{_lambda_.5} parent=0 // pred_check_branch
    %11 = sbr.rel (0) target = $region9
  $region8: #{_lambda_.5} parent=0 // pred_region
    _
  $region9: #{_lambda_.5} parent=0 // pred_fallthru
    _
  // Predicated region
  $region10: #{_lambda_.5} parent=0 // pred_check
    _
  $region11: #{_lambda_.5} parent=0 // pred_check_branch
    %13 = sbr.rel (0) target = $region13
  $region12: #{_lambda_.5} parent=0 // pred_region
    _
  $region13: #{_lambda_.5} parent=0 // pred_fallthru
    _
  %v15 = vld [vmem:[%s0] sm:$0xff]
  %v16 = vld [vmem:[%s0 + $0x8] sm:$0xff]
  %v17 = vld [vmem:[%s0 + $0x10] sm:$0xff]
  %v18 = vld [vmem:[%s0 + $0x18] sm:$0xff]
  %v19 = vld [vmem:[%s0 + $0x20] sm:$0xff]
  %v20 = vld [vmem:[%s0 + $0x28] sm:$0xff]
  %v21 = vld [vmem:[%s0 + $0x30] sm:$0xff]
  %v22 = vld [vmem:[%s0 + $0x38] sm:$0xff]
  %v23 = vld [vmem:[%s0 + $0x40] sm:$0xff]
  %v24 = vld [vmem:[%s0 + $0x48] sm:$0xff]
  %v25 = vld [vmem:[%s0 + $0x50] sm:$0xff]
  %v26 = vld [vmem:[%s0 + $0x58] sm:$0xff]
  %v27 = vld [vmem:[%s0 + $0x60] sm:$0xff]
  %v28 = vld [vmem:[%s0 + $0x68] sm:$0xff]
  %v29 = vld [vmem:[%s0 + $0x70] sm:$0xff]
  %v30 = vld [vmem:[%s0 + $0x78] sm:$0xff]
  %v31 = vunpack.c.l.bf16 %v15
  %v32 = vunpack.c.h.bf16 %v15
  %v33 = vunpack.c.l.bf16 %v16
  %v34 = vunpack.c.h.bf16 %v16
  %v35 = vunpack.c.l.bf16 %v17
  %v36 = vunpack.c.h.bf16 %v17
  %v37 = vunpack.c.l.bf16 %v18
  %v38 = vunpack.c.h.bf16 %v18
  %v39 = vunpack.c.l.bf16 %v19
  %v40 = vunpack.c.h.bf16 %v19
  %v41 = vunpack.c.l.bf16 %v20
  %v42 = vunpack.c.h.bf16 %v20
  %v43 = vunpack.c.l.bf16 %v21
  %v44 = vunpack.c.h.bf16 %v21
  %v45 = vunpack.c.l.bf16 %v22
  %v46 = vunpack.c.h.bf16 %v22
  %v47 = vunpack.c.l.bf16 %v23
  %v48 = vunpack.c.h.bf16 %v23
  %v49 = vunpack.c.l.bf16 %v24
  %v50 = vunpack.c.h.bf16 %v24
  %v51 = vunpack.c.l.bf16 %v25
  %v52 = vunpack.c.h.bf16 %v25
  %v53 = vunpack.c.l.bf16 %v26
  %v54 = vunpack.c.h.bf16 %v26
  %v55 = vunpack.c.l.bf16 %v27
  %v56 = vunpack.c.h.bf16 %v27
  %v57 = vunpack.c.l.bf16 %v28
  %v58 = vunpack.c.h.bf16 %v28
  %v59 = vunpack.c.l.bf16 %v29
  %v60 = vunpack.c.h.bf16 %v29
  %v61 = vunpack.c.l.bf16 %v30
  %v62 = vunpack.c.h.bf16 %v30
  %v63 = vlaneseq
  %v64 = vand.u32 %v63, 127
  %v65 = vadd.s32 %v64, 128
  %vm66 = vcmp.lt.s32.totalorder %v64, 147
  %vm67 = vcmp.lt.s32.totalorder %v65, 147
  %v68 = vsel %vm66, 1, 0
  %v69 = vsel %vm67, 1, 0
  %v70 = vcvt.s32.f32 %v68
  %v71 = vcvt.s32.f32 %v69
  %v72 = vadd.f32 %v31, %v32
  %73 = vadd.xlane.f32.xlu0 %v72
  %v74 = vpop.xlane.xlu0 %73
  %v75 = vadd.f32 %v33, %v34
  %76 = vadd.xlane.f32.xlu0 %v75
  %v77 = vpop.xlane.xlu0 %76
  %v78 = vadd.f32 %v35, %v36
  %79 = vadd.xlane.f32.xlu0 %v78
  %v80 = vpop.xlane.xlu0 %79
  %v81 = vadd.f32 %v37, %v38
  %82 = vadd.xlane.f32.xlu0 %v81
  %v83 = vpop.xlane.xlu0 %82
  %v84 = vadd.f32 %v39, %v40
  %85 = vadd.xlane.f32.xlu0 %v84
  %v86 = vpop.xlane.xlu0 %85
  %v87 = vadd.f32 %v41, %v42
  %88 = vadd.xlane.f32.xlu0 %v87
  %v89 = vpop.xlane.xlu0 %88
  %v90 = vadd.f32 %v43, %v44
  %91 = vadd.xlane.f32.xlu0 %v90
  %v92 = vpop.xlane.xlu0 %91
  %v93 = vadd.f32 %v45, %v46
  %94 = vadd.xlane.f32.xlu0 %v93
  %v95 = vpop.xlane.xlu0 %94
  %v96 = vadd.f32 %v47, %v48
  %97 = vadd.xlane.f32.xlu0 %v96
  %v98 = vpop.xlane.xlu0 %97
  %v99 = vadd.f32 %v49, %v50
  %100 = vadd.xlane.f32.xlu0 %v99
  %v101 = vpop.xlane.xlu0 %100
  %v102 = vadd.f32 %v51, %v52
  %103 = vadd.xlane.f32.xlu0 %v102
  %v104 = vpop.xlane.xlu0 %103
  %v105 = vadd.f32 %v53, %v54
  %106 = vadd.xlane.f32.xlu0 %v105
  %v107 = vpop.xlane.xlu0 %106
  %v108 = vadd.f32 %v55, %v56
  %109 = vadd.xlane.f32.xlu0 %v108
  %v110 = vpop.xlane.xlu0 %109
  %v111 = vadd.f32 %v57, %v58
  %112 = vadd.xlane.f32.xlu0 %v111
  %v113 = vpop.xlane.xlu0 %112
  %v114 = vadd.f32 %v59, %v60
  %115 = vadd.xlane.f32.xlu0 %v114
  %v116 = vpop.xlane.xlu0 %115
  %v117 = vadd.f32 %v61, %v62
  %118 = vadd.xlane.f32.xlu0 %v117
  %v119 = vpop.xlane.xlu0 %118
  %v120 = vmul.f32 %v74, 0.006802721
  %v121 = vmul.f32 %v77, 0.006802721
  %v122 = vmul.f32 %v80, 0.006802721
  %v123 = vmul.f32 %v83, 0.006802721
  %v124 = vmul.f32 %v86, 0.006802721
  %v125 = vmul.f32 %v89, 0.006802721
  %v126 = vmul.f32 %v92, 0.006802721
  %v127 = vmul.f32 %v95, 0.006802721
  %v128 = vmul.f32 %v98, 0.006802721
  %v129 = vmul.f32 %v101, 0.006802721
  %v130 = vmul.f32 %v104, 0.006802721
  %v131 = vmul.f32 %v107, 0.006802721
  %v132 = vmul.f32 %v110, 0.006802721
  %v133 = vmul.f32 %v113, 0.006802721
  %v134 = vmul.f32 %v116, 0.006802721
  %v135 = vmul.f32 %v119, 0.006802721
  %v136 = vsub.f32 %v31, %v120
  %v137 = vsub.f32 %v32, %v120
  %v138 = vsub.f32 %v33, %v121
  %v139 = vsub.f32 %v34, %v121
  %v140 = vsub.f32 %v35, %v122
  %v141 = vsub.f32 %v36, %v122
  %v142 = vsub.f32 %v37, %v123
  %v143 = vsub.f32 %v38, %v123
  %v144 = vsub.f32 %v39, %v124
  %v145 = vsub.f32 %v40, %v124
  %v146 = vsub.f32 %v41, %v125
  %v147 = vsub.f32 %v42, %v125
  %v148 = vsub.f32 %v43, %v126
  %v149 = vsub.f32 %v44, %v126
  %v150 = vsub.f32 %v45, %v127
  %v151 = vsub.f32 %v46, %v127
  %v152 = vsub.f32 %v47, %v128
  %v153 = vsub.f32 %v48, %v128
  %v154 = vsub.f32 %v49, %v129
  %v155 = vsub.f32 %v50, %v129
  %v156 = vsub.f32 %v51, %v130
  %v157 = vsub.f32 %v52, %v130
  %v158 = vsub.f32 %v53, %v131
  %v159 = vsub.f32 %v54, %v131
  %v160 = vsub.f32 %v55, %v132
  %v161 = vsub.f32 %v56, %v132
  %v162 = vsub.f32 %v57, %v133
  %v163 = vsub.f32 %v58, %v133
  %v164 = vsub.f32 %v59, %v134
  %v165 = vsub.f32 %v60, %v134
  %v166 = vsub.f32 %v61, %v135
  %v167 = vsub.f32 %v62, %v135
  %v168 = vmul.f32 %v136, %v70
  %v169 = vmul.f32 %v137, %v71
  %v170 = vmul.f32 %v138, %v70
  %v171 = vmul.f32 %v139, %v71
  %v172 = vmul.f32 %v140, %v70
  %v173 = vmul.f32 %v141, %v71
  %v174 = vmul.f32 %v142, %v70
  %v175 = vmul.f32 %v143, %v71
  %v176 = vmul.f32 %v144, %v70
  %v177 = vmul.f32 %v145, %v71
  %v178 = vmul.f32 %v146, %v70
  %v179 = vmul.f32 %v147, %v71
  %v180 = vmul.f32 %v148, %v70
  %v181 = vmul.f32 %v149, %v71
  %v182 = vmul.f32 %v150, %v70
  %v183 = vmul.f32 %v151, %v71
  %v184 = vmul.f32 %v152, %v70
  %v185 = vmul.f32 %v153, %v71
  %v186 = vmul.f32 %v154, %v70
  %v187 = vmul.f32 %v155, %v71
  %v188 = vmul.f32 %v156, %v70
  %v189 = vmul.f32 %v157, %v71
  %v190 = vmul.f32 %v158, %v70
  %v191 = vmul.f32 %v159, %v71
  %v192 = vmul.f32 %v160, %v70
  %v193 = vmul.f32 %v161, %v71
  %v194 = vmul.f32 %v162, %v70
  %v195 = vmul.f32 %v163, %v71
  %v196 = vmul.f32 %v164, %v70
  %v197 = vmul.f32 %v165, %v71
  %v198 = vmul.f32 %v166, %v70
  %v199 = vmul.f32 %v167, %v71
  %v200 = vmul.f32 %v168, %v168
  %v201 = vmul.f32 %v169, %v169
  %v202 = vmul.f32 %v170, %v170
  %v203 = vmul.f32 %v171, %v171
  %v204 = vmul.f32 %v172, %v172
  %v205 = vmul.f32 %v173, %v173
  %v206 = vmul.f32 %v174, %v174
  %v207 = vmul.f32 %v175, %v175
  %v208 = vmul.f32 %v176, %v176
  %v209 = vmul.f32 %v177, %v177
  %v210 = vmul.f32 %v178, %v178
  %v211 = vmul.f32 %v179, %v179
  %v212 = vmul.f32 %v180, %v180
  %v213 = vmul.f32 %v181, %v181
  %v214 = vmul.f32 %v182, %v182
  %v215 = vmul.f32 %v183, %v183
  %v216 = vmul.f32 %v184, %v184
  %v217 = vmul.f32 %v185, %v185
  %v218 = vmul.f32 %v186, %v186
  %v219 = vmul.f32 %v187, %v187
  %v220 = vmul.f32 %v188, %v188
  %v221 = vmul.f32 %v189, %v189
  %v222 = vmul.f32 %v190, %v190
  %v223 = vmul.f32 %v191, %v191
  %v224 = vmul.f32 %v192, %v192
  %v225 = vmul.f32 %v193, %v193
  %v226 = vmul.f32 %v194, %v194
  %v227 = vmul.f32 %v195, %v195
  %v228 = vmul.f32 %v196, %v196
  %v229 = vmul.f32 %v197, %v197
  %v230 = vmul.f32 %v198, %v198
  %v231 = vmul.f32 %v199, %v199
  %v232 = vadd.f32 %v200, %v201
  %233 = vadd.xlane.f32.xlu0 %v232
  %v234 = vpop.xlane.xlu0 %233
  %v235 = vadd.f32 %v202, %v203
  %236 = vadd.xlane.f32.xlu0 %v235
  %v237 = vpop.xlane.xlu0 %236
  %v238 = vadd.f32 %v204, %v205
  %239 = vadd.xlane.f32.xlu0 %v238
  %v240 = vpop.xlane.xlu0 %239
  %v241 = vadd.f32 %v206, %v207
  %242 = vadd.xlane.f32.xlu0 %v241
  %v243 = vpop.xlane.xlu0 %242
  %v244 = vadd.f32 %v208, %v209
  %245 = vadd.xlane.f32.xlu0 %v244
  %v246 = vpop.xlane.xlu0 %245
  %v247 = vadd.f32 %v210, %v211
  %248 = vadd.xlane.f32.xlu0 %v247
  %v249 = vpop.xlane.xlu0 %248
  %v250 = vadd.f32 %v212, %v213
  %251 = vadd.xlane.f32.xlu0 %v250
  %v252 = vpop.xlane.xlu0 %251
  %v253 = vadd.f32 %v214, %v215
  %254 = vadd.xlane.f32.xlu0 %v253
  %v255 = vpop.xlane.xlu0 %254
  %v256 = vadd.f32 %v216, %v217
  %257 = vadd.xlane.f32.xlu0 %v256
  %v258 = vpop.xlane.xlu0 %257
  %v259 = vadd.f32 %v218, %v219
  %260 = vadd.xlane.f32.xlu0 %v259
  %v261 = vpop.xlane.xlu0 %260
  %v262 = vadd.f32 %v220, %v221
  %263 = vadd.xlane.f32.xlu0 %v262
  %v264 = vpop.xlane.xlu0 %263
  %v265 = vadd.f32 %v222, %v223
  %266 = vadd.xlane.f32.xlu0 %v265
  %v267 = vpop.xlane.xlu0 %266
  %v268 = vadd.f32 %v224, %v225
  %269 = vadd.xlane.f32.xlu0 %v268
  %v270 = vpop.xlane.xlu0 %269
  %v271 = vadd.f32 %v226, %v227
  %272 = vadd.xlane.f32.xlu0 %v271
  %v273 = vpop.xlane.xlu0 %272
  %v274 = vadd.f32 %v228, %v229
  %275 = vadd.xlane.f32.xlu0 %v274
  %v276 = vpop.xlane.xlu0 %275
  %v277 = vadd.f32 %v230, %v231
  %278 = vadd.xlane.f32.xlu0 %v277
  %v279 = vpop.xlane.xlu0 %278
  %v280 = vmul.f32 %v234, 0.006802721
  %v281 = vmul.f32 %v237, 0.006802721
  %v282 = vmul.f32 %v240, 0.006802721
  %v283 = vmul.f32 %v243, 0.006802721
  %v284 = vmul.f32 %v246, 0.006802721
  %v285 = vmul.f32 %v249, 0.006802721
  %v286 = vmul.f32 %v252, 0.006802721
  %v287 = vmul.f32 %v255, 0.006802721
  %v288 = vmul.f32 %v258, 0.006802721
  %v289 = vmul.f32 %v261, 0.006802721
  %v290 = vmul.f32 %v264, 0.006802721
  %v291 = vmul.f32 %v267, 0.006802721
  %v292 = vmul.f32 %v270, 0.006802721
  %v293 = vmul.f32 %v273, 0.006802721
  %v294 = vmul.f32 %v276, 0.006802721
  %v295 = vmul.f32 %v279, 0.006802721
  %v296 = vadd.f32 %v280, 1e-05
  %v297 = vadd.f32 %v281, 1e-05
  %v298 = vadd.f32 %v282, 1e-05
  %v299 = vadd.f32 %v283, 1e-05
  %v300 = vadd.f32 %v284, 1e-05
  %v301 = vadd.f32 %v285, 1e-05
  %v302 = vadd.f32 %v286, 1e-05
  %v303 = vadd.f32 %v287, 1e-05
  %v304 = vadd.f32 %v288, 1e-05
  %v305 = vadd.f32 %v289, 1e-05
  %v306 = vadd.f32 %v290, 1e-05
  %v307 = vadd.f32 %v291, 1e-05
  %v308 = vadd.f32 %v292, 1e-05
  %v309 = vadd.f32 %v293, 1e-05
  %v310 = vadd.f32 %v294, 1e-05
  %v311 = vadd.f32 %v295, 1e-05
  %v312 = vrsqrt.pop %v296
  %v313 = vrsqrt.pop %v297
  %v314 = vrsqrt.pop %v298
  %v315 = vrsqrt.pop %v299
  %v316 = vrsqrt.pop %v300
  %v317 = vrsqrt.pop %v301
  %v318 = vrsqrt.pop %v302
  %v319 = vrsqrt.pop %v303
  %v320 = vrsqrt.pop %v304
  %v321 = vrsqrt.pop %v305
  %v322 = vrsqrt.pop %v306
  %v323 = vrsqrt.pop %v307
  %v324 = vrsqrt.pop %v308
  %v325 = vrsqrt.pop %v309
  %v326 = vrsqrt.pop %v310
  %v327 = vrsqrt.pop %v311
  %v328 = vmul.f32 %v168, %v312
  %v329 = vmul.f32 %v169, %v312
  %v330 = vmul.f32 %v170, %v313
  %v331 = vmul.f32 %v171, %v313
  %v332 = vmul.f32 %v172, %v314
  %v333 = vmul.f32 %v173, %v314
  %v334 = vmul.f32 %v174, %v315
  %v335 = vmul.f32 %v175, %v315
  %v336 = vmul.f32 %v176, %v316
  %v337 = vmul.f32 %v177, %v316
  %v338 = vmul.f32 %v178, %v317
  %v339 = vmul.f32 %v179, %v317
  %v340 = vmul.f32 %v180, %v318
  %v341 = vmul.f32 %v181, %v318
  %v342 = vmul.f32 %v182, %v319
  %v343 = vmul.f32 %v183, %v319
  %v344 = vmul.f32 %v184, %v320
  %v345 = vmul.f32 %v185, %v320
  %v346 = vmul.f32 %v186, %v321
  %v347 = vmul.f32 %v187, %v321
  %v348 = vmul.f32 %v188, %v322
  %v349 = vmul.f32 %v189, %v322
  %v350 = vmul.f32 %v190, %v323
  %v351 = vmul.f32 %v191, %v323
  %v352 = vmul.f32 %v192, %v324
  %v353 = vmul.f32 %v193, %v324
  %v354 = vmul.f32 %v194, %v325
  %v355 = vmul.f32 %v195, %v325
  %v356 = vmul.f32 %v196, %v326
  %v357 = vmul.f32 %v197, %v326
  %v358 = vmul.f32 %v198, %v327
  %v359 = vmul.f32 %v199, %v327
  %v360 = vld [vmem:[%s2] ss:$2 sm:$0x3]
  %v362 = vlaneseq
  %v363 = vshrl.u32 %v362, 7
  %v364 = vsub.s32 0, %v363
  %v365 = vrot.slane %v360, %v364
  %v366 = vlaneseq
  %v367 = vshrl.u32 %v366, 7
  %v368 = vsub.s32 1, %v367
  %v369 = vrot.slane %v360, %v368
  %v372 = vmul.f32 %v328, %v365
  %v373 = vmul.f32 %v329, %v369
  %v374 = vmul.f32 %v330, %v365
  %v375 = vmul.f32 %v331, %v369
  %v376 = vmul.f32 %v332, %v365
  %v377 = vmul.f32 %v333, %v369
  %v378 = vmul.f32 %v334, %v365
  %v379 = vmul.f32 %v335, %v369
  %v380 = vmul.f32 %v336, %v365
  %v381 = vmul.f32 %v337, %v369
  %v382 = vmul.f32 %v338, %v365
  %v383 = vmul.f32 %v339, %v369
  %v384 = vmul.f32 %v340, %v365
  %v385 = vmul.f32 %v341, %v369
  %v386 = vmul.f32 %v342, %v365
  %v387 = vmul.f32 %v343, %v369
  %v388 = vmul.f32 %v344, %v365
  %v389 = vmul.f32 %v345, %v369
  %v390 = vmul.f32 %v346, %v365
  %v391 = vmul.f32 %v347, %v369
  %v392 = vmul.f32 %v348, %v365
  %v393 = vmul.f32 %v349, %v369
  %v394 = vmul.f32 %v350, %v365
  %v395 = vmul.f32 %v351, %v369
  %v396 = vmul.f32 %v352, %v365
  %v397 = vmul.f32 %v353, %v369
  %v398 = vmul.f32 %v354, %v365
  %v399 = vmul.f32 %v355, %v369
  %v400 = vmul.f32 %v356, %v365
  %v401 = vmul.f32 %v357, %v369
  %v402 = vmul.f32 %v358, %v365
  %v403 = vmul.f32 %v359, %v369
  %s404 = scalar_lea.vmem %s2, 1
  %v405 = vld [vmem:[%s404] ss:$2 sm:$0x3]
  %v407 = vlaneseq
  %v408 = vshrl.u32 %v407, 7
  %v409 = vsub.s32 0, %v408
  %v410 = vrot.slane %v405, %v409
  %v411 = vlaneseq
  %v412 = vshrl.u32 %v411, 7
  %v413 = vsub.s32 1, %v412
  %v414 = vrot.slane %v405, %v413
  %v417 = vadd.f32 %v372, %v410
  %v418 = vadd.f32 %v373, %v414
  %v419 = vadd.f32 %v374, %v410
  %v420 = vadd.f32 %v375, %v414
  %v421 = vadd.f32 %v376, %v410
  %v422 = vadd.f32 %v377, %v414
  %v423 = vadd.f32 %v378, %v410
  %v424 = vadd.f32 %v379, %v414
  %v425 = vadd.f32 %v380, %v410
  %v426 = vadd.f32 %v381, %v414
  %v427 = vadd.f32 %v382, %v410
  %v428 = vadd.f32 %v383, %v414
  %v429 = vadd.f32 %v384, %v410
  %v430 = vadd.f32 %v385, %v414
  %v431 = vadd.f32 %v386, %v410
  %v432 = vadd.f32 %v387, %v414
  %v433 = vadd.f32 %v388, %v410
  %v434 = vadd.f32 %v389, %v414
  %v435 = vadd.f32 %v390, %v410
  %v436 = vadd.f32 %v391, %v414
  %v437 = vadd.f32 %v392, %v410
  %v438 = vadd.f32 %v393, %v414
  %v439 = vadd.f32 %v394, %v410
  %v440 = vadd.f32 %v395, %v414
  %v441 = vadd.f32 %v396, %v410
  %v442 = vadd.f32 %v397, %v414
  %v443 = vadd.f32 %v398, %v410
  %v444 = vadd.f32 %v399, %v414
  %v445 = vadd.f32 %v400, %v410
  %v446 = vadd.f32 %v401, %v414
  %v447 = vadd.f32 %v402, %v410
  %v448 = vadd.f32 %v403, %v414
  %v449 = vpack.c.bf16 %v419, %v417
  %v450 = vpack.c.bf16 %v420, %v418
  %v451 = vpack.c.bf16 %v423, %v421
  %v452 = vpack.c.bf16 %v424, %v422
  %v453 = vpack.c.bf16 %v427, %v425
  %v454 = vpack.c.bf16 %v428, %v426
  %v455 = vpack.c.bf16 %v431, %v429
  %v456 = vpack.c.bf16 %v432, %v430
  %v457 = vpack.c.bf16 %v435, %v433
  %v458 = vpack.c.bf16 %v436, %v434
  %v459 = vpack.c.bf16 %v439, %v437
  %v460 = vpack.c.bf16 %v440, %v438
  %v461 = vpack.c.bf16 %v443, %v441
  %v462 = vpack.c.bf16 %v444, %v442
  %v463 = vpack.c.bf16 %v447, %v445
  %v464 = vpack.c.bf16 %v448, %v446
  %v465 = vld [vmem:[%s1] sm:$0xff]
  %v466 = vld [vmem:[%s1 + $0x8] sm:$0xf]
  %v467 = vld [vmem:[%s1 + $0xc] sm:$0xff]
  %v468 = vld [vmem:[%s1 + $0x14] sm:$0xf]
  %v469 = vld [vmem:[%s1 + $0x18] sm:$0xff]
  %v470 = vld [vmem:[%s1 + $0x20] sm:$0xf]
  %v471 = vld [vmem:[%s1 + $0x24] sm:$0xff]
  %v472 = vld [vmem:[%s1 + $0x2c] sm:$0xf]
  %v473 = vld [vmem:[%s1 + $0x30] sm:$0xff]
  %v474 = vld [vmem:[%s1 + $0x38] sm:$0xf]
  %v475 = vld [vmem:[%s1 + $0x3c] sm:$0xff]
  %v476 = vld [vmem:[%s1 + $0x44] sm:$0xf]
  %v477 = vld [vmem:[%s1 + $0x48] sm:$0xff]
  %v478 = vld [vmem:[%s1 + $0x50] sm:$0xf]
  %v479 = vld [vmem:[%s1 + $0x54] sm:$0xff]
  %v480 = vld [vmem:[%s1 + $0x5c] sm:$0xf]
  %v481 = vld [vmem:[%s1 + $0x60] sm:$0xff]
  %v482 = vld [vmem:[%s1 + $0x68] sm:$0xf]
  %v483 = vld [vmem:[%s1 + $0x6c] sm:$0xff]
  %v484 = vld [vmem:[%s1 + $0x74] sm:$0xf]
  %v485 = vld [vmem:[%s1 + $0x78] sm:$0xff]
  %v486 = vld [vmem:[%s1 + $0x80] sm:$0xf]
  %v487 = vld [vmem:[%s1 + $0x84] sm:$0xff]
  %v488 = vld [vmem:[%s1 + $0x8c] sm:$0xf]
  %v489 = vld [vmem:[%s1 + $0x90] sm:$0xff]
  %v490 = vld [vmem:[%s1 + $0x98] sm:$0xf]
  %v491 = vld [vmem:[%s1 + $0x9c] sm:$0xff]
  %v492 = vld [vmem:[%s1 + $0xa4] sm:$0xf]
  %v493 = vld [vmem:[%s1 + $0xa8] sm:$0xff]
  %v494 = vld [vmem:[%s1 + $0xb0] sm:$0xf]
  %v495 = vld [vmem:[%s1 + $0xb4] sm:$0xff]
  %v496 = vld [vmem:[%s1 + $0xbc] sm:$0xf]
  %v497 = vld [vmem:[%s1 + $0xc0] sm:$0xff]
  %v498 = vld [vmem:[%s1 + $0xc8] sm:$0xf]
  %v499 = vld [vmem:[%s1 + $0xcc] sm:$0xff]
  %v500 = vld [vmem:[%s1 + $0xd4] sm:$0xf]
  %v501 = vld [vmem:[%s1 + $0xd8] sm:$0xff]
  %v502 = vld [vmem:[%s1 + $0xe0] sm:$0xf]
  %v503 = vld [vmem:[%s1 + $0xe4] sm:$0xff]
  %v504 = vld [vmem:[%s1 + $0xec] sm:$0xf]
  %v505 = vld [vmem:[%s1 + $0xf0] sm:$0xff]
  %v506 = vld [vmem:[%s1 + $0xf8] sm:$0xf]
  %v507 = vld [vmem:[%s1 + $0xfc] sm:$0xff]
  %v508 = vld [vmem:[%s1 + $0x104] sm:$0xf]
  %v509 = vld [vmem:[%s1 + $0x108] sm:$0xff]
  %v510 = vld [vmem:[%s1 + $0x110] sm:$0xf]
  %v511 = vld [vmem:[%s1 + $0x114] sm:$0xff]
  %v512 = vld [vmem:[%s1 + $0x11c] sm:$0xf]
  %v513 = vld [vmem:[%s1 + $0x120] sm:$0xff]
  %v514 = vld [vmem:[%s1 + $0x128] sm:$0xf]
  %v515 = vld [vmem:[%s1 + $0x12c] sm:$0xff]
  %v516 = vld [vmem:[%s1 + $0x134] sm:$0xf]
  %v517 = vld [vmem:[%s1 + $0x138] sm:$0xff]
  %v518 = vld [vmem:[%s1 + $0x140] sm:$0xf]
  %v519 = vld [vmem:[%s1 + $0x144] sm:$0xff]
  %v520 = vld [vmem:[%s1 + $0x14c] sm:$0xf]
  %v521 = vld [vmem:[%s1 + $0x150] sm:$0xff]
  %v522 = vld [vmem:[%s1 + $0x158] sm:$0xf]
  %v523 = vld [vmem:[%s1 + $0x15c] sm:$0xff]
  %v524 = vld [vmem:[%s1 + $0x164] sm:$0xf]
  %v525 = vld [vmem:[%s1 + $0x168] sm:$0xff]
  %v526 = vld [vmem:[%s1 + $0x170] sm:$0xf]
  %v527 = vld [vmem:[%s1 + $0x174] sm:$0xff]
  %v528 = vld [vmem:[%s1 + $0x17c] sm:$0xf]
  %v593 = vunpack.c.l.b16 %v465
  %v594 = vunpack.c.h.b16 %v465
  %v595 = vunpack.c.l.b16 %v466
  %v596 = vunpack.c.l.b16 %v467
  %v597 = vunpack.c.h.b16 %v467
  %v598 = vunpack.c.l.b16 %v468
  %v599 = vunpack.c.l.b16 %v469
  %v600 = vunpack.c.h.b16 %v469
  %v601 = vunpack.c.l.b16 %v470
  %v602 = vunpack.c.l.b16 %v471
  %v603 = vunpack.c.h.b16 %v471
  %v604 = vunpack.c.l.b16 %v472
  %v605 = vunpack.c.l.b16 %v473
  %v606 = vunpack.c.h.b16 %v473
  %v607 = vunpack.c.l.b16 %v474
  %v608 = vunpack.c.l.b16 %v475
  %v609 = vunpack.c.h.b16 %v475
  %v610 = vunpack.c.l.b16 %v476
  %v611 = vunpack.c.l.b16 %v477
  %v612 = vunpack.c.h.b16 %v477
  %v613 = vunpack.c.l.b16 %v478
  %v614 = vunpack.c.l.b16 %v479
  %v615 = vunpack.c.h.b16 %v479
  %v616 = vunpack.c.l.b16 %v480
  %v617 = vunpack.c.l.b16 %v481
  %v618 = vunpack.c.h.b16 %v481
  %v619 = vunpack.c.l.b16 %v482
  %v620 = vunpack.c.l.b16 %v483
  %v621 = vunpack.c.h.b16 %v483
  %v622 = vunpack.c.l.b16 %v484
  %v623 = vunpack.c.l.b16 %v485
  %v624 = vunpack.c.h.b16 %v485
  %v625 = vunpack.c.l.b16 %v486
  %v626 = vunpack.c.l.b16 %v487
  %v627 = vunpack.c.h.b16 %v487
  %v628 = vunpack.c.l.b16 %v488
  %v629 = vunpack.c.l.b16 %v489
  %v630 = vunpack.c.h.b16 %v489
  %v631 = vunpack.c.l.b16 %v490
  %v632 = vunpack.c.l.b16 %v491
  %v633 = vunpack.c.h.b16 %v491
  %v634 = vunpack.c.l.b16 %v492
  %v635 = vunpack.c.l.b16 %v493
  %v636 = vunpack.c.h.b16 %v493
  %v637 = vunpack.c.l.b16 %v494
  %v638 = vunpack.c.l.b16 %v495
  %v639 = vunpack.c.h.b16 %v495
  %v640 = vunpack.c.l.b16 %v496
  %v641 = vunpack.c.l.b16 %v497
  %v642 = vunpack.c.h.b16 %v497
  %v643 = vunpack.c.l.b16 %v498
  %v644 = vunpack.c.l.b16 %v499
  %v645 = vunpack.c.h.b16 %v499
  %v646 = vunpack.c.l.b16 %v500
  %v647 = vunpack.c.l.b16 %v501
  %v648 = vunpack.c.h.b16 %v501
  %v649 = vunpack.c.l.b16 %v502
  %v650 = vunpack.c.l.b16 %v503
  %v651 = vunpack.c.h.b16 %v503
  %v652 = vunpack.c.l.b16 %v504
  %v653 = vunpack.c.l.b16 %v505
  %v654 = vunpack.c.h.b16 %v505
  %v655 = vunpack.c.l.b16 %v506
  %v656 = vunpack.c.l.b16 %v507
  %v657 = vunpack.c.h.b16 %v507
  %v658 = vunpack.c.l.b16 %v508
  %v659 = vunpack.c.l.b16 %v509
  %v660 = vunpack.c.h.b16 %v509
  %v661 = vunpack.c.l.b16 %v510
  %v662 = vunpack.c.l.b16 %v511
  %v663 = vunpack.c.h.b16 %v511
  %v664 = vunpack.c.l.b16 %v512
  %v665 = vunpack.c.l.b16 %v513
  %v666 = vunpack.c.h.b16 %v513
  %v667 = vunpack.c.l.b16 %v514
  %v668 = vunpack.c.l.b16 %v515
  %v669 = vunpack.c.h.b16 %v515
  %v670 = vunpack.c.l.b16 %v516
  %v671 = vunpack.c.l.b16 %v517
  %v672 = vunpack.c.h.b16 %v517
  %v673 = vunpack.c.l.b16 %v518
  %v674 = vunpack.c.l.b16 %v519
  %v675 = vunpack.c.h.b16 %v519
  %v676 = vunpack.c.l.b16 %v520
  %v677 = vunpack.c.l.b16 %v521
  %v678 = vunpack.c.h.b16 %v521
  %v679 = vunpack.c.l.b16 %v522
  %v680 = vunpack.c.l.b16 %v523
  %v681 = vunpack.c.h.b16 %v523
  %v682 = vunpack.c.l.b16 %v524
  %v683 = vunpack.c.l.b16 %v525
  %v684 = vunpack.c.h.b16 %v525
  %v685 = vunpack.c.l.b16 %v526
  %v686 = vunpack.c.l.b16 %v527
  %v687 = vunpack.c.h.b16 %v527
  %v688 = vunpack.c.l.b16 %v528
  %v689 = vpack.c.b16 %v596, %v593
  %v690 = vpack.c.b16 %v597, %v594
  %v691 = vpack.c.b16 %v598, %v595
  %v692 = vpack.c.b16 %v602, %v599
  %v693 = vpack.c.b16 %v603, %v600
  %v694 = vpack.c.b16 %v604, %v601
  %v695 = vpack.c.b16 %v608, %v605
  %v696 = vpack.c.b16 %v609, %v606
  %v697 = vpack.c.b16 %v610, %v607
  %v698 = vpack.c.b16 %v614, %v611
  %v699 = vpack.c.b16 %v615, %v612
  %v700 = vpack.c.b16 %v616, %v613
  %v701 = vpack.c.b16 %v620, %v617
  %v702 = vpack.c.b16 %v621, %v618
  %v703 = vpack.c.b16 %v622, %v619
  %v704 = vpack.c.b16 %v626, %v623
  %v705 = vpack.c.b16 %v627, %v624
  %v706 = vpack.c.b16 %v628, %v625
  %v707 = vpack.c.b16 %v632, %v629
  %v708 = vpack.c.b16 %v633, %v630
  %v709 = vpack.c.b16 %v634, %v631
  %v710 = vpack.c.b16 %v638, %v635
  %v711 = vpack.c.b16 %v639, %v636
  %v712 = vpack.c.b16 %v640, %v637
  %v713 = vpack.c.b16 %v644, %v641
  %v714 = vpack.c.b16 %v645, %v642
  %v715 = vpack.c.b16 %v646, %v643
  %v716 = vpack.c.b16 %v650, %v647
  %v717 = vpack.c.b16 %v651, %v648
  %v718 = vpack.c.b16 %v652, %v649
  %v719 = vpack.c.b16 %v656, %v653
  %v720 = vpack.c.b16 %v657, %v654
  %v721 = vpack.c.b16 %v658, %v655
  %v722 = vpack.c.b16 %v662, %v659
  %v723 = vpack.c.b16 %v663, %v660
  %v724 = vpack.c.b16 %v664, %v661
  %v725 = vpack.c.b16 %v668, %v665
  %v726 = vpack.c.b16 %v669, %v666
  %v727 = vpack.c.b16 %v670, %v667
  %v728 = vpack.c.b16 %v674, %v671
  %v729 = vpack.c.b16 %v675, %v672
  %v730 = vpack.c.b16 %v676, %v673
  %v731 = vpack.c.b16 %v680, %v677
  %v732 = vpack.c.b16 %v681, %v678
  %v733 = vpack.c.b16 %v682, %v679
  %v734 = vpack.c.b16 %v686, %v683
  %v735 = vpack.c.b16 %v687, %v684
  %v736 = vpack.c.b16 %v688, %v685
  %785 = vmatprep.subr.bf16.mxu0 %v711
  %786 = vmatpush1.bf16.msra.mxu0 %v710
  %787 = vmatprep.subr.bf16.mxu0 %v708
  %788 = vmatpush1.bf16.msra.mxu0 %v707
  %789 = vmatprep.subr.bf16.mxu0 %v705
  %790 = vmatpush1.bf16.msra.mxu0 %v704
  %791 = vmatprep.subr.bf16.mxu0 %v702
  %792 = vmatpush1.bf16.msra.mxu0 %v701
  %793 = vmatprep.subr.bf16.mxu0 %v699
  %794 = vmatpush1.bf16.msra.mxu0 %v698
  %795 = vmatprep.subr.bf16.mxu0 %v696
  %796 = vmatpush1.bf16.msra.mxu0 %v695
  %797 = vmatprep.subr.bf16.mxu0 %v693
  %798 = vmatpush1.bf16.msra.mxu0 %v692
  %799 = vmatprep.subr.bf16.mxu0 %v690
  %800 = vmatpush1.bf16.msra.mxu0 %v689
  %801 = vmatprep.subr.bf16.mxu0 %v735
  %802 = vmatpush2.bf16.msra.mxu0 %v734
  %803 = vmatprep.subr.bf16.mxu0 %v732
  %804 = vmatpush2.bf16.msra.mxu0 %v731
  %805 = vmatprep.subr.bf16.mxu0 %v729
  %806 = vmatpush2.bf16.msra.mxu0 %v728
  %807 = vmatprep.subr.bf16.mxu0 %v726
  %808 = vmatpush2.bf16.msra.mxu0 %v725
  %809 = vmatprep.subr.bf16.mxu0 %v723
  %810 = vmatpush2.bf16.msra.mxu0 %v722
  %811 = vmatprep.subr.bf16.mxu0 %v720
  %812 = vmatpush2.bf16.msra.mxu0 %v719
  %813 = vmatprep.subr.bf16.mxu0 %v717
  %814 = vmatpush2.bf16.msra.mxu0 %v716
  %815 = vmatprep.subr.bf16.mxu0 %v714
  %816 = vmatpush2.bf16.msra.mxu0 %v713
  %817 = vmatprep.mubr.bf16.mxu0 %v450
  %818 = vmatmul.mubr.bf16.gmra.mxu0 %v449
  %v819 = vpop.f32.mrf.mxu0
  %v820 = vadd.f32 0.0, %v819
  %v821 = vpop.f32.mrf.mxu0
  %v822 = vadd.f32 0.0, %v821
  %v823 = vpop.f32.mrf.mxu0
  %v824 = vadd.f32 0.0, %v823
  %v825 = vpop.f32.mrf.mxu0
  %v826 = vadd.f32 0.0, %v825
  %827 = vmatprep.mubr.bf16.mxu0 %v452
  %828 = vmatmul.mubr.bf16.gmra.mxu0 %v451
  %v829 = vpop.f32.mrf.mxu0
  %v830 = vadd.f32 0.0, %v829
  %v831 = vpop.f32.mrf.mxu0
  %v832 = vadd.f32 0.0, %v831
  %v833 = vpop.f32.mrf.mxu0
  %v834 = vadd.f32 0.0, %v833
  %v835 = vpop.f32.mrf.mxu0
  %v836 = vadd.f32 0.0, %v835
  %837 = vmatprep.mubr.bf16.mxu0 %v454
  %838 = vmatmul.mubr.bf16.gmra.mxu0 %v453
  %v839 = vpop.f32.mrf.mxu0
  %v840 = vadd.f32 0.0, %v839
  %v841 = vpop.f32.mrf.mxu0
  %v842 = vadd.f32 0.0, %v841
  %v843 = vpop.f32.mrf.mxu0
  %v844 = vadd.f32 0.0, %v843
  %v845 = vpop.f32.mrf.mxu0
  %v846 = vadd.f32 0.0, %v845
  %847 = vmatprep.mubr.bf16.mxu0 %v456
  %848 = vmatmul.mubr.bf16.gmra.mxu0 %v455
  %v849 = vpop.f32.mrf.mxu0
  %v850 = vadd.f32 0.0, %v849
  %v851 = vpop.f32.mrf.mxu0
  %v852 = vadd.f32 0.0, %v851
  %v853 = vpop.f32.mrf.mxu0
  %v854 = vadd.f32 0.0, %v853
  %v855 = vpop.f32.mrf.mxu0
  %v856 = vadd.f32 0.0, %v855
  %857 = vmatprep.mubr.bf16.mxu0 %v458
  %858 = vmatmul.mubr.bf16.gmra.mxu0 %v457
  %v859 = vpop.f32.mrf.mxu0
  %v860 = vadd.f32 0.0, %v859
  %v861 = vpop.f32.mrf.mxu0
  %v862 = vadd.f32 0.0, %v861
  %v863 = vpop.f32.mrf.mxu0
  %v864 = vadd.f32 0.0, %v863
  %v865 = vpop.f32.mrf.mxu0
  %v866 = vadd.f32 0.0, %v865
  %867 = vmatprep.mubr.bf16.mxu0 %v460
  %868 = vmatmul.mubr.bf16.gmra.mxu0 %v459
  %v869 = vpop.f32.mrf.mxu0
  %v870 = vadd.f32 0.0, %v869
  %v871 = vpop.f32.mrf.mxu0
  %v872 = vadd.f32 0.0, %v871
  %v873 = vpop.f32.mrf.mxu0
  %v874 = vadd.f32 0.0, %v873
  %v875 = vpop.f32.mrf.mxu0
  %v876 = vadd.f32 0.0, %v875
  %877 = vmatprep.mubr.bf16.mxu0 %v462
  %878 = vmatmul.mubr.bf16.gmra.mxu0 %v461
  %v879 = vpop.f32.mrf.mxu0
  %v880 = vadd.f32 0.0, %v879
  %v881 = vpop.f32.mrf.mxu0
  %v882 = vadd.f32 0.0, %v881
  %v883 = vpop.f32.mrf.mxu0
  %v884 = vadd.f32 0.0, %v883
  %v885 = vpop.f32.mrf.mxu0
  %v886 = vadd.f32 0.0, %v885
  %887 = vmatprep.mubr.bf16.mxu0 %v464
  %888 = vmatmul.mubr.bf16.gmra.mxu0 %v463
  %v889 = vpop.f32.mrf.mxu0
  %v890 = vadd.f32 0.0, %v889
  %v891 = vpop.f32.mrf.mxu0
  %v892 = vadd.f32 0.0, %v891
  %v893 = vpop.f32.mrf.mxu0
  %v894 = vadd.f32 0.0, %v893
  %v895 = vpop.f32.mrf.mxu0
  %v896 = vadd.f32 0.0, %v895
  %897 = vdwg.mxu0
  %898 = vmatprep.subr.bf16.mxu0 0
  %899 = vmatpush1.bf16.msra.mxu0 %v712
  %900 = vmatprep.subr.bf16.mxu0 0
  %901 = vmatpush1.bf16.msra.mxu0 %v709
  %902 = vmatprep.subr.bf16.mxu0 0
  %903 = vmatpush1.bf16.msra.mxu0 %v706
  %904 = vmatprep.subr.bf16.mxu0 0
  %905 = vmatpush1.bf16.msra.mxu0 %v703
  %906 = vmatprep.subr.bf16.mxu0 0
  %907 = vmatpush1.bf16.msra.mxu0 %v700
  %908 = vmatprep.subr.bf16.mxu0 0
  %909 = vmatpush1.bf16.msra.mxu0 %v697
  %910 = vmatprep.subr.bf16.mxu0 0
  %911 = vmatpush1.bf16.msra.mxu0 %v694
  %912 = vmatprep.subr.bf16.mxu0 0
  %913 = vmatpush1.bf16.msra.mxu0 %v691
  %914 = vmatprep.subr.bf16.mxu0 0
  %915 = vmatpush2.bf16.msra.mxu0 %v736
  %916 = vmatprep.subr.bf16.mxu0 0
  %917 = vmatpush2.bf16.msra.mxu0 %v733
  %918 = vmatprep.subr.bf16.mxu0 0
  %919 = vmatpush2.bf16.msra.mxu0 %v730
  %920 = vmatprep.subr.bf16.mxu0 0
  %921 = vmatpush2.bf16.msra.mxu0 %v727
  %922 = vmatprep.subr.bf16.mxu0 0
  %923 = vmatpush2.bf16.msra.mxu0 %v724
  %924 = vmatprep.subr.bf16.mxu0 0
  %925 = vmatpush2.bf16.msra.mxu0 %v721
  %926 = vmatprep.subr.bf16.mxu0 0
  %927 = vmatpush2.bf16.msra.mxu0 %v718
  %928 = vmatprep.subr.bf16.mxu0 0
  %929 = vmatpush2.bf16.msra.mxu0 %v715
  %930 = vmatprep.mubr.bf16.mxu0 %v450
  %931 = vmatmul.mubr.bf16.gmra.mxu0 %v449
  %v932 = vpop.f32.mrf.mxu0
  %v933 = vadd.f32 0.0, %v932
  %v934 = vpop.f32.mrf.mxu0
  %v935 = vpop.f32.mrf.mxu0
  %v936 = vadd.f32 0.0, %v935
  %v937 = vpop.f32.mrf.mxu0
  %938 = vmatprep.mubr.bf16.mxu0 %v452
  %939 = vmatmul.mubr.bf16.gmra.mxu0 %v451
  %v940 = vpop.f32.mrf.mxu0
  %v941 = vadd.f32 0.0, %v940
  %v942 = vpop.f32.mrf.mxu0
  %v943 = vpop.f32.mrf.mxu0
  %v944 = vadd.f32 0.0, %v943
  %v945 = vpop.f32.mrf.mxu0
  %946 = vmatprep.mubr.bf16.mxu0 %v454
  %947 = vmatmul.mubr.bf16.gmra.mxu0 %v453
  %v948 = vpop.f32.mrf.mxu0
  %v949 = vadd.f32 0.0, %v948
  %v950 = vpop.f32.mrf.mxu0
  %v951 = vpop.f32.mrf.mxu0
  %v952 = vadd.f32 0.0, %v951
  %v953 = vpop.f32.mrf.mxu0
  %954 = vmatprep.mubr.bf16.mxu0 %v456
  %955 = vmatmul.mubr.bf16.gmra.mxu0 %v455
  %v956 = vpop.f32.mrf.mxu0
  %v957 = vadd.f32 0.0, %v956
  %v958 = vpop.f32.mrf.mxu0
  %v959 = vpop.f32.mrf.mxu0
  %v960 = vadd.f32 0.0, %v959
  %v961 = vpop.f32.mrf.mxu0
  %962 = vmatprep.mubr.bf16.mxu0 %v458
  %963 = vmatmul.mubr.bf16.gmra.mxu0 %v457
  %v964 = vpop.f32.mrf.mxu0
  %v965 = vadd.f32 0.0, %v964
  %v966 = vpop.f32.mrf.mxu0
  %v967 = vpop.f32.mrf.mxu0
  %v968 = vadd.f32 0.0, %v967
  %v969 = vpop.f32.mrf.mxu0
  %970 = vmatprep.mubr.bf16.mxu0 %v460
  %971 = vmatmul.mubr.bf16.gmra.mxu0 %v459
  %v972 = vpop.f32.mrf.mxu0
  %v973 = vadd.f32 0.0, %v972
  %v974 = vpop.f32.mrf.mxu0
  %v975 = vpop.f32.mrf.mxu0
  %v976 = vadd.f32 0.0, %v975
  %v977 = vpop.f32.mrf.mxu0
  %978 = vmatprep.mubr.bf16.mxu0 %v462
  %979 = vmatmul.mubr.bf16.gmra.mxu0 %v461
  %v980 = vpop.f32.mrf.mxu0
  %v981 = vadd.f32 0.0, %v980
  %v982 = vpop.f32.mrf.mxu0
  %v983 = vpop.f32.mrf.mxu0
  %v984 = vadd.f32 0.0, %v983
  %v985 = vpop.f32.mrf.mxu0
  %986 = vmatprep.mubr.bf16.mxu0 %v464
  %987 = vmatmul.mubr.bf16.gmra.mxu0 %v463
  %v988 = vpop.f32.mrf.mxu0
  %v989 = vadd.f32 0.0, %v988
  %v990 = vpop.f32.mrf.mxu0
  %v991 = vpop.f32.mrf.mxu0
  %v992 = vadd.f32 0.0, %v991
  %v993 = vpop.f32.mrf.mxu0
  %994 = vdwg.mxu0
  %v995 = vpack.c.bf16 %v824, %v820
  %v996 = vpack.c.bf16 %v826, %v822
  %v997 = vpack.c.bf16 %v936, %v933
  %v998 = vpack.c.bf16 %v834, %v830
  %v999 = vpack.c.bf16 %v836, %v832
  %v1000 = vpack.c.bf16 %v944, %v941
  %v1001 = vpack.c.bf16 %v844, %v840
  %v1002 = vpack.c.bf16 %v846, %v842
  %v1003 = vpack.c.bf16 %v952, %v949
  %v1004 = vpack.c.bf16 %v854, %v850
  %v1005 = vpack.c.bf16 %v856, %v852
  %v1006 = vpack.c.bf16 %v960, %v957
  %v1007 = vpack.c.bf16 %v864, %v860
  %v1008 = vpack.c.bf16 %v866, %v862
  %v1009 = vpack.c.bf16 %v968, %v965
  %v1010 = vpack.c.bf16 %v874, %v870
  %v1011 = vpack.c.bf16 %v876, %v872
  %v1012 = vpack.c.bf16 %v976, %v973
  %v1013 = vpack.c.bf16 %v884, %v880
  %v1014 = vpack.c.bf16 %v886, %v882
  %v1015 = vpack.c.bf16 %v984, %v981
  %v1016 = vpack.c.bf16 %v894, %v890
  %v1017 = vpack.c.bf16 %v896, %v892
  %v1018 = vpack.c.bf16 %v992, %v989
  %v1043 = vunpack.c.l.b16 %v995
  %v1044 = vunpack.c.l.b16 %v996
  %v1045 = vunpack.c.l.b16 %v997
  %v1046 = vunpack.c.h.b16 %v995
  %v1047 = vunpack.c.h.b16 %v996
  %v1048 = vunpack.c.h.b16 %v997
  %v1049 = vunpack.c.l.b16 %v998
  %v1050 = vunpack.c.l.b16 %v999
  %v1051 = vunpack.c.l.b16 %v1000
  %v1052 = vunpack.c.h.b16 %v998
  %v1053 = vunpack.c.h.b16 %v999
  %v1054 = vunpack.c.h.b16 %v1000
  %v1055 = vunpack.c.l.b16 %v1001
  %v1056 = vunpack.c.l.b16 %v1002
  %v1057 = vunpack.c.l.b16 %v1003
  %v1058 = vunpack.c.h.b16 %v1001
  %v1059 = vunpack.c.h.b16 %v1002
  %v1060 = vunpack.c.h.b16 %v1003
  %v1061 = vunpack.c.l.b16 %v1004
  %v1062 = vunpack.c.l.b16 %v1005
  %v1063 = vunpack.c.l.b16 %v1006
  %v1064 = vunpack.c.h.b16 %v1004
  %v1065 = vunpack.c.h.b16 %v1005
  %v1066 = vunpack.c.h.b16 %v1006
  %v1067 = vunpack.c.l.b16 %v1007
  %v1068 = vunpack.c.l.b16 %v1008
  %v1069 = vunpack.c.l.b16 %v1009
  %v1070 = vunpack.c.h.b16 %v1007
  %v1071 = vunpack.c.h.b16 %v1008
  %v1072 = vunpack.c.h.b16 %v1009
  %v1073 = vunpack.c.l.b16 %v1010
  %v1074 = vunpack.c.l.b16 %v1011
  %v1075 = vunpack.c.l.b16 %v1012
  %v1076 = vunpack.c.h.b16 %v1010
  %v1077 = vunpack.c.h.b16 %v1011
  %v1078 = vunpack.c.h.b16 %v1012
  %v1079 = vunpack.c.l.b16 %v1013
  %v1080 = vunpack.c.l.b16 %v1014
  %v1081 = vunpack.c.l.b16 %v1015
  %v1082 = vunpack.c.h.b16 %v1013
  %v1083 = vunpack.c.h.b16 %v1014
  %v1084 = vunpack.c.h.b16 %v1015
  %v1085 = vunpack.c.l.b16 %v1016
  %v1086 = vunpack.c.l.b16 %v1017
  %v1087 = vunpack.c.l.b16 %v1018
  %v1088 = vunpack.c.h.b16 %v1016
  %v1089 = vunpack.c.h.b16 %v1017
  %v1090 = vunpack.c.h.b16 %v1018
  %v1091 = vpack.c.b16 %v1044, %v1043
  %v1092 = vpack.c.b16 %v1045, %v1045
  %v1093 = vpack.c.b16 %v1047, %v1046
  %v1094 = vpack.c.b16 %v1048, %v1048
  %v1095 = vpack.c.b16 %v1050, %v1049
  %v1096 = vpack.c.b16 %v1051, %v1051
  %v1097 = vpack.c.b16 %v1053, %v1052
  %v1098 = vpack.c.b16 %v1054, %v1054
  %v1099 = vpack.c.b16 %v1056, %v1055
  %v1100 = vpack.c.b16 %v1057, %v1057
  %v1101 = vpack.c.b16 %v1059, %v1058
  %v1102 = vpack.c.b16 %v1060, %v1060
  %v1103 = vpack.c.b16 %v1062, %v1061
  %v1104 = vpack.c.b16 %v1063, %v1063
  %v1105 = vpack.c.b16 %v1065, %v1064
  %v1106 = vpack.c.b16 %v1066, %v1066
  %v1107 = vpack.c.b16 %v1068, %v1067
  %v1108 = vpack.c.b16 %v1069, %v1069
  %v1109 = vpack.c.b16 %v1071, %v1070
  %v1110 = vpack.c.b16 %v1072, %v1072
  %v1111 = vpack.c.b16 %v1074, %v1073
  %v1112 = vpack.c.b16 %v1075, %v1075
  %v1113 = vpack.c.b16 %v1077, %v1076
  %v1114 = vpack.c.b16 %v1078, %v1078
  %v1115 = vpack.c.b16 %v1080, %v1079
  %v1116 = vpack.c.b16 %v1081, %v1081
  %v1117 = vpack.c.b16 %v1083, %v1082
  %v1118 = vpack.c.b16 %v1084, %v1084
  %v1119 = vpack.c.b16 %v1086, %v1085
  %v1120 = vpack.c.b16 %v1087, %v1087
  %v1121 = vpack.c.b16 %v1089, %v1088
  %v1122 = vpack.c.b16 %v1090, %v1090
  %1155 = vst [vmem:[%s3] sm:$0xff] %v1091
  %1156 = vst [vmem:[%s3 + $0x8] sm:$0xf] %v1092
  %1157 = vst [vmem:[%s3 + $0xc] sm:$0xff] %v1093
  %1158 = vst [vmem:[%s3 + $0x14] sm:$0xf] %v1094
  %1159 = vst [vmem:[%s3 + $0x18] sm:$0xff] %v1095
  %1160 = vst [vmem:[%s3 + $0x20] sm:$0xf] %v1096
  %1161 = vst [vmem:[%s3 + $0x24] sm:$0xff] %v1097
  %1162 = vst [vmem:[%s3 + $0x2c] sm:$0xf] %v1098
  %1163 = vst [vmem:[%s3 + $0x30] sm:$0xff] %v1099
  %1164 = vst [vmem:[%s3 + $0x38] sm:$0xf] %v1100
  %1165 = vst [vmem:[%s3 + $0x3c] sm:$0xff] %v1101
  %1166 = vst [vmem:[%s3 + $0x44] sm:$0xf] %v1102
  %1167 = vst [vmem:[%s3 + $0x48] sm:$0xff] %v1103
  %1168 = vst [vmem:[%s3 + $0x50] sm:$0xf] %v1104
  %1169 = vst [vmem:[%s3 + $0x54] sm:$0xff] %v1105
  %1170 = vst [vmem:[%s3 + $0x5c] sm:$0xf] %v1106
  %1171 = vst [vmem:[%s3 + $0x60] sm:$0xff] %v1107
  %1172 = vst [vmem:[%s3 + $0x68] sm:$0xf] %v1108
  %1173 = vst [vmem:[%s3 + $0x6c] sm:$0xff] %v1109
  %1174 = vst [vmem:[%s3 + $0x74] sm:$0xf] %v1110
  %1175 = vst [vmem:[%s3 + $0x78] sm:$0xff] %v1111
  %1176 = vst [vmem:[%s3 + $0x80] sm:$0xf] %v1112
  %1177 = vst [vmem:[%s3 + $0x84] sm:$0xff] %v1113
  %1178 = vst [vmem:[%s3 + $0x8c] sm:$0xf] %v1114
  %1179 = vst [vmem:[%s3 + $0x90] sm:$0xff] %v1115
  %1180 = vst [vmem:[%s3 + $0x98] sm:$0xf] %v1116
  %1181 = vst [vmem:[%s3 + $0x9c] sm:$0xff] %v1117
  %1182 = vst [vmem:[%s3 + $0xa4] sm:$0xf] %v1118
  %1183 = vst [vmem:[%s3 + $0xa8] sm:$0xff] %v1119
  %1184 = vst [vmem:[%s3 + $0xb0] sm:$0xf] %v1120
  %1185 = vst [vmem:[%s3 + $0xb4] sm:$0xff] %v1121
  %1186 = vst [vmem:[%s3 + $0xbc] sm:$0xf] %v1122
  // Predicated region
  $region14: #{_lambda_.5} parent=0 // pred_check
    _
  $region15: #{_lambda_.5} parent=0 // pred_check_branch
    %1188 = sbr.rel (0) target = $region17
  $region16: #{_lambda_.5} parent=0 // pred_region
    _
  $region17: #{_lambda_.5} parent=0 // pred_fallthru
    _
  // Predicated region
  $region18: #{_lambda_.5} parent=0 // pred_check
    _
  $region19: #{_lambda_.5} parent=0 // pred_check_branch
    %1190 = sbr.rel (0) target = $region21
  $region20: #{_lambda_.5} parent=0 // pred_region
    _
  $region21: #{_lambda_.5} parent=0 // pred_fallthru
    _

// kernel: _lambda_.7
$region0: #{_lambda_.7}
  #allocation0 [shape = 'u32[]', space=smem, size = 0x4, offset = 0x4, fixed_abs, tag = 'smem constant byte address 0x4 - core index']
  #allocation1 [shape = 'u32[144,128]{1,0:T(1,128)}', space=vmem, size = 0x12000, scoped, tag = 'internal scratch']
  %s0 = inlined_call_operand.vmem [shape: bf16[32,640], index: 0, kind: input, shape index: {}]
  %s1 = inlined_call_operand.vmem [shape: bf16[640,384], index: 1, kind: input, shape index: {}]
  %s2 = inlined_call_operand.vmem [shape: f32[2,640], index: 2, kind: input, shape index: {}]
  %s3 = inlined_call_operand.vmem [shape: bf16[32,384], index: 3, kind: output, shape index: {}]
  %s4 = sld [smem:[#allocation0]]
  $region22: #{_lambda_.7} parent=0
    _
  %s6 = ssub.s32 1, %s4
  %s7 = scalar_select 0, %s6, %s4
  // Predicated region
  $region2: #{_lambda_.7} parent=0 // pred_check
    _
  $region3: #{_lambda_.7} parent=0 // pred_check_branch
    %9 = sbr.rel (0) target = $region5
  $region4: #{_lambda_.7} parent=0 // pred_region
    _
  $region5: #{_lambda_.7} parent=0 // pred_fallthru
    _
  // Predicated region
  $region6: #{_lambda_.7} parent=0 // pred_check
    _
  $region7: #{_lambda_.7} parent=0 // pred_check_branch
    %11 = sbr.rel (0) target = $region9
  $region8: #{_lambda_.7} parent=0 // pred_region
    _
  $region9: #{_lambda_.7} parent=0 // pred_fallthru
    _
  // Predicated region
  $region10: #{_lambda_.7} parent=0 // pred_check
    _
  $region11: #{_lambda_.7} parent=0 // pred_check_branch
    %13 = sbr.rel (0) target = $region13
  $region12: #{_lambda_.7} parent=0 // pred_region
    _
  $region13: #{_lambda_.7} parent=0 // pred_fallthru
    _
  %v15 = vld [vmem:[%s0] sm:$0xff]
  %v16 = vld [vmem:[%s0 + $0x8] sm:$0xff]
  %v17 = vld [vmem:[%s0 + $0x10] sm:$0xf]
  %v18 = vld [vmem:[%s0 + $0x14] sm:$0xff]
  %v19 = vld [vmem:[%s0 + $0x1c] sm:$0xff]
  %v20 = vld [vmem:[%s0 + $0x24] sm:$0xf]
  %v21 = vld [vmem:[%s0 + $0x28] sm:$0xff]
  %v22 = vld [vmem:[%s0 + $0x30] sm:$0xff]
  %v23 = vld [vmem:[%s0 + $0x38] sm:$0xf]
  %v24 = vld [vmem:[%s0 + $0x3c] sm:$0xff]
  %v25 = vld [vmem:[%s0 + $0x44] sm:$0xff]
  %v26 = vld [vmem:[%s0 + $0x4c] sm:$0xf]
  %v27 = vunpack.c.l.bf16 %v15
  %v28 = vunpack.c.h.bf16 %v15
  %v29 = vunpack.c.l.bf16 %v16
  %v30 = vunpack.c.h.bf16 %v16
  %v31 = vunpack.c.l.bf16 %v17
  %v32 = vunpack.c.l.bf16 %v18
  %v33 = vunpack.c.h.bf16 %v18
  %v34 = vunpack.c.l.bf16 %v19
  %v35 = vunpack.c.h.bf16 %v19
  %v36 = vunpack.c.l.bf16 %v20
  %v37 = vunpack.c.l.bf16 %v21
  %v38 = vunpack.c.h.bf16 %v21
  %v39 = vunpack.c.l.bf16 %v22
  %v40 = vunpack.c.h.bf16 %v22
  %v41 = vunpack.c.l.bf16 %v23
  %v42 = vunpack.c.l.bf16 %v24
  %v43 = vunpack.c.h.bf16 %v24
  %v44 = vunpack.c.l.bf16 %v25
  %v45 = vunpack.c.h.bf16 %v25
  %v46 = vunpack.c.l.bf16 %v26
  %v47 = vlaneseq
  %v48 = vand.u32 %v47, 127
  %v49 = vadd.s32 %v48, 128
  %v50 = vadd.s32 %v48, 256
  %v51 = vadd.s32 %v48, 384
  %v52 = vadd.s32 %v48, 512
  %vm53 = vcmp.lt.s32.totalorder %v48, 576
  %vm54 = vcmp.lt.s32.totalorder %v49, 576
  %vm55 = vcmp.lt.s32.totalorder %v50, 576
  %vm56 = vcmp.lt.s32.totalorder %v51, 576
  %vm57 = vcmp.lt.s32.totalorder %v52, 576
  %v58 = vsel %vm53, 1, 0
  %v59 = vsel %vm54, 1, 0
  %v60 = vsel %vm55, 1, 0
  %v61 = vsel %vm56, 1, 0
  %v62 = vsel %vm57, 1, 0
  %v63 = vcvt.s32.f32 %v58
  %v64 = vcvt.s32.f32 %v59
  %v65 = vcvt.s32.f32 %v60
  %v66 = vcvt.s32.f32 %v61
  %v67 = vcvt.s32.f32 %v62
  %v68 = vadd.f32 %v27, %v28
  %v69 = vadd.f32 %v68, %v29
  %v70 = vadd.f32 %v69, %v30
  %v71 = vadd.f32 %v70, %v31
  %72 = vadd.xlane.f32.xlu0 %v71
  %v73 = vpop.xlane.xlu0 %72
  %v74 = vadd.f32 %v32, %v33
  %v75 = vadd.f32 %v74, %v34
  %v76 = vadd.f32 %v75, %v35
  %v77 = vadd.f32 %v76, %v36
  %78 = vadd.xlane.f32.xlu0 %v77
  %v79 = vpop.xlane.xlu0 %78
  %v80 = vadd.f32 %v37, %v38
  %v81 = vadd.f32 %v80, %v39
  %v82 = vadd.f32 %v81, %v40
  %v83 = vadd.f32 %v82, %v41
  %84 = vadd.xlane.f32.xlu0 %v83
  %v85 = vpop.xlane.xlu0 %84
  %v86 = vadd.f32 %v42, %v43
  %v87 = vadd.f32 %v86, %v44
  %v88 = vadd.f32 %v87, %v45
  %v89 = vadd.f32 %v88, %v46
  %90 = vadd.xlane.f32.xlu0 %v89
  %v91 = vpop.xlane.xlu0 %90
  %v92 = vmul.f32 %v73, 0.0017361111
  %v93 = vmul.f32 %v79, 0.0017361111
  %v94 = vmul.f32 %v85, 0.0017361111
  %v95 = vmul.f32 %v91, 0.0017361111
  %v96 = vsub.f32 %v27, %v92
  %v97 = vsub.f32 %v28, %v92
  %v98 = vsub.f32 %v29, %v92
  %v99 = vsub.f32 %v30, %v92
  %v100 = vsub.f32 %v31, %v92
  %v101 = vsub.f32 %v32, %v93
  %v102 = vsub.f32 %v33, %v93
  %v103 = vsub.f32 %v34, %v93
  %v104 = vsub.f32 %v35, %v93
  %v105 = vsub.f32 %v36, %v93
  %v106 = vsub.f32 %v37, %v94
  %v107 = vsub.f32 %v38, %v94
  %v108 = vsub.f32 %v39, %v94
  %v109 = vsub.f32 %v40, %v94
  %v110 = vsub.f32 %v41, %v94
  %v111 = vsub.f32 %v42, %v95
  %v112 = vsub.f32 %v43, %v95
  %v113 = vsub.f32 %v44, %v95
  %v114 = vsub.f32 %v45, %v95
  %v115 = vsub.f32 %v46, %v95
  %v116 = vmul.f32 %v96, %v63
  %v117 = vmul.f32 %v97, %v64
  %v118 = vmul.f32 %v98, %v65
  %v119 = vmul.f32 %v99, %v66
  %v120 = vmul.f32 %v100, %v67
  %v121 = vmul.f32 %v101, %v63
  %v122 = vmul.f32 %v102, %v64
  %v123 = vmul.f32 %v103, %v65
  %v124 = vmul.f32 %v104, %v66
  %v125 = vmul.f32 %v105, %v67
  %v126 = vmul.f32 %v106, %v63
  %v127 = vmul.f32 %v107, %v64
  %v128 = vmul.f32 %v108, %v65
  %v129 = vmul.f32 %v109, %v66
  %v130 = vmul.f32 %v110, %v67
  %v131 = vmul.f32 %v111, %v63
  %v132 = vmul.f32 %v112, %v64
  %v133 = vmul.f32 %v113, %v65
  %v134 = vmul.f32 %v114, %v66
  %v135 = vmul.f32 %v115, %v67
  %v136 = vmul.f32 %v116, %v116
  %v137 = vmul.f32 %v117, %v117
  %v138 = vmul.f32 %v118, %v118
  %v139 = vmul.f32 %v119, %v119
  %v140 = vmul.f32 %v120, %v120
  %v141 = vmul.f32 %v121, %v121
  %v142 = vmul.f32 %v122, %v122
  %v143 = vmul.f32 %v123, %v123
  %v144 = vmul.f32 %v124, %v124
  %v145 = vmul.f32 %v125, %v125
  %v146 = vmul.f32 %v126, %v126
  %v147 = vmul.f32 %v127, %v127
  %v148 = vmul.f32 %v128, %v128
  %v149 = vmul.f32 %v129, %v129
  %v150 = vmul.f32 %v130, %v130
  %v151 = vmul.f32 %v131, %v131
  %v152 = vmul.f32 %v132, %v132
  %v153 = vmul.f32 %v133, %v133
  %v154 = vmul.f32 %v134, %v134
  %v155 = vmul.f32 %v135, %v135
  %v156 = vadd.f32 %v136, %v137
  %v157 = vadd.f32 %v156, %v138
  %v158 = vadd.f32 %v157, %v139
  %v159 = vadd.f32 %v158, %v140
  %160 = vadd.xlane.f32.xlu0 %v159
  %v161 = vpop.xlane.xlu0 %160
  %v162 = vadd.f32 %v141, %v142
  %v163 = vadd.f32 %v162, %v143
  %v164 = vadd.f32 %v163, %v144
  %v165 = vadd.f32 %v164, %v145
  %166 = vadd.xlane.f32.xlu0 %v165
  %v167 = vpop.xlane.xlu0 %166
  %v168 = vadd.f32 %v146, %v147
  %v169 = vadd.f32 %v168, %v148
  %v170 = vadd.f32 %v169, %v149
  %v171 = vadd.f32 %v170, %v150
  %172 = vadd.xlane.f32.xlu0 %v171
  %v173 = vpop.xlane.xlu0 %172
  %v174 = vadd.f32 %v151, %v152
  %v175 = vadd.f32 %v174, %v153
  %v176 = vadd.f32 %v175, %v154
  %v177 = vadd.f32 %v176, %v155
  %178 = vadd.xlane.f32.xlu0 %v177
  %v179 = vpop.xlane.xlu0 %178
  %v180 = vmul.f32 %v161, 0.0017361111
  %v181 = vmul.f32 %v167, 0.0017361111
  %v182 = vmul.f32 %v173, 0.0017361111
  %v183 = vmul.f32 %v179, 0.0017361111
  %v184 = vadd.f32 %v180, 1e-05
  %v185 = vadd.f32 %v181, 1e-05
  %v186 = vadd.f32 %v182, 1e-05
  %v187 = vadd.f32 %v183, 1e-05
  %v188 = vrsqrt.pop %v184
  %v189 = vrsqrt.pop %v185
  %v190 = vrsqrt.pop %v186
  %v191 = vrsqrt.pop %v187
  %v192 = vmul.f32 %v116, %v188
  %v193 = vmul.f32 %v117, %v188
  %v194 = vmul.f32 %v118, %v188
  %v195 = vmul.f32 %v119, %v188
  %v196 = vmul.f32 %v120, %v188
  %v197 = vmul.f32 %v121, %v189
  %v198 = vmul.f32 %v122, %v189
  %v199 = vmul.f32 %v123, %v189
  %v200 = vmul.f32 %v124, %v189
  %v201 = vmul.f32 %v125, %v189
  %v202 = vmul.f32 %v126, %v190
  %v203 = vmul.f32 %v127, %v190
  %v204 = vmul.f32 %v128, %v190
  %v205 = vmul.f32 %v129, %v190
  %v206 = vmul.f32 %v130, %v190
  %v207 = vmul.f32 %v131, %v191
  %v208 = vmul.f32 %v132, %v191
  %v209 = vmul.f32 %v133, %v191
  %v210 = vmul.f32 %v134, %v191
  %v211 = vmul.f32 %v135, %v191
  %v212 = vld [vmem:[%s2] ss:$2 sm:$0x1f]
  %v214 = vlaneseq
  %v215 = vshrl.u32 %v214, 7
  %v216 = vsub.s32 0, %v215
  %v217 = vrot.slane %v212, %v216
  %v218 = vlaneseq
  %v219 = vshrl.u32 %v218, 7
  %v220 = vsub.s32 1, %v219
  %v221 = vrot.slane %v212, %v220
  %v222 = vlaneseq
  %v223 = vshrl.u32 %v222, 7
  %v224 = vsub.s32 2, %v223
  %v225 = vrot.slane %v212, %v224
  %v226 = vlaneseq
  %v227 = vshrl.u32 %v226, 7
  %v228 = vsub.s32 3, %v227
  %v229 = vrot.slane %v212, %v228
  %v230 = vlaneseq
  %v231 = vshrl.u32 %v230, 7
  %v232 = vsub.s32 4, %v231
  %v233 = vrot.slane %v212, %v232
  %v239 = vmul.f32 %v192, %v217
  %v240 = vmul.f32 %v193, %v221
  %v241 = vmul.f32 %v194, %v225
  %v242 = vmul.f32 %v195, %v229
  %v243 = vmul.f32 %v196, %v233
  %v244 = vmul.f32 %v197, %v217
  %v245 = vmul.f32 %v198, %v221
  %v246 = vmul.f32 %v199, %v225
  %v247 = vmul.f32 %v200, %v229
  %v248 = vmul.f32 %v201, %v233
  %v249 = vmul.f32 %v202, %v217
  %v250 = vmul.f32 %v203, %v221
  %v251 = vmul.f32 %v204, %v225
  %v252 = vmul.f32 %v205, %v229
  %v253 = vmul.f32 %v206, %v233
  %v254 = vmul.f32 %v207, %v217
  %v255 = vmul.f32 %v208, %v221
  %v256 = vmul.f32 %v209, %v225
  %v257 = vmul.f32 %v210, %v229
  %v258 = vmul.f32 %v211, %v233
  %s259 = scalar_lea.vmem %s2, 1
  %v260 = vld [vmem:[%s259] ss:$2 sm:$0x1f]
  %v262 = vlaneseq
  %v263 = vshrl.u32 %v262, 7
  %v264 = vsub.s32 0, %v263
  %v265 = vrot.slane %v260, %v264
  %v266 = vlaneseq
  %v267 = vshrl.u32 %v266, 7
  %v268 = vsub.s32 1, %v267
  %v269 = vrot.slane %v260, %v268
  %v270 = vlaneseq
  %v271 = vshrl.u32 %v270, 7
  %v272 = vsub.s32 2, %v271
  %v273 = vrot.slane %v260, %v272
  %v274 = vlaneseq
  %v275 = vshrl.u32 %v274, 7
  %v276 = vsub.s32 3, %v275
  %v277 = vrot.slane %v260, %v276
  %v278 = vlaneseq
  %v279 = vshrl.u32 %v278, 7
  %v280 = vsub.s32 4, %v279
  %v281 = vrot.slane %v260, %v280
  %v287 = vadd.f32 %v239, %v265
  %v288 = vadd.f32 %v240, %v269
  %v289 = vadd.f32 %v241, %v273
  %v290 = vadd.f32 %v242, %v277
  %v291 = vadd.f32 %v243, %v281
  %v292 = vadd.f32 %v244, %v265
  %v293 = vadd.f32 %v245, %v269
  %v294 = vadd.f32 %v246, %v273
  %v295 = vadd.f32 %v247, %v277
  %v296 = vadd.f32 %v248, %v281
  %v297 = vadd.f32 %v249, %v265
  %v298 = vadd.f32 %v250, %v269
  %v299 = vadd.f32 %v251, %v273
  %v300 = vadd.f32 %v252, %v277
  %v301 = vadd.f32 %v253, %v281
  %v302 = vadd.f32 %v254, %v265
  %v303 = vadd.f32 %v255, %v269
  %v304 = vadd.f32 %v256, %v273
  %v305 = vadd.f32 %v257, %v277
  %v306 = vadd.f32 %v258, %v281
  %v307 = vpack.c.bf16 %v292, %v287
  %v308 = vpack.c.bf16 %v293, %v288
  %v309 = vpack.c.bf16 %v294, %v289
  %v310 = vpack.c.bf16 %v295, %v290
  %v311 = vpack.c.bf16 %v296, %v291
  %v312 = vpack.c.bf16 %v302, %v297
  %v313 = vpack.c.bf16 %v303, %v298
  %v314 = vpack.c.bf16 %v304, %v299
  %v315 = vpack.c.bf16 %v305, %v300
  %v316 = vpack.c.bf16 %v306, %v301
  %v317 = vld [vmem:[%s1] sm:$0xff]
  %v318 = vld [vmem:[%s1 + $0x8] sm:$0xf]
  %v319 = vld [vmem:[%s1 + $0xc] sm:$0xff]
  %v320 = vld [vmem:[%s1 + $0x14] sm:$0xf]
  %v321 = vld [vmem:[%s1 + $0x18] sm:$0xff]
  %v322 = vld [vmem:[%s1 + $0x20] sm:$0xf]
  %v323 = vld [vmem:[%s1 + $0x24] sm:$0xff]
  %v324 = vld [vmem:[%s1 + $0x2c] sm:$0xf]
  %v325 = vld [vmem:[%s1 + $0x30] sm:$0xff]
  %v326 = vld [vmem:[%s1 + $0x38] sm:$0xf]
  %v327 = vld [vmem:[%s1 + $0x3c] sm:$0xff]
  %v328 = vld [vmem:[%s1 + $0x44] sm:$0xf]
  %v329 = vld [vmem:[%s1 + $0x48] sm:$0xff]
  %v330 = vld [vmem:[%s1 + $0x50] sm:$0xf]
  %v331 = vld [vmem:[%s1 + $0x54] sm:$0xff]
  %v332 = vld [vmem:[%s1 + $0x5c] sm:$0xf]
  %v333 = vld [vmem:[%s1 + $0x60] sm:$0xff]
  %v334 = vld [vmem:[%s1 + $0x68] sm:$0xf]
  %v335 = vld [vmem:[%s1 + $0x6c] sm:$0xff]
  %v336 = vld [vmem:[%s1 + $0x74] sm:$0xf]
  %v337 = vld [vmem:[%s1 + $0x78] sm:$0xff]
  %v338 = vld [vmem:[%s1 + $0x80] sm:$0xf]
  %v339 = vld [vmem:[%s1 + $0x84] sm:$0xff]
  %v340 = vld [vmem:[%s1 + $0x8c] sm:$0xf]
  %v341 = vld [vmem:[%s1 + $0x90] sm:$0xff]
  %v342 = vld [vmem:[%s1 + $0x98] sm:$0xf]
  %v343 = vld [vmem:[%s1 + $0x9c] sm:$0xff]
  %v344 = vld [vmem:[%s1 + $0xa4] sm:$0xf]
  %v345 = vld [vmem:[%s1 + $0xa8] sm:$0xff]
  %v346 = vld [vmem:[%s1 + $0xb0] sm:$0xf]
  %v347 = vld [vmem:[%s1 + $0xb4] sm:$0xff]
  %v348 = vld [vmem:[%s1 + $0xbc] sm:$0xf]
  %v349 = vld [vmem:[%s1 + $0xc0] sm:$0xff]
  %v350 = vld [vmem:[%s1 + $0xc8] sm:$0xf]
  %v351 = vld [vmem:[%s1 + $0xcc] sm:$0xff]
  %v352 = vld [vmem:[%s1 + $0xd4] sm:$0xf]
  %v353 = vld [vmem:[%s1 + $0xd8] sm:$0xff]
  %v354 = vld [vmem:[%s1 + $0xe0] sm:$0xf]
  %v355 = vld [vmem:[%s1 + $0xe4] sm:$0xff]
  %v356 = vld [vmem:[%s1 + $0xec] sm:$0xf]
  %v357 = vld [vmem:[%s1 + $0xf0] sm:$0xff]
  %v358 = vld [vmem:[%s1 + $0xf8] sm:$0xf]
  %v359 = vld [vmem:[%s1 + $0xfc] sm:$0xff]
  %v360 = vld [vmem:[%s1 + $0x104] sm:$0xf]
  %v361 = vld [vmem:[%s1 + $0x108] sm:$0xff]
  %v362 = vld [vmem:[%s1 + $0x110] sm:$0xf]
  %v363 = vld [vmem:[%s1 + $0x114] sm:$0xff]
  %v364 = vld [vmem:[%s1 + $0x11c] sm:$0xf]
  %v365 = vld [vmem:[%s1 + $0x120] sm:$0xff]
  %v366 = vld [vmem:[%s1 + $0x128] sm:$0xf]
  %v367 = vld [vmem:[%s1 + $0x12c] sm:$0xff]
  %v368 = vld [vmem:[%s1 + $0x134] sm:$0xf]
  %v369 = vld [vmem:[%s1 + $0x138] sm:$0xff]
  %v370 = vld [vmem:[%s1 + $0x140] sm:$0xf]
  %v371 = vld [vmem:[%s1 + $0x144] sm:$0xff]
  %v372 = vld [vmem:[%s1 + $0x14c] sm:$0xf]
  %v373 = vld [vmem:[%s1 + $0x150] sm:$0xff]
  %v374 = vld [vmem:[%s1 + $0x158] sm:$0xf]
  %v375 = vld [vmem:[%s1 + $0x15c] sm:$0xff]
  %v376 = vld [vmem:[%s1 + $0x164] sm:$0xf]
  %v377 = vld [vmem:[%s1 + $0x168] sm:$0xff]
  %v378 = vld [vmem:[%s1 + $0x170] sm:$0xf]
  %v379 = vld [vmem:[%s1 + $0x174] sm:$0xff]
  %v380 = vld [vmem:[%s1 + $0x17c] sm:$0xf]
  %v381 = vld [vmem:[%s1 + $0x180] sm:$0xff]
  %v382 = vld [vmem:[%s1 + $0x188] sm:$0xf]
  %v383 = vld [vmem:[%s1 + $0x18c] sm:$0xff]
  %v384 = vld [vmem:[%s1 + $0x194] sm:$0xf]
  %v385 = vld [vmem:[%s1 + $0x198] sm:$0xff]
  %v386 = vld [vmem:[%s1 + $0x1a0] sm:$0xf]
  %v387 = vld [vmem:[%s1 + $0x1a4] sm:$0xff]
  %v388 = vld [vmem:[%s1 + $0x1ac] sm:$0xf]
  %v389 = vld [vmem:[%s1 + $0x1b0] sm:$0xff]
  %v390 = vld [vmem:[%s1 + $0x1b8] sm:$0xf]
  %v391 = vld [vmem:[%s1 + $0x1bc] sm:$0xff]
  %v392 = vld [vmem:[%s1 + $0x1c4] sm:$0xf]
  %v393 = vld [vmem:[%s1 + $0x1c8] sm:$0xff]
  %v394 = vld [vmem:[%s1 + $0x1d0] sm:$0xf]
  %v395 = vld [vmem:[%s1 + $0x1d4] sm:$0xff]
  %v396 = vld [vmem:[%s1 + $0x1dc] sm:$0xf]
  %v397 = vld [vmem:[%s1 + $0x1e0] sm:$0xff]
  %v398 = vld [vmem:[%s1 + $0x1e8] sm:$0xf]
  %v399 = vld [vmem:[%s1 + $0x1ec] sm:$0xff]
  %v400 = vld [vmem:[%s1 + $0x1f4] sm:$0xf]
  %v401 = vld [vmem:[%s1 + $0x1f8] sm:$0xff]
  %v402 = vld [vmem:[%s1 + $0x200] sm:$0xf]
  %v403 = vld [vmem:[%s1 + $0x204] sm:$0xff]
  %v404 = vld [vmem:[%s1 + $0x20c] sm:$0xf]
  %v405 = vld [vmem:[%s1 + $0x210] sm:$0xff]
  %v406 = vld [vmem:[%s1 + $0x218] sm:$0xf]
  %v407 = vld [vmem:[%s1 + $0x21c] sm:$0xff]
  %v408 = vld [vmem:[%s1 + $0x224] sm:$0xf]
  %v409 = vld [vmem:[%s1 + $0x228] sm:$0xff]
  %v410 = vld [vmem:[%s1 + $0x230] sm:$0xf]
  %v411 = vld [vmem:[%s1 + $0x234] sm:$0xff]
  %v412 = vld [vmem:[%s1 + $0x23c] sm:$0xf]
  %v413 = vld [vmem:[%s1 + $0x240] sm:$0xff]
  %v414 = vld [vmem:[%s1 + $0x248] sm:$0xf]
  %v415 = vld [vmem:[%s1 + $0x24c] sm:$0xff]
  %v416 = vld [vmem:[%s1 + $0x254] sm:$0xf]
  %v417 = vld [vmem:[%s1 + $0x258] sm:$0xff]
  %v418 = vld [vmem:[%s1 + $0x260] sm:$0xf]
  %v419 = vld [vmem:[%s1 + $0x264] sm:$0xff]
  %v420 = vld [vmem:[%s1 + $0x26c] sm:$0xf]
  %v421 = vld [vmem:[%s1 + $0x270] sm:$0xff]
  %v422 = vld [vmem:[%s1 + $0x278] sm:$0xf]
  %v423 = vld [vmem:[%s1 + $0x27c] sm:$0xff]
  %v424 = vld [vmem:[%s1 + $0x284] sm:$0xf]
  %v425 = vld [vmem:[%s1 + $0x288] sm:$0xff]
  %v426 = vld [vmem:[%s1 + $0x290] sm:$0xf]
  %v427 = vld [vmem:[%s1 + $0x294] sm:$0xff]
  %v428 = vld [vmem:[%s1 + $0x29c] sm:$0xf]
  %v429 = vld [vmem:[%s1 + $0x2a0] sm:$0xff]
  %v430 = vld [vmem:[%s1 + $0x2a8] sm:$0xf]
  %v431 = vld [vmem:[%s1 + $0x2ac] sm:$0xff]
  %v432 = vld [vmem:[%s1 + $0x2b4] sm:$0xf]
  %v433 = vld [vmem:[%s1 + $0x2b8] sm:$0xff]
  %v434 = vld [vmem:[%s1 + $0x2c0] sm:$0xf]
  %v435 = vld [vmem:[%s1 + $0x2c4] sm:$0xff]
  %v436 = vld [vmem:[%s1 + $0x2cc] sm:$0xf]
  %v437 = vld [vmem:[%s1 + $0x2d0] sm:$0xff]
  %v438 = vld [vmem:[%s1 + $0x2d8] sm:$0xf]
  %v439 = vld [vmem:[%s1 + $0x2dc] sm:$0xff]
  %v440 = vld [vmem:[%s1 + $0x2e4] sm:$0xf]
  %v441 = vld [vmem:[%s1 + $0x2e8] sm:$0xff]
  %v442 = vld [vmem:[%s1 + $0x2f0] sm:$0xf]
  %v443 = vld [vmem:[%s1 + $0x2f4] sm:$0xff]
  %v444 = vld [vmem:[%s1 + $0x2fc] sm:$0xf]
  %v445 = vld [vmem:[%s1 + $0x300] sm:$0xff]
  %v446 = vld [vmem:[%s1 + $0x308] sm:$0xf]
  %v447 = vld [vmem:[%s1 + $0x30c] sm:$0xff]
  %v448 = vld [vmem:[%s1 + $0x314] sm:$0xf]
  %v449 = vld [vmem:[%s1 + $0x318] sm:$0xff]
  %v450 = vld [vmem:[%s1 + $0x320] sm:$0xf]
  %v451 = vld [vmem:[%s1 + $0x324] sm:$0xff]
  %v452 = vld [vmem:[%s1 + $0x32c] sm:$0xf]
  %v453 = vld [vmem:[%s1 + $0x330] sm:$0xff]
  %v454 = vld [vmem:[%s1 + $0x338] sm:$0xf]
  %v455 = vld [vmem:[%s1 + $0x33c] sm:$0xff]
  %v456 = vld [vmem:[%s1 + $0x344] sm:$0xf]
  %v457 = vld [vmem:[%s1 + $0x348] sm:$0xff]
  %v458 = vld [vmem:[%s1 + $0x350] sm:$0xf]
  %v459 = vld [vmem:[%s1 + $0x354] sm:$0xff]
  %v460 = vld [vmem:[%s1 + $0x35c] sm:$0xf]
  %v461 = vld [vmem:[%s1 + $0x360] sm:$0xff]
  %v462 = vld [vmem:[%s1 + $0x368] sm:$0xf]
  %v463 = vld [vmem:[%s1 + $0x36c] sm:$0xff]
  %v464 = vld [vmem:[%s1 + $0x374] sm:$0xf]
  %v465 = vld [vmem:[%s1 + $0x378] sm:$0xff]
  %v466 = vld [vmem:[%s1 + $0x380] sm:$0xf]
  %v467 = vld [vmem:[%s1 + $0x384] sm:$0xff]
  %v468 = vld [vmem:[%s1 + $0x38c] sm:$0xf]
  %v469 = vld [vmem:[%s1 + $0x390] sm:$0xff]
  %v470 = vld [vmem:[%s1 + $0x398] sm:$0xf]
  %v471 = vld [vmem:[%s1 + $0x39c] sm:$0xff]
  %v472 = vld [vmem:[%s1 + $0x3a4] sm:$0xf]
  %v473 = vld [vmem:[%s1 + $0x3a8] sm:$0xff]
  %v474 = vld [vmem:[%s1 + $0x3b0] sm:$0xf]
  %v475 = vld [vmem:[%s1 + $0x3b4] sm:$0xff]
  %v476 = vld [vmem:[%s1 + $0x3bc] sm:$0xf]
  %v637 = vunpack.c.l.b16 %v317
  %v638 = vunpack.c.h.b16 %v317
  %v639 = vunpack.c.l.b16 %v318
  %v640 = vunpack.c.l.b16 %v319
  %v641 = vunpack.c.h.b16 %v319
  %v642 = vunpack.c.l.b16 %v320
  %v643 = vunpack.c.l.b16 %v321
  %v644 = vunpack.c.h.b16 %v321
  %v645 = vunpack.c.l.b16 %v322
  %v646 = vunpack.c.l.b16 %v323
  %v647 = vunpack.c.h.b16 %v323
  %v648 = vunpack.c.l.b16 %v324
  %v649 = vunpack.c.l.b16 %v325
  %v650 = vunpack.c.h.b16 %v325
  %v651 = vunpack.c.l.b16 %v326
  %v652 = vunpack.c.l.b16 %v327
  %v653 = vunpack.c.h.b16 %v327
  %v654 = vunpack.c.l.b16 %v328
  %v655 = vunpack.c.l.b16 %v329
  %v656 = vunpack.c.h.b16 %v329
  %v657 = vunpack.c.l.b16 %v330
  %v658 = vunpack.c.l.b16 %v331
  %v659 = vunpack.c.h.b16 %v331
  %v660 = vunpack.c.l.b16 %v332
  %v661 = vunpack.c.l.b16 %v333
  %v662 = vunpack.c.h.b16 %v333
  %v663 = vunpack.c.l.b16 %v334
  %v664 = vunpack.c.l.b16 %v335
  %v665 = vunpack.c.h.b16 %v335
  %v666 = vunpack.c.l.b16 %v336
  %v667 = vunpack.c.l.b16 %v337
  %v668 = vunpack.c.h.b16 %v337
  %v669 = vunpack.c.l.b16 %v338
  %v670 = vunpack.c.l.b16 %v339
  %v671 = vunpack.c.h.b16 %v339
  %v672 = vunpack.c.l.b16 %v340
  %v673 = vunpack.c.l.b16 %v341
  %v674 = vunpack.c.h.b16 %v341
  %v675 = vunpack.c.l.b16 %v342
  %v676 = vunpack.c.l.b16 %v343
  %v677 = vunpack.c.h.b16 %v343
  %v678 = vunpack.c.l.b16 %v344
  %v679 = vunpack.c.l.b16 %v345
  %v680 = vunpack.c.h.b16 %v345
  %v681 = vunpack.c.l.b16 %v346
  %v682 = vunpack.c.l.b16 %v347
  %v683 = vunpack.c.h.b16 %v347
  %v684 = vunpack.c.l.b16 %v348
  %v685 = vunpack.c.l.b16 %v349
  %v686 = vunpack.c.h.b16 %v349
  %v687 = vunpack.c.l.b16 %v350
  %v688 = vunpack.c.l.b16 %v351
  %v689 = vunpack.c.h.b16 %v351
  %v690 = vunpack.c.l.b16 %v352
  %v691 = vunpack.c.l.b16 %v353
  %v692 = vunpack.c.h.b16 %v353
  %v693 = vunpack.c.l.b16 %v354
  %v694 = vunpack.c.l.b16 %v355
  %v695 = vunpack.c.h.b16 %v355
  %v696 = vunpack.c.l.b16 %v356
  %v697 = vunpack.c.l.b16 %v357
  %v698 = vunpack.c.h.b16 %v357
  %v699 = vunpack.c.l.b16 %v358
  %v700 = vunpack.c.l.b16 %v359
  %v701 = vunpack.c.h.b16 %v359
  %v702 = vunpack.c.l.b16 %v360
  %v703 = vunpack.c.l.b16 %v361
  %v704 = vunpack.c.h.b16 %v361
  %v705 = vunpack.c.l.b16 %v362
  %v706 = vunpack.c.l.b16 %v363
  %v707 = vunpack.c.h.b16 %v363
  %v708 = vunpack.c.l.b16 %v364
  %v709 = vunpack.c.l.b16 %v365
  %v710 = vunpack.c.h.b16 %v365
  %v711 = vunpack.c.l.b16 %v366
  %v712 = vunpack.c.l.b16 %v367
  %v713 = vunpack.c.h.b16 %v367
  %v714 = vunpack.c.l.b16 %v368
  %v715 = vunpack.c.l.b16 %v369
  %v716 = vunpack.c.h.b16 %v369
  %v717 = vunpack.c.l.b16 %v370
  %v718 = vunpack.c.l.b16 %v371
  %v719 = vunpack.c.h.b16 %v371
  %v720 = vunpack.c.l.b16 %v372
  %v721 = vunpack.c.l.b16 %v373
  %v722 = vunpack.c.h.b16 %v373
  %v723 = vunpack.c.l.b16 %v374
  %v724 = vunpack.c.l.b16 %v375
  %v725 = vunpack.c.h.b16 %v375
  %v726 = vunpack.c.l.b16 %v376
  %v727 = vunpack.c.l.b16 %v377
  %v728 = vunpack.c.h.b16 %v377
  %v729 = vunpack.c.l.b16 %v378
  %v730 = vunpack.c.l.b16 %v379
  %v731 = vunpack.c.h.b16 %v379
  %v732 = vunpack.c.l.b16 %v380
  %v733 = vunpack.c.l.b16 %v381
  %v734 = vunpack.c.h.b16 %v381
  %v735 = vunpack.c.l.b16 %v382
  %v736 = vunpack.c.l.b16 %v383
  %v737 = vunpack.c.h.b16 %v383
  %v738 = vunpack.c.l.b16 %v384
  %v739 = vunpack.c.l.b16 %v385
  %v740 = vunpack.c.h.b16 %v385
  %v741 = vunpack.c.l.b16 %v386
  %v742 = vunpack.c.l.b16 %v387
  %v743 = vunpack.c.h.b16 %v387
  %v744 = vunpack.c.l.b16 %v388
  %v745 = vunpack.c.l.b16 %v389
  %v746 = vunpack.c.h.b16 %v389
  %v747 = vunpack.c.l.b16 %v390
  %v748 = vunpack.c.l.b16 %v391
  %v749 = vunpack.c.h.b16 %v391
  %v750 = vunpack.c.l.b16 %v392
  %v751 = vunpack.c.l.b16 %v393
  %v752 = vunpack.c.h.b16 %v393
  %v753 = vunpack.c.l.b16 %v394
  %v754 = vunpack.c.l.b16 %v395
  %v755 = vunpack.c.h.b16 %v395
  %v756 = vunpack.c.l.b16 %v396
  %v757 = vunpack.c.l.b16 %v397
  %v758 = vunpack.c.h.b16 %v397
  %v759 = vunpack.c.l.b16 %v398
  %v760 = vunpack.c.l.b16 %v399
  %v761 = vunpack.c.h.b16 %v399
  %v762 = vunpack.c.l.b16 %v400
  %v763 = vunpack.c.l.b16 %v401
  %v764 = vunpack.c.h.b16 %v401
  %v765 = vunpack.c.l.b16 %v402
  %v766 = vunpack.c.l.b16 %v403
  %v767 = vunpack.c.h.b16 %v403
  %v768 = vunpack.c.l.b16 %v404
  %v769 = vunpack.c.l.b16 %v405
  %v770 = vunpack.c.h.b16 %v405
  %v771 = vunpack.c.l.b16 %v406
  %v772 = vunpack.c.l.b16 %v407
  %v773 = vunpack.c.h.b16 %v407
  %v774 = vunpack.c.l.b16 %v408
  %v775 = vunpack.c.l.b16 %v409
  %v776 = vunpack.c.h.b16 %v409
  %v777 = vunpack.c.l.b16 %v410
  %v778 = vunpack.c.l.b16 %v411
  %v779 = vunpack.c.h.b16 %v411
  %v780 = vunpack.c.l.b16 %v412
  %v781 = vunpack.c.l.b16 %v413
  %v782 = vunpack.c.h.b16 %v413
  %v783 = vunpack.c.l.b16 %v414
  %v784 = vunpack.c.l.b16 %v415
  %v785 = vunpack.c.h.b16 %v415
  %v786 = vunpack.c.l.b16 %v416
  %v787 = vunpack.c.l.b16 %v417
  %v788 = vunpack.c.h.b16 %v417
  %v789 = vunpack.c.l.b16 %v418
  %v790 = vunpack.c.l.b16 %v419
  %v791 = vunpack.c.h.b16 %v419
  %v792 = vunpack.c.l.b16 %v420
  %v793 = vunpack.c.l.b16 %v421
  %v794 = vunpack.c.h.b16 %v421
  %v795 = vunpack.c.l.b16 %v422
  %v796 = vunpack.c.l.b16 %v423
  %v797 = vunpack.c.h.b16 %v423
  %v798 = vunpack.c.l.b16 %v424
  %v799 = vunpack.c.l.b16 %v425
  %v800 = vunpack.c.h.b16 %v425
  %v801 = vunpack.c.l.b16 %v426
  %v802 = vunpack.c.l.b16 %v427
  %v803 = vunpack.c.h.b16 %v427
  %v804 = vunpack.c.l.b16 %v428
  %v805 = vunpack.c.l.b16 %v429
  %v806 = vunpack.c.h.b16 %v429
  %v807 = vunpack.c.l.b16 %v430
  %v808 = vunpack.c.l.b16 %v431
  %v809 = vunpack.c.h.b16 %v431
  %v810 = vunpack.c.l.b16 %v432
  %v811 = vunpack.c.l.b16 %v433
  %v812 = vunpack.c.h.b16 %v433
  %v813 = vunpack.c.l.b16 %v434
  %v814 = vunpack.c.l.b16 %v435
  %v815 = vunpack.c.h.b16 %v435
  %v816 = vunpack.c.l.b16 %v436
  %v817 = vunpack.c.l.b16 %v437
  %v818 = vunpack.c.h.b16 %v437
  %v819 = vunpack.c.l.b16 %v438
  %v820 = vunpack.c.l.b16 %v439
  %v821 = vunpack.c.h.b16 %v439
  %v822 = vunpack.c.l.b16 %v440
  %v823 = vunpack.c.l.b16 %v441
  %v824 = vunpack.c.h.b16 %v441
  %v825 = vunpack.c.l.b16 %v442
  %v826 = vunpack.c.l.b16 %v443
  %v827 = vunpack.c.h.b16 %v443
  %v828 = vunpack.c.l.b16 %v444
  %v829 = vunpack.c.l.b16 %v445
  %v830 = vunpack.c.h.b16 %v445
  %v831 = vunpack.c.l.b16 %v446
  %v832 = vunpack.c.l.b16 %v447
  %v833 = vunpack.c.h.b16 %v447
  %v834 = vunpack.c.l.b16 %v448
  %v835 = vunpack.c.l.b16 %v449
  %v836 = vunpack.c.h.b16 %v449
  %v837 = vunpack.c.l.b16 %v450
  %v838 = vunpack.c.l.b16 %v451
  %v839 = vunpack.c.h.b16 %v451
  %v840 = vunpack.c.l.b16 %v452
  %v841 = vunpack.c.l.b16 %v453
  %v842 = vunpack.c.h.b16 %v453
  %v843 = vunpack.c.l.b16 %v454
  %v844 = vunpack.c.l.b16 %v455
  %v845 = vunpack.c.h.b16 %v455
  %v846 = vunpack.c.l.b16 %v456
  %v847 = vunpack.c.l.b16 %v457
  %v848 = vunpack.c.h.b16 %v457
  %v849 = vunpack.c.l.b16 %v458
  %v850 = vunpack.c.l.b16 %v459
  %v851 = vunpack.c.h.b16 %v459
  %v852 = vunpack.c.l.b16 %v460
  %v853 = vunpack.c.l.b16 %v461
  %v854 = vunpack.c.h.b16 %v461
  %v855 = vunpack.c.l.b16 %v462
  %v856 = vunpack.c.l.b16 %v463
  %v857 = vunpack.c.h.b16 %v463
  %v858 = vunpack.c.l.b16 %v464
  %v859 = vunpack.c.l.b16 %v465
  %v860 = vunpack.c.h.b16 %v465
  %v861 = vunpack.c.l.b16 %v466
  %v862 = vunpack.c.l.b16 %v467
  %v863 = vunpack.c.h.b16 %v467
  %v864 = vunpack.c.l.b16 %v468
  %v865 = vunpack.c.l.b16 %v469
  %v866 = vunpack.c.h.b16 %v469
  %v867 = vunpack.c.l.b16 %v470
  %v868 = vunpack.c.l.b16 %v471
  %v869 = vunpack.c.h.b16 %v471
  %v870 = vunpack.c.l.b16 %v472
  %v871 = vunpack.c.l.b16 %v473
  %v872 = vunpack.c.h.b16 %v473
  %v873 = vunpack.c.l.b16 %v474
  %v874 = vunpack.c.l.b16 %v475
  %v875 = vunpack.c.h.b16 %v475
  %v876 = vunpack.c.l.b16 %v476
  %v877 = vpack.c.b16 %v640, %v637
  %v878 = vpack.c.b16 %v641, %v638
  %v879 = vpack.c.b16 %v642, %v639
  %v880 = vpack.c.b16 %v646, %v643
  %v881 = vpack.c.b16 %v647, %v644
  %v882 = vpack.c.b16 %v648, %v645
  %v883 = vpack.c.b16 %v652, %v649
  %v884 = vpack.c.b16 %v653, %v650
  %v885 = vpack.c.b16 %v654, %v651
  %v886 = vpack.c.b16 %v658, %v655
  %v887 = vpack.c.b16 %v659, %v656
  %v888 = vpack.c.b16 %v660, %v657
  %v889 = vpack.c.b16 %v664, %v661
  %v890 = vpack.c.b16 %v665, %v662
  %v891 = vpack.c.b16 %v666, %v663
  %v892 = vpack.c.b16 %v670, %v667
  %v893 = vpack.c.b16 %v671, %v668
  %v894 = vpack.c.b16 %v672, %v669
  %v895 = vpack.c.b16 %v676, %v673
  %v896 = vpack.c.b16 %v677, %v674
  %v897 = vpack.c.b16 %v678, %v675
  %v898 = vpack.c.b16 %v682, %v679
  %v899 = vpack.c.b16 %v683, %v680
  %v900 = vpack.c.b16 %v684, %v681
  %v901 = vpack.c.b16 %v688, %v685
  %v902 = vpack.c.b16 %v689, %v686
  %v903 = vpack.c.b16 %v690, %v687
  %v904 = vpack.c.b16 %v694, %v691
  %v905 = vpack.c.b16 %v695, %v692
  %v906 = vpack.c.b16 %v696, %v693
  %v907 = vpack.c.b16 %v700, %v697
  %v908 = vpack.c.b16 %v701, %v698
  %v909 = vpack.c.b16 %v702, %v699
  %v910 = vpack.c.b16 %v706, %v703
  %v911 = vpack.c.b16 %v707, %v704
  %v912 = vpack.c.b16 %v708, %v705
  %v913 = vpack.c.b16 %v712, %v709
  %v914 = vpack.c.b16 %v713, %v710
  %v915 = vpack.c.b16 %v714, %v711
  %v916 = vpack.c.b16 %v718, %v715
  %v917 = vpack.c.b16 %v719, %v716
  %v918 = vpack.c.b16 %v720, %v717
  %v919 = vpack.c.b16 %v724, %v721
  %v920 = vpack.c.b16 %v725, %v722
  %v921 = vpack.c.b16 %v726, %v723
  %v922 = vpack.c.b16 %v730, %v727
  %v923 = vpack.c.b16 %v731, %v728
  %v924 = vpack.c.b16 %v732, %v729
  %v925 = vpack.c.b16 %v736, %v733
  %v926 = vpack.c.b16 %v737, %v734
  %v927 = vpack.c.b16 %v738, %v735
  %v928 = vpack.c.b16 %v742, %v739
  %v929 = vpack.c.b16 %v743, %v740
  %v930 = vpack.c.b16 %v744, %v741
  %v931 = vpack.c.b16 %v748, %v745
  %v932 = vpack.c.b16 %v749, %v746
  %v933 = vpack.c.b16 %v750, %v747
  %v934 = vpack.c.b16 %v754, %v751
  %v935 = vpack.c.b16 %v755, %v752
  %v936 = vpack.c.b16 %v756, %v753
  %v937 = vpack.c.b16 %v760, %v757
  %v938 = vpack.c.b16 %v761, %v758
  %v939 = vpack.c.b16 %v762, %v759
  %v940 = vpack.c.b16 %v766, %v763
  %v941 = vpack.c.b16 %v767, %v764
  %v942 = vpack.c.b16 %v768, %v765
  %v943 = vpack.c.b16 %v772, %v769
  %v944 = vpack.c.b16 %v773, %v770
  %v945 = vpack.c.b16 %v774, %v771
  %v946 = vpack.c.b16 %v778, %v775
  %v947 = vpack.c.b16 %v779, %v776
  %v948 = vpack.c.b16 %v780, %v777
  %v949 = vpack.c.b16 %v784, %v781
  %v950 = vpack.c.b16 %v785, %v782
  %v951 = vpack.c.b16 %v786, %v783
  %v952 = vpack.c.b16 %v790, %v787
  %v953 = vpack.c.b16 %v791, %v788
  %v954 = vpack.c.b16 %v792, %v789
  %v955 = vpack.c.b16 %v796, %v793
  %v956 = vpack.c.b16 %v797, %v794
  %v957 = vpack.c.b16 %v798, %v795
  %v958 = vpack.c.b16 %v802, %v799
  %v959 = vpack.c.b16 %v803, %v800
  %v960 = vpack.c.b16 %v804, %v801
  %v961 = vpack.c.b16 %v808, %v805
  %v962 = vpack.c.b16 %v809, %v806
  %v963 = vpack.c.b16 %v810, %v807
  %v964 = vpack.c.b16 %v814, %v811
  %v965 = vpack.c.b16 %v815, %v812
  %v966 = vpack.c.b16 %v816, %v813
  %v967 = vpack.c.b16 %v820, %v817
  %v968 = vpack.c.b16 %v821, %v818
  %v969 = vpack.c.b16 %v822, %v819
  %v970 = vpack.c.b16 %v826, %v823
  %v971 = vpack.c.b16 %v827, %v824
  %v972 = vpack.c.b16 %v828, %v825
  %v973 = vpack.c.b16 %v832, %v829
  %v974 = vpack.c.b16 %v833, %v830
  %v975 = vpack.c.b16 %v834, %v831
  %v976 = vpack.c.b16 %v838, %v835
  %v977 = vpack.c.b16 %v839, %v836
  %v978 = vpack.c.b16 %v840, %v837
  %v979 = vpack.c.b16 %v844, %v841
  %v980 = vpack.c.b16 %v845, %v842
  %v981 = vpack.c.b16 %v846, %v843
  %v982 = vpack.c.b16 %v850, %v847
  %v983 = vpack.c.b16 %v851, %v848
  %v984 = vpack.c.b16 %v852, %v849
  %v985 = vpack.c.b16 %v856, %v853
  %v986 = vpack.c.b16 %v857, %v854
  %v987 = vpack.c.b16 %v858, %v855
  %v988 = vpack.c.b16 %v862, %v859
  %v989 = vpack.c.b16 %v863, %v860
  %v990 = vpack.c.b16 %v864, %v861
  %v991 = vpack.c.b16 %v868, %v865
  %v992 = vpack.c.b16 %v869, %v866
  %v993 = vpack.c.b16 %v870, %v867
  %v994 = vpack.c.b16 %v874, %v871
  %v995 = vpack.c.b16 %v875, %v872
  %v996 = vpack.c.b16 %v876, %v873
  %1117 = vmatprep.subr.bf16.mxu0 %v899
  %1118 = vmatpush1.bf16.msra.mxu0 %v898
  %1119 = vmatprep.subr.bf16.mxu0 %v896
  %1120 = vmatpush1.bf16.msra.mxu0 %v895
  %1121 = vmatprep.subr.bf16.mxu0 %v893
  %1122 = vmatpush1.bf16.msra.mxu0 %v892
  %1123 = vmatprep.subr.bf16.mxu0 %v890
  %1124 = vmatpush1.bf16.msra.mxu0 %v889
  %1125 = vmatprep.subr.bf16.mxu0 %v887
  %1126 = vmatpush1.bf16.msra.mxu0 %v886
  %1127 = vmatprep.subr.bf16.mxu0 %v884
  %1128 = vmatpush1.bf16.msra.mxu0 %v883
  %1129 = vmatprep.subr.bf16.mxu0 %v881
  %1130 = vmatpush1.bf16.msra.mxu0 %v880
  %1131 = vmatprep.subr.bf16.mxu0 %v878
  %1132 = vmatpush1.bf16.msra.mxu0 %v877
  %1133 = vmatprep.subr.bf16.mxu0 %v923
  %1134 = vmatpush2.bf16.msra.mxu0 %v922
  %1135 = vmatprep.subr.bf16.mxu0 %v920
  %1136 = vmatpush2.bf16.msra.mxu0 %v919
  %1137 = vmatprep.subr.bf16.mxu0 %v917
  %1138 = vmatpush2.bf16.msra.mxu0 %v916
  %1139 = vmatprep.subr.bf16.mxu0 %v914
  %1140 = vmatpush2.bf16.msra.mxu0 %v913
  %1141 = vmatprep.subr.bf16.mxu0 %v911
  %1142 = vmatpush2.bf16.msra.mxu0 %v910
  %1143 = vmatprep.subr.bf16.mxu0 %v908
  %1144 = vmatpush2.bf16.msra.mxu0 %v907
  %1145 = vmatprep.subr.bf16.mxu0 %v905
  %1146 = vmatpush2.bf16.msra.mxu0 %v904
  %1147 = vmatprep.subr.bf16.mxu0 %v902
  %1148 = vmatpush2.bf16.msra.mxu0 %v901
  %1149 = vmatprep.mubr.bf16.mxu0 %v308
  %1150 = vmatmul.mubr.bf16.gmra.mxu0 %v307
  %v1151 = vpop.f32.mrf.mxu0
  %v1152 = vadd.f32 0.0, %v1151
  %v1153 = vpop.f32.mrf.mxu0
  %v1154 = vadd.f32 0.0, %v1153
  %v1155 = vpop.f32.mrf.mxu0
  %v1156 = vadd.f32 0.0, %v1155
  %v1157 = vpop.f32.mrf.mxu0
  %v1158 = vadd.f32 0.0, %v1157
  %1159 = vmatprep.mubr.bf16.mxu0 %v313
  %1160 = vmatmul.mubr.bf16.gmra.mxu0 %v312
  %v1161 = vpop.f32.mrf.mxu0
  %v1162 = vadd.f32 0.0, %v1161
  %v1163 = vpop.f32.mrf.mxu0
  %v1164 = vadd.f32 0.0, %v1163
  %v1165 = vpop.f32.mrf.mxu0
  %v1166 = vadd.f32 0.0, %v1165
  %v1167 = vpop.f32.mrf.mxu0
  %v1168 = vadd.f32 0.0, %v1167
  %1169 = vdwg.mxu0
  %1170 = vmatprep.subr.bf16.mxu0 %v947
  %1171 = vmatpush1.bf16.msra.mxu0 %v946
  %1172 = vmatprep.subr.bf16.mxu0 %v944
  %1173 = vmatpush1.bf16.msra.mxu0 %v943
  %1174 = vmatprep.subr.bf16.mxu0 %v941
  %1175 = vmatpush1.bf16.msra.mxu0 %v940
  %1176 = vmatprep.subr.bf16.mxu0 %v938
  %1177 = vmatpush1.bf16.msra.mxu0 %v937
  %1178 = vmatprep.subr.bf16.mxu0 %v935
  %1179 = vmatpush1.bf16.msra.mxu0 %v934
  %1180 = vmatprep.subr.bf16.mxu0 %v932
  %1181 = vmatpush1.bf16.msra.mxu0 %v931
  %1182 = vmatprep.subr.bf16.mxu0 %v929
  %1183 = vmatpush1.bf16.msra.mxu0 %v928
  %1184 = vmatprep.subr.bf16.mxu0 %v926
  %1185 = vmatpush1.bf16.msra.mxu0 %v925
  %1186 = vmatprep.subr.bf16.mxu0 %v971
  %1187 = vmatpush2.bf16.msra.mxu0 %v970
  %1188 = vmatprep.subr.bf16.mxu0 %v968
  %1189 = vmatpush2.bf16.msra.mxu0 %v967
  %1190 = vmatprep.subr.bf16.mxu0 %v965
  %1191 = vmatpush2.bf16.msra.mxu0 %v964
  %1192 = vmatprep.subr.bf16.mxu0 %v962
  %1193 = vmatpush2.bf16.msra.mxu0 %v961
  %1194 = vmatprep.subr.bf16.mxu0 %v959
  %1195 = vmatpush2.bf16.msra.mxu0 %v958
  %1196 = vmatprep.subr.bf16.mxu0 %v956
  %1197 = vmatpush2.bf16.msra.mxu0 %v955
  %1198 = vmatprep.subr.bf16.mxu0 %v953
  %1199 = vmatpush2.bf16.msra.mxu0 %v952
  %1200 = vmatprep.subr.bf16.mxu0 %v950
  %1201 = vmatpush2.bf16.msra.mxu0 %v949
  %1202 = vmatprep.mubr.bf16.mxu0 %v310
  %1203 = vmatmul.mubr.bf16.gmra.mxu0 %v309
  %v1204 = vpop.f32.mrf.mxu0
  %v1205 = vadd.f32 %v1152, %v1204
  %v1206 = vpop.f32.mrf.mxu0
  %v1207 = vadd.f32 %v1154, %v1206
  %v1208 = vpop.f32.mrf.mxu0
  %v1209 = vadd.f32 %v1156, %v1208
  %v1210 = vpop.f32.mrf.mxu0
  %v1211 = vadd.f32 %v1158, %v1210
  %1212 = vmatprep.mubr.bf16.mxu0 %v315
  %1213 = vmatmul.mubr.bf16.gmra.mxu0 %v314
  %v1214 = vpop.f32.mrf.mxu0
  %v1215 = vadd.f32 %v1162, %v1214
  %v1216 = vpop.f32.mrf.mxu0
  %v1217 = vadd.f32 %v1164, %v1216
  %v1218 = vpop.f32.mrf.mxu0
  %v1219 = vadd.f32 %v1166, %v1218
  %v1220 = vpop.f32.mrf.mxu0
  %v1221 = vadd.f32 %v1168, %v1220
  %1222 = vdwg.mxu0
  %1223 = vmatprep.subr.bf16.mxu0 %v995
  %1224 = vmatpush1.bf16.msra.mxu0 %v994
  %1225 = vmatprep.subr.bf16.mxu0 %v992
  %1226 = vmatpush1.bf16.msra.mxu0 %v991
  %1227 = vmatprep.subr.bf16.mxu0 %v989
  %1228 = vmatpush1.bf16.msra.mxu0 %v988
  %1229 = vmatprep.subr.bf16.mxu0 %v986
  %1230 = vmatpush1.bf16.msra.mxu0 %v985
  %1231 = vmatprep.subr.bf16.mxu0 %v983
  %1232 = vmatpush1.bf16.msra.mxu0 %v982
  %1233 = vmatprep.subr.bf16.mxu0 %v980
  %1234 = vmatpush1.bf16.msra.mxu0 %v979
  %1235 = vmatprep.subr.bf16.mxu0 %v977
  %1236 = vmatpush1.bf16.msra.mxu0 %v976
  %1237 = vmatprep.subr.bf16.mxu0 %v974
  %1238 = vmatpush1.bf16.msra.mxu0 %v973
  %1239 = vmatprep.subr.bf16.mxu0 0
  %1240 = vmatpush2.bf16.msra.mxu0 0
  %1241 = vmatprep.subr.bf16.mxu0 0
  %1242 = vmatpush2.bf16.msra.mxu0 0
  %1243 = vmatprep.subr.bf16.mxu0 0
  %1244 = vmatpush2.bf16.msra.mxu0 0
  %1245 = vmatprep.subr.bf16.mxu0 0
  %1246 = vmatpush2.bf16.msra.mxu0 0
  %1247 = vmatprep.subr.bf16.mxu0 0
  %1248 = vmatpush2.bf16.msra.mxu0 0
  %1249 = vmatprep.subr.bf16.mxu0 0
  %1250 = vmatpush2.bf16.msra.mxu0 0
  %1251 = vmatprep.subr.bf16.mxu0 0
  %1252 = vmatpush2.bf16.msra.mxu0 0
  %1253 = vmatprep.subr.bf16.mxu0 0
  %1254 = vmatpush2.bf16.msra.mxu0 0
  %1255 = vmatprep.mubr.bf16.mxu0 0
  %1256 = vmatmul.mubr.bf16.gmra.mxu0 %v311
  %v1257 = vpop.f32.mrf.mxu0
  %v1258 = vadd.f32 %v1205, %v1257
  %v1259 = vpop.f32.mrf.mxu0
  %v1260 = vadd.f32 %v1207, %v1259
  %v1261 = vpop.f32.mrf.mxu0
  %v1262 = vadd.f32 %v1209, %v1261
  %v1263 = vpop.f32.mrf.mxu0
  %v1264 = vadd.f32 %v1211, %v1263
  %1265 = vmatprep.mubr.bf16.mxu0 0
  %1266 = vmatmul.mubr.bf16.gmra.mxu0 %v316
  %v1267 = vpop.f32.mrf.mxu0
  %v1268 = vadd.f32 %v1215, %v1267
  %v1269 = vpop.f32.mrf.mxu0
  %v1270 = vadd.f32 %v1217, %v1269
  %v1271 = vpop.f32.mrf.mxu0
  %v1272 = vadd.f32 %v1219, %v1271
  %v1273 = vpop.f32.mrf.mxu0
  %v1274 = vadd.f32 %v1221, %v1273
  %1275 = vdwg.mxu0
  %1276 = vmatprep.subr.bf16.mxu0 0
  %1277 = vmatpush1.bf16.msra.mxu0 %v900
  %1278 = vmatprep.subr.bf16.mxu0 0
  %1279 = vmatpush1.bf16.msra.mxu0 %v897
  %1280 = vmatprep.subr.bf16.mxu0 0
  %1281 = vmatpush1.bf16.msra.mxu0 %v894
  %1282 = vmatprep.subr.bf16.mxu0 0
  %1283 = vmatpush1.bf16.msra.mxu0 %v891
  %1284 = vmatprep.subr.bf16.mxu0 0
  %1285 = vmatpush1.bf16.msra.mxu0 %v888
  %1286 = vmatprep.subr.bf16.mxu0 0
  %1287 = vmatpush1.bf16.msra.mxu0 %v885
  %1288 = vmatprep.subr.bf16.mxu0 0
  %1289 = vmatpush1.bf16.msra.mxu0 %v882
  %1290 = vmatprep.subr.bf16.mxu0 0
  %1291 = vmatpush1.bf16.msra.mxu0 %v879
  %1292 = vmatprep.subr.bf16.mxu0 0
  %1293 = vmatpush2.bf16.msra.mxu0 %v924
  %1294 = vmatprep.subr.bf16.mxu0 0
  %1295 = vmatpush2.bf16.msra.mxu0 %v921
  %1296 = vmatprep.subr.bf16.mxu0 0
  %1297 = vmatpush2.bf16.msra.mxu0 %v918
  %1298 = vmatprep.subr.bf16.mxu0 0
  %1299 = vmatpush2.bf16.msra.mxu0 %v915
  %1300 = vmatprep.subr.bf16.mxu0 0
  %1301 = vmatpush2.bf16.msra.mxu0 %v912
  %1302 = vmatprep.subr.bf16.mxu0 0
  %1303 = vmatpush2.bf16.msra.mxu0 %v909
  %1304 = vmatprep.subr.bf16.mxu0 0
  %1305 = vmatpush2.bf16.msra.mxu0 %v906
  %1306 = vmatprep.subr.bf16.mxu0 0
  %1307 = vmatpush2.bf16.msra.mxu0 %v903
  %1308 = vmatprep.mubr.bf16.mxu0 %v308
  %1309 = vmatmul.mubr.bf16.gmra.mxu0 %v307
  %v1310 = vpop.f32.mrf.mxu0
  %v1311 = vadd.f32 0.0, %v1310
  %v1312 = vpop.f32.mrf.mxu0
  %v1313 = vpop.f32.mrf.mxu0
  %v1314 = vadd.f32 0.0, %v1313
  %v1315 = vpop.f32.mrf.mxu0
  %1316 = vmatprep.mubr.bf16.mxu0 %v313
  %1317 = vmatmul.mubr.bf16.gmra.mxu0 %v312
  %v1318 = vpop.f32.mrf.mxu0
  %v1319 = vadd.f32 0.0, %v1318
  %v1320 = vpop.f32.mrf.mxu0
  %v1321 = vpop.f32.mrf.mxu0
  %v1322 = vadd.f32 0.0, %v1321
  %v1323 = vpop.f32.mrf.mxu0
  %1324 = vdwg.mxu0
  %1325 = vmatprep.subr.bf16.mxu0 0
  %1326 = vmatpush1.bf16.msra.mxu0 %v948
  %1327 = vmatprep.subr.bf16.mxu0 0
  %1328 = vmatpush1.bf16.msra.mxu0 %v945
  %1329 = vmatprep.subr.bf16.mxu0 0
  %1330 = vmatpush1.bf16.msra.mxu0 %v942
  %1331 = vmatprep.subr.bf16.mxu0 0
  %1332 = vmatpush1.bf16.msra.mxu0 %v939
  %1333 = vmatprep.subr.bf16.mxu0 0
  %1334 = vmatpush1.bf16.msra.mxu0 %v936
  %1335 = vmatprep.subr.bf16.mxu0 0
  %1336 = vmatpush1.bf16.msra.mxu0 %v933
  %1337 = vmatprep.subr.bf16.mxu0 0
  %1338 = vmatpush1.bf16.msra.mxu0 %v930
  %1339 = vmatprep.subr.bf16.mxu0 0
  %1340 = vmatpush1.bf16.msra.mxu0 %v927
  %1341 = vmatprep.subr.bf16.mxu0 0
  %1342 = vmatpush2.bf16.msra.mxu0 %v972
  %1343 = vmatprep.subr.bf16.mxu0 0
  %1344 = vmatpush2.bf16.msra.mxu0 %v969
  %1345 = vmatprep.subr.bf16.mxu0 0
  %1346 = vmatpush2.bf16.msra.mxu0 %v966
  %1347 = vmatprep.subr.bf16.mxu0 0
  %1348 = vmatpush2.bf16.msra.mxu0 %v963
  %1349 = vmatprep.subr.bf16.mxu0 0
  %1350 = vmatpush2.bf16.msra.mxu0 %v960
  %1351 = vmatprep.subr.bf16.mxu0 0
  %1352 = vmatpush2.bf16.msra.mxu0 %v957
  %1353 = vmatprep.subr.bf16.mxu0 0
  %1354 = vmatpush2.bf16.msra.mxu0 %v954
  %1355 = vmatprep.subr.bf16.mxu0 0
  %1356 = vmatpush2.bf16.msra.mxu0 %v951
  %1357 = vmatprep.mubr.bf16.mxu0 %v310
  %1358 = vmatmul.mubr.bf16.gmra.mxu0 %v309
  %v1359 = vpop.f32.mrf.mxu0
  %v1360 = vadd.f32 %v1311, %v1359
  %v1361 = vpop.f32.mrf.mxu0
  %v1362 = vpop.f32.mrf.mxu0
  %v1363 = vadd.f32 %v1314, %v1362
  %v1364 = vpop.f32.mrf.mxu0
  %1365 = vmatprep.mubr.bf16.mxu0 %v315
  %1366 = vmatmul.mubr.bf16.gmra.mxu0 %v314
  %v1367 = vpop.f32.mrf.mxu0
  %v1368 = vadd.f32 %v1319, %v1367
  %v1369 = vpop.f32.mrf.mxu0
  %v1370 = vpop.f32.mrf.mxu0
  %v1371 = vadd.f32 %v1322, %v1370
  %v1372 = vpop.f32.mrf.mxu0
  %1373 = vdwg.mxu0
  %1374 = vmatprep.subr.bf16.mxu0 0
  %1375 = vmatpush1.bf16.msra.mxu0 %v996
  %1376 = vmatprep.subr.bf16.mxu0 0
  %1377 = vmatpush1.bf16.msra.mxu0 %v993
  %1378 = vmatprep.subr.bf16.mxu0 0
  %1379 = vmatpush1.bf16.msra.mxu0 %v990
  %1380 = vmatprep.subr.bf16.mxu0 0
  %1381 = vmatpush1.bf16.msra.mxu0 %v987
  %1382 = vmatprep.subr.bf16.mxu0 0
  %1383 = vmatpush1.bf16.msra.mxu0 %v984
  %1384 = vmatprep.subr.bf16.mxu0 0
  %1385 = vmatpush1.bf16.msra.mxu0 %v981
  %1386 = vmatprep.subr.bf16.mxu0 0
  %1387 = vmatpush1.bf16.msra.mxu0 %v978
  %1388 = vmatprep.subr.bf16.mxu0 0
  %1389 = vmatpush1.bf16.msra.mxu0 %v975
  %1390 = vmatprep.subr.bf16.mxu0 0
  %1391 = vmatpush2.bf16.msra.mxu0 0
  %1392 = vmatprep.subr.bf16.mxu0 0
  %1393 = vmatpush2.bf16.msra.mxu0 0
  %1394 = vmatprep.subr.bf16.mxu0 0
  %1395 = vmatpush2.bf16.msra.mxu0 0
  %1396 = vmatprep.subr.bf16.mxu0 0
  %1397 = vmatpush2.bf16.msra.mxu0 0
  %1398 = vmatprep.subr.bf16.mxu0 0
  %1399 = vmatpush2.bf16.msra.mxu0 0
  %1400 = vmatprep.subr.bf16.mxu0 0
  %1401 = vmatpush2.bf16.msra.mxu0 0
  %1402 = vmatprep.subr.bf16.mxu0 0
  %1403 = vmatpush2.bf16.msra.mxu0 0
  %1404 = vmatprep.subr.bf16.mxu0 0
  %1405 = vmatpush2.bf16.msra.mxu0 0
  %1406 = vmatprep.mubr.bf16.mxu0 0
  %1407 = vmatmul.mubr.bf16.gmra.mxu0 %v311
  %v1408 = vpop.f32.mrf.mxu0
  %v1409 = vadd.f32 %v1360, %v1408
  %v1410 = vpop.f32.mrf.mxu0
  %v1411 = vpop.f32.mrf.mxu0
  %v1412 = vadd.f32 %v1363, %v1411
  %v1413 = vpop.f32.mrf.mxu0
  %1414 = vmatprep.mubr.bf16.mxu0 0
  %1415 = vmatmul.mubr.bf16.gmra.mxu0 %v316
  %v1416 = vpop.f32.mrf.mxu0
  %v1417 = vadd.f32 %v1368, %v1416
  %v1418 = vpop.f32.mrf.mxu0
  %v1419 = vpop.f32.mrf.mxu0
  %v1420 = vadd.f32 %v1371, %v1419
  %v1421 = vpop.f32.mrf.mxu0
  %1422 = vdwg.mxu0
  %v1423 = vpack.c.bf16 %v1262, %v1258
  %v1424 = vpack.c.bf16 %v1264, %v1260
  %v1425 = vpack.c.bf16 %v1412, %v1409
  %v1426 = vpack.c.bf16 %v1272, %v1268
  %v1427 = vpack.c.bf16 %v1274, %v1270
  %v1428 = vpack.c.bf16 %v1420, %v1417
  %v1435 = vunpack.c.l.b16 %v1423
  %v1436 = vunpack.c.l.b16 %v1424
  %v1437 = vunpack.c.l.b16 %v1425
  %v1438 = vunpack.c.h.b16 %v1423
  %v1439 = vunpack.c.h.b16 %v1424
  %v1440 = vunpack.c.h.b16 %v1425
  %v1441 = vunpack.c.l.b16 %v1426
  %v1442 = vunpack.c.l.b16 %v1427
  %v1443 = vunpack.c.l.b16 %v1428
  %v1444 = vunpack.c.h.b16 %v1426
  %v1445 = vunpack.c.h.b16 %v1427
  %v1446 = vunpack.c.h.b16 %v1428
  %v1447 = vpack.c.b16 %v1436, %v1435
  %v1448 = vpack.c.b16 %v1437, %v1437
  %v1449 = vpack.c.b16 %v1439, %v1438
  %v1450 = vpack.c.b16 %v1440, %v1440
  %v1451 = vpack.c.b16 %v1442, %v1441
  %v1452 = vpack.c.b16 %v1443, %v1443
  %v1453 = vpack.c.b16 %v1445, %v1444
  %v1454 = vpack.c.b16 %v1446, %v1446
  %1463 = vst [vmem:[%s3] sm:$0xff] %v1447
  %1464 = vst [vmem:[%s3 + $0x8] sm:$0xf] %v1448
  %1465 = vst [vmem:[%s3 + $0xc] sm:$0xff] %v1449
  %1466 = vst [vmem:[%s3 + $0x14] sm:$0xf] %v1450
  %1467 = vst [vmem:[%s3 + $0x18] sm:$0xff] %v1451
  %1468 = vst [vmem:[%s3 + $0x20] sm:$0xf] %v1452
  %1469 = vst [vmem:[%s3 + $0x24] sm:$0xff] %v1453
  %1470 = vst [vmem:[%s3 + $0x2c] sm:$0xf] %v1454
  // Predicated region
  $region14: #{_lambda_.7} parent=0 // pred_check
    _
  $region15: #{_lambda_.7} parent=0 // pred_check_branch
    %1472 = sbr.rel (0) target = $region17
  $region16: #{_lambda_.7} parent=0 // pred_region
    _
  $region17: #{_lambda_.7} parent=0 // pred_fallthru
    _
  // Predicated region
  $region18: #{_lambda_.7} parent=0 // pred_check
    _
  $region19: #{_lambda_.7} parent=0 // pred_check_branch
    %1474 = sbr.rel (0) target = $region21
  $region20: #{_lambda_.7} parent=0 // pred_region
    _
  $region21: #{_lambda_.7} parent=0 // pred_fallthru
    _

// kernel: _lambda_.8
$region0: #{_lambda_.8}
  #allocation0 [shape = 'u32[]', space=smem, size = 0x4, offset = 0x4, fixed_abs, tag = 'smem constant byte address 0x4 - core index']
  #allocation1 [shape = 'u32[144,128]{1,0:T(1,128)}', space=vmem, size = 0x12000, scoped, tag = 'internal scratch']
  #allocation2 [shape = 'f32[16,1]{1,0:T(8,128)}', space=vmem, size = 0x2000, scoped, tag = 'scratch operand']
  #allocation3 [shape = 'f32[16,1]{1,0:T(8,128)}', space=vmem, size = 0x2000, scoped, tag = 'scratch operand']
  #allocation4 [shape = 'f32[16,128]{1,0:T(8,128)}', space=vmem, size = 0x2000, scoped, tag = 'scratch operand']
  %s0 = inlined_call_operand.vmem [shape: bf16[2,16,384], index: 0, kind: input, shape index: {}, may-alias: {0,1,2,3}]
  %s1 = inlined_call_operand.vmem [shape: bf16[2,16,384], index: 1, kind: input, shape index: {}, may-alias: {0,1,2,3}]
  %s2 = inlined_call_operand.vmem [shape: bf16[2,16,384], index: 2, kind: input, shape index: {}, may-alias: {0,1,2,3}]
  %s3 = inlined_call_operand.vmem [shape: bf16[2,16,384], index: 3, kind: input, shape index: {}, may-alias: {0,1,2,3}]
  %s4 = inlined_call_operand.vmem [shape: bf16[128,128], index: 4, kind: input, shape index: {}]
  %s5 = inlined_call_operand.vmem [shape: bf16[128,128], index: 5, kind: input, shape index: {}]
  %s6 = inlined_call_operand.vmem [shape: bf16[128,128], index: 6, kind: input, shape index: {}]
  %s7 = inlined_call_operand.vmem [shape: f32[8,128], index: 7, kind: input, shape index: {}]
  %s8 = inlined_call_operand.vmem [shape: bf16[2,16,128], index: 8, kind: output, shape index: {}]
  %s9 = sld [smem:[#allocation0]]
  $region237: #{_lambda_.8} parent=0
    _
  %s11 = ssub.s32 1, %s9
  %s12 = scalar_select 0, %s11, %s9
  $region1: #{_lambda_.8} parent=0
    #allocation5 [shape = 'u8[8192]{0}', space=vmem, size = 0x2000, scoped, tag = 'input window, operand 0']
    #allocation6 [shape = 'u8[8192]{0}', space=vmem, size = 0x2000, scoped, tag = 'input window, operand 1']
    #allocation7 [shape = 'u8[8192]{0}', space=vmem, size = 0x2000, scoped, tag = 'input window, operand 2']
    #allocation8 [shape = 'u8[8192]{0}', space=vmem, size = 0x2000, scoped, tag = 'input window, operand 3']
    loop: start=0, step=1, limit=4
    $region2: #{_lambda_.8} parent=1 // loop_pre_header
      _
    $region3: #{_lambda_.8} parent=1 // loop_header
      %s14 = sphi 0, %s18
      %p15 = scmp.ge.s32.totalorder %s14, 4
      %s21 = sphi 0, %s40
      %s22 = sphi 0, %s36
      %s23 = sphi 0, %s32
      %s24 = sphi 0, %s21
      %s25 = sphi 0, %s22
      %s26 = sphi 0, %s23
      %s27 = sphi 0, %s24
      %s28 = sphi 0, %s25
      %s29 = sphi 0, %s26
      %s45 = sphi 0, %s47
      %s48 = sphi 0, %s45
      %s49 = sphi 0, %s48
      %s65 = sphi 0, %s49
      %s73 = sphi 0, %s75
      %s76 = sphi 0, %s73
      %s77 = sphi 0, %s76
      %s93 = sphi 0, %s77
      %s101 = sphi 0, %s103
      %s104 = sphi 0, %s101
      %s105 = sphi 0, %s104
      %s121 = sphi 0, %s105
      %s129 = sphi 0, %s131
      %s132 = sphi 0, %s129
      %s133 = sphi 0, %s132
      %s149 = sphi 0, %s133
      %s153 = sphi 0, %s153
      %s155 = sphi 0, %s153
      %s156 = sphi 0, %s155
      %s170 = sphi 0, %s156
      %s174 = sphi 0, %s174
      %s176 = sphi 0, %s174
      %s177 = sphi 0, %s176
      %s191 = sphi 0, %s177
      %s195 = sphi 0, %s195
      %s197 = sphi 0, %s195
      %s198 = sphi 0, %s197
      %s212 = sphi 0, %s198
      %s216 = sphi 0, %s216
      %s218 = sphi 0, %s216
      %s219 = sphi 0, %s218
      %s233 = sphi 0, %s219
      %s241 = sphi 0, %s243
      %s244 = sphi 0, %s241
      %s245 = sphi 0, %s244
      %s261 = sphi 0, %s245
    $region4: #{_lambda_.8} parent=1 // loop_header_branch
      %17 = sbr.rel (%p15) target = $region8
    $region5: #{_lambda_.8} parent=1 // loop_body
      %s19 = ssub.s32 %s14, 1
      %s20 = ssub.s32 %s14, 2
      %s30 = sadd.s32 1, %s23
      %p31 = scmp.ge.s32.totalorder %s30, 1
      %s32 = scalar_select %p31, 0, %s30
      %s33 = sadd.s32 1, %s22
      %s34 = scalar_select %p31, %s33, %s22
      %p35 = scmp.ge.s32.totalorder %s34, 1
      %s36 = scalar_select %p35, 0, %s34
      %s37 = sadd.s32 1, %s21
      %s38 = scalar_select %p35, %s37, %s21
      %p39 = scmp.ge.s32.totalorder %s38, 2
      %s40 = scalar_select %p39, 0, %s38
      %s41 = ssub.s32 %s21, %s40
      %s42 = ssub.s32 %s22, %s36
      %s43 = sor.u32 %s41, %s42
      %p44 = scmp.eq.s32.totalorder %s43, 0
      %s46 = sadd.s32 %s45, 1
      %s47 = scalar_select %p44, %s45, %s46
      %p50 = pneg %p44
      %p51 = scmp.eq.s32.totalorder %s14, 1
      %p52 = por %p50, %p51
      %p53 = scmp.ne.s32.totalorder %s45, %s48
      %p54 = scmp.eq.s32.totalorder %s14, 0
      %p55 = por %p53, %p54
      %p56 = scmp.ne.s32.totalorder %s45, %s48
      %p57 = scmp.eq.s32.totalorder %s19, 1
      %p58 = por %p56, %p57
      %p59 = scmp.ne.s32.totalorder %s48, %s49
      %p60 = scmp.eq.s32.totalorder %s19, 0
      %p61 = por %p59, %p60
      %p62 = scmp.ne.s32.totalorder %s48, %s49
      %p63 = scmp.eq.s32.totalorder %s20, 1
      %p64 = por %p62, %p63
      %p66 = scmp.ne.s32.totalorder %s49, %s65
      %p67 = scmp.eq.s32.totalorder %s20, 0
      %p68 = por %p66, %p67
      %s69 = ssub.s32 %s21, %s40
      %s70 = ssub.s32 %s23, %s32
      %s71 = sor.u32 %s69, %s70
      %p72 = scmp.eq.s32.totalorder %s71, 0
      %s74 = sadd.s32 %s73, 1
      %s75 = scalar_select %p72, %s73, %s74
      %p78 = pneg %p72
      %p79 = scmp.eq.s32.totalorder %s14, 1
      %p80 = por %p78, %p79
      %p81 = scmp.ne.s32.totalorder %s73, %s76
      %p82 = scmp.eq.s32.totalorder %s14, 0
      %p83 = por %p81, %p82
      %p84 = scmp.ne.s32.totalorder %s73, %s76
      %p85 = scmp.eq.s32.totalorder %s19, 1
      %p86 = por %p84, %p85
      %p87 = scmp.ne.s32.totalorder %s76, %s77
      %p88 = scmp.eq.s32.totalorder %s19, 0
      %p89 = por %p87, %p88
      %p90 = scmp.ne.s32.totalorder %s76, %s77
      %p91 = scmp.eq.s32.totalorder %s20, 1
      %p92 = por %p90, %p91
      %p94 = scmp.ne.s32.totalorder %s77, %s93
      %p95 = scmp.eq.s32.totalorder %s20, 0
      %p96 = por %p94, %p95
      %s97 = ssub.s32 %s21, %s40
      %s98 = ssub.s32 %s23, %s32
      %s99 = sor.u32 %s97, %s98
      %p100 = scmp.eq.s32.totalorder %s99, 0
      %s102 = sadd.s32 %s101, 1
      %s103 = scalar_select %p100, %s101, %s102
      %p106 = pneg %p100
      %p107 = scmp.eq.s32.totalorder %s14, 1
      %p108 = por %p106, %p107
      %p109 = scmp.ne.s32.totalorder %s101, %s104
      %p110 = scmp.eq.s32.totalorder %s14, 0
      %p111 = por %p109, %p110
      %p112 = scmp.ne.s32.totalorder %s101, %s104
      %p113 = scmp.eq.s32.totalorder %s19, 1
      %p114 = por %p112, %p113
      %p115 = scmp.ne.s32.totalorder %s104, %s105
      %p116 = scmp.eq.s32.totalorder %s19, 0
      %p117 = por %p115, %p116
      %p118 = scmp.ne.s32.totalorder %s104, %s105
      %p119 = scmp.eq.s32.totalorder %s20, 1
      %p120 = por %p118, %p119
      %p122 = scmp.ne.s32.totalorder %s105, %s121
      %p123 = scmp.eq.s32.totalorder %s20, 0
      %p124 = por %p122, %p123
      %s125 = ssub.s32 %s21, %s40
      %s126 = ssub.s32 %s22, %s36
      %s127 = sor.u32 %s125, %s126
      %p128 = scmp.eq.s32.totalorder %s127, 0
      %s130 = sadd.s32 %s129, 1
      %s131 = scalar_select %p128, %s129, %s130
      %p134 = pneg %p128
      %p135 = scmp.eq.s32.totalorder %s14, 1
      %p136 = por %p134, %p135
      %p137 = scmp.ne.s32.totalorder %s129, %s132
      %p138 = scmp.eq.s32.totalorder %s14, 0
      %p139 = por %p137, %p138
      %p140 = scmp.ne.s32.totalorder %s129, %s132
      %p141 = scmp.eq.s32.totalorder %s19, 1
      %p142 = por %p140, %p141
      %p143 = scmp.ne.s32.totalorder %s132, %s133
      %p144 = scmp.eq.s32.totalorder %s19, 0
      %p145 = por %p143, %p144
      %p146 = scmp.ne.s32.totalorder %s132, %s133
      %p147 = scmp.eq.s32.totalorder %s20, 1
      %p148 = por %p146, %p147
      %p150 = scmp.ne.s32.totalorder %s133, %s149
      %p151 = scmp.eq.s32.totalorder %s20, 0
      %p152 = por %p150, %p151
      %s154 = sadd.s32 %s153, 1
      %p157 = scmp.eq.s32.totalorder %s14, 1
      %p158 = scmp.ne.s32.totalorder %s153, %s155
      %p159 = scmp.eq.s32.totalorder %s14, 0
      %p160 = por %p158, %p159
      %p161 = scmp.ne.s32.totalorder %s153, %s155
      %p162 = scmp.eq.s32.totalorder %s19, 1
      %p163 = por %p161, %p162
      %p164 = scmp.ne.s32.totalorder %s155, %s156
      %p165 = scmp.eq.s32.totalorder %s19, 0
      %p166 = por %p164, %p165
      %p167 = scmp.ne.s32.totalorder %s155, %s156
      %p168 = scmp.eq.s32.totalorder %s20, 1
      %p169 = por %p167, %p168
      %p171 = scmp.ne.s32.totalorder %s156, %s170
      %p172 = scmp.eq.s32.totalorder %s20, 0
      %p173 = por %p171, %p172
      %s175 = sadd.s32 %s174, 1
      %p178 = scmp.eq.s32.totalorder %s14, 1
      %p179 = scmp.ne.s32.totalorder %s174, %s176
      %p180 = scmp.eq.s32.totalorder %s14, 0
      %p181 = por %p179, %p180
      %p182 = scmp.ne.s32.totalorder %s174, %s176
      %p183 = scmp.eq.s32.totalorder %s19, 1
      %p184 = por %p182, %p183
      %p185 = scmp.ne.s32.totalorder %s176, %s177
      %p186 = scmp.eq.s32.totalorder %s19, 0
      %p187 = por %p185, %p186
      %p188 = scmp.ne.s32.totalorder %s176, %s177
      %p189 = scmp.eq.s32.totalorder %s20, 1
      %p190 = por %p188, %p189
      %p192 = scmp.ne.s32.totalorder %s177, %s191
      %p193 = scmp.eq.s32.totalorder %s20, 0
      %p194 = por %p192, %p193
      %s196 = sadd.s32 %s195, 1
      %p199 = scmp.eq.s32.totalorder %s14, 1
      %p200 = scmp.ne.s32.totalorder %s195, %s197
      %p201 = scmp.eq.s32.totalorder %s14, 0
      %p202 = por %p200, %p201
      %p203 = scmp.ne.s32.totalorder %s195, %s197
      %p204 = scmp.eq.s32.totalorder %s19, 1
      %p205 = por %p203, %p204
      %p206 = scmp.ne.s32.totalorder %s197, %s198
      %p207 = scmp.eq.s32.totalorder %s19, 0
      %p208 = por %p206, %p207
      %p209 = scmp.ne.s32.totalorder %s197, %s198
      %p210 = scmp.eq.s32.totalorder %s20, 1
      %p211 = por %p209, %p210
      %p213 = scmp.ne.s32.totalorder %s198, %s212
      %p214 = scmp.eq.s32.totalorder %s20, 0
      %p215 = por %p213, %p214
      %s217 = sadd.s32 %s216, 1
      %p220 = scmp.eq.s32.totalorder %s14, 1
      %p221 = scmp.ne.s32.totalorder %s216, %s218
      %p222 = scmp.eq.s32.totalorder %s14, 0
      %p223 = por %p221, %p222
      %p224 = scmp.ne.s32.totalorder %s216, %s218
      %p225 = scmp.eq.s32.totalorder %s19, 1
      %p226 = por %p224, %p225
      %p227 = scmp.ne.s32.totalorder %s218, %s219
      %p228 = scmp.eq.s32.totalorder %s19, 0
      %p229 = por %p227, %p228
      %p230 = scmp.ne.s32.totalorder %s218, %s219
      %p231 = scmp.eq.s32.totalorder %s20, 1
      %p232 = por %p230, %p231
      %p234 = scmp.ne.s32.totalorder %s219, %s233
      %p235 = scmp.eq.s32.totalorder %s20, 0
      %p236 = por %p234, %p235
      %s237 = ssub.s32 %s21, %s40
      %s238 = ssub.s32 %s22, %s36
      %s239 = sor.u32 %s237, %s238
      %p240 = scmp.eq.s32.totalorder %s239, 0
      %s242 = sadd.s32 %s241, 1
      %s243 = scalar_select %p240, %s241, %s242
      %p246 = pneg %p240
      %p247 = scmp.eq.s32.totalorder %s14, 1
      %p248 = por %p246, %p247
      %p249 = scmp.ne.s32.totalorder %s241, %s244
      %p250 = scmp.eq.s32.totalorder %s14, 0
      %p251 = por %p249, %p250
      %p252 = scmp.ne.s32.totalorder %s241, %s244
      %p253 = scmp.eq.s32.totalorder %s19, 1
      %p254 = por %p252, %p253
      %p255 = scmp.ne.s32.totalorder %s244, %s245
      %p256 = scmp.eq.s32.totalorder %s19, 0
      %p257 = por %p255, %p256
      %p258 = scmp.ne.s32.totalorder %s244, %s245
      %p259 = scmp.eq.s32.totalorder %s20, 1
      %p260 = por %p258, %p259
      %p262 = scmp.ne.s32.totalorder %s245, %s261
      %p263 = scmp.eq.s32.totalorder %s20, 0
      %p264 = por %p262, %p263
      %p265 = scmp.le.s32.totalorder 1, %s14
      %p266 = scmp.lt.s32.totalorder %s14, 3
      %p267 = pnand %p265, %p266
      %p268 = pneg %p267
      // Predicated region
      $region9: #{_lambda_.8} parent=5 // pred_check
        _
      $region10: #{_lambda_.8} parent=5 // pred_check_branch
        %270 = sbr.rel (%p267) target = $region12
      $region11: #{_lambda_.8} parent=5 // pred_region
        %s271 = ssub.s32 %s14, 1
        // Predicated region
        $region13: #{_lambda_.8} parent=11 // pred_check
          %p272 = pneg %p166
        $region14: #{_lambda_.8} parent=11 // pred_check_branch
          %274 = sbr.rel (%p272) target = $region16
        $region15: #{_lambda_.8} parent=11 // pred_region
          _
        $region16: #{_lambda_.8} parent=11 // pred_fallthru
          _
        // Predicated region
        $region17: #{_lambda_.8} parent=11 // pred_check
          %p275 = pneg %p187
        $region18: #{_lambda_.8} parent=11 // pred_check_branch
          %277 = sbr.rel (%p275) target = $region20
        $region19: #{_lambda_.8} parent=11 // pred_region
          _
        $region20: #{_lambda_.8} parent=11 // pred_fallthru
          _
        // Predicated region
        $region21: #{_lambda_.8} parent=11 // pred_check
          %p278 = pneg %p208
        $region22: #{_lambda_.8} parent=11 // pred_check_branch
          %280 = sbr.rel (%p278) target = $region24
        $region23: #{_lambda_.8} parent=11 // pred_region
          _
        $region24: #{_lambda_.8} parent=11 // pred_fallthru
          _
        // Predicated region
        $region25: #{_lambda_.8} parent=11 // pred_check
          %p281 = pneg %p229
        $region26: #{_lambda_.8} parent=11 // pred_check_branch
          %283 = sbr.rel (%p281) target = $region28
        $region27: #{_lambda_.8} parent=11 // pred_region
          _
        $region28: #{_lambda_.8} parent=11 // pred_fallthru
          _
      $region12: #{_lambda_.8} parent=5 // pred_fallthru
        _
      %p284 = scmp.lt.s32.totalorder %s14, 2
      // Predicated region
      $region29: #{_lambda_.8} parent=5 // pred_check
        %p285 = pneg %p284
      $region30: #{_lambda_.8} parent=5 // pred_check_branch
        %287 = sbr.rel (%p285) target = $region32
      $region31: #{_lambda_.8} parent=5 // pred_region
        // Predicated region
        $region33: #{_lambda_.8} parent=31 // pred_check
          %p288 = pneg %p55
        $region34: #{_lambda_.8} parent=31 // pred_check_branch
          %290 = sbr.rel (%p288) target = $region36
        $region35: #{_lambda_.8} parent=31 // pred_region
          %s291 = sand.u32 %s45, 1
          %s292 = sand.u32 %s45, 1
          %s293 = smul.addr %s292, 8
          %s294 = scalar_lea.vmem [#allocation5], %s293
          %s295 = smul.u32 2, %s22
          %s296 = smul.addr %s295, 3
          %s297 = smul.addr %s21, 6
          %s298 = sadd.s32 %s296, %s297
          %s299 = smul.addr %s298, 4
          %s300 = scalar_lea.vmem %s0, %s299
          // Predicated region
          $region37: #{_lambda_.8} parent=35 // pred_check
            _
          $region38: #{_lambda_.8} parent=35 // pred_check_branch
            %302 = sbr.rel (0) target = $region40
          $region39: #{_lambda_.8} parent=35 // pred_region
            // Predicated region
            $region41: #{_lambda_.8} parent=39 // pred_check
              _
            $region42: #{_lambda_.8} parent=39 // pred_check_branch
              %304 = sbr.rel target = $region44
            $region43: #{_lambda_.8} parent=39 // pred_region
              // Predicated region
              $region56: #{_lambda_.8} parent=43 // pred_check
                _
              $region57: #{_lambda_.8} parent=43 // pred_check_branch
                %322 = sbr.rel (0) target = $region59
              $region58: #{_lambda_.8} parent=43 // pred_region
                loop: start=0, step=1, limit=1
                $region60: #{_lambda_.8} parent=58 // loop_pre_header
                  _
                $region61: #{_lambda_.8} parent=58 // loop_header
                  %s324 = sphi 0, %s328
                  %p325 = scmp.ge.s32.totalorder %s324, 1
                  %s329 = sphi %s300, %s300
                  %s330 = sphi %s294, %s294
                $region62: #{_lambda_.8} parent=58 // loop_header_branch
                  %327 = sbr.rel (%p325) target = $region66
                $region63: #{_lambda_.8} parent=58 // loop_body
                  _
                $region64: #{_lambda_.8} parent=58 // loop_footer
                  %s328 = sadd.s32 1, %s324
                $region65: #{_lambda_.8} parent=58 // loop_footer_branch
                  %323 = sbr.rel target = $region61
                $region66: #{_lambda_.8} parent=58 // loop_exit
                  _
                %s332 = ssub.s32 16, 1
                loop: start=0, step=1, limit=1
                $region67: #{_lambda_.8} parent=58 // loop_pre_header
                  _
                $region68: #{_lambda_.8} parent=58 // loop_header
                  %s334 = sphi 0, %s338
                  %p335 = scmp.ge.s32.totalorder %s334, 1
                  %s339 = sphi %s300, %s300
                  %s340 = sphi %s294, %s294
                $region69: #{_lambda_.8} parent=58 // loop_header_branch
                  %337 = sbr.rel (%p335) target = $region73
                $region70: #{_lambda_.8} parent=58 // loop_body
                  %v341 = vld [vmem:[%s339] sm:%s332]
                  %342 = vst [vmem:[%s340] sm:%s332] %v341
                  %v343 = vld [vmem:[%s339 + $0xc] sm:%s332]
                  %344 = vst [vmem:[%s340 + $0x4] sm:%s332] %v343
                $region71: #{_lambda_.8} parent=58 // loop_footer
                  %s338 = sadd.s32 1, %s334
                $region72: #{_lambda_.8} parent=58 // loop_footer_branch
                  %333 = sbr.rel target = $region68
                $region73: #{_lambda_.8} parent=58 // loop_exit
                  _
              $region59: #{_lambda_.8} parent=43 // pred_fallthru
                _
            $region44: #{_lambda_.8} parent=39 // pred_fallthru
              _
            // Predicated region
            $region45: #{_lambda_.8} parent=39 // pred_check
              _
            $region46: #{_lambda_.8} parent=39 // pred_check_branch
              %306 = sbr.rel (0) target = $region48
            $region47: #{_lambda_.8} parent=39 // pred_region
              %s308 = ssub.s32 16, 1
              loop: start=0, step=1, limit=1
              $region49: #{_lambda_.8} parent=47 // loop_pre_header
                _
              $region50: #{_lambda_.8} parent=47 // loop_header
                %s310 = sphi 0, %s314
                %p311 = scmp.ge.s32.totalorder %s310, 1
                %s315 = sphi %s300, %s300
                %s316 = sphi %s294, %s294
              $region51: #{_lambda_.8} parent=47 // loop_header_branch
                %313 = sbr.rel (%p311) target = $region55
              $region52: #{_lambda_.8} parent=47 // loop_body
                %v317 = vld [vmem:[%s315] sm:%s308]
                %318 = vst [vmem:[%s316] sm:%s308] %v317
                %v319 = vld [vmem:[%s315 + $0xc] sm:%s308]
                %320 = vst [vmem:[%s316 + $0x4] sm:%s308] %v319
              $region53: #{_lambda_.8} parent=47 // loop_footer
                %s314 = sadd.s32 1, %s310
              $region54: #{_lambda_.8} parent=47 // loop_footer_branch
                %309 = sbr.rel target = $region50
              $region55: #{_lambda_.8} parent=47 // loop_exit
                _
            $region48: #{_lambda_.8} parent=39 // pred_fallthru
              _
          $region40: #{_lambda_.8} parent=35 // pred_fallthru
            _
          %345 = vnop
        $region36: #{_lambda_.8} parent=31 // pred_fallthru
          _
        // Predicated region
        $region74: #{_lambda_.8} parent=31 // pred_check
          %p346 = pneg %p83
        $region75: #{_lambda_.8} parent=31 // pred_check_branch
          %348 = sbr.rel (%p346) target = $region77
        $region76: #{_lambda_.8} parent=31 // pred_region
          %s349 = sand.u32 %s73, 1
          %s350 = sand.u32 %s73, 1
          %s351 = smul.addr %s350, 8
          %s352 = scalar_lea.vmem [#allocation6], %s351
          %s353 = smul.u32 2, %s23
          %s354 = smul.addr %s353, 3
          %s355 = sadd.s32 1, %s354
          %s356 = smul.addr %s21, 6
          %s357 = sadd.s32 %s355, %s356
          %s358 = smul.addr %s357, 4
          %s359 = scalar_lea.vmem %s1, %s358
          // Predicated region
          $region78: #{_lambda_.8} parent=76 // pred_check
            _
          $region79: #{_lambda_.8} parent=76 // pred_check_branch
            %361 = sbr.rel (0) target = $region81
          $region80: #{_lambda_.8} parent=76 // pred_region
            // Predicated region
            $region82: #{_lambda_.8} parent=80 // pred_check
              _
            $region83: #{_lambda_.8} parent=80 // pred_check_branch
              %363 = sbr.rel target = $region85
            $region84: #{_lambda_.8} parent=80 // pred_region
              // Predicated region
              $region97: #{_lambda_.8} parent=84 // pred_check
                _
              $region98: #{_lambda_.8} parent=84 // pred_check_branch
                %381 = sbr.rel (0) target = $region100
              $region99: #{_lambda_.8} parent=84 // pred_region
                loop: start=0, step=1, limit=1
                $region101: #{_lambda_.8} parent=99 // loop_pre_header
                  _
                $region102: #{_lambda_.8} parent=99 // loop_header
                  %s383 = sphi 0, %s387
                  %p384 = scmp.ge.s32.totalorder %s383, 1
                  %s388 = sphi %s359, %s359
                  %s389 = sphi %s352, %s352
                $region103: #{_lambda_.8} parent=99 // loop_header_branch
                  %386 = sbr.rel (%p384) target = $region107
                $region104: #{_lambda_.8} parent=99 // loop_body
                  _
                $region105: #{_lambda_.8} parent=99 // loop_footer
                  %s387 = sadd.s32 1, %s383
                $region106: #{_lambda_.8} parent=99 // loop_footer_branch
                  %382 = sbr.rel target = $region102
                $region107: #{_lambda_.8} parent=99 // loop_exit
                  _
                %s391 = ssub.s32 16, 1
                loop: start=0, step=1, limit=1
                $region108: #{_lambda_.8} parent=99 // loop_pre_header
                  _
                $region109: #{_lambda_.8} parent=99 // loop_header
                  %s393 = sphi 0, %s397
                  %p394 = scmp.ge.s32.totalorder %s393, 1
                  %s398 = sphi %s359, %s359
                  %s399 = sphi %s352, %s352
                $region110: #{_lambda_.8} parent=99 // loop_header_branch
                  %396 = sbr.rel (%p394) target = $region114
                $region111: #{_lambda_.8} parent=99 // loop_body
                  %v400 = vld [vmem:[%s398] sm:%s391]
                  %401 = vst [vmem:[%s399] sm:%s391] %v400
                  %v402 = vld [vmem:[%s398 + $0xc] sm:%s391]
                  %403 = vst [vmem:[%s399 + $0x4] sm:%s391] %v402
                $region112: #{_lambda_.8} parent=99 // loop_footer
                  %s397 = sadd.s32 1, %s393
                $region113: #{_lambda_.8} parent=99 // loop_footer_branch
                  %392 = sbr.rel target = $region109
                $region114: #{_lambda_.8} parent=99 // loop_exit
                  _
              $region100: #{_lambda_.8} parent=84 // pred_fallthru
                _
            $region85: #{_lambda_.8} parent=80 // pred_fallthru
              _
            // Predicated region
            $region86: #{_lambda_.8} parent=80 // pred_check
              _
            $region87: #{_lambda_.8} parent=80 // pred_check_branch
              %365 = sbr.rel (0) target = $region89
            $region88: #{_lambda_.8} parent=80 // pred_region
              %s367 = ssub.s32 16, 1
              loop: start=0, step=1, limit=1
              $region90: #{_lambda_.8} parent=88 // loop_pre_header
                _
              $region91: #{_lambda_.8} parent=88 // loop_header
                %s369 = sphi 0, %s373
                %p370 = scmp.ge.s32.totalorder %s369, 1
                %s374 = sphi %s359, %s359
                %s375 = sphi %s352, %s352
              $region92: #{_lambda_.8} parent=88 // loop_header_branch
                %372 = sbr.rel (%p370) target = $region96
              $region93: #{_lambda_.8} parent=88 // loop_body
                %v376 = vld [vmem:[%s374] sm:%s367]
                %377 = vst [vmem:[%s375] sm:%s367] %v376
                %v378 = vld [vmem:[%s374 + $0xc] sm:%s367]
                %379 = vst [vmem:[%s375 + $0x4] sm:%s367] %v378
              $region94: #{_lambda_.8} parent=88 // loop_footer
                %s373 = sadd.s32 1, %s369
              $region95: #{_lambda_.8} parent=88 // loop_footer_branch
                %368 = sbr.rel target = $region91
              $region96: #{_lambda_.8} parent=88 // loop_exit
                _
            $region89: #{_lambda_.8} parent=80 // pred_fallthru
              _
          $region81: #{_lambda_.8} parent=76 // pred_fallthru
            _
          %404 = vnop
        $region77: #{_lambda_.8} parent=31 // pred_fallthru
          _
        // Predicated region
        $region115: #{_lambda_.8} parent=31 // pred_check
          %p405 = pneg %p111
        $region116: #{_lambda_.8} parent=31 // pred_check_branch
          %407 = sbr.rel (%p405) target = $region118
        $region117: #{_lambda_.8} parent=31 // pred_region
          %s408 = sand.u32 %s101, 1
          %s409 = sand.u32 %s101, 1
          %s410 = smul.addr %s409, 8
          %s411 = scalar_lea.vmem [#allocation7], %s410
          %s412 = smul.u32 2, %s23
          %s413 = smul.addr %s412, 3
          %s414 = sadd.s32 2, %s413
          %s415 = smul.addr %s21, 6
          %s416 = sadd.s32 %s414, %s415
          %s417 = smul.addr %s416, 4
          %s418 = scalar_lea.vmem %s2, %s417
          // Predicated region
          $region119: #{_lambda_.8} parent=117 // pred_check
            _
          $region120: #{_lambda_.8} parent=117 // pred_check_branch
            %420 = sbr.rel (0) target = $region122
          $region121: #{_lambda_.8} parent=117 // pred_region
            // Predicated region
            $region123: #{_lambda_.8} parent=121 // pred_check
              _
            $region124: #{_lambda_.8} parent=121 // pred_check_branch
              %422 = sbr.rel target = $region126
            $region125: #{_lambda_.8} parent=121 // pred_region
              // Predicated region
              $region138: #{_lambda_.8} parent=125 // pred_check
                _
              $region139: #{_lambda_.8} parent=125 // pred_check_branch
                %440 = sbr.rel (0) target = $region141
              $region140: #{_lambda_.8} parent=125 // pred_region
                loop: start=0, step=1, limit=1
                $region142: #{_lambda_.8} parent=140 // loop_pre_header
                  _
                $region143: #{_lambda_.8} parent=140 // loop_header
                  %s442 = sphi 0, %s446
                  %p443 = scmp.ge.s32.totalorder %s442, 1
                  %s447 = sphi %s418, %s418
                  %s448 = sphi %s411, %s411
                $region144: #{_lambda_.8} parent=140 // loop_header_branch
                  %445 = sbr.rel (%p443) target = $region148
                $region145: #{_lambda_.8} parent=140 // loop_body
                  _
                $region146: #{_lambda_.8} parent=140 // loop_footer
                  %s446 = sadd.s32 1, %s442
                $region147: #{_lambda_.8} parent=140 // loop_footer_branch
                  %441 = sbr.rel target = $region143
                $region148: #{_lambda_.8} parent=140 // loop_exit
                  _
                %s450 = ssub.s32 16, 1
                loop: start=0, step=1, limit=1
                $region149: #{_lambda_.8} parent=140 // loop_pre_header
                  _
                $region150: #{_lambda_.8} parent=140 // loop_header
                  %s452 = sphi 0, %s456
                  %p453 = scmp.ge.s32.totalorder %s452, 1
                  %s457 = sphi %s418, %s418
                  %s458 = sphi %s411, %s411
                $region151: #{_lambda_.8} parent=140 // loop_header_branch
                  %455 = sbr.rel (%p453) target = $region155
                $region152: #{_lambda_.8} parent=140 // loop_body
                  %v459 = vld [vmem:[%s457] sm:%s450]
                  %460 = vst [vmem:[%s458] sm:%s450] %v459
                  %v461 = vld [vmem:[%s457 + $0xc] sm:%s450]
                  %462 = vst [vmem:[%s458 + $0x4] sm:%s450] %v461
                $region153: #{_lambda_.8} parent=140 // loop_footer
                  %s456 = sadd.s32 1, %s452
                $region154: #{_lambda_.8} parent=140 // loop_footer_branch
                  %451 = sbr.rel target = $region150
                $region155: #{_lambda_.8} parent=140 // loop_exit
                  _
              $region141: #{_lambda_.8} parent=125 // pred_fallthru
                _
            $region126: #{_lambda_.8} parent=121 // pred_fallthru
              _
            // Predicated region
            $region127: #{_lambda_.8} parent=121 // pred_check
              _
            $region128: #{_lambda_.8} parent=121 // pred_check_branch
              %424 = sbr.rel (0) target = $region130
            $region129: #{_lambda_.8} parent=121 // pred_region
              %s426 = ssub.s32 16, 1
              loop: start=0, step=1, limit=1
              $region131: #{_lambda_.8} parent=129 // loop_pre_header
                _
              $region132: #{_lambda_.8} parent=129 // loop_header
                %s428 = sphi 0, %s432
                %p429 = scmp.ge.s32.totalorder %s428, 1
                %s433 = sphi %s418, %s418
                %s434 = sphi %s411, %s411
              $region133: #{_lambda_.8} parent=129 // loop_header_branch
                %431 = sbr.rel (%p429) target = $region137
              $region134: #{_lambda_.8} parent=129 // loop_body
                %v435 = vld [vmem:[%s433] sm:%s426]
                %436 = vst [vmem:[%s434] sm:%s426] %v435
                %v437 = vld [vmem:[%s433 + $0xc] sm:%s426]
                %438 = vst [vmem:[%s434 + $0x4] sm:%s426] %v437
              $region135: #{_lambda_.8} parent=129 // loop_footer
                %s432 = sadd.s32 1, %s428
              $region136: #{_lambda_.8} parent=129 // loop_footer_branch
                %427 = sbr.rel target = $region132
              $region137: #{_lambda_.8} parent=129 // loop_exit
                _
            $region130: #{_lambda_.8} parent=121 // pred_fallthru
              _
          $region122: #{_lambda_.8} parent=117 // pred_fallthru
            _
          %463 = vnop
        $region118: #{_lambda_.8} parent=31 // pred_fallthru
          _
        // Predicated region
        $region156: #{_lambda_.8} parent=31 // pred_check
          %p464 = pneg %p139
        $region157: #{_lambda_.8} parent=31 // pred_check_branch
          %466 = sbr.rel (%p464) target = $region159
        $region158: #{_lambda_.8} parent=31 // pred_region
          %s467 = sand.u32 %s129, 1
          %s468 = sand.u32 %s129, 1
          %s469 = smul.addr %s468, 8
          %s470 = scalar_lea.vmem [#allocation8], %s469
          %s471 = smul.u32 2, %s22
          %s472 = smul.addr %s471, 3
          %s473 = sadd.s32 2, %s472
          %s474 = smul.addr %s21, 6
          %s475 = sadd.s32 %s473, %s474
          %s476 = smul.addr %s475, 4
          %s477 = scalar_lea.vmem %s3, %s476
          // Predicated region
          $region160: #{_lambda_.8} parent=158 // pred_check
            _
          $region161: #{_lambda_.8} parent=158 // pred_check_branch
            %479 = sbr.rel (0) target = $region163
          $region162: #{_lambda_.8} parent=158 // pred_region
            // Predicated region
            $region164: #{_lambda_.8} parent=162 // pred_check
              _
            $region165: #{_lambda_.8} parent=162 // pred_check_branch
              %481 = sbr.rel target = $region167
            $region166: #{_lambda_.8} parent=162 // pred_region
              // Predicated region
              $region179: #{_lambda_.8} parent=166 // pred_check
                _
              $region180: #{_lambda_.8} parent=166 // pred_check_branch
                %499 = sbr.rel (0) target = $region182
              $region181: #{_lambda_.8} parent=166 // pred_region
                loop: start=0, step=1, limit=1
                $region183: #{_lambda_.8} parent=181 // loop_pre_header
                  _
                $region184: #{_lambda_.8} parent=181 // loop_header
                  %s501 = sphi 0, %s505
                  %p502 = scmp.ge.s32.totalorder %s501, 1
                  %s506 = sphi %s477, %s477
                  %s507 = sphi %s470, %s470
                $region185: #{_lambda_.8} parent=181 // loop_header_branch
                  %504 = sbr.rel (%p502) target = $region189
                $region186: #{_lambda_.8} parent=181 // loop_body
                  _
                $region187: #{_lambda_.8} parent=181 // loop_footer
                  %s505 = sadd.s32 1, %s501
                $region188: #{_lambda_.8} parent=181 // loop_footer_branch
                  %500 = sbr.rel target = $region184
                $region189: #{_lambda_.8} parent=181 // loop_exit
                  _
                %s509 = ssub.s32 16, 1
                loop: start=0, step=1, limit=1
                $region190: #{_lambda_.8} parent=181 // loop_pre_header
                  _
                $region191: #{_lambda_.8} parent=181 // loop_header
                  %s511 = sphi 0, %s515
                  %p512 = scmp.ge.s32.totalorder %s511, 1
                  %s516 = sphi %s477, %s477
                  %s517 = sphi %s470, %s470
                $region192: #{_lambda_.8} parent=181 // loop_header_branch
                  %514 = sbr.rel (%p512) target = $region196
                $region193: #{_lambda_.8} parent=181 // loop_body
                  %v518 = vld [vmem:[%s516] sm:%s509]
                  %519 = vst [vmem:[%s517] sm:%s509] %v518
                  %v520 = vld [vmem:[%s516 + $0xc] sm:%s509]
                  %521 = vst [vmem:[%s517 + $0x4] sm:%s509] %v520
                $region194: #{_lambda_.8} parent=181 // loop_footer
                  %s515 = sadd.s32 1, %s511
                $region195: #{_lambda_.8} parent=181 // loop_footer_branch
                  %510 = sbr.rel target = $region191
                $region196: #{_lambda_.8} parent=181 // loop_exit
                  _
              $region182: #{_lambda_.8} parent=166 // pred_fallthru
                _
            $region167: #{_lambda_.8} parent=162 // pred_fallthru
              _
            // Predicated region
            $region168: #{_lambda_.8} parent=162 // pred_check
              _
            $region169: #{_lambda_.8} parent=162 // pred_check_branch
              %483 = sbr.rel (0) target = $region171
            $region170: #{_lambda_.8} parent=162 // pred_region
              %s485 = ssub.s32 16, 1
              loop: start=0, step=1, limit=1
              $region172: #{_lambda_.8} parent=170 // loop_pre_header
                _
              $region173: #{_lambda_.8} parent=170 // loop_header
                %s487 = sphi 0, %s491
                %p488 = scmp.ge.s32.totalorder %s487, 1
                %s492 = sphi %s477, %s477
                %s493 = sphi %s470, %s470
              $region174: #{_lambda_.8} parent=170 // loop_header_branch
                %490 = sbr.rel (%p488) target = $region178
              $region175: #{_lambda_.8} parent=170 // loop_body
                %v494 = vld [vmem:[%s492] sm:%s485]
                %495 = vst [vmem:[%s493] sm:%s485] %v494
                %v496 = vld [vmem:[%s492 + $0xc] sm:%s485]
                %497 = vst [vmem:[%s493 + $0x4] sm:%s485] %v496
              $region176: #{_lambda_.8} parent=170 // loop_footer
                %s491 = sadd.s32 1, %s487
              $region177: #{_lambda_.8} parent=170 // loop_footer_branch
                %486 = sbr.rel target = $region173
              $region178: #{_lambda_.8} parent=170 // loop_exit
                _
            $region171: #{_lambda_.8} parent=162 // pred_fallthru
              _
          $region163: #{_lambda_.8} parent=158 // pred_fallthru
            _
          %522 = vnop
        $region159: #{_lambda_.8} parent=31 // pred_fallthru
          _
      $region32: #{_lambda_.8} parent=5 // pred_fallthru
        _
      %p523 = scmp.le.s32.totalorder 1, %s14
      %p524 = scmp.lt.s32.totalorder %s14, 3
      %p525 = pnand %p523, %p524
      %p526 = pneg %p525
      // Predicated region
      $region197: #{_lambda_.8} parent=5 // pred_check
        _
      $region198: #{_lambda_.8} parent=5 // pred_check_branch
        %528 = sbr.rel (%p525) target = $region200
      $region199: #{_lambda_.8} parent=5 // pred_region
        %s529 = ssub.s32 %s14, 1
        %s530 = sand.u32 %s48, 1
        %s531 = sand.u32 %s48, 1
        %s532 = smul.addr %s531, 8
        %s533 = scalar_lea.vmem [#allocation5], %s532
        // Predicated region
        $region201: #{_lambda_.8} parent=199 // pred_check
          %p534 = pneg %p61
        $region202: #{_lambda_.8} parent=199 // pred_check_branch
          %536 = sbr.rel (%p534) target = $region204
        $region203: #{_lambda_.8} parent=199 // pred_region
          _
        $region204: #{_lambda_.8} parent=199 // pred_fallthru
          _
        %s537 = sand.u32 %s76, 1
        %s538 = sand.u32 %s76, 1
        %s539 = smul.addr %s538, 8
        %s540 = scalar_lea.vmem [#allocation6], %s539
        // Predicated region
        $region205: #{_lambda_.8} parent=199 // pred_check
          %p541 = pneg %p89
        $region206: #{_lambda_.8} parent=199 // pred_check_branch
          %543 = sbr.rel (%p541) target = $region208
        $region207: #{_lambda_.8} parent=199 // pred_region
          _
        $region208: #{_lambda_.8} parent=199 // pred_fallthru
          _
        %s544 = sand.u32 %s104, 1
        %s545 = sand.u32 %s104, 1
        %s546 = smul.addr %s545, 8
        %s547 = scalar_lea.vmem [#allocation7], %s546
        // Predicated region
        $region209: #{_lambda_.8} parent=199 // pred_check
          %p548 = pneg %p117
        $region210: #{_lambda_.8} parent=199 // pred_check_branch
          %550 = sbr.rel (%p548) target = $region212
        $region211: #{_lambda_.8} parent=199 // pred_region
          _
        $region212: #{_lambda_.8} parent=199 // pred_fallthru
          _
        %s551 = sand.u32 %s132, 1
        %s552 = sand.u32 %s132, 1
        %s553 = smul.addr %s552, 8
        %s554 = scalar_lea.vmem [#allocation8], %s553
        // Predicated region
        $region213: #{_lambda_.8} parent=199 // pred_check
          %p555 = pneg %p145
        $region214: #{_lambda_.8} parent=199 // pred_check_branch
          %557 = sbr.rel (%p555) target = $region216
        $region215: #{_lambda_.8} parent=199 // pred_region
          _
        $region216: #{_lambda_.8} parent=199 // pred_fallthru
          _
        %s558 = sand.u32 %s48, 1
        %s559 = sand.u32 %s48, 1
        %s560 = smul.addr %s559, 8
        %s561 = scalar_lea.vmem [#allocation5], %s560
        %p562 = pneg %p61
        %p563 = pneg %p58
        %s564 = sand.u32 %s76, 1
        %s565 = sand.u32 %s76, 1
        %s566 = smul.addr %s565, 8
        %s567 = scalar_lea.vmem [#allocation6], %s566
        %p568 = pneg %p89
        %p569 = pneg %p86
        %s570 = sand.u32 %s104, 1
        %s571 = sand.u32 %s104, 1
        %s572 = smul.addr %s571, 8
        %s573 = scalar_lea.vmem [#allocation7], %s572
        %p574 = pneg %p117
        %p575 = pneg %p114
        %s576 = sand.u32 %s132, 1
        %s577 = sand.u32 %s132, 1
        %s578 = smul.addr %s577, 8
        %s579 = scalar_lea.vmem [#allocation8], %s578
        %p580 = pneg %p145
        %p581 = pneg %p142
        %p582 = pneg %p166
        %p583 = pneg %p163
        %p584 = pneg %p187
        %p585 = pneg %p184
        %p586 = pneg %p208
        %p587 = pneg %p205
        %p588 = pneg %p229
        %p589 = pneg %p226
        %p590 = pneg %p257
        %p591 = pneg %p254
        %s592 = smul.u32 2, %s25
        %p593 = scmp.lt.s32.totalorder %s24, 1
        %s594 = scalar_select %p593, %s24, 1
        %p595 = scmp.lt.s32.totalorder %s592, 1
        %s596 = scalar_select %p595, %s592, 1
        %s597 = smul.addr %s594, 2
        %s598 = sadd.s32 %s596, %s597
        %s599 = smul.addr %s598, 4
        %s600 = scalar_lea.vmem %s8, %s599
        %s601 = smul.u32 2, %s25
        %s602 = smul.u32 2, %s26
        %s603 = smul.u32 2, %s26
        %s604 = smul.u32 2, %s25
        %s605 = smul.u32 2, %s25
        %p606 = scmp.lt.s32.totalorder %s24, 1
        %s607 = scalar_select %p606, %s24, 1
        %p608 = scmp.lt.s32.totalorder %s605, 1
        %s609 = scalar_select %p608, %s605, 1
        %s610 = smul.addr %s607, 2
        %s611 = sadd.s32 %s609, %s610
        %s612 = smul.addr %s611, 4
        %s613 = scalar_lea.vmem %s8, %s612
        %s614 = smul.u32 2, %s25
        %p616 = scmp.eq.s32.totalorder %s26, 0
        // Predicated region
        $region217: #{_lambda_.8} parent=199 // pred_check
          %p617 = pneg %p616
        $region218: #{_lambda_.8} parent=199 // pred_check_branch
          %619 = sbr.rel (%p617) target = $region220
        $region219: #{_lambda_.8} parent=199 // pred_region
          %vm620 = vcmask 7168
          %621 = vst.msk [vmem:[#allocation2] sm:$0xff] %vm620, -inf
          %622 = vst.msk [vmem:[#allocation2 + $0x8] sm:$0xff] %vm620, -inf
          %623 = vst.msk [vmem:[#allocation3] sm:$0xff] %vm620, 0.0
          %624 = vst.msk [vmem:[#allocation3 + $0x8] sm:$0xff] %vm620, 0.0
          %625 = vst [vmem:[#allocation4] sm:$0xff] 0.0
          %626 = vst [vmem:[#allocation4 + $0x8] sm:$0xff] 0.0
        $region220: #{_lambda_.8} parent=199 // pred_fallthru
          _
        %v627 = vld [vmem:[%s533] sm:$0xf]
        %v628 = vld [vmem:[%s533 + $0x4] sm:$0xf]
        %v629 = vld [vmem:[%s540] sm:$0xf]
        %v630 = vld [vmem:[%s540 + $0x4] sm:$0xf]
        %v631 = vld [vmem:[%s547] sm:$0xf]
        %v632 = vld [vmem:[%s547 + $0x4] sm:$0xf]
        %v635 = vunpack.c.l.b16 %v627
        %v636 = vunpack.c.l.b16 %v628
        %v637 = vpack.c.b16 %v636, %v635
        %v641 = vunpack.c.l.b16 %v629
        %v642 = vunpack.c.l.b16 %v630
        %v643 = vpack.c.b16 %v642, %v641
        %645 = vmatprep.subr.bf16.mxu0 0
        %646 = vmatpush1.bf16.xpose.msra.mxu0 0
        %647 = vmatprep.subr.bf16.mxu0 0
        %648 = vmatpush1.bf16.xpose.msra.mxu0 0
        %649 = vmatprep.subr.bf16.mxu0 0
        %650 = vmatpush1.bf16.xpose.msra.mxu0 0
        %651 = vmatprep.subr.bf16.mxu0 0
        %652 = vmatpush1.bf16.xpose.msra.mxu0 0
        %653 = vmatprep.subr.bf16.mxu0 0
        %654 = vmatpush1.bf16.xpose.msra.mxu0 0
        %655 = vmatprep.subr.bf16.mxu0 0
        %656 = vmatpush1.bf16.xpose.msra.mxu0 0
        %657 = vmatprep.subr.bf16.mxu0 0
        %658 = vmatpush1.bf16.xpose.msra.mxu0 0
        %659 = vmatprep.subr.bf16.mxu0 0
        %660 = vmatpush1.bf16.xpose.msra.mxu0 %v643
        %661 = vmatprep.subr.bf16.mxu0 0
        %662 = vmatpush2.bf16.xpose.msra.mxu0 0
        %663 = vmatprep.subr.bf16.mxu0 0
        %664 = vmatpush2.bf16.xpose.msra.mxu0 0
        %665 = vmatprep.subr.bf16.mxu0 0
        %666 = vmatpush2.bf16.xpose.msra.mxu0 0
        %667 = vmatprep.subr.bf16.mxu0 0
        %668 = vmatpush2.bf16.xpose.msra.mxu0 0
        %669 = vmatprep.subr.bf16.mxu0 0
        %670 = vmatpush2.bf16.xpose.msra.mxu0 0
        %671 = vmatprep.subr.bf16.mxu0 0
        %672 = vmatpush2.bf16.xpose.msra.mxu0 0
        %673 = vmatprep.subr.bf16.mxu0 0
        %674 = vmatpush2.bf16.xpose.msra.mxu0 0
        %675 = vmatprep.subr.bf16.mxu0 0
        %676 = vmatpush2.bf16.xpose.msra.mxu0 0
        %677 = vmatprep.mubr.bf16.mxu0 0
        %678 = vmatmul.mubr.bf16.gmra.mxu0 %v637
        %v679 = vpop.f32.mrf.mxu0
        %v680 = vadd.f32 0.0, %v679
        %v681 = vpop.f32.mrf.mxu0
        %v682 = vpop.f32.mrf.mxu0
        %v683 = vadd.f32 0.0, %v682
        %v684 = vpop.f32.mrf.mxu0
        %685 = vdwg.mxu0
        %v686 = vld [vmem:[#allocation2] sm:$0xff]
        %v687 = vld [vmem:[#allocation2 + $0x8] sm:$0xff]
        %vm688 = vcmask 130048
        %v689 = vsel %vm688, %v680, -inf
        %690 = vmax.xlane.f32.xlu0 %v689
        %v691 = vpop.xlane.xlu0 %690
        %v692 = vsel %vm688, %v683, -inf
        %693 = vmax.xlane.f32.xlu0 %v692
        %v694 = vpop.xlane.xlu0 %693
        %v695 = vmax.f32 %v686, %v691
        %v696 = vmax.f32 %v687, %v694
        %v697 = vsub.f32 %v686, %v695
        %v698 = vsub.f32 %v687, %v696
        %v699 = vmul.f32 %v697, 1.442695
        %v700 = vpow.pop %v699
        %v701 = vmul.f32 %v698, 1.442695
        %v702 = vpow.pop %v701
        %704 = vset.pattern.permute.xlu0 0
        %705 = vperm.xlu0 %704, %v695
        %v706 = vpop.permute.xlu0 %705
        %709 = vset.pattern.permute.xlu0 0
        %710 = vperm.xlu0 %709, %v696
        %v711 = vpop.permute.xlu0 %710
        %v713 = vsub.f32 %v680, %v706
        %v714 = vsub.f32 %v683, %v711
        %v715 = vmul.f32 %v713, 1.442695
        %v716 = vpow.pop %v715
        %v717 = vmul.f32 %v714, 1.442695
        %v718 = vpow.pop %v717
        %v719 = vld [vmem:[#allocation3] sm:$0xff]
        %v720 = vld [vmem:[#allocation3 + $0x8] sm:$0xff]
        %v721 = vmul.f32 %v700, %v719
        %v722 = vmul.f32 %v702, %v720
        %v723 = vsel %vm688, %v716, 0.0
        %724 = vadd.xlane.f32.xlu0 %v723
        %v725 = vpop.xlane.xlu0 %724
        %v726 = vsel %vm688, %v718, 0.0
        %727 = vadd.xlane.f32.xlu0 %v726
        %v728 = vpop.xlane.xlu0 %727
        %v729 = vadd.f32 %v721, %v725
        %v730 = vadd.f32 %v722, %v728
        %vm731 = vcmask 7168
        %732 = vst.msk [vmem:[#allocation3] sm:$0xff] %vm731, %v729
        %733 = vst.msk [vmem:[#allocation3 + $0x8] sm:$0xff] %vm731, %v730
        %v734 = vld [vmem:[#allocation4] sm:$0xff]
        %v735 = vld [vmem:[#allocation4 + $0x8] sm:$0xff]
        %737 = vset.pattern.permute.xlu0 0
        %738 = vperm.xlu0 %737, %v700
        %v739 = vpop.permute.xlu0 %738
        %742 = vset.pattern.permute.xlu0 0
        %743 = vperm.xlu0 %742, %v702
        %v744 = vpop.permute.xlu0 %743
        %v746 = vmul.f32 %v739, %v734
        %v747 = vmul.f32 %v744, %v735
        %v748 = vpack.c.bf16 %v718, %v716
        %v751 = vunpack.c.l.b16 %v631
        %v752 = vunpack.c.l.b16 %v632
        %v753 = vpack.c.b16 %v752, %v751
        %v756 = vsel %vm688, %v748, 0
        %758 = vmatprep.subr.bf16.mxu0 0
        %759 = vmatpush1.bf16.msra.mxu0 0
        %760 = vmatprep.subr.bf16.mxu0 0
        %761 = vmatpush1.bf16.msra.mxu0 0
        %762 = vmatprep.subr.bf16.mxu0 0
        %763 = vmatpush1.bf16.msra.mxu0 0
        %764 = vmatprep.subr.bf16.mxu0 0
        %765 = vmatpush1.bf16.msra.mxu0 0
        %766 = vmatprep.subr.bf16.mxu0 0
        %767 = vmatpush1.bf16.msra.mxu0 0
        %768 = vmatprep.subr.bf16.mxu0 0
        %769 = vmatpush1.bf16.msra.mxu0 0
        %770 = vmatprep.subr.bf16.mxu0 0
        %771 = vmatpush1.bf16.msra.mxu0 0
        %772 = vmatprep.subr.bf16.mxu0 0
        %773 = vmatpush1.bf16.msra.mxu0 %v753
        %774 = vmatprep.subr.bf16.mxu0 0
        %775 = vmatpush2.bf16.msra.mxu0 0
        %776 = vmatprep.subr.bf16.mxu0 0
        %777 = vmatpush2.bf16.msra.mxu0 0
        %778 = vmatprep.subr.bf16.mxu0 0
        %779 = vmatpush2.bf16.msra.mxu0 0
        %780 = vmatprep.subr.bf16.mxu0 0
        %781 = vmatpush2.bf16.msra.mxu0 0
        %782 = vmatprep.subr.bf16.mxu0 0
        %783 = vmatpush2.bf16.msra.mxu0 0
        %784 = vmatprep.subr.bf16.mxu0 0
        %785 = vmatpush2.bf16.msra.mxu0 0
        %786 = vmatprep.subr.bf16.mxu0 0
        %787 = vmatpush2.bf16.msra.mxu0 0
        %788 = vmatprep.subr.bf16.mxu0 0
        %789 = vmatpush2.bf16.msra.mxu0 0
        %790 = vmatprep.mubr.bf16.mxu0 0
        %791 = vmatmul.mubr.bf16.gmra.mxu0 %v756
        %v792 = vpop.f32.mrf.mxu0
        %v793 = vadd.f32 0.0, %v792
        %v794 = vpop.f32.mrf.mxu0
        %v795 = vpop.f32.mrf.mxu0
        %v796 = vadd.f32 0.0, %v795
        %v797 = vpop.f32.mrf.mxu0
        %798 = vdwg.mxu0
        %v799 = vadd.f32 %v746, %v793
        %v800 = vadd.f32 %v747, %v796
        %801 = vst [vmem:[#allocation4] sm:$0xff] %v799
        %802 = vst [vmem:[#allocation4 + $0x8] sm:$0xff] %v800
        %803 = vst.msk [vmem:[#allocation2] sm:$0xff] %vm731, %v695
        %804 = vst.msk [vmem:[#allocation2 + $0x8] sm:$0xff] %vm731, %v696
        // Predicated region
        $region221: #{_lambda_.8} parent=199 // pred_check
          %p805 = pneg %p616
        $region222: #{_lambda_.8} parent=199 // pred_check_branch
          %807 = sbr.rel (%p805) target = $region224
        $region223: #{_lambda_.8} parent=199 // pred_region
          %v808 = vld [vmem:[#allocation4] sm:$0xff]
          %v809 = vld [vmem:[#allocation4 + $0x8] sm:$0xff]
          %v810 = vld [vmem:[#allocation3] sm:$0xff]
          %v811 = vld [vmem:[#allocation3 + $0x8] sm:$0xff]
          %v812 = vrcp.pop %v810
          %v813 = vrcp.pop %v811
          %815 = vset.pattern.permute.xlu0 0
          %816 = vperm.xlu0 %815, %v812
          %v817 = vpop.permute.xlu0 %816
          %820 = vset.pattern.permute.xlu0 0
          %821 = vperm.xlu0 %820, %v813
          %v822 = vpop.permute.xlu0 %821
          %v824 = vmul.f32 %v808, %v817
          %v825 = vmul.f32 %v809, %v822
          %v826 = vpack.c.bf16 %v825, %v824
          %v827 = vld [vmem:[%s4] sm:$0xf]
          %v828 = vld [vmem:[%s4 + $0x4] sm:$0xf]
          %v829 = vld [vmem:[%s4 + $0x8] sm:$0xf]
          %v830 = vld [vmem:[%s4 + $0xc] sm:$0xf]
          %v831 = vld [vmem:[%s4 + $0x10] sm:$0xf]
          %v832 = vld [vmem:[%s4 + $0x14] sm:$0xf]
          %v833 = vld [vmem:[%s4 + $0x18] sm:$0xf]
          %v834 = vld [vmem:[%s4 + $0x1c] sm:$0xf]
          %v835 = vld [vmem:[%s4 + $0x20] sm:$0xf]
          %v836 = vld [vmem:[%s4 + $0x24] sm:$0xf]
          %v837 = vld [vmem:[%s4 + $0x28] sm:$0xf]
          %v838 = vld [vmem:[%s4 + $0x2c] sm:$0xf]
          %v839 = vld [vmem:[%s4 + $0x30] sm:$0xf]
          %v840 = vld [vmem:[%s4 + $0x34] sm:$0xf]
          %v841 = vld [vmem:[%s4 + $0x38] sm:$0xf]
          %v842 = vld [vmem:[%s4 + $0x3c] sm:$0xf]
          %v843 = vld [vmem:[%s7] sm:$0x1]
          %v844 = vlaneseq
          %v845 = vshrl.u32 %v844, 7
          %v846 = vsub.s32 0, %v845
          %v847 = vrot.slane %v843, %v846
          %v864 = vunpack.c.l.b16 %v827
          %v865 = vunpack.c.l.b16 %v828
          %v866 = vunpack.c.l.b16 %v829
          %v867 = vunpack.c.l.b16 %v830
          %v868 = vunpack.c.l.b16 %v831
          %v869 = vunpack.c.l.b16 %v832
          %v870 = vunpack.c.l.b16 %v833
          %v871 = vunpack.c.l.b16 %v834
          %v872 = vunpack.c.l.b16 %v835
          %v873 = vunpack.c.l.b16 %v836
          %v874 = vunpack.c.l.b16 %v837
          %v875 = vunpack.c.l.b16 %v838
          %v876 = vunpack.c.l.b16 %v839
          %v877 = vunpack.c.l.b16 %v840
          %v878 = vunpack.c.l.b16 %v841
          %v879 = vunpack.c.l.b16 %v842
          %v880 = vpack.c.b16 %v865, %v864
          %v881 = vpack.c.b16 %v867, %v866
          %v882 = vpack.c.b16 %v869, %v868
          %v883 = vpack.c.b16 %v871, %v870
          %v884 = vpack.c.b16 %v873, %v872
          %v885 = vpack.c.b16 %v875, %v874
          %v886 = vpack.c.b16 %v877, %v876
          %v887 = vpack.c.b16 %v879, %v878
          %896 = vmatprep.subr.bf16.mxu0 0
          %897 = vmatpush1.bf16.msra.mxu0 %v887
          %898 = vmatprep.subr.bf16.mxu0 0
          %899 = vmatpush1.bf16.msra.mxu0 %v886
          %900 = vmatprep.subr.bf16.mxu0 0
          %901 = vmatpush1.bf16.msra.mxu0 %v885
          %902 = vmatprep.subr.bf16.mxu0 0
          %903 = vmatpush1.bf16.msra.mxu0 %v884
          %904 = vmatprep.subr.bf16.mxu0 0
          %905 = vmatpush1.bf16.msra.mxu0 %v883
          %906 = vmatprep.subr.bf16.mxu0 0
          %907 = vmatpush1.bf16.msra.mxu0 %v882
          %908 = vmatprep.subr.bf16.mxu0 0
          %909 = vmatpush1.bf16.msra.mxu0 %v881
          %910 = vmatprep.subr.bf16.mxu0 0
          %911 = vmatpush1.bf16.msra.mxu0 %v880
          %912 = vmatprep.subr.bf16.mxu0 0
          %913 = vmatpush2.bf16.msra.mxu0 0
          %914 = vmatprep.subr.bf16.mxu0 0
          %915 = vmatpush2.bf16.msra.mxu0 0
          %916 = vmatprep.subr.bf16.mxu0 0
          %917 = vmatpush2.bf16.msra.mxu0 0
          %918 = vmatprep.subr.bf16.mxu0 0
          %919 = vmatpush2.bf16.msra.mxu0 0
          %920 = vmatprep.subr.bf16.mxu0 0
          %921 = vmatpush2.bf16.msra.mxu0 0
          %922 = vmatprep.subr.bf16.mxu0 0
          %923 = vmatpush2.bf16.msra.mxu0 0
          %924 = vmatprep.subr.bf16.mxu0 0
          %925 = vmatpush2.bf16.msra.mxu0 0
          %926 = vmatprep.subr.bf16.mxu0 0
          %927 = vmatpush2.bf16.msra.mxu0 0
          %928 = vmatprep.mubr.bf16.mxu0 0
          %929 = vmatmul.mubr.bf16.gmra.mxu0 %v826
          %v930 = vpop.f32.mrf.mxu0
          %v931 = vadd.f32 %v847, %v930
          %v932 = vpop.f32.mrf.mxu0
          %v933 = vpop.f32.mrf.mxu0
          %v934 = vadd.f32 %v847, %v933
          %v935 = vpop.f32.mrf.mxu0
          %936 = vdwg.mxu0
          %v937 = vld [vmem:[%s554] sm:$0xf]
          %v938 = vld [vmem:[%s554 + $0x4] sm:$0xf]
          %v939 = vunpack.c.l.bf16 %v937
          %v940 = vunpack.c.l.bf16 %v938
          %v941 = vadd.f32 %v939, %v931
          %v942 = vadd.f32 %v940, %v934
          %v943 = vlaneseq
          %v944 = vand.u32 %v943, 127
          %vm945 = vcmp.lt.s32.totalorder %v944, 64
          %v946 = vsel %vm945, 1, 0
          %v947 = vcvt.s32.f32 %v946
          %948 = vadd.xlane.f32.xlu0 %v941
          %v949 = vpop.xlane.xlu0 %948
          %950 = vadd.xlane.f32.xlu0 %v942
          %v951 = vpop.xlane.xlu0 %950
          %v952 = vmul.f32 %v949, 0.015625
          %v953 = vmul.f32 %v951, 0.015625
          %v954 = vsub.f32 %v941, %v952
          %v955 = vsub.f32 %v942, %v953
          %v956 = vmul.f32 %v954, %v947
          %v957 = vmul.f32 %v955, %v947
          %v958 = vmul.f32 %v956, %v956
          %v959 = vmul.f32 %v957, %v957
          %960 = vadd.xlane.f32.xlu0 %v958
          %v961 = vpop.xlane.xlu0 %960
          %962 = vadd.xlane.f32.xlu0 %v959
          %v963 = vpop.xlane.xlu0 %962
          %v964 = vmul.f32 %v961, 0.015625
          %v965 = vmul.f32 %v963, 0.015625
          %v966 = vadd.f32 %v964, 1e-05
          %v967 = vadd.f32 %v965, 1e-05
          %v968 = vrsqrt.pop %v966
          %v969 = vrsqrt.pop %v967
          %v970 = vmul.f32 %v956, %v968
          %v971 = vmul.f32 %v957, %v969
          %v972 = vld [vmem:[%s7 + $0x1] sm:$0x1]
          %v973 = vlaneseq
          %v974 = vshrl.u32 %v973, 7
          %v975 = vsub.s32 0, %v974
          %v976 = vrot.slane %v972, %v975
          %v977 = vmul.f32 %v970, %v976
          %v978 = vmul.f32 %v971, %v976
          %v979 = vld [vmem:[%s7 + $0x2] sm:$0x1]
          %v980 = vlaneseq
          %v981 = vshrl.u32 %v980, 7
          %v982 = vsub.s32 0, %v981
          %v983 = vrot.slane %v979, %v982
          %v984 = vadd.f32 %v977, %v983
          %v985 = vadd.f32 %v978, %v983
          %v986 = vpack.c.bf16 %v985, %v984
          %v987 = vld [vmem:[%s5] sm:$0xf]
          %v988 = vld [vmem:[%s5 + $0x4] sm:$0xf]
          %v989 = vld [vmem:[%s5 + $0x8] sm:$0xf]
          %v990 = vld [vmem:[%s5 + $0xc] sm:$0xf]
          %v991 = vld [vmem:[%s5 + $0x10] sm:$0xf]
          %v992 = vld [vmem:[%s5 + $0x14] sm:$0xf]
          %v993 = vld [vmem:[%s5 + $0x18] sm:$0xf]
          %v994 = vld [vmem:[%s5 + $0x1c] sm:$0xf]
          %v995 = vld [vmem:[%s5 + $0x20] sm:$0xf]
          %v996 = vld [vmem:[%s5 + $0x24] sm:$0xf]
          %v997 = vld [vmem:[%s5 + $0x28] sm:$0xf]
          %v998 = vld [vmem:[%s5 + $0x2c] sm:$0xf]
          %v999 = vld [vmem:[%s5 + $0x30] sm:$0xf]
          %v1000 = vld [vmem:[%s5 + $0x34] sm:$0xf]
          %v1001 = vld [vmem:[%s5 + $0x38] sm:$0xf]
          %v1002 = vld [vmem:[%s5 + $0x3c] sm:$0xf]
          %v1003 = vld [vmem:[%s7 + $0x3] sm:$0x1]
          %v1004 = vlaneseq
          %v1005 = vshrl.u32 %v1004, 7
          %v1006 = vsub.s32 0, %v1005
          %v1007 = vrot.slane %v1003, %v1006
          %v1024 = vunpack.c.l.b16 %v987
          %v1025 = vunpack.c.l.b16 %v988
          %v1026 = vunpack.c.l.b16 %v989
          %v1027 = vunpack.c.l.b16 %v990
          %v1028 = vunpack.c.l.b16 %v991
          %v1029 = vunpack.c.l.b16 %v992
          %v1030 = vunpack.c.l.b16 %v993
          %v1031 = vunpack.c.l.b16 %v994
          %v1032 = vunpack.c.l.b16 %v995
          %v1033 = vunpack.c.l.b16 %v996
          %v1034 = vunpack.c.l.b16 %v997
          %v1035 = vunpack.c.l.b16 %v998
          %v1036 = vunpack.c.l.b16 %v999
          %v1037 = vunpack.c.l.b16 %v1000
          %v1038 = vunpack.c.l.b16 %v1001
          %v1039 = vunpack.c.l.b16 %v1002
          %v1040 = vpack.c.b16 %v1025, %v1024
          %v1041 = vpack.c.b16 %v1027, %v1026
          %v1042 = vpack.c.b16 %v1029, %v1028
          %v1043 = vpack.c.b16 %v1031, %v1030
          %v1044 = vpack.c.b16 %v1033, %v1032
          %v1045 = vpack.c.b16 %v1035, %v1034
          %v1046 = vpack.c.b16 %v1037, %v1036
          %v1047 = vpack.c.b16 %v1039, %v1038
          %1056 = vmatprep.subr.bf16.mxu0 0
          %1057 = vmatpush1.bf16.msra.mxu0 %v1047
          %1058 = vmatprep.subr.bf16.mxu0 0
          %1059 = vmatpush1.bf16.msra.mxu0 %v1046
          %1060 = vmatprep.subr.bf16.mxu0 0
          %1061 = vmatpush1.bf16.msra.mxu0 %v1045
          %1062 = vmatprep.subr.bf16.mxu0 0
          %1063 = vmatpush1.bf16.msra.mxu0 %v1044
          %1064 = vmatprep.subr.bf16.mxu0 0
          %1065 = vmatpush1.bf16.msra.mxu0 %v1043
          %1066 = vmatprep.subr.bf16.mxu0 0
          %1067 = vmatpush1.bf16.msra.mxu0 %v1042
          %1068 = vmatprep.subr.bf16.mxu0 0
          %1069 = vmatpush1.bf16.msra.mxu0 %v1041
          %1070 = vmatprep.subr.bf16.mxu0 0
          %1071 = vmatpush1.bf16.msra.mxu0 %v1040
          %1072 = vmatprep.subr.bf16.mxu0 0
          %1073 = vmatpush2.bf16.msra.mxu0 0
          %1074 = vmatprep.subr.bf16.mxu0 0
          %1075 = vmatpush2.bf16.msra.mxu0 0
          %1076 = vmatprep.subr.bf16.mxu0 0
          %1077 = vmatpush2.bf16.msra.mxu0 0
          %1078 = vmatprep.subr.bf16.mxu0 0
          %1079 = vmatpush2.bf16.msra.mxu0 0
          %1080 = vmatprep.subr.bf16.mxu0 0
          %1081 = vmatpush2.bf16.msra.mxu0 0
          %1082 = vmatprep.subr.bf16.mxu0 0
          %1083 = vmatpush2.bf16.msra.mxu0 0
          %1084 = vmatprep.subr.bf16.mxu0 0
          %1085 = vmatpush2.bf16.msra.mxu0 0
          %1086 = vmatprep.subr.bf16.mxu0 0
          %1087 = vmatpush2.bf16.msra.mxu0 0
          %1088 = vmatprep.mubr.bf16.mxu0 0
          %1089 = vmatmul.mubr.bf16.gmra.mxu0 %v986
          %v1090 = vpop.f32.mrf.mxu0
          %v1091 = vadd.f32 %v1007, %v1090
          %v1092 = vpop.f32.mrf.mxu0
          %v1093 = vpop.f32.mrf.mxu0
          %v1094 = vadd.f32 %v1007, %v1093
          %v1095 = vpop.f32.mrf.mxu0
          %1096 = vdwg.mxu0
          %v1097 = vmul.f32 %v1091, 0.5
          %v1098 = vmul.f32 %v1094, 0.5
          %v1099 = vmul.f32 %v1091, 0.044715
          %v1100 = vmul.f32 %v1094, 0.044715
          %v1101 = vmul.f32 %v1099, %v1091
          %v1102 = vmul.f32 %v1100, %v1094
          %v1103 = vmul.f32 %v1101, %v1091
          %v1104 = vmul.f32 %v1102, %v1094
          %v1105 = vadd.f32 %v1091, %v1103
          %v1106 = vadd.f32 %v1094, %v1104
          %v1107 = vmul.f32 %v1105, 0.7978846
          %v1108 = vmul.f32 %v1106, 0.7978846
          %v1109 = vtanh.pop %v1107
          %v1110 = vtanh.pop %v1108
          %v1111 = vadd.f32 %v1109, 1.0
          %v1112 = vadd.f32 %v1110, 1.0
          %v1113 = vmul.f32 %v1097, %v1111
          %v1114 = vmul.f32 %v1098, %v1112
          %v1115 = vpack.c.bf16 %v1114, %v1113
          %v1116 = vld [vmem:[%s6] sm:$0xf]
          %v1117 = vld [vmem:[%s6 + $0x4] sm:$0xf]
          %v1118 = vld [vmem:[%s6 + $0x8] sm:$0xf]
          %v1119 = vld [vmem:[%s6 + $0xc] sm:$0xf]
          %v1120 = vld [vmem:[%s6 + $0x10] sm:$0xf]
          %v1121 = vld [vmem:[%s6 + $0x14] sm:$0xf]
          %v1122 = vld [vmem:[%s6 + $0x18] sm:$0xf]
          %v1123 = vld [vmem:[%s6 + $0x1c] sm:$0xf]
          %v1124 = vld [vmem:[%s6 + $0x20] sm:$0xf]
          %v1125 = vld [vmem:[%s6 + $0x24] sm:$0xf]
          %v1126 = vld [vmem:[%s6 + $0x28] sm:$0xf]
          %v1127 = vld [vmem:[%s6 + $0x2c] sm:$0xf]
          %v1128 = vld [vmem:[%s6 + $0x30] sm:$0xf]
          %v1129 = vld [vmem:[%s6 + $0x34] sm:$0xf]
          %v1130 = vld [vmem:[%s6 + $0x38] sm:$0xf]
          %v1131 = vld [vmem:[%s6 + $0x3c] sm:$0xf]
          %v1132 = vld [vmem:[%s7 + $0x4] sm:$0x1]
          %v1133 = vlaneseq
          %v1134 = vshrl.u32 %v1133, 7
          %v1135 = vsub.s32 0, %v1134
          %v1136 = vrot.slane %v1132, %v1135
          %v1153 = vunpack.c.l.b16 %v1116
          %v1154 = vunpack.c.l.b16 %v1117
          %v1155 = vunpack.c.l.b16 %v1118
          %v1156 = vunpack.c.l.b16 %v1119
          %v1157 = vunpack.c.l.b16 %v1120
          %v1158 = vunpack.c.l.b16 %v1121
          %v1159 = vunpack.c.l.b16 %v1122
          %v1160 = vunpack.c.l.b16 %v1123
          %v1161 = vunpack.c.l.b16 %v1124
          %v1162 = vunpack.c.l.b16 %v1125
          %v1163 = vunpack.c.l.b16 %v1126
          %v1164 = vunpack.c.l.b16 %v1127
          %v1165 = vunpack.c.l.b16 %v1128
          %v1166 = vunpack.c.l.b16 %v1129
          %v1167 = vunpack.c.l.b16 %v1130
          %v1168 = vunpack.c.l.b16 %v1131
          %v1169 = vpack.c.b16 %v1154, %v1153
          %v1170 = vpack.c.b16 %v1156, %v1155
          %v1171 = vpack.c.b16 %v1158, %v1157
          %v1172 = vpack.c.b16 %v1160, %v1159
          %v1173 = vpack.c.b16 %v1162, %v1161
          %v1174 = vpack.c.b16 %v1164, %v1163
          %v1175 = vpack.c.b16 %v1166, %v1165
          %v1176 = vpack.c.b16 %v1168, %v1167
          %1185 = vmatprep.subr.bf16.mxu0 0
          %1186 = vmatpush1.bf16.msra.mxu0 %v1176
          %1187 = vmatprep.subr.bf16.mxu0 0
          %1188 = vmatpush1.bf16.msra.mxu0 %v1175
          %1189 = vmatprep.subr.bf16.mxu0 0
          %1190 = vmatpush1.bf16.msra.mxu0 %v1174
          %1191 = vmatprep.subr.bf16.mxu0 0
          %1192 = vmatpush1.bf16.msra.mxu0 %v1173
          %1193 = vmatprep.subr.bf16.mxu0 0
          %1194 = vmatpush1.bf16.msra.mxu0 %v1172
          %1195 = vmatprep.subr.bf16.mxu0 0
          %1196 = vmatpush1.bf16.msra.mxu0 %v1171
          %1197 = vmatprep.subr.bf16.mxu0 0
          %1198 = vmatpush1.bf16.msra.mxu0 %v1170
          %1199 = vmatprep.subr.bf16.mxu0 0
          %1200 = vmatpush1.bf16.msra.mxu0 %v1169
          %1201 = vmatprep.subr.bf16.mxu0 0
          %1202 = vmatpush2.bf16.msra.mxu0 0
          %1203 = vmatprep.subr.bf16.mxu0 0
          %1204 = vmatpush2.bf16.msra.mxu0 0
          %1205 = vmatprep.subr.bf16.mxu0 0
          %1206 = vmatpush2.bf16.msra.mxu0 0
          %1207 = vmatprep.subr.bf16.mxu0 0
          %1208 = vmatpush2.bf16.msra.mxu0 0
          %1209 = vmatprep.subr.bf16.mxu0 0
          %1210 = vmatpush2.bf16.msra.mxu0 0
          %1211 = vmatprep.subr.bf16.mxu0 0
          %1212 = vmatpush2.bf16.msra.mxu0 0
          %1213 = vmatprep.subr.bf16.mxu0 0
          %1214 = vmatpush2.bf16.msra.mxu0 0
          %1215 = vmatprep.subr.bf16.mxu0 0
          %1216 = vmatpush2.bf16.msra.mxu0 0
          %1217 = vmatprep.mubr.bf16.mxu0 0
          %1218 = vmatmul.mubr.bf16.gmra.mxu0 %v1115
          %v1219 = vpop.f32.mrf.mxu0
          %v1220 = vadd.f32 %v1136, %v1219
          %v1221 = vpop.f32.mrf.mxu0
          %v1222 = vpop.f32.mrf.mxu0
          %v1223 = vadd.f32 %v1136, %v1222
          %v1224 = vpop.f32.mrf.mxu0
          %1225 = vdwg.mxu0
          %v1226 = vadd.f32 %v941, %v1220
          %v1227 = vadd.f32 %v942, %v1223
          %v1228 = vpack.c.bf16 %v1227, %v1226
          %v1230 = vunpack.c.l.b16 %v1228
          %v1231 = vunpack.c.h.b16 %v1228
          %v1232 = vpack.c.b16 %v1230, %v1230
          %v1233 = vpack.c.b16 %v1231, %v1231
          %1236 = vst [vmem:[%s613] sm:$0xf] %v1232
          %1237 = vst [vmem:[%s613 + $0x4] sm:$0xf] %v1233
        $region224: #{_lambda_.8} parent=199 // pred_fallthru
          _
        %s1238 = smul.u32 2, %s25
        %p1239 = scmp.lt.s32.totalorder %s24, 1
        %s1240 = scalar_select %p1239, %s24, 1
        %p1241 = scmp.lt.s32.totalorder %s1238, 1
        %s1242 = scalar_select %p1241, %s1238, 1
        %s1243 = smul.addr %s1240, 2
        %s1244 = sadd.s32 %s1242, %s1243
        %s1245 = smul.addr %s1244, 4
        %s1246 = scalar_lea.vmem %s8, %s1245
        // Predicated region
        $region225: #{_lambda_.8} parent=199 // pred_check
          %p1247 = pneg %p254
        $region226: #{_lambda_.8} parent=199 // pred_check_branch
          %1249 = sbr.rel (%p1247) target = $region228
        $region227: #{_lambda_.8} parent=199 // pred_region
          %s1250 = smul.u32 2, %s25
        $region228: #{_lambda_.8} parent=199 // pred_fallthru
          _
      $region200: #{_lambda_.8} parent=5 // pred_fallthru
        _
      %p1251 = scmp.le.s32.totalorder 2, %s14
      // Predicated region
      $region229: #{_lambda_.8} parent=5 // pred_check
        %p1252 = pneg %p1251
      $region230: #{_lambda_.8} parent=5 // pred_check_branch
        %1254 = sbr.rel (%p1252) target = $region232
      $region231: #{_lambda_.8} parent=5 // pred_region
        %s1255 = ssub.s32 %s14, 2
        // Predicated region
        $region233: #{_lambda_.8} parent=231 // pred_check
          %p1256 = pneg %p260
        $region234: #{_lambda_.8} parent=231 // pred_check_branch
          %1258 = sbr.rel (%p1256) target = $region236
        $region235: #{_lambda_.8} parent=231 // pred_region
          %s1259 = smul.u32 2, %s28
          %p1260 = scmp.lt.s32.totalorder %s27, 1
          %s1261 = scalar_select %p1260, %s27, 1
          %p1262 = scmp.lt.s32.totalorder %s1259, 1
          %s1263 = scalar_select %p1262, %s1259, 1
          %s1264 = smul.addr %s1261, 2
          %s1265 = sadd.s32 %s1263, %s1264
          %s1266 = smul.addr %s1265, 4
          %s1267 = scalar_lea.vmem %s8, %s1266
        $region236: #{_lambda_.8} parent=231 // pred_fallthru
          _
      $region232: #{_lambda_.8} parent=5 // pred_fallthru
        _
    $region6: #{_lambda_.8} parent=1 // loop_footer
      %s18 = sadd.s32 1, %s14
    $region7: #{_lambda_.8} parent=1 // loop_footer_branch
      %13 = sbr.rel target = $region3
    $region8: #{_lambda_.8} parent=1 // loop_exit
      _

// kernel: _lambda_.9
$region0: #{_lambda_.9}
  #allocation0 [shape = 'u32[]', space=smem, size = 0x4, offset = 0x4, fixed_abs, tag = 'smem constant byte address 0x4 - core index']
  #allocation1 [shape = 'u32[144,128]{1,0:T(1,128)}', space=vmem, size = 0x12000, scoped, tag = 'internal scratch']
  %s0 = inlined_call_operand.vmem [shape: bf16[8,640], index: 0, kind: input, shape index: {}]
  %s1 = inlined_call_operand.vmem [shape: bf16[640,128], index: 1, kind: input, shape index: {}]
  %s2 = inlined_call_operand.vmem [shape: f32[1,128], index: 2, kind: input, shape index: {}]
  %s3 = inlined_call_operand.hbm [shape: f32[8,128], index: 3, kind: output, shape index: {}]
  %s4 = sld [smem:[#allocation0]]
  $region22: #{_lambda_.9} parent=0
    _
  %s6 = ssub.s32 1, %s4
  %s7 = scalar_select 0, %s6, %s4
  $region1: #{_lambda_.9} parent=0
    #allocation2 [shape = 'u8[4096]{0}', space=vmem, size = 0x1000, scoped, tag = 'output window, operand 0, single buffered']
    #allocation3 [shape = 's32[1]{0}', space=sflag, size = 0x4, scoped, tag = 'scoped memory for _lambda_.9']
    %8 = vsyncpa [#allocation3], 0
    // Predicated region
    $region2: #{_lambda_.9} parent=1 // pred_check
      _
    $region3: #{_lambda_.9} parent=1 // pred_check_branch
      %10 = sbr.rel (0) target = $region5
    $region4: #{_lambda_.9} parent=1 // pred_region
      _
    $region5: #{_lambda_.9} parent=1 // pred_fallthru
      _
    // Predicated region
    $region6: #{_lambda_.9} parent=1 // pred_check
      _
    $region7: #{_lambda_.9} parent=1 // pred_check_branch
      %12 = sbr.rel (0) target = $region9
    $region8: #{_lambda_.9} parent=1 // pred_region
      _
    $region9: #{_lambda_.9} parent=1 // pred_fallthru
      _
    // Predicated region
    $region10: #{_lambda_.9} parent=1 // pred_check
      _
    $region11: #{_lambda_.9} parent=1 // pred_check_branch
      %14 = sbr.rel (0) target = $region13
    $region12: #{_lambda_.9} parent=1 // pred_region
      _
    $region13: #{_lambda_.9} parent=1 // pred_fallthru
      _
    %v16 = vld [vmem:[%s0] sm:$0xff]
    %v17 = vld [vmem:[%s0 + $0x8] sm:$0xff]
    %v18 = vld [vmem:[%s0 + $0x10] sm:$0xf]
    %v19 = vld [vmem:[%s1] sm:$0xf]
    %v20 = vld [vmem:[%s1 + $0x4] sm:$0xf]
    %v21 = vld [vmem:[%s1 + $0x8] sm:$0xf]
    %v22 = vld [vmem:[%s1 + $0xc] sm:$0xf]
    %v23 = vld [vmem:[%s1 + $0x10] sm:$0xf]
    %v24 = vld [vmem:[%s1 + $0x14] sm:$0xf]
    %v25 = vld [vmem:[%s1 + $0x18] sm:$0xf]
    %v26 = vld [vmem:[%s1 + $0x1c] sm:$0xf]
    %v27 = vld [vmem:[%s1 + $0x20] sm:$0xf]
    %v28 = vld [vmem:[%s1 + $0x24] sm:$0xf]
    %v29 = vld [vmem:[%s1 + $0x28] sm:$0xf]
    %v30 = vld [vmem:[%s1 + $0x2c] sm:$0xf]
    %v31 = vld [vmem:[%s1 + $0x30] sm:$0xf]
    %v32 = vld [vmem:[%s1 + $0x34] sm:$0xf]
    %v33 = vld [vmem:[%s1 + $0x38] sm:$0xf]
    %v34 = vld [vmem:[%s1 + $0x3c] sm:$0xf]
    %v35 = vld [vmem:[%s1 + $0x40] sm:$0xf]
    %v36 = vld [vmem:[%s1 + $0x44] sm:$0xf]
    %v37 = vld [vmem:[%s1 + $0x48] sm:$0xf]
    %v38 = vld [vmem:[%s1 + $0x4c] sm:$0xf]
    %v39 = vld [vmem:[%s1 + $0x50] sm:$0xf]
    %v40 = vld [vmem:[%s1 + $0x54] sm:$0xf]
    %v41 = vld [vmem:[%s1 + $0x58] sm:$0xf]
    %v42 = vld [vmem:[%s1 + $0x5c] sm:$0xf]
    %v43 = vld [vmem:[%s1 + $0x60] sm:$0xf]
    %v44 = vld [vmem:[%s1 + $0x64] sm:$0xf]
    %v45 = vld [vmem:[%s1 + $0x68] sm:$0xf]
    %v46 = vld [vmem:[%s1 + $0x6c] sm:$0xf]
    %v47 = vld [vmem:[%s1 + $0x70] sm:$0xf]
    %v48 = vld [vmem:[%s1 + $0x74] sm:$0xf]
    %v49 = vld [vmem:[%s1 + $0x78] sm:$0xf]
    %v50 = vld [vmem:[%s1 + $0x7c] sm:$0xf]
    %v51 = vld [vmem:[%s1 + $0x80] sm:$0xf]
    %v52 = vld [vmem:[%s1 + $0x84] sm:$0xf]
    %v53 = vld [vmem:[%s1 + $0x88] sm:$0xf]
    %v54 = vld [vmem:[%s1 + $0x8c] sm:$0xf]
    %v55 = vld [vmem:[%s1 + $0x90] sm:$0xf]
    %v56 = vld [vmem:[%s1 + $0x94] sm:$0xf]
    %v57 = vld [vmem:[%s1 + $0x98] sm:$0xf]
    %v58 = vld [vmem:[%s1 + $0x9c] sm:$0xf]
    %v59 = vld [vmem:[%s1 + $0xa0] sm:$0xf]
    %v60 = vld [vmem:[%s1 + $0xa4] sm:$0xf]
    %v61 = vld [vmem:[%s1 + $0xa8] sm:$0xf]
    %v62 = vld [vmem:[%s1 + $0xac] sm:$0xf]
    %v63 = vld [vmem:[%s1 + $0xb0] sm:$0xf]
    %v64 = vld [vmem:[%s1 + $0xb4] sm:$0xf]
    %v65 = vld [vmem:[%s1 + $0xb8] sm:$0xf]
    %v66 = vld [vmem:[%s1 + $0xbc] sm:$0xf]
    %v67 = vld [vmem:[%s1 + $0xc0] sm:$0xf]
    %v68 = vld [vmem:[%s1 + $0xc4] sm:$0xf]
    %v69 = vld [vmem:[%s1 + $0xc8] sm:$0xf]
    %v70 = vld [vmem:[%s1 + $0xcc] sm:$0xf]
    %v71 = vld [vmem:[%s1 + $0xd0] sm:$0xf]
    %v72 = vld [vmem:[%s1 + $0xd4] sm:$0xf]
    %v73 = vld [vmem:[%s1 + $0xd8] sm:$0xf]
    %v74 = vld [vmem:[%s1 + $0xdc] sm:$0xf]
    %v75 = vld [vmem:[%s1 + $0xe0] sm:$0xf]
    %v76 = vld [vmem:[%s1 + $0xe4] sm:$0xf]
    %v77 = vld [vmem:[%s1 + $0xe8] sm:$0xf]
    %v78 = vld [vmem:[%s1 + $0xec] sm:$0xf]
    %v79 = vld [vmem:[%s1 + $0xf0] sm:$0xf]
    %v80 = vld [vmem:[%s1 + $0xf4] sm:$0xf]
    %v81 = vld [vmem:[%s1 + $0xf8] sm:$0xf]
    %v82 = vld [vmem:[%s1 + $0xfc] sm:$0xf]
    %v83 = vld [vmem:[%s1 + $0x100] sm:$0xf]
    %v84 = vld [vmem:[%s1 + $0x104] sm:$0xf]
    %v85 = vld [vmem:[%s1 + $0x108] sm:$0xf]
    %v86 = vld [vmem:[%s1 + $0x10c] sm:$0xf]
    %v87 = vld [vmem:[%s1 + $0x110] sm:$0xf]
    %v88 = vld [vmem:[%s1 + $0x114] sm:$0xf]
    %v89 = vld [vmem:[%s1 + $0x118] sm:$0xf]
    %v90 = vld [vmem:[%s1 + $0x11c] sm:$0xf]
    %v91 = vld [vmem:[%s1 + $0x120] sm:$0xf]
    %v92 = vld [vmem:[%s1 + $0x124] sm:$0xf]
    %v93 = vld [vmem:[%s1 + $0x128] sm:$0xf]
    %v94 = vld [vmem:[%s1 + $0x12c] sm:$0xf]
    %v95 = vld [vmem:[%s1 + $0x130] sm:$0xf]
    %v96 = vld [vmem:[%s1 + $0x134] sm:$0xf]
    %v97 = vld [vmem:[%s1 + $0x138] sm:$0xf]
    %v98 = vld [vmem:[%s1 + $0x13c] sm:$0xf]
    %v99 = vld [vmem:[%s2] sm:$0x1]
    %v101 = vlaneseq
    %v102 = vshrl.u32 %v101, 7
    %v103 = vsub.s32 0, %v102
    %v104 = vrot.slane %v99, %v103
    %v109 = vunpack.c.l.b16 %v16
    %v110 = vunpack.c.h.b16 %v16
    %v111 = vunpack.c.l.b16 %v17
    %v112 = vunpack.c.h.b16 %v17
    %v113 = vunpack.c.l.b16 %v18
    %v114 = vpack.c.b16 %v109, %v109
    %v115 = vpack.c.b16 %v110, %v110
    %v116 = vpack.c.b16 %v111, %v111
    %v117 = vpack.c.b16 %v112, %v112
    %v118 = vpack.c.b16 %v113, %v113
    %v204 = vunpack.c.l.b16 %v19
    %v205 = vunpack.c.l.b16 %v20
    %v206 = vunpack.c.l.b16 %v21
    %v207 = vunpack.c.l.b16 %v22
    %v208 = vunpack.c.l.b16 %v23
    %v209 = vunpack.c.l.b16 %v24
    %v210 = vunpack.c.l.b16 %v25
    %v211 = vunpack.c.l.b16 %v26
    %v212 = vunpack.c.l.b16 %v27
    %v213 = vunpack.c.l.b16 %v28
    %v214 = vunpack.c.l.b16 %v29
    %v215 = vunpack.c.l.b16 %v30
    %v216 = vunpack.c.l.b16 %v31
    %v217 = vunpack.c.l.b16 %v32
    %v218 = vunpack.c.l.b16 %v33
    %v219 = vunpack.c.l.b16 %v34
    %v220 = vunpack.c.l.b16 %v35
    %v221 = vunpack.c.l.b16 %v36
    %v222 = vunpack.c.l.b16 %v37
    %v223 = vunpack.c.l.b16 %v38
    %v224 = vunpack.c.l.b16 %v39
    %v225 = vunpack.c.l.b16 %v40
    %v226 = vunpack.c.l.b16 %v41
    %v227 = vunpack.c.l.b16 %v42
    %v228 = vunpack.c.l.b16 %v43
    %v229 = vunpack.c.l.b16 %v44
    %v230 = vunpack.c.l.b16 %v45
    %v231 = vunpack.c.l.b16 %v46
    %v232 = vunpack.c.l.b16 %v47
    %v233 = vunpack.c.l.b16 %v48
    %v234 = vunpack.c.l.b16 %v49
    %v235 = vunpack.c.l.b16 %v50
    %v236 = vunpack.c.l.b16 %v51
    %v237 = vunpack.c.l.b16 %v52
    %v238 = vunpack.c.l.b16 %v53
    %v239 = vunpack.c.l.b16 %v54
    %v240 = vunpack.c.l.b16 %v55
    %v241 = vunpack.c.l.b16 %v56
    %v242 = vunpack.c.l.b16 %v57
    %v243 = vunpack.c.l.b16 %v58
    %v244 = vunpack.c.l.b16 %v59
    %v245 = vunpack.c.l.b16 %v60
    %v246 = vunpack.c.l.b16 %v61
    %v247 = vunpack.c.l.b16 %v62
    %v248 = vunpack.c.l.b16 %v63
    %v249 = vunpack.c.l.b16 %v64
    %v250 = vunpack.c.l.b16 %v65
    %v251 = vunpack.c.l.b16 %v66
    %v252 = vunpack.c.l.b16 %v67
    %v253 = vunpack.c.l.b16 %v68
    %v254 = vunpack.c.l.b16 %v69
    %v255 = vunpack.c.l.b16 %v70
    %v256 = vunpack.c.l.b16 %v71
    %v257 = vunpack.c.l.b16 %v72
    %v258 = vunpack.c.l.b16 %v73
    %v259 = vunpack.c.l.b16 %v74
    %v260 = vunpack.c.l.b16 %v75
    %v261 = vunpack.c.l.b16 %v76
    %v262 = vunpack.c.l.b16 %v77
    %v263 = vunpack.c.l.b16 %v78
    %v264 = vunpack.c.l.b16 %v79
    %v265 = vunpack.c.l.b16 %v80
    %v266 = vunpack.c.l.b16 %v81
    %v267 = vunpack.c.l.b16 %v82
    %v268 = vunpack.c.l.b16 %v83
    %v269 = vunpack.c.l.b16 %v84
    %v270 = vunpack.c.l.b16 %v85
    %v271 = vunpack.c.l.b16 %v86
    %v272 = vunpack.c.l.b16 %v87
    %v273 = vunpack.c.l.b16 %v88
    %v274 = vunpack.c.l.b16 %v89
    %v275 = vunpack.c.l.b16 %v90
    %v276 = vunpack.c.l.b16 %v91
    %v277 = vunpack.c.l.b16 %v92
    %v278 = vunpack.c.l.b16 %v93
    %v279 = vunpack.c.l.b16 %v94
    %v280 = vunpack.c.l.b16 %v95
    %v281 = vunpack.c.l.b16 %v96
    %v282 = vunpack.c.l.b16 %v97
    %v283 = vunpack.c.l.b16 %v98
    %v284 = vpack.c.b16 %v205, %v204
    %v285 = vpack.c.b16 %v207, %v206
    %v286 = vpack.c.b16 %v209, %v208
    %v287 = vpack.c.b16 %v211, %v210
    %v288 = vpack.c.b16 %v213, %v212
    %v289 = vpack.c.b16 %v215, %v214
    %v290 = vpack.c.b16 %v217, %v216
    %v291 = vpack.c.b16 %v219, %v218
    %v292 = vpack.c.b16 %v221, %v220
    %v293 = vpack.c.b16 %v223, %v222
    %v294 = vpack.c.b16 %v225, %v224
    %v295 = vpack.c.b16 %v227, %v226
    %v296 = vpack.c.b16 %v229, %v228
    %v297 = vpack.c.b16 %v231, %v230
    %v298 = vpack.c.b16 %v233, %v232
    %v299 = vpack.c.b16 %v235, %v234
    %v300 = vpack.c.b16 %v237, %v236
    %v301 = vpack.c.b16 %v239, %v238
    %v302 = vpack.c.b16 %v241, %v240
    %v303 = vpack.c.b16 %v243, %v242
    %v304 = vpack.c.b16 %v245, %v244
    %v305 = vpack.c.b16 %v247, %v246
    %v306 = vpack.c.b16 %v249, %v248
    %v307 = vpack.c.b16 %v251, %v250
    %v308 = vpack.c.b16 %v253, %v252
    %v309 = vpack.c.b16 %v255, %v254
    %v310 = vpack.c.b16 %v257, %v256
    %v311 = vpack.c.b16 %v259, %v258
    %v312 = vpack.c.b16 %v261, %v260
    %v313 = vpack.c.b16 %v263, %v262
    %v314 = vpack.c.b16 %v265, %v264
    %v315 = vpack.c.b16 %v267, %v266
    %v316 = vpack.c.b16 %v269, %v268
    %v317 = vpack.c.b16 %v271, %v270
    %v318 = vpack.c.b16 %v273, %v272
    %v319 = vpack.c.b16 %v275, %v274
    %v320 = vpack.c.b16 %v277, %v276
    %v321 = vpack.c.b16 %v279, %v278
    %v322 = vpack.c.b16 %v281, %v280
    %v323 = vpack.c.b16 %v283, %v282
    %364 = vmatprep.subr.bf16.mxu0 0
    %365 = vmatpush1.bf16.msra.mxu0 %v291
    %366 = vmatprep.subr.bf16.mxu0 0
    %367 = vmatpush1.bf16.msra.mxu0 %v290
    %368 = vmatprep.subr.bf16.mxu0 0
    %369 = vmatpush1.bf16.msra.mxu0 %v289
    %370 = vmatprep.subr.bf16.mxu0 0
    %371 = vmatpush1.bf16.msra.mxu0 %v288
    %372 = vmatprep.subr.bf16.mxu0 0
    %373 = vmatpush1.bf16.msra.mxu0 %v287
    %374 = vmatprep.subr.bf16.mxu0 0
    %375 = vmatpush1.bf16.msra.mxu0 %v286
    %376 = vmatprep.subr.bf16.mxu0 0
    %377 = vmatpush1.bf16.msra.mxu0 %v285
    %378 = vmatprep.subr.bf16.mxu0 0
    %379 = vmatpush1.bf16.msra.mxu0 %v284
    %380 = vmatprep.subr.bf16.mxu0 0
    %381 = vmatpush2.bf16.msra.mxu0 %v299
    %382 = vmatprep.subr.bf16.mxu0 0
    %383 = vmatpush2.bf16.msra.mxu0 %v298
    %384 = vmatprep.subr.bf16.mxu0 0
    %385 = vmatpush2.bf16.msra.mxu0 %v297
    %386 = vmatprep.subr.bf16.mxu0 0
    %387 = vmatpush2.bf16.msra.mxu0 %v296
    %388 = vmatprep.subr.bf16.mxu0 0
    %389 = vmatpush2.bf16.msra.mxu0 %v295
    %390 = vmatprep.subr.bf16.mxu0 0
    %391 = vmatpush2.bf16.msra.mxu0 %v294
    %392 = vmatprep.subr.bf16.mxu0 0
    %393 = vmatpush2.bf16.msra.mxu0 %v293
    %394 = vmatprep.subr.bf16.mxu0 0
    %395 = vmatpush2.bf16.msra.mxu0 %v292
    %396 = vmatprep.mubr.bf16.mxu0 %v115
    %397 = vmatmul.mubr.bf16.gmra.mxu0 %v114
    %v398 = vpop.f32.mrf.mxu0
    %v399 = vadd.f32 %v104, %v398
    %v400 = vpop.f32.mrf.mxu0
    %v401 = vpop.f32.mrf.mxu0
    %v402 = vpop.f32.mrf.mxu0
    %403 = vdwg.mxu0
    %404 = vmatprep.subr.bf16.mxu0 0
    %405 = vmatpush1.bf16.msra.mxu0 %v307
    %406 = vmatprep.subr.bf16.mxu0 0
    %407 = vmatpush1.bf16.msra.mxu0 %v306
    %408 = vmatprep.subr.bf16.mxu0 0
    %409 = vmatpush1.bf16.msra.mxu0 %v305
    %410 = vmatprep.subr.bf16.mxu0 0
    %411 = vmatpush1.bf16.msra.mxu0 %v304
    %412 = vmatprep.subr.bf16.mxu0 0
    %413 = vmatpush1.bf16.msra.mxu0 %v303
    %414 = vmatprep.subr.bf16.mxu0 0
    %415 = vmatpush1.bf16.msra.mxu0 %v302
    %416 = vmatprep.subr.bf16.mxu0 0
    %417 = vmatpush1.bf16.msra.mxu0 %v301
    %418 = vmatprep.subr.bf16.mxu0 0
    %419 = vmatpush1.bf16.msra.mxu0 %v300
    %420 = vmatprep.subr.bf16.mxu0 0
    %421 = vmatpush2.bf16.msra.mxu0 %v315
    %422 = vmatprep.subr.bf16.mxu0 0
    %423 = vmatpush2.bf16.msra.mxu0 %v314
    %424 = vmatprep.subr.bf16.mxu0 0
    %425 = vmatpush2.bf16.msra.mxu0 %v313
    %426 = vmatprep.subr.bf16.mxu0 0
    %427 = vmatpush2.bf16.msra.mxu0 %v312
    %428 = vmatprep.subr.bf16.mxu0 0
    %429 = vmatpush2.bf16.msra.mxu0 %v311
    %430 = vmatprep.subr.bf16.mxu0 0
    %431 = vmatpush2.bf16.msra.mxu0 %v310
    %432 = vmatprep.subr.bf16.mxu0 0
    %433 = vmatpush2.bf16.msra.mxu0 %v309
    %434 = vmatprep.subr.bf16.mxu0 0
    %435 = vmatpush2.bf16.msra.mxu0 %v308
    %436 = vmatprep.mubr.bf16.mxu0 %v117
    %437 = vmatmul.mubr.bf16.gmra.mxu0 %v116
    %v438 = vpop.f32.mrf.mxu0
    %v439 = vadd.f32 %v399, %v438
    %v440 = vpop.f32.mrf.mxu0
    %v441 = vpop.f32.mrf.mxu0
    %v442 = vpop.f32.mrf.mxu0
    %443 = vdwg.mxu0
    %444 = vmatprep.subr.bf16.mxu0 0
    %445 = vmatpush1.bf16.msra.mxu0 %v323
    %446 = vmatprep.subr.bf16.mxu0 0
    %447 = vmatpush1.bf16.msra.mxu0 %v322
    %448 = vmatprep.subr.bf16.mxu0 0
    %449 = vmatpush1.bf16.msra.mxu0 %v321
    %450 = vmatprep.subr.bf16.mxu0 0
    %451 = vmatpush1.bf16.msra.mxu0 %v320
    %452 = vmatprep.subr.bf16.mxu0 0
    %453 = vmatpush1.bf16.msra.mxu0 %v319
    %454 = vmatprep.subr.bf16.mxu0 0
    %455 = vmatpush1.bf16.msra.mxu0 %v318
    %456 = vmatprep.subr.bf16.mxu0 0
    %457 = vmatpush1.bf16.msra.mxu0 %v317
    %458 = vmatprep.subr.bf16.mxu0 0
    %459 = vmatpush1.bf16.msra.mxu0 %v316
    %460 = vmatprep.subr.bf16.mxu0 0
    %461 = vmatpush2.bf16.msra.mxu0 0
    %462 = vmatprep.subr.bf16.mxu0 0
    %463 = vmatpush2.bf16.msra.mxu0 0
    %464 = vmatprep.subr.bf16.mxu0 0
    %465 = vmatpush2.bf16.msra.mxu0 0
    %466 = vmatprep.subr.bf16.mxu0 0
    %467 = vmatpush2.bf16.msra.mxu0 0
    %468 = vmatprep.subr.bf16.mxu0 0
    %469 = vmatpush2.bf16.msra.mxu0 0
    %470 = vmatprep.subr.bf16.mxu0 0
    %471 = vmatpush2.bf16.msra.mxu0 0
    %472 = vmatprep.subr.bf16.mxu0 0
    %473 = vmatpush2.bf16.msra.mxu0 0
    %474 = vmatprep.subr.bf16.mxu0 0
    %475 = vmatpush2.bf16.msra.mxu0 0
    %476 = vmatprep.mubr.bf16.mxu0 0
    %477 = vmatmul.mubr.bf16.gmra.mxu0 %v118
    %v478 = vpop.f32.mrf.mxu0
    %v479 = vadd.f32 %v439, %v478
    %v480 = vpop.f32.mrf.mxu0
    %v481 = vpop.f32.mrf.mxu0
    %v482 = vpop.f32.mrf.mxu0
    %483 = vdwg.mxu0
    %484 = vst [vmem:[#allocation2] sm:$0xff] %v479
    // Predicated region
    $region14: #{_lambda_.9} parent=1 // pred_check
      _
    $region15: #{_lambda_.9} parent=1 // pred_check_branch
      %486 = sbr.rel (0) target = $region17
    $region16: #{_lambda_.9} parent=1 // pred_region
      %s488 = ssub.s32 128, 128
      %489 = vsyncadd [#allocation3], %s488
      %s491 = sshll.u32 [#allocation2], 4
      %s492 = int_to_ptr.vmem [resolvable:$true] %s491
      %494 = dma.vmem_to_hbm [thread:$0]  %s492, 128, %s3, [#allocation3]
    $region17: #{_lambda_.9} parent=1 // pred_fallthru
      _
    // Predicated region
    $region18: #{_lambda_.9} parent=1 // pred_check
      _
    $region19: #{_lambda_.9} parent=1 // pred_check_branch
      %496 = sbr.rel (0) target = $region21
    $region20: #{_lambda_.9} parent=1 // pred_region
      %497 = dma.done [#allocation3], 128
    $region21: #{_lambda_.9} parent=1 // pred_fallthru
      _
    %498 = vsyncpa [#allocation3], 1

</llo_original>
